<compile_context>
chip_gen: v5e
topology: v5e:2x2
jax: 0.10.0
libtpu: 0.0.40
codegen_flags: <defaults>
</compile_context>

<pallas_src>
import jax
import jax.numpy as jnp
from jax.experimental import pallas as pl
from jax.experimental.pallas import tpu as pltpu

H = 1024          # XLM-R large hidden size (fc1 input)
D_HEAD = 128      # single attention head dim (substitute backbone)
D_FFN = 512       # substitute FFN intermediate size
D_FC1 = 512       # classification head fc1 output
NUM_CLASSES = 2
LANE_PAD = 128    # lane-dense padded width for the head output
VOCAB = 64
B = 2             # batch
S = 8             # sequence length


# ----------------------------------------------------------------------------
# Fused Pallas kernel: encoder layer + CLS pooling + classification head
# ----------------------------------------------------------------------------
def xlmr_fused_kernel(h_ref, bias_ref,
                      wqkv_ref, wo_ref,
                      w1_ref, b1_ref, w2_ref, b2_ref,
                      g1_ref, be1_ref, g2_ref, be2_ref,
                      fc1w_ref, fc1b_ref, fc2w_ref, fc2b_ref,
                      o_ref):
    h2d = h_ref[...]                                  # (B*S, H) f32 (pre-flattened)
    h_bf = h2d.astype(jnp.bfloat16)

    # ---- fused Q/K/V projection: one (H, 3*D_HEAD) GEMM, bf16 in / f32 acc ----
    qkv = jnp.dot(h_bf, wqkv_ref[...],
                  preferred_element_type=jnp.float32)             # (B*S, 3*D_HEAD)
    q = qkv[:, 0 * D_HEAD:1 * D_HEAD].reshape(B, S, D_HEAD).astype(jnp.bfloat16)
    k = qkv[:, 1 * D_HEAD:2 * D_HEAD].reshape(B, S, D_HEAD).astype(jnp.bfloat16)
    v = qkv[:, 2 * D_HEAD:3 * D_HEAD].reshape(B, S, D_HEAD).astype(jnp.bfloat16)

    # ---- scaled dot-product attention with precomputed additive mask bias ----
    scale = jnp.float32(1.0 / (D_HEAD ** 0.5))
    scores = jnp.einsum('bqd,bkd->bqk', q, k,
                        preferred_element_type=jnp.float32) * scale   # (B, S, S)
    scores = scores + bias_ref[...][:, None, :]                        # (B,S) bias

    m = jnp.max(scores, axis=-1, keepdims=True)
    p = jnp.exp(scores - m)
    p = p * pl.reciprocal(jnp.sum(p, axis=-1, keepdims=True), approx=True)
    ctx = jnp.einsum('bqk,bkd->bqd', p.astype(jnp.bfloat16), v,
                     preferred_element_type=jnp.float32)               # (B, S, D_HEAD)

    attn = jnp.dot(ctx.reshape(B * S, D_HEAD).astype(jnp.bfloat16), wo_ref[...],
                   preferred_element_type=jnp.float32)                 # (B*S, H)

    # ---- residual + LayerNorm 1 (f32 elementwise) ----
    x = h2d + attn
    mu = jnp.mean(x, axis=-1, keepdims=True)
    var = jnp.mean((x - mu) * (x - mu), axis=-1, keepdims=True)
    x = (x - mu) * jax.lax.rsqrt(var + 1e-5) * g1_ref[...] + be1_ref[...]

    # ---- FFN (GELU tanh approx), bf16 matmul inputs, f32 accumulation ----
    f = jnp.dot(x.astype(jnp.bfloat16), w1_ref[...],
                preferred_element_type=jnp.float32) + b1_ref[...]
    f = 0.5 * f * (1.0 + jnp.tanh(0.7978845608028654 * (f + 0.044715 * f * f * f)))
    f = jnp.dot(f.astype(jnp.bfloat16), w2_ref[...],
                preferred_element_type=jnp.float32) + b2_ref[...]

    # ---- residual + LayerNorm 2 ----
    y = x + f
    mu2 = jnp.mean(y, axis=-1, keepdims=True)
    var2 = jnp.mean((y - mu2) * (y - mu2), axis=-1, keepdims=True)
    y = (y - mu2) * jax.lax.rsqrt(var2 + 1e-5) * g2_ref[...] + be2_ref[...]

    # ---- fused classification head on the <CLS> token of each sequence ----
    pooled = y.reshape(B, S, H)[:, 0, :]                               # (B, H)
    h1 = jnp.dot(pooled.astype(jnp.bfloat16), fc1w_ref[...],
                 preferred_element_type=jnp.float32) + fc1b_ref[...]   # (B, 512)
    h1 = jnp.maximum(h1, 0.0)                    # ReLU; Dropout(0.2) identity at eval
    # fc2 weight padded to 128 lanes (zeros), bias padded with -1e9 so the padded
    # lanes vanish from the log-softmax; lane-dense (B, 128) store.
    logits = jnp.dot(h1.astype(jnp.bfloat16), fc2w_ref[...],
                     preferred_element_type=jnp.float32) + fc2b_ref[...]   # (B, 128)
    lm = jnp.max(logits, axis=-1, keepdims=True)
    z = logits - lm
    lse = jnp.log(jnp.sum(jnp.exp(z), axis=-1, keepdims=True))
    o_ref[...] = z - lse


# ----------------------------------------------------------------------------
# Wrapper
# ----------------------------------------------------------------------------
def xlmr_forward(input_ids, attention_mask, params):
    b, s = input_ids.shape
    # glue: embedding lookup (token + position) and layout plumbing in plain JAX
    tok_emb = params['tok_emb'][input_ids]                 # (B, S, H)
    pos_emb = params['pos_emb'][None, :s]                  # (1, S, H)
    h2d = (tok_emb + pos_emb).astype(jnp.float32).reshape(b * s, H)
    mask_bias = ((1.0 - attention_mask.astype(jnp.float32)) * -1e9)   # (B, S)

    vmem = pl.BlockSpec(memory_space=pltpu.MemorySpace.VMEM)
    # NOTE: for realistic batch sizes, add grid=(B,) with dimension_semantics=
    # ("parallel",) to shard across v7x's two TensorCores; at B=2 it is not worth
    # the extra grid-step overhead.
    logprobs_padded = pl.pallas_call(
        xlmr_fused_kernel,
        out_shape=jax.ShapeDtypeStruct((b, LANE_PAD), jnp.float32),
        in_specs=[vmem] * 16,
        out_specs=vmem,
    )(h2d, mask_bias,
      params['wqkv'], params['wo'],
      params['ffn_w1'], params['ffn_b1'], params['ffn_w2'], params['ffn_b2'],
      params['ln1_g'], params['ln1_b'], params['ln2_g'], params['ln2_b'],
      params['fc1_w'], params['fc1_b'], params['fc2_w_pad'], params['fc2_b_pad'])

    return logprobs_padded[:, :NUM_CLASSES]                # (B, 2) log-probabilities


def init_params(key):
    ks = jax.random.split(key, 16)
    scale = 0.02
    bf = jnp.bfloat16

    wq = scale * jax.random.normal(ks[2], (H, D_HEAD), jnp.float32)
    wk = scale * jax.random.normal(ks[3], (H, D_HEAD), jnp.float32)
    wv = scale * jax.random.normal(ks[4], (H, D_HEAD), jnp.float32)

    fc2_w = scale * jax.random.normal(ks[9], (D_FC1, NUM_CLASSES), jnp.float32)
    fc2_b = jnp.zeros((NUM_CLASSES,), jnp.float32)
    # lane-dense padding: zero weight columns, -1e9 bias on the padded lanes
    fc2_w_pad = jnp.zeros((D_FC1, LANE_PAD), jnp.float32).at[:, :NUM_CLASSES].set(fc2_w)
    fc2_b_pad = jnp.full((1, LANE_PAD), -1e9, jnp.float32).at[0, :NUM_CLASSES].set(fc2_b)

    p = {
        'tok_emb': scale * jax.random.normal(ks[0], (VOCAB, H), jnp.float32),
        'pos_emb': scale * jax.random.normal(ks[1], (S, H), jnp.float32),
        # fused QKV projection weight, bf16 (MXU-native, halves weight DMA)
        'wqkv': jnp.concatenate([wq, wk, wv], axis=1).astype(bf),     # (H, 3*D_HEAD)
        'wo': (scale * jax.random.normal(ks[5], (D_HEAD, H), jnp.float32)).astype(bf),
        'ffn_w1': (scale * jax.random.normal(ks[6], (H, D_FFN), jnp.float32)).astype(bf),
        'ffn_b1': jnp.zeros((1, D_FFN), jnp.float32),
        'ffn_w2': (scale * jax.random.normal(ks[7], (D_FFN, H), jnp.float32)).astype(bf),
        'ffn_b2': jnp.zeros((1, H), jnp.float32),
        'ln1_g': jnp.ones((1, H), jnp.float32),
        'ln1_b': jnp.zeros((1, H), jnp.float32),
        'ln2_g': jnp.ones((1, H), jnp.float32),
        'ln2_b': jnp.zeros((1, H), jnp.float32),
        # classification head: weights stored as (in, out) so kernel does x @ W + b
        'fc1_w': (scale * jax.random.normal(ks[8], (H, D_FC1), jnp.float32)).astype(bf),
        'fc1_b': jnp.zeros((1, D_FC1), jnp.float32),
        'fc2_w_pad': fc2_w_pad.astype(bf),
        'fc2_b_pad': fc2_b_pad,
    }
    return p


if __name__ == "__main__":
    key = jax.random.PRNGKey(0)
    k_ids, k_params = jax.random.split(key)

    input_ids = jax.random.randint(k_ids, (B, S), 0, VOCAB, dtype=jnp.int32)
    attention_mask = jnp.ones((B, S), jnp.float32).at[1, 6:].set(0.0)  # pad tail of sample 1

    params = init_params(k_params)

    out = xlmr_forward(input_ids, attention_mask, params)
    out = jax.block_until_ready(out)

    assert out.shape == (B, NUM_CLASSES)
    # rows of exp(log_softmax) must sum to ~1
    row_sums = jnp.sum(jnp.exp(out), axis=1)
    assert bool(jnp.all(jnp.abs(row_sums - 1.0) < 1e-4))

    print("KERNEL_OK")
</pallas_src>

<mosaic_0001>
module attributes {stable_mosaic.version = 11 : i64} {
  func.func @xlmr_fused_kernel(%arg0: memref<16x1024xf32, #tpu.memory_space<vmem>>, %arg1: memref<2x8xf32, #tpu.memory_space<vmem>>, %arg2: memref<1024x384xbf16, #tpu.memory_space<vmem>>, %arg3: memref<128x1024xbf16, #tpu.memory_space<vmem>>, %arg4: memref<1024x512xbf16, #tpu.memory_space<vmem>>, %arg5: memref<1x512xf32, #tpu.memory_space<vmem>>, %arg6: memref<512x1024xbf16, #tpu.memory_space<vmem>>, %arg7: memref<1x1024xf32, #tpu.memory_space<vmem>>, %arg8: memref<1x1024xf32, #tpu.memory_space<vmem>>, %arg9: memref<1x1024xf32, #tpu.memory_space<vmem>>, %arg10: memref<1x1024xf32, #tpu.memory_space<vmem>>, %arg11: memref<1x1024xf32, #tpu.memory_space<vmem>>, %arg12: memref<1024x512xbf16, #tpu.memory_space<vmem>>, %arg13: memref<1x512xf32, #tpu.memory_space<vmem>>, %arg14: memref<512x128xbf16, #tpu.memory_space<vmem>>, %arg15: memref<1x128xf32, #tpu.memory_space<vmem>>, %arg16: memref<2x128xf32, #tpu.memory_space<vmem>>) attributes {dimension_semantics = [], scalar_prefetch = 0 : i64, scratch_operands = 0 : i64, tpu.core_type = #tpu.core_type<tc>} {
    %c0 = arith.constant 0 : index
    %c0_0 = arith.constant 0 : index
    %0 = vector.load %arg0[%c0, %c0_0] : memref<16x1024xf32, #tpu.memory_space<vmem>>, vector<16x1024xf32>
    %1 = arith.truncf %0 : vector<16x1024xf32> to vector<16x1024xbf16>
    %c0_1 = arith.constant 0 : index
    %c0_2 = arith.constant 0 : index
    %2 = vector.load %arg2[%c0_1, %c0_2] : memref<1024x384xbf16, #tpu.memory_space<vmem>>, vector<1024x384xbf16>
    %cst = arith.constant dense<0.000000e+00> : vector<16x384xf32>
    %3 = tpu.matmul %1, %2, %cst {dimension_numbers = #tpu.dot_dimension_numbers<[1], [0], [0], [1], [0, 0, 1, 1], [], []>} : vector<16x1024xbf16>, vector<1024x384xbf16>, vector<16x384xf32> -> vector<16x384xf32>
    %4 = vector.extract_strided_slice %3 {offsets = [0, 0], sizes = [16, 128], strides = [1, 1]} : vector<16x384xf32> to vector<16x128xf32>
    %5 = vector.shape_cast %4 : vector<16x128xf32> to vector<2x8x128xf32>
    %6 = arith.truncf %5 : vector<2x8x128xf32> to vector<2x8x128xbf16>
    %7 = vector.extract_strided_slice %3 {offsets = [0, 128], sizes = [16, 128], strides = [1, 1]} : vector<16x384xf32> to vector<16x128xf32>
    %8 = vector.shape_cast %7 : vector<16x128xf32> to vector<2x8x128xf32>
    %9 = arith.truncf %8 : vector<2x8x128xf32> to vector<2x8x128xbf16>
    %10 = vector.extract_strided_slice %3 {offsets = [0, 256], sizes = [16, 128], strides = [1, 1]} : vector<16x384xf32> to vector<16x128xf32>
    %11 = vector.shape_cast %10 : vector<16x128xf32> to vector<2x8x128xf32>
    %12 = arith.truncf %11 : vector<2x8x128xf32> to vector<2x8x128xbf16>
    "tpu.trace_start"() <{level = 10 : i32, message = "bqd,bkd->bqk"}> : () -> ()
    %cst_3 = arith.constant dense<0.000000e+00> : vector<2x8x8xf32>
    %13 = tpu.matmul %6, %9, %cst_3 {dimension_numbers = #tpu.dot_dimension_numbers<[2], [2], [1], [1], [0, 0, 0, 1, 1, 1], [0], [0]>} : vector<2x8x128xbf16>, vector<2x8x128xbf16>, vector<2x8x8xf32> -> vector<2x8x8xf32>
    "tpu.trace_stop"() : () -> ()
    %cst_4 = arith.constant 0.0883883461 : f32
    %14 = vector.broadcast %cst_4 : f32 to vector<2x8x8xf32>
    %15 = arith.mulf %13, %14 : vector<2x8x8xf32>
    %c0_5 = arith.constant 0 : index
    %c0_6 = arith.constant 0 : index
    %16 = vector.load %arg1[%c0_5, %c0_6] : memref<2x8xf32, #tpu.memory_space<vmem>>, vector<2x8xf32>
    %17 = vector.shape_cast %16 : vector<2x8xf32> to vector<2x1x8xf32>
    %18 = vector.broadcast %17 : vector<2x1x8xf32> to vector<2x8x8xf32>
    %19 = arith.addf %15, %18 : vector<2x8x8xf32>
    %cst_7 = arith.constant dense<0xFF800000> : vector<2x8xf32>
    %20 = vector.multi_reduction <maximumf>, %19, %cst_7 [2] : vector<2x8x8xf32> to vector<2x8xf32>
    %21 = vector.shape_cast %20 : vector<2x8xf32> to vector<2x8x1xf32>
    %22 = vector.broadcast %21 : vector<2x8x1xf32> to vector<2x8x8xf32>
    %23 = arith.subf %19, %22 : vector<2x8x8xf32>
    %24 = math.exp %23 : vector<2x8x8xf32>
    %cst_8 = arith.constant dense<0.000000e+00> : vector<2x8xf32>
    %25 = vector.multi_reduction <add>, %24, %cst_8 [2] : vector<2x8x8xf32> to vector<2x8xf32>
    %26 = vector.shape_cast %25 : vector<2x8xf32> to vector<2x8x1xf32>
    %27 = tpu.reciprocal %26 {approx = true} : vector<2x8x1xf32> -> vector<2x8x1xf32>
    %28 = vector.broadcast %27 : vector<2x8x1xf32> to vector<2x8x8xf32>
    %29 = arith.mulf %24, %28 : vector<2x8x8xf32>
    %30 = arith.truncf %29 : vector<2x8x8xf32> to vector<2x8x8xbf16>
    "tpu.trace_start"() <{level = 10 : i32, message = "bqk,bkd->bqd"}> : () -> ()
    %cst_9 = arith.constant dense<0.000000e+00> : vector<2x8x128xf32>
    %31 = tpu.matmul %30, %12, %cst_9 {dimension_numbers = #tpu.dot_dimension_numbers<[2], [1], [1], [2], [0, 0, 0, 1, 1, 2], [0], [0]>} : vector<2x8x8xbf16>, vector<2x8x128xbf16>, vector<2x8x128xf32> -> vector<2x8x128xf32>
    "tpu.trace_stop"() : () -> ()
    %32 = vector.shape_cast %31 : vector<2x8x128xf32> to vector<16x128xf32>
    %33 = arith.truncf %32 : vector<16x128xf32> to vector<16x128xbf16>
    %c0_10 = arith.constant 0 : index
    %c0_11 = arith.constant 0 : index
    %34 = vector.load %arg3[%c0_10, %c0_11] : memref<128x1024xbf16, #tpu.memory_space<vmem>>, vector<128x1024xbf16>
    %cst_12 = arith.constant dense<0.000000e+00> : vector<16x1024xf32>
    %35 = tpu.matmul %33, %34, %cst_12 {dimension_numbers = #tpu.dot_dimension_numbers<[1], [0], [0], [1], [0, 0, 1, 1], [], []>} : vector<16x128xbf16>, vector<128x1024xbf16>, vector<16x1024xf32> -> vector<16x1024xf32>
    %36 = arith.addf %0, %35 : vector<16x1024xf32>
    %cst_13 = arith.constant dense<0.000000e+00> : vector<16xf32>
    %37 = vector.multi_reduction <add>, %36, %cst_13 [1] : vector<16x1024xf32> to vector<16xf32>
    %38 = vector.shape_cast %37 : vector<16xf32> to vector<16x1xf32>
    %cst_14 = arith.constant 1.024000e+03 : f32
    %39 = vector.broadcast %cst_14 : f32 to vector<16x1xf32>
    %40 = arith.divf %38, %39 : vector<16x1xf32>
    %41 = vector.broadcast %40 : vector<16x1xf32> to vector<16x1024xf32>
    %42 = arith.subf %36, %41 : vector<16x1024xf32>
    %43 = vector.broadcast %40 : vector<16x1xf32> to vector<16x1024xf32>
    %44 = arith.subf %36, %43 : vector<16x1024xf32>
    %45 = arith.mulf %42, %44 : vector<16x1024xf32>
    %cst_15 = arith.constant dense<0.000000e+00> : vector<16xf32>
    %46 = vector.multi_reduction <add>, %45, %cst_15 [1] : vector<16x1024xf32> to vector<16xf32>
    %47 = vector.shape_cast %46 : vector<16xf32> to vector<16x1xf32>
    %cst_16 = arith.constant 1.024000e+03 : f32
    %48 = vector.broadcast %cst_16 : f32 to vector<16x1xf32>
    %49 = arith.divf %47, %48 : vector<16x1xf32>
    %50 = vector.broadcast %40 : vector<16x1xf32> to vector<16x1024xf32>
    %51 = arith.subf %36, %50 : vector<16x1024xf32>
    %cst_17 = arith.constant 9.99999974E-6 : f32
    %52 = vector.broadcast %cst_17 : f32 to vector<16x1xf32>
    %53 = arith.addf %49, %52 : vector<16x1xf32>
    %54 = math.rsqrt %53 : vector<16x1xf32>
    %55 = vector.broadcast %54 : vector<16x1xf32> to vector<16x1024xf32>
    %56 = arith.mulf %51, %55 : vector<16x1024xf32>
    %c0_18 = arith.constant 0 : index
    %c0_19 = arith.constant 0 : index
    %57 = vector.load %arg8[%c0_18, %c0_19] : memref<1x1024xf32, #tpu.memory_space<vmem>>, vector<1x1024xf32>
    %58 = vector.broadcast %57 : vector<1x1024xf32> to vector<16x1024xf32>
    %59 = arith.mulf %56, %58 : vector<16x1024xf32>
    %c0_20 = arith.constant 0 : index
    %c0_21 = arith.constant 0 : index
    %60 = vector.load %arg9[%c0_20, %c0_21] : memref<1x1024xf32, #tpu.memory_space<vmem>>, vector<1x1024xf32>
    %61 = vector.broadcast %60 : vector<1x1024xf32> to vector<16x1024xf32>
    %62 = arith.addf %59, %61 : vector<16x1024xf32>
    %63 = arith.truncf %62 : vector<16x1024xf32> to vector<16x1024xbf16>
    %c0_22 = arith.constant 0 : index
    %c0_23 = arith.constant 0 : index
    %64 = vector.load %arg4[%c0_22, %c0_23] : memref<1024x512xbf16, #tpu.memory_space<vmem>>, vector<1024x512xbf16>
    %cst_24 = arith.constant dense<0.000000e+00> : vector<16x512xf32>
    %65 = tpu.matmul %63, %64, %cst_24 {dimension_numbers = #tpu.dot_dimension_numbers<[1], [0], [0], [1], [0, 0, 1, 1], [], []>} : vector<16x1024xbf16>, vector<1024x512xbf16>, vector<16x512xf32> -> vector<16x512xf32>
    %c0_25 = arith.constant 0 : index
    %c0_26 = arith.constant 0 : index
    %66 = vector.load %arg5[%c0_25, %c0_26] : memref<1x512xf32, #tpu.memory_space<vmem>>, vector<1x512xf32>
    %67 = vector.broadcast %66 : vector<1x512xf32> to vector<16x512xf32>
    %68 = arith.addf %65, %67 : vector<16x512xf32>
    %cst_27 = arith.constant 5.000000e-01 : f32
    %69 = vector.broadcast %cst_27 : f32 to vector<16x512xf32>
    %70 = arith.mulf %69, %68 : vector<16x512xf32>
    %cst_28 = arith.constant 4.471500e-02 : f32
    %71 = vector.broadcast %cst_28 : f32 to vector<16x512xf32>
    %72 = arith.mulf %71, %68 : vector<16x512xf32>
    %73 = arith.mulf %72, %68 : vector<16x512xf32>
    %74 = arith.mulf %73, %68 : vector<16x512xf32>
    %75 = arith.addf %68, %74 : vector<16x512xf32>
    %cst_29 = arith.constant 0.797884583 : f32
    %76 = vector.broadcast %cst_29 : f32 to vector<16x512xf32>
    %77 = arith.mulf %76, %75 : vector<16x512xf32>
    %78 = math.tanh %77 : vector<16x512xf32>
    %cst_30 = arith.constant 1.000000e+00 : f32
    %79 = vector.broadcast %cst_30 : f32 to vector<16x512xf32>
    %80 = arith.addf %79, %78 : vector<16x512xf32>
    %81 = arith.mulf %70, %80 : vector<16x512xf32>
    %82 = arith.truncf %81 : vector<16x512xf32> to vector<16x512xbf16>
    %c0_31 = arith.constant 0 : index
    %c0_32 = arith.constant 0 : index
    %83 = vector.load %arg6[%c0_31, %c0_32] : memref<512x1024xbf16, #tpu.memory_space<vmem>>, vector<512x1024xbf16>
    %cst_33 = arith.constant dense<0.000000e+00> : vector<16x1024xf32>
    %84 = tpu.matmul %82, %83, %cst_33 {dimension_numbers = #tpu.dot_dimension_numbers<[1], [0], [0], [1], [0, 0, 1, 1], [], []>} : vector<16x512xbf16>, vector<512x1024xbf16>, vector<16x1024xf32> -> vector<16x1024xf32>
    %c0_34 = arith.constant 0 : index
    %c0_35 = arith.constant 0 : index
    %85 = vector.load %arg7[%c0_34, %c0_35] : memref<1x1024xf32, #tpu.memory_space<vmem>>, vector<1x1024xf32>
    %86 = vector.broadcast %85 : vector<1x1024xf32> to vector<16x1024xf32>
    %87 = arith.addf %84, %86 : vector<16x1024xf32>
    %88 = arith.addf %62, %87 : vector<16x1024xf32>
    %cst_36 = arith.constant dense<0.000000e+00> : vector<16xf32>
    %89 = vector.multi_reduction <add>, %88, %cst_36 [1] : vector<16x1024xf32> to vector<16xf32>
    %90 = vector.shape_cast %89 : vector<16xf32> to vector<16x1xf32>
    %cst_37 = arith.constant 1.024000e+03 : f32
    %91 = vector.broadcast %cst_37 : f32 to vector<16x1xf32>
    %92 = arith.divf %90, %91 : vector<16x1xf32>
    %93 = vector.broadcast %92 : vector<16x1xf32> to vector<16x1024xf32>
    %94 = arith.subf %88, %93 : vector<16x1024xf32>
    %95 = vector.broadcast %92 : vector<16x1xf32> to vector<16x1024xf32>
    %96 = arith.subf %88, %95 : vector<16x1024xf32>
    %97 = arith.mulf %94, %96 : vector<16x1024xf32>
    %cst_38 = arith.constant dense<0.000000e+00> : vector<16xf32>
    %98 = vector.multi_reduction <add>, %97, %cst_38 [1] : vector<16x1024xf32> to vector<16xf32>
    %99 = vector.shape_cast %98 : vector<16xf32> to vector<16x1xf32>
    %cst_39 = arith.constant 1.024000e+03 : f32
    %100 = vector.broadcast %cst_39 : f32 to vector<16x1xf32>
    %101 = arith.divf %99, %100 : vector<16x1xf32>
    %102 = vector.broadcast %92 : vector<16x1xf32> to vector<16x1024xf32>
    %103 = arith.subf %88, %102 : vector<16x1024xf32>
    %cst_40 = arith.constant 9.99999974E-6 : f32
    %104 = vector.broadcast %cst_40 : f32 to vector<16x1xf32>
    %105 = arith.addf %101, %104 : vector<16x1xf32>
    %106 = math.rsqrt %105 : vector<16x1xf32>
    %107 = vector.broadcast %106 : vector<16x1xf32> to vector<16x1024xf32>
    %108 = arith.mulf %103, %107 : vector<16x1024xf32>
    %c0_41 = arith.constant 0 : index
    %c0_42 = arith.constant 0 : index
    %109 = vector.load %arg10[%c0_41, %c0_42] : memref<1x1024xf32, #tpu.memory_space<vmem>>, vector<1x1024xf32>
    %110 = vector.broadcast %109 : vector<1x1024xf32> to vector<16x1024xf32>
    %111 = arith.mulf %108, %110 : vector<16x1024xf32>
    %c0_43 = arith.constant 0 : index
    %c0_44 = arith.constant 0 : index
    %112 = vector.load %arg11[%c0_43, %c0_44] : memref<1x1024xf32, #tpu.memory_space<vmem>>, vector<1x1024xf32>
    %113 = vector.broadcast %112 : vector<1x1024xf32> to vector<16x1024xf32>
    %114 = arith.addf %111, %113 : vector<16x1024xf32>
    %115 = vector.shape_cast %114 : vector<16x1024xf32> to vector<2x8x1024xf32>
    %116 = vector.extract_strided_slice %115 {offsets = [0, 0, 0], sizes = [2, 1, 1024], strides = [1, 1, 1]} : vector<2x8x1024xf32> to vector<2x1x1024xf32>
    %117 = vector.shape_cast %116 : vector<2x1x1024xf32> to vector<2x1024xf32>
    %118 = arith.truncf %117 : vector<2x1024xf32> to vector<2x1024xbf16>
    %c0_45 = arith.constant 0 : index
    %c0_46 = arith.constant 0 : index
    %119 = vector.load %arg12[%c0_45, %c0_46] : memref<1024x512xbf16, #tpu.memory_space<vmem>>, vector<1024x512xbf16>
    %cst_47 = arith.constant dense<0.000000e+00> : vector<2x512xf32>
    %120 = tpu.matmul %118, %119, %cst_47 {dimension_numbers = #tpu.dot_dimension_numbers<[1], [0], [0], [1], [0, 0, 1, 1], [], []>} : vector<2x1024xbf16>, vector<1024x512xbf16>, vector<2x512xf32> -> vector<2x512xf32>
    %c0_48 = arith.constant 0 : index
    %c0_49 = arith.constant 0 : index
    %121 = vector.load %arg13[%c0_48, %c0_49] : memref<1x512xf32, #tpu.memory_space<vmem>>, vector<1x512xf32>
    %122 = vector.broadcast %121 : vector<1x512xf32> to vector<2x512xf32>
    %123 = arith.addf %120, %122 : vector<2x512xf32>
    %cst_50 = arith.constant 0.000000e+00 : f32
    %124 = vector.broadcast %cst_50 : f32 to vector<2x512xf32>
    %125 = arith.maximumf %123, %124 : vector<2x512xf32>
    %126 = arith.truncf %125 : vector<2x512xf32> to vector<2x512xbf16>
    %c0_51 = arith.constant 0 : index
    %c0_52 = arith.constant 0 : index
    %127 = vector.load %arg14[%c0_51, %c0_52] : memref<512x128xbf16, #tpu.memory_space<vmem>>, vector<512x128xbf16>
    %cst_53 = arith.constant dense<0.000000e+00> : vector<2x128xf32>
    %128 = tpu.matmul %126, %127, %cst_53 {dimension_numbers = #tpu.dot_dimension_numbers<[1], [0], [0], [1], [0, 0, 1, 1], [], []>} : vector<2x512xbf16>, vector<512x128xbf16>, vector<2x128xf32> -> vector<2x128xf32>
    %c0_54 = arith.constant 0 : index
    %c0_55 = arith.constant 0 : index
    %129 = vector.load %arg15[%c0_54, %c0_55] : memref<1x128xf32, #tpu.memory_space<vmem>>, vector<1x128xf32>
    %130 = vector.broadcast %129 : vector<1x128xf32> to vector<2x128xf32>
    %131 = arith.addf %128, %130 : vector<2x128xf32>
    %cst_56 = arith.constant dense<0xFF800000> : vector<2xf32>
    %132 = vector.multi_reduction <maximumf>, %131, %cst_56 [1] : vector<2x128xf32> to vector<2xf32>
    %133 = vector.shape_cast %132 : vector<2xf32> to vector<2x1xf32>
    %134 = vector.broadcast %133 : vector<2x1xf32> to vector<2x128xf32>
    %135 = arith.subf %131, %134 : vector<2x128xf32>
    %136 = math.exp %135 : vector<2x128xf32>
    %cst_57 = arith.constant dense<0.000000e+00> : vector<2xf32>
    %137 = vector.multi_reduction <add>, %136, %cst_57 [1] : vector<2x128xf32> to vector<2xf32>
    %138 = vector.shape_cast %137 : vector<2xf32> to vector<2x1xf32>
    %139 = math.log %138 : vector<2x1xf32>
    %140 = vector.broadcast %139 : vector<2x1xf32> to vector<2x128xf32>
    %141 = arith.subf %135, %140 : vector<2x128xf32>
    %c0_58 = arith.constant 0 : index
    %c0_59 = arith.constant 0 : index
    %142 = vector.load %arg16[%c0_58, %c0_59] : memref<2x128xf32, #tpu.memory_space<vmem>>, vector<2x128xf32>
    tpu.vector_store %arg16[%c0_58, %c0_59], %141 {strides = array<i32>} : memref<2x128xf32, #tpu.memory_space<vmem>>, vector<2x128xf32>,
    return
  }
}

</mosaic_0001>

<llo_original>
// kernel: tpu_custom_call.1
$region0: #{tpu_custom_call.1}
  #allocation0 [shape = 'u32[]', space=smem, size = 0x4, offset = 0x4, fixed_abs, tag = 'smem constant byte address 0x4 - core index']
  #allocation1 [shape = 'u32[72,128]{1,0:T(1,128)}', space=vmem, size = 0x9000, scoped, tag = 'internal scratch']
  %s0 = inlined_call_operand.hbm [shape: f32[16,1024], index: 0, kind: input, shape index: {}]
  %s1 = inlined_call_operand.hbm [shape: f32[2,8], index: 1, kind: input, shape index: {}]
  %s2 = inlined_call_operand.hbm [shape: bf16[1024,384], index: 2, kind: input, shape index: {}]
  %s3 = inlined_call_operand.hbm [shape: bf16[128,1024], index: 3, kind: input, shape index: {}]
  %s4 = inlined_call_operand.hbm [shape: bf16[1024,512], index: 4, kind: input, shape index: {}]
  %s5 = inlined_call_operand.hbm [shape: f32[1,512], index: 5, kind: input, shape index: {}]
  %s6 = inlined_call_operand.hbm [shape: bf16[512,1024], index: 6, kind: input, shape index: {}]
  %s7 = inlined_call_operand.hbm [shape: f32[1,1024], index: 7, kind: input, shape index: {}]
  %s8 = inlined_call_operand.hbm [shape: f32[1,1024], index: 8, kind: input, shape index: {}]
  %s9 = inlined_call_operand.vmem [shape: f32[1,1024], index: 9, kind: input, shape index: {}]
  %s10 = inlined_call_operand.hbm [shape: f32[1,1024], index: 10, kind: input, shape index: {}]
  %s11 = inlined_call_operand.hbm [shape: f32[1,1024], index: 11, kind: input, shape index: {}]
  %s12 = inlined_call_operand.hbm [shape: bf16[1024,512], index: 12, kind: input, shape index: {}]
  %s13 = inlined_call_operand.vmem [shape: f32[1,512], index: 13, kind: input, shape index: {}]
  %s14 = inlined_call_operand.hbm [shape: bf16[512,128], index: 14, kind: input, shape index: {}]
  %s15 = inlined_call_operand.vmem [shape: f32[1,128], index: 15, kind: input, shape index: {}]
  %s16 = inlined_call_operand.hbm [shape: f32[2,128], index: 16, kind: output, shape index: {}]
  %s17 = sld [smem:[#allocation0]]
  $region126: #{tpu_custom_call.1} parent=0
    _
  %s19 = ssub.s32 1, %s17
  %s20 = scalar_select 0, %s19, %s17
  $region1: #{tpu_custom_call.1} parent=0
    #allocation2 [shape = 'u8[65536]{0}', space=vmem, size = 0x10000, scoped, tag = 'input window, operand 0, single buffered']
    #allocation3 [shape = 's32[1]{0}', space=sflag, size = 0x4, scoped, tag = 'scoped memory for tpu_custom_call.1']
    #allocation4 [shape = 's32[1]{0}', space=sflag, size = 0x4, scoped, tag = 'scoped memory for tpu_custom_call.1']
    #allocation5 [shape = 'u8[1024]{0}', space=vmem, size = 0x400, scoped, tag = 'input window, operand 1, single buffered']
    #allocation6 [shape = 's32[1]{0}', space=sflag, size = 0x4, scoped, tag = 'scoped memory for tpu_custom_call.1']
    #allocation7 [shape = 'u8[786432]{0}', space=vmem, size = 0xc0000, scoped, tag = 'input window, operand 2, single buffered']
    #allocation8 [shape = 'u8[262144]{0}', space=vmem, size = 0x40000, scoped, tag = 'input window, operand 3, single buffered']
    #allocation9 [shape = 's32[1]{0}', space=sflag, size = 0x4, scoped, tag = 'scoped memory for tpu_custom_call.1']
    #allocation10 [shape = 'u8[1048576]{0}', space=vmem, size = 0x100000, scoped, tag = 'input window, operand 4, single buffered']
    #allocation11 [shape = 'u8[2048]{0}', space=vmem, size = 0x800, scoped, tag = 'input window, operand 5, single buffered']
    #allocation12 [shape = 's32[1]{0}', space=sflag, size = 0x4, scoped, tag = 'scoped memory for tpu_custom_call.1']
    #allocation13 [shape = 'u8[1048576]{0}', space=vmem, size = 0x100000, scoped, tag = 'input window, operand 6, single buffered']
    #allocation14 [shape = 'u8[4096]{0}', space=vmem, size = 0x1000, scoped, tag = 'input window, operand 7, single buffered']
    #allocation15 [shape = 's32[1]{0}', space=sflag, size = 0x4, scoped, tag = 'scoped memory for tpu_custom_call.1']
    #allocation16 [shape = 'u8[4096]{0}', space=vmem, size = 0x1000, scoped, tag = 'input window, operand 8, single buffered']
    #allocation17 [shape = 'u8[4096]{0}', space=vmem, size = 0x1000, scoped, tag = 'input window, operand 10, single buffered']
    #allocation18 [shape = 's32[1]{0}', space=sflag, size = 0x4, scoped, tag = 'scoped memory for tpu_custom_call.1']
    #allocation19 [shape = 'u8[4096]{0}', space=vmem, size = 0x1000, scoped, tag = 'input window, operand 11, single buffered']
    #allocation20 [shape = 'u8[1048576]{0}', space=vmem, size = 0x100000, scoped, tag = 'input window, operand 12, single buffered']
    #allocation21 [shape = 's32[1]{0}', space=sflag, size = 0x4, scoped, tag = 'scoped memory for tpu_custom_call.1']
    #allocation22 [shape = 'u8[131072]{0}', space=vmem, size = 0x20000, scoped, tag = 'input window, operand 14, single buffered']
    #allocation23 [shape = 'u8[1024]{0}', space=vmem, size = 0x400, scoped, tag = 'output window, operand 0, single buffered']
    %21 = vsyncpa [#allocation3], 0
    %22 = vsyncpa [#allocation6], 0
    %23 = vsyncpa [#allocation9], 0
    %24 = vsyncpa [#allocation12], 0
    %25 = vsyncpa [#allocation15], 0
    %26 = vsyncpa [#allocation18], 0
    %27 = vsyncpa [#allocation21], 0
    %28 = vsyncpa [#allocation4], 0
    // Predicated region
    $region2: #{tpu_custom_call.1} parent=1 // pred_check
      _
    $region3: #{tpu_custom_call.1} parent=1 // pred_check_branch
      %30 = sbr.rel (0) target = $region5
    $region4: #{tpu_custom_call.1} parent=1 // pred_region
      %32 = vsyncadd [#allocation3], 0
      %s33 = sshll.u32 %s0, 4
      %s34 = int_to_ptr.hbm [resolvable:$true] %s33
      %s35 = sshll.u32 [#allocation2], 4
      %s36 = int_to_ptr.vmem [resolvable:$true] %s35
      %41 = dma.hbm_to_vmem [thread:$0]  %s34, 2048, %s36, [#allocation3], 1024, 1024, 64
    $region5: #{tpu_custom_call.1} parent=1 // pred_fallthru
      _
    // Predicated region
    $region6: #{tpu_custom_call.1} parent=1 // pred_check
      _
    $region7: #{tpu_custom_call.1} parent=1 // pred_check_branch
      %43 = sbr.rel (0) target = $region9
    $region8: #{tpu_custom_call.1} parent=1 // pred_region
      %45 = vsyncadd [#allocation6], 0
      %s47 = sshll.u32 %s1, 4
      %s48 = int_to_ptr.hbm [resolvable:$true] %s47
      %s49 = sshll.u32 [#allocation5], 4
      %s50 = int_to_ptr.vmem [resolvable:$true] %s49
      %52 = dma.hbm_to_vmem [thread:$0]  %s48, 32, %s50, [#allocation6]
    $region9: #{tpu_custom_call.1} parent=1 // pred_fallthru
      _
    // Predicated region
    $region10: #{tpu_custom_call.1} parent=1 // pred_check
      _
    $region11: #{tpu_custom_call.1} parent=1 // pred_check_branch
      %54 = sbr.rel (0) target = $region13
    $region12: #{tpu_custom_call.1} parent=1 // pred_region
      %56 = vsyncadd [#allocation6], 0
      %s57 = sshll.u32 %s2, 4
      %s58 = int_to_ptr.hbm [resolvable:$true] %s57
      %s59 = sshll.u32 [#allocation7], 4
      %s60 = int_to_ptr.vmem [resolvable:$true] %s59
      %65 = dma.hbm_to_vmem [thread:$0]  %s58, 24576, %s60, [#allocation6], 192, 192, 12
    $region13: #{tpu_custom_call.1} parent=1 // pred_fallthru
      _
    // Predicated region
    $region14: #{tpu_custom_call.1} parent=1 // pred_check
      _
    $region15: #{tpu_custom_call.1} parent=1 // pred_check_branch
      %67 = sbr.rel (0) target = $region17
    $region16: #{tpu_custom_call.1} parent=1 // pred_region
      %69 = vsyncadd [#allocation9], 0
      %s70 = sshll.u32 %s3, 4
      %s71 = int_to_ptr.hbm [resolvable:$true] %s70
      %s72 = sshll.u32 [#allocation8], 4
      %s73 = int_to_ptr.vmem [resolvable:$true] %s72
      %78 = dma.hbm_to_vmem [thread:$0]  %s71, 8192, %s73, [#allocation9], 512, 512, 32
    $region17: #{tpu_custom_call.1} parent=1 // pred_fallthru
      _
    // Predicated region
    $region18: #{tpu_custom_call.1} parent=1 // pred_check
      _
    $region19: #{tpu_custom_call.1} parent=1 // pred_check_branch
      %80 = sbr.rel (0) target = $region21
    $region20: #{tpu_custom_call.1} parent=1 // pred_region
      %82 = vsyncadd [#allocation9], 0
      %s83 = sshll.u32 %s4, 4
      %s84 = int_to_ptr.hbm [resolvable:$true] %s83
      %s85 = sshll.u32 [#allocation10], 4
      %s86 = int_to_ptr.vmem [resolvable:$true] %s85
      %91 = dma.hbm_to_vmem [thread:$0]  %s84, 32768, %s86, [#allocation9], 256, 256, 16
    $region21: #{tpu_custom_call.1} parent=1 // pred_fallthru
      _
    // Predicated region
    $region22: #{tpu_custom_call.1} parent=1 // pred_check
      _
    $region23: #{tpu_custom_call.1} parent=1 // pred_check_branch
      %93 = sbr.rel (0) target = $region25
    $region24: #{tpu_custom_call.1} parent=1 // pred_region
      %95 = vsyncadd [#allocation12], 0
      %s97 = sshll.u32 %s5, 4
      %s98 = int_to_ptr.hbm [resolvable:$true] %s97
      %s99 = sshll.u32 [#allocation11], 4
      %s100 = int_to_ptr.vmem [resolvable:$true] %s99
      %102 = dma.hbm_to_vmem [thread:$0]  %s98, 64, %s100, [#allocation12]
    $region25: #{tpu_custom_call.1} parent=1 // pred_fallthru
      _
    // Predicated region
    $region26: #{tpu_custom_call.1} parent=1 // pred_check
      _
    $region27: #{tpu_custom_call.1} parent=1 // pred_check_branch
      %104 = sbr.rel (0) target = $region29
    $region28: #{tpu_custom_call.1} parent=1 // pred_region
      %106 = vsyncadd [#allocation12], 0
      %s107 = sshll.u32 %s6, 4
      %s108 = int_to_ptr.hbm [resolvable:$true] %s107
      %s109 = sshll.u32 [#allocation13], 4
      %s110 = int_to_ptr.vmem [resolvable:$true] %s109
      %115 = dma.hbm_to_vmem [thread:$0]  %s108, 32768, %s110, [#allocation12], 512, 512, 32
    $region29: #{tpu_custom_call.1} parent=1 // pred_fallthru
      _
    // Predicated region
    $region30: #{tpu_custom_call.1} parent=1 // pred_check
      _
    $region31: #{tpu_custom_call.1} parent=1 // pred_check_branch
      %117 = sbr.rel (0) target = $region33
    $region32: #{tpu_custom_call.1} parent=1 // pred_region
      %119 = vsyncadd [#allocation15], 0
      %s121 = sshll.u32 %s7, 4
      %s122 = int_to_ptr.hbm [resolvable:$true] %s121
      %s123 = sshll.u32 [#allocation14], 4
      %s124 = int_to_ptr.vmem [resolvable:$true] %s123
      %126 = dma.hbm_to_vmem [thread:$0]  %s122, 128, %s124, [#allocation15]
    $region33: #{tpu_custom_call.1} parent=1 // pred_fallthru
      _
    // Predicated region
    $region34: #{tpu_custom_call.1} parent=1 // pred_check
      _
    $region35: #{tpu_custom_call.1} parent=1 // pred_check_branch
      %128 = sbr.rel (0) target = $region37
    $region36: #{tpu_custom_call.1} parent=1 // pred_region
      %130 = vsyncadd [#allocation15], 0
      %s132 = sshll.u32 %s8, 4
      %s133 = int_to_ptr.hbm [resolvable:$true] %s132
      %s134 = sshll.u32 [#allocation16], 4
      %s135 = int_to_ptr.vmem [resolvable:$true] %s134
      %137 = dma.hbm_to_vmem [thread:$0]  %s133, 128, %s135, [#allocation15]
    $region37: #{tpu_custom_call.1} parent=1 // pred_fallthru
      _
    // Predicated region
    $region38: #{tpu_custom_call.1} parent=1 // pred_check
      _
    $region39: #{tpu_custom_call.1} parent=1 // pred_check_branch
      %139 = sbr.rel (0) target = $region41
    $region40: #{tpu_custom_call.1} parent=1 // pred_region
      _
    $region41: #{tpu_custom_call.1} parent=1 // pred_fallthru
      _
    // Predicated region
    $region42: #{tpu_custom_call.1} parent=1 // pred_check
      _
    $region43: #{tpu_custom_call.1} parent=1 // pred_check_branch
      %141 = sbr.rel (0) target = $region45
    $region44: #{tpu_custom_call.1} parent=1 // pred_region
      %143 = vsyncadd [#allocation18], 0
      %s145 = sshll.u32 %s10, 4
      %s146 = int_to_ptr.hbm [resolvable:$true] %s145
      %s147 = sshll.u32 [#allocation17], 4
      %s148 = int_to_ptr.vmem [resolvable:$true] %s147
      %150 = dma.hbm_to_vmem [thread:$0]  %s146, 128, %s148, [#allocation18]
    $region45: #{tpu_custom_call.1} parent=1 // pred_fallthru
      _
    // Predicated region
    $region46: #{tpu_custom_call.1} parent=1 // pred_check
      _
    $region47: #{tpu_custom_call.1} parent=1 // pred_check_branch
      %152 = sbr.rel (0) target = $region49
    $region48: #{tpu_custom_call.1} parent=1 // pred_region
      %154 = vsyncadd [#allocation18], 0
      %s156 = sshll.u32 %s11, 4
      %s157 = int_to_ptr.hbm [resolvable:$true] %s156
      %s158 = sshll.u32 [#allocation19], 4
      %s159 = int_to_ptr.vmem [resolvable:$true] %s158
      %161 = dma.hbm_to_vmem [thread:$0]  %s157, 128, %s159, [#allocation18]
    $region49: #{tpu_custom_call.1} parent=1 // pred_fallthru
      _
    // Predicated region
    $region50: #{tpu_custom_call.1} parent=1 // pred_check
      _
    $region51: #{tpu_custom_call.1} parent=1 // pred_check_branch
      %163 = sbr.rel (0) target = $region53
    $region52: #{tpu_custom_call.1} parent=1 // pred_region
      %165 = vsyncadd [#allocation21], 0
      %s166 = sshll.u32 %s12, 4
      %s167 = int_to_ptr.hbm [resolvable:$true] %s166
      %s168 = sshll.u32 [#allocation20], 4
      %s169 = int_to_ptr.vmem [resolvable:$true] %s168
      %174 = dma.hbm_to_vmem [thread:$0]  %s167, 32768, %s169, [#allocation21], 256, 256, 16
    $region53: #{tpu_custom_call.1} parent=1 // pred_fallthru
      _
    // Predicated region
    $region54: #{tpu_custom_call.1} parent=1 // pred_check
      _
    $region55: #{tpu_custom_call.1} parent=1 // pred_check_branch
      %176 = sbr.rel (0) target = $region57
    $region56: #{tpu_custom_call.1} parent=1 // pred_region
      _
    $region57: #{tpu_custom_call.1} parent=1 // pred_fallthru
      _
    // Predicated region
    $region58: #{tpu_custom_call.1} parent=1 // pred_check
      _
    $region59: #{tpu_custom_call.1} parent=1 // pred_check_branch
      %178 = sbr.rel (0) target = $region61
    $region60: #{tpu_custom_call.1} parent=1 // pred_region
      %180 = vsyncadd [#allocation21], 0
      %s181 = sshll.u32 %s14, 4
      %s182 = int_to_ptr.hbm [resolvable:$true] %s181
      %s183 = sshll.u32 [#allocation22], 4
      %s184 = int_to_ptr.vmem [resolvable:$true] %s183
      %189 = dma.hbm_to_vmem [thread:$0]  %s182, 4096, %s184, [#allocation21], 64, 64, 4
    $region61: #{tpu_custom_call.1} parent=1 // pred_fallthru
      _
    // Predicated region
    $region62: #{tpu_custom_call.1} parent=1 // pred_check
      _
    $region63: #{tpu_custom_call.1} parent=1 // pred_check_branch
      %191 = sbr.rel (0) target = $region65
    $region64: #{tpu_custom_call.1} parent=1 // pred_region
      _
    $region65: #{tpu_custom_call.1} parent=1 // pred_fallthru
      _
    // Predicated region
    $region66: #{tpu_custom_call.1} parent=1 // pred_check
      _
    $region67: #{tpu_custom_call.1} parent=1 // pred_check_branch
      %193 = sbr.rel (0) target = $region69
    $region68: #{tpu_custom_call.1} parent=1 // pred_region
      %195 = dma.done [#allocation3], 2048
    $region69: #{tpu_custom_call.1} parent=1 // pred_fallthru
      _
    // Predicated region
    $region70: #{tpu_custom_call.1} parent=1 // pred_check
      _
    $region71: #{tpu_custom_call.1} parent=1 // pred_check_branch
      %197 = sbr.rel (0) target = $region73
    $region72: #{tpu_custom_call.1} parent=1 // pred_region
      %199 = dma.done [#allocation6], 32
    $region73: #{tpu_custom_call.1} parent=1 // pred_fallthru
      _
    // Predicated region
    $region74: #{tpu_custom_call.1} parent=1 // pred_check
      _
    $region75: #{tpu_custom_call.1} parent=1 // pred_check_branch
      %201 = sbr.rel (0) target = $region77
    $region76: #{tpu_custom_call.1} parent=1 // pred_region
      %203 = dma.done [#allocation6], 24576
    $region77: #{tpu_custom_call.1} parent=1 // pred_fallthru
      _
    // Predicated region
    $region78: #{tpu_custom_call.1} parent=1 // pred_check
      _
    $region79: #{tpu_custom_call.1} parent=1 // pred_check_branch
      %205 = sbr.rel (0) target = $region81
    $region80: #{tpu_custom_call.1} parent=1 // pred_region
      %207 = dma.done [#allocation9], 8192
    $region81: #{tpu_custom_call.1} parent=1 // pred_fallthru
      _
    // Predicated region
    $region82: #{tpu_custom_call.1} parent=1 // pred_check
      _
    $region83: #{tpu_custom_call.1} parent=1 // pred_check_branch
      %209 = sbr.rel (0) target = $region85
    $region84: #{tpu_custom_call.1} parent=1 // pred_region
      %211 = dma.done [#allocation9], 32768
    $region85: #{tpu_custom_call.1} parent=1 // pred_fallthru
      _
    // Predicated region
    $region86: #{tpu_custom_call.1} parent=1 // pred_check
      _
    $region87: #{tpu_custom_call.1} parent=1 // pred_check_branch
      %213 = sbr.rel (0) target = $region89
    $region88: #{tpu_custom_call.1} parent=1 // pred_region
      %215 = dma.done [#allocation12], 64
    $region89: #{tpu_custom_call.1} parent=1 // pred_fallthru
      _
    // Predicated region
    $region90: #{tpu_custom_call.1} parent=1 // pred_check
      _
    $region91: #{tpu_custom_call.1} parent=1 // pred_check_branch
      %217 = sbr.rel (0) target = $region93
    $region92: #{tpu_custom_call.1} parent=1 // pred_region
      %219 = dma.done [#allocation12], 32768
    $region93: #{tpu_custom_call.1} parent=1 // pred_fallthru
      _
    // Predicated region
    $region94: #{tpu_custom_call.1} parent=1 // pred_check
      _
    $region95: #{tpu_custom_call.1} parent=1 // pred_check_branch
      %221 = sbr.rel (0) target = $region97
    $region96: #{tpu_custom_call.1} parent=1 // pred_region
      %223 = dma.done [#allocation15], 128
    $region97: #{tpu_custom_call.1} parent=1 // pred_fallthru
      _
    // Predicated region
    $region98: #{tpu_custom_call.1} parent=1 // pred_check
      _
    $region99: #{tpu_custom_call.1} parent=1 // pred_check_branch
      %225 = sbr.rel (0) target = $region101
    $region100: #{tpu_custom_call.1} parent=1 // pred_region
      %227 = dma.done [#allocation15], 128
    $region101: #{tpu_custom_call.1} parent=1 // pred_fallthru
      _
    // Predicated region
    $region102: #{tpu_custom_call.1} parent=1 // pred_check
      _
    $region103: #{tpu_custom_call.1} parent=1 // pred_check_branch
      %229 = sbr.rel (0) target = $region105
    $region104: #{tpu_custom_call.1} parent=1 // pred_region
      %231 = dma.done [#allocation18], 128
    $region105: #{tpu_custom_call.1} parent=1 // pred_fallthru
      _
    // Predicated region
    $region106: #{tpu_custom_call.1} parent=1 // pred_check
      _
    $region107: #{tpu_custom_call.1} parent=1 // pred_check_branch
      %233 = sbr.rel (0) target = $region109
    $region108: #{tpu_custom_call.1} parent=1 // pred_region
      %235 = dma.done [#allocation18], 128
    $region109: #{tpu_custom_call.1} parent=1 // pred_fallthru
      _
    // Predicated region
    $region110: #{tpu_custom_call.1} parent=1 // pred_check
      _
    $region111: #{tpu_custom_call.1} parent=1 // pred_check_branch
      %237 = sbr.rel (0) target = $region113
    $region112: #{tpu_custom_call.1} parent=1 // pred_region
      %239 = dma.done [#allocation21], 32768
    $region113: #{tpu_custom_call.1} parent=1 // pred_fallthru
      _
    // Predicated region
    $region114: #{tpu_custom_call.1} parent=1 // pred_check
      _
    $region115: #{tpu_custom_call.1} parent=1 // pred_check_branch
      %241 = sbr.rel (0) target = $region117
    $region116: #{tpu_custom_call.1} parent=1 // pred_region
      %243 = dma.done [#allocation21], 4096
    $region117: #{tpu_custom_call.1} parent=1 // pred_fallthru
      _
    %v245 = vld [vmem:[#allocation2] sm:$0xff]
    %v246 = vld [vmem:[#allocation2 + $0x8] sm:$0xff]
    %v247 = vld [vmem:[#allocation2 + $0x10] sm:$0xff]
    %v248 = vld [vmem:[#allocation2 + $0x18] sm:$0xff]
    %v249 = vld [vmem:[#allocation2 + $0x20] sm:$0xff]
    %v250 = vld [vmem:[#allocation2 + $0x28] sm:$0xff]
    %v251 = vld [vmem:[#allocation2 + $0x30] sm:$0xff]
    %v252 = vld [vmem:[#allocation2 + $0x38] sm:$0xff]
    %v253 = vld [vmem:[#allocation2 + $0x40] sm:$0xff]
    %v254 = vld [vmem:[#allocation2 + $0x48] sm:$0xff]
    %v255 = vld [vmem:[#allocation2 + $0x50] sm:$0xff]
    %v256 = vld [vmem:[#allocation2 + $0x58] sm:$0xff]
    %v257 = vld [vmem:[#allocation2 + $0x60] sm:$0xff]
    %v258 = vld [vmem:[#allocation2 + $0x68] sm:$0xff]
    %v259 = vld [vmem:[#allocation2 + $0x70] sm:$0xff]
    %v260 = vld [vmem:[#allocation2 + $0x78] sm:$0xff]
    %v261 = vpack.c.bf16 %v253, %v245
    %v262 = vpack.c.bf16 %v254, %v246
    %v263 = vpack.c.bf16 %v255, %v247
    %v264 = vpack.c.bf16 %v256, %v248
    %v265 = vpack.c.bf16 %v257, %v249
    %v266 = vpack.c.bf16 %v258, %v250
    %v267 = vpack.c.bf16 %v259, %v251
    %v268 = vpack.c.bf16 %v260, %v252
    %v269 = vld [vmem:[#allocation7] sm:$0xff]
    %v270 = vld [vmem:[#allocation7 + $0x8] sm:$0xf]
    %v271 = vld [vmem:[#allocation7 + $0xc] sm:$0xff]
    %v272 = vld [vmem:[#allocation7 + $0x14] sm:$0xf]
    %v273 = vld [vmem:[#allocation7 + $0x18] sm:$0xff]
    %v274 = vld [vmem:[#allocation7 + $0x20] sm:$0xf]
    %v275 = vld [vmem:[#allocation7 + $0x24] sm:$0xff]
    %v276 = vld [vmem:[#allocation7 + $0x2c] sm:$0xf]
    %v277 = vld [vmem:[#allocation7 + $0x30] sm:$0xff]
    %v278 = vld [vmem:[#allocation7 + $0x38] sm:$0xf]
    %v279 = vld [vmem:[#allocation7 + $0x3c] sm:$0xff]
    %v280 = vld [vmem:[#allocation7 + $0x44] sm:$0xf]
    %v281 = vld [vmem:[#allocation7 + $0x48] sm:$0xff]
    %v282 = vld [vmem:[#allocation7 + $0x50] sm:$0xf]
    %v283 = vld [vmem:[#allocation7 + $0x54] sm:$0xff]
    %v284 = vld [vmem:[#allocation7 + $0x5c] sm:$0xf]
    %v285 = vld [vmem:[#allocation7 + $0x60] sm:$0xff]
    %v286 = vld [vmem:[#allocation7 + $0x68] sm:$0xf]
    %v287 = vld [vmem:[#allocation7 + $0x6c] sm:$0xff]
    %v288 = vld [vmem:[#allocation7 + $0x74] sm:$0xf]
    %v289 = vld [vmem:[#allocation7 + $0x78] sm:$0xff]
    %v290 = vld [vmem:[#allocation7 + $0x80] sm:$0xf]
    %v291 = vld [vmem:[#allocation7 + $0x84] sm:$0xff]
    %v292 = vld [vmem:[#allocation7 + $0x8c] sm:$0xf]
    %v293 = vld [vmem:[#allocation7 + $0x90] sm:$0xff]
    %v294 = vld [vmem:[#allocation7 + $0x98] sm:$0xf]
    %v295 = vld [vmem:[#allocation7 + $0x9c] sm:$0xff]
    %v296 = vld [vmem:[#allocation7 + $0xa4] sm:$0xf]
    %v297 = vld [vmem:[#allocation7 + $0xa8] sm:$0xff]
    %v298 = vld [vmem:[#allocation7 + $0xb0] sm:$0xf]
    %v299 = vld [vmem:[#allocation7 + $0xb4] sm:$0xff]
    %v300 = vld [vmem:[#allocation7 + $0xbc] sm:$0xf]
    %v301 = vld [vmem:[#allocation7 + $0xc0] sm:$0xff]
    %v302 = vld [vmem:[#allocation7 + $0xc8] sm:$0xf]
    %v303 = vld [vmem:[#allocation7 + $0xcc] sm:$0xff]
    %v304 = vld [vmem:[#allocation7 + $0xd4] sm:$0xf]
    %v305 = vld [vmem:[#allocation7 + $0xd8] sm:$0xff]
    %v306 = vld [vmem:[#allocation7 + $0xe0] sm:$0xf]
    %v307 = vld [vmem:[#allocation7 + $0xe4] sm:$0xff]
    %v308 = vld [vmem:[#allocation7 + $0xec] sm:$0xf]
    %v309 = vld [vmem:[#allocation7 + $0xf0] sm:$0xff]
    %v310 = vld [vmem:[#allocation7 + $0xf8] sm:$0xf]
    %v311 = vld [vmem:[#allocation7 + $0xfc] sm:$0xff]
    %v312 = vld [vmem:[#allocation7 + $0x104] sm:$0xf]
    %v313 = vld [vmem:[#allocation7 + $0x108] sm:$0xff]
    %v314 = vld [vmem:[#allocation7 + $0x110] sm:$0xf]
    %v315 = vld [vmem:[#allocation7 + $0x114] sm:$0xff]
    %v316 = vld [vmem:[#allocation7 + $0x11c] sm:$0xf]
    %v317 = vld [vmem:[#allocation7 + $0x120] sm:$0xff]
    %v318 = vld [vmem:[#allocation7 + $0x128] sm:$0xf]
    %v319 = vld [vmem:[#allocation7 + $0x12c] sm:$0xff]
    %v320 = vld [vmem:[#allocation7 + $0x134] sm:$0xf]
    %v321 = vld [vmem:[#allocation7 + $0x138] sm:$0xff]
    %v322 = vld [vmem:[#allocation7 + $0x140] sm:$0xf]
    %v323 = vld [vmem:[#allocation7 + $0x144] sm:$0xff]
    %v324 = vld [vmem:[#allocation7 + $0x14c] sm:$0xf]
    %v325 = vld [vmem:[#allocation7 + $0x150] sm:$0xff]
    %v326 = vld [vmem:[#allocation7 + $0x158] sm:$0xf]
    %v327 = vld [vmem:[#allocation7 + $0x15c] sm:$0xff]
    %v328 = vld [vmem:[#allocation7 + $0x164] sm:$0xf]
    %v329 = vld [vmem:[#allocation7 + $0x168] sm:$0xff]
    %v330 = vld [vmem:[#allocation7 + $0x170] sm:$0xf]
    %v331 = vld [vmem:[#allocation7 + $0x174] sm:$0xff]
    %v332 = vld [vmem:[#allocation7 + $0x17c] sm:$0xf]
    %v333 = vld [vmem:[#allocation7 + $0x180] sm:$0xff]
    %v334 = vld [vmem:[#allocation7 + $0x188] sm:$0xf]
    %v335 = vld [vmem:[#allocation7 + $0x18c] sm:$0xff]
    %v336 = vld [vmem:[#allocation7 + $0x194] sm:$0xf]
    %v337 = vld [vmem:[#allocation7 + $0x198] sm:$0xff]
    %v338 = vld [vmem:[#allocation7 + $0x1a0] sm:$0xf]
    %v339 = vld [vmem:[#allocation7 + $0x1a4] sm:$0xff]
    %v340 = vld [vmem:[#allocation7 + $0x1ac] sm:$0xf]
    %v341 = vld [vmem:[#allocation7 + $0x1b0] sm:$0xff]
    %v342 = vld [vmem:[#allocation7 + $0x1b8] sm:$0xf]
    %v343 = vld [vmem:[#allocation7 + $0x1bc] sm:$0xff]
    %v344 = vld [vmem:[#allocation7 + $0x1c4] sm:$0xf]
    %v345 = vld [vmem:[#allocation7 + $0x1c8] sm:$0xff]
    %v346 = vld [vmem:[#allocation7 + $0x1d0] sm:$0xf]
    %v347 = vld [vmem:[#allocation7 + $0x1d4] sm:$0xff]
    %v348 = vld [vmem:[#allocation7 + $0x1dc] sm:$0xf]
    %v349 = vld [vmem:[#allocation7 + $0x1e0] sm:$0xff]
    %v350 = vld [vmem:[#allocation7 + $0x1e8] sm:$0xf]
    %v351 = vld [vmem:[#allocation7 + $0x1ec] sm:$0xff]
    %v352 = vld [vmem:[#allocation7 + $0x1f4] sm:$0xf]
    %v353 = vld [vmem:[#allocation7 + $0x1f8] sm:$0xff]
    %v354 = vld [vmem:[#allocation7 + $0x200] sm:$0xf]
    %v355 = vld [vmem:[#allocation7 + $0x204] sm:$0xff]
    %v356 = vld [vmem:[#allocation7 + $0x20c] sm:$0xf]
    %v357 = vld [vmem:[#allocation7 + $0x210] sm:$0xff]
    %v358 = vld [vmem:[#allocation7 + $0x218] sm:$0xf]
    %v359 = vld [vmem:[#allocation7 + $0x21c] sm:$0xff]
    %v360 = vld [vmem:[#allocation7 + $0x224] sm:$0xf]
    %v361 = vld [vmem:[#allocation7 + $0x228] sm:$0xff]
    %v362 = vld [vmem:[#allocation7 + $0x230] sm:$0xf]
    %v363 = vld [vmem:[#allocation7 + $0x234] sm:$0xff]
    %v364 = vld [vmem:[#allocation7 + $0x23c] sm:$0xf]
    %v365 = vld [vmem:[#allocation7 + $0x240] sm:$0xff]
    %v366 = vld [vmem:[#allocation7 + $0x248] sm:$0xf]
    %v367 = vld [vmem:[#allocation7 + $0x24c] sm:$0xff]
    %v368 = vld [vmem:[#allocation7 + $0x254] sm:$0xf]
    %v369 = vld [vmem:[#allocation7 + $0x258] sm:$0xff]
    %v370 = vld [vmem:[#allocation7 + $0x260] sm:$0xf]
    %v371 = vld [vmem:[#allocation7 + $0x264] sm:$0xff]
    %v372 = vld [vmem:[#allocation7 + $0x26c] sm:$0xf]
    %v373 = vld [vmem:[#allocation7 + $0x270] sm:$0xff]
    %v374 = vld [vmem:[#allocation7 + $0x278] sm:$0xf]
    %v375 = vld [vmem:[#allocation7 + $0x27c] sm:$0xff]
    %v376 = vld [vmem:[#allocation7 + $0x284] sm:$0xf]
    %v377 = vld [vmem:[#allocation7 + $0x288] sm:$0xff]
    %v378 = vld [vmem:[#allocation7 + $0x290] sm:$0xf]
    %v379 = vld [vmem:[#allocation7 + $0x294] sm:$0xff]
    %v380 = vld [vmem:[#allocation7 + $0x29c] sm:$0xf]
    %v381 = vld [vmem:[#allocation7 + $0x2a0] sm:$0xff]
    %v382 = vld [vmem:[#allocation7 + $0x2a8] sm:$0xf]
    %v383 = vld [vmem:[#allocation7 + $0x2ac] sm:$0xff]
    %v384 = vld [vmem:[#allocation7 + $0x2b4] sm:$0xf]
    %v385 = vld [vmem:[#allocation7 + $0x2b8] sm:$0xff]
    %v386 = vld [vmem:[#allocation7 + $0x2c0] sm:$0xf]
    %v387 = vld [vmem:[#allocation7 + $0x2c4] sm:$0xff]
    %v388 = vld [vmem:[#allocation7 + $0x2cc] sm:$0xf]
    %v389 = vld [vmem:[#allocation7 + $0x2d0] sm:$0xff]
    %v390 = vld [vmem:[#allocation7 + $0x2d8] sm:$0xf]
    %v391 = vld [vmem:[#allocation7 + $0x2dc] sm:$0xff]
    %v392 = vld [vmem:[#allocation7 + $0x2e4] sm:$0xf]
    %v393 = vld [vmem:[#allocation7 + $0x2e8] sm:$0xff]
    %v394 = vld [vmem:[#allocation7 + $0x2f0] sm:$0xf]
    %v395 = vld [vmem:[#allocation7 + $0x2f4] sm:$0xff]
    %v396 = vld [vmem:[#allocation7 + $0x2fc] sm:$0xf]
    %v397 = vld [vmem:[#allocation7 + $0x300] sm:$0xff]
    %v398 = vld [vmem:[#allocation7 + $0x308] sm:$0xf]
    %v399 = vld [vmem:[#allocation7 + $0x30c] sm:$0xff]
    %v400 = vld [vmem:[#allocation7 + $0x314] sm:$0xf]
    %v401 = vld [vmem:[#allocation7 + $0x318] sm:$0xff]
    %v402 = vld [vmem:[#allocation7 + $0x320] sm:$0xf]
    %v403 = vld [vmem:[#allocation7 + $0x324] sm:$0xff]
    %v404 = vld [vmem:[#allocation7 + $0x32c] sm:$0xf]
    %v405 = vld [vmem:[#allocation7 + $0x330] sm:$0xff]
    %v406 = vld [vmem:[#allocation7 + $0x338] sm:$0xf]
    %v407 = vld [vmem:[#allocation7 + $0x33c] sm:$0xff]
    %v408 = vld [vmem:[#allocation7 + $0x344] sm:$0xf]
    %v409 = vld [vmem:[#allocation7 + $0x348] sm:$0xff]
    %v410 = vld [vmem:[#allocation7 + $0x350] sm:$0xf]
    %v411 = vld [vmem:[#allocation7 + $0x354] sm:$0xff]
    %v412 = vld [vmem:[#allocation7 + $0x35c] sm:$0xf]
    %v413 = vld [vmem:[#allocation7 + $0x360] sm:$0xff]
    %v414 = vld [vmem:[#allocation7 + $0x368] sm:$0xf]
    %v415 = vld [vmem:[#allocation7 + $0x36c] sm:$0xff]
    %v416 = vld [vmem:[#allocation7 + $0x374] sm:$0xf]
    %v417 = vld [vmem:[#allocation7 + $0x378] sm:$0xff]
    %v418 = vld [vmem:[#allocation7 + $0x380] sm:$0xf]
    %v419 = vld [vmem:[#allocation7 + $0x384] sm:$0xff]
    %v420 = vld [vmem:[#allocation7 + $0x38c] sm:$0xf]
    %v421 = vld [vmem:[#allocation7 + $0x390] sm:$0xff]
    %v422 = vld [vmem:[#allocation7 + $0x398] sm:$0xf]
    %v423 = vld [vmem:[#allocation7 + $0x39c] sm:$0xff]
    %v424 = vld [vmem:[#allocation7 + $0x3a4] sm:$0xf]
    %v425 = vld [vmem:[#allocation7 + $0x3a8] sm:$0xff]
    %v426 = vld [vmem:[#allocation7 + $0x3b0] sm:$0xf]
    %v427 = vld [vmem:[#allocation7 + $0x3b4] sm:$0xff]
    %v428 = vld [vmem:[#allocation7 + $0x3bc] sm:$0xf]
    %v429 = vld [vmem:[#allocation7 + $0x3c0] sm:$0xff]
    %v430 = vld [vmem:[#allocation7 + $0x3c8] sm:$0xf]
    %v431 = vld [vmem:[#allocation7 + $0x3cc] sm:$0xff]
    %v432 = vld [vmem:[#allocation7 + $0x3d4] sm:$0xf]
    %v433 = vld [vmem:[#allocation7 + $0x3d8] sm:$0xff]
    %v434 = vld [vmem:[#allocation7 + $0x3e0] sm:$0xf]
    %v435 = vld [vmem:[#allocation7 + $0x3e4] sm:$0xff]
    %v436 = vld [vmem:[#allocation7 + $0x3ec] sm:$0xf]
    %v437 = vld [vmem:[#allocation7 + $0x3f0] sm:$0xff]
    %v438 = vld [vmem:[#allocation7 + $0x3f8] sm:$0xf]
    %v439 = vld [vmem:[#allocation7 + $0x3fc] sm:$0xff]
    %v440 = vld [vmem:[#allocation7 + $0x404] sm:$0xf]
    %v441 = vld [vmem:[#allocation7 + $0x408] sm:$0xff]
    %v442 = vld [vmem:[#allocation7 + $0x410] sm:$0xf]
    %v443 = vld [vmem:[#allocation7 + $0x414] sm:$0xff]
    %v444 = vld [vmem:[#allocation7 + $0x41c] sm:$0xf]
    %v445 = vld [vmem:[#allocation7 + $0x420] sm:$0xff]
    %v446 = vld [vmem:[#allocation7 + $0x428] sm:$0xf]
    %v447 = vld [vmem:[#allocation7 + $0x42c] sm:$0xff]
    %v448 = vld [vmem:[#allocation7 + $0x434] sm:$0xf]
    %v449 = vld [vmem:[#allocation7 + $0x438] sm:$0xff]
    %v450 = vld [vmem:[#allocation7 + $0x440] sm:$0xf]
    %v451 = vld [vmem:[#allocation7 + $0x444] sm:$0xff]
    %v452 = vld [vmem:[#allocation7 + $0x44c] sm:$0xf]
    %v453 = vld [vmem:[#allocation7 + $0x450] sm:$0xff]
    %v454 = vld [vmem:[#allocation7 + $0x458] sm:$0xf]
    %v455 = vld [vmem:[#allocation7 + $0x45c] sm:$0xff]
    %v456 = vld [vmem:[#allocation7 + $0x464] sm:$0xf]
    %v457 = vld [vmem:[#allocation7 + $0x468] sm:$0xff]
    %v458 = vld [vmem:[#allocation7 + $0x470] sm:$0xf]
    %v459 = vld [vmem:[#allocation7 + $0x474] sm:$0xff]
    %v460 = vld [vmem:[#allocation7 + $0x47c] sm:$0xf]
    %v461 = vld [vmem:[#allocation7 + $0x480] sm:$0xff]
    %v462 = vld [vmem:[#allocation7 + $0x488] sm:$0xf]
    %v463 = vld [vmem:[#allocation7 + $0x48c] sm:$0xff]
    %v464 = vld [vmem:[#allocation7 + $0x494] sm:$0xf]
    %v465 = vld [vmem:[#allocation7 + $0x498] sm:$0xff]
    %v466 = vld [vmem:[#allocation7 + $0x4a0] sm:$0xf]
    %v467 = vld [vmem:[#allocation7 + $0x4a4] sm:$0xff]
    %v468 = vld [vmem:[#allocation7 + $0x4ac] sm:$0xf]
    %v469 = vld [vmem:[#allocation7 + $0x4b0] sm:$0xff]
    %v470 = vld [vmem:[#allocation7 + $0x4b8] sm:$0xf]
    %v471 = vld [vmem:[#allocation7 + $0x4bc] sm:$0xff]
    %v472 = vld [vmem:[#allocation7 + $0x4c4] sm:$0xf]
    %v473 = vld [vmem:[#allocation7 + $0x4c8] sm:$0xff]
    %v474 = vld [vmem:[#allocation7 + $0x4d0] sm:$0xf]
    %v475 = vld [vmem:[#allocation7 + $0x4d4] sm:$0xff]
    %v476 = vld [vmem:[#allocation7 + $0x4dc] sm:$0xf]
    %v477 = vld [vmem:[#allocation7 + $0x4e0] sm:$0xff]
    %v478 = vld [vmem:[#allocation7 + $0x4e8] sm:$0xf]
    %v479 = vld [vmem:[#allocation7 + $0x4ec] sm:$0xff]
    %v480 = vld [vmem:[#allocation7 + $0x4f4] sm:$0xf]
    %v481 = vld [vmem:[#allocation7 + $0x4f8] sm:$0xff]
    %v482 = vld [vmem:[#allocation7 + $0x500] sm:$0xf]
    %v483 = vld [vmem:[#allocation7 + $0x504] sm:$0xff]
    %v484 = vld [vmem:[#allocation7 + $0x50c] sm:$0xf]
    %v485 = vld [vmem:[#allocation7 + $0x510] sm:$0xff]
    %v486 = vld [vmem:[#allocation7 + $0x518] sm:$0xf]
    %v487 = vld [vmem:[#allocation7 + $0x51c] sm:$0xff]
    %v488 = vld [vmem:[#allocation7 + $0x524] sm:$0xf]
    %v489 = vld [vmem:[#allocation7 + $0x528] sm:$0xff]
    %v490 = vld [vmem:[#allocation7 + $0x530] sm:$0xf]
    %v491 = vld [vmem:[#allocation7 + $0x534] sm:$0xff]
    %v492 = vld [vmem:[#allocation7 + $0x53c] sm:$0xf]
    %v493 = vld [vmem:[#allocation7 + $0x540] sm:$0xff]
    %v494 = vld [vmem:[#allocation7 + $0x548] sm:$0xf]
    %v495 = vld [vmem:[#allocation7 + $0x54c] sm:$0xff]
    %v496 = vld [vmem:[#allocation7 + $0x554] sm:$0xf]
    %v497 = vld [vmem:[#allocation7 + $0x558] sm:$0xff]
    %v498 = vld [vmem:[#allocation7 + $0x560] sm:$0xf]
    %v499 = vld [vmem:[#allocation7 + $0x564] sm:$0xff]
    %v500 = vld [vmem:[#allocation7 + $0x56c] sm:$0xf]
    %v501 = vld [vmem:[#allocation7 + $0x570] sm:$0xff]
    %v502 = vld [vmem:[#allocation7 + $0x578] sm:$0xf]
    %v503 = vld [vmem:[#allocation7 + $0x57c] sm:$0xff]
    %v504 = vld [vmem:[#allocation7 + $0x584] sm:$0xf]
    %v505 = vld [vmem:[#allocation7 + $0x588] sm:$0xff]
    %v506 = vld [vmem:[#allocation7 + $0x590] sm:$0xf]
    %v507 = vld [vmem:[#allocation7 + $0x594] sm:$0xff]
    %v508 = vld [vmem:[#allocation7 + $0x59c] sm:$0xf]
    %v509 = vld [vmem:[#allocation7 + $0x5a0] sm:$0xff]
    %v510 = vld [vmem:[#allocation7 + $0x5a8] sm:$0xf]
    %v511 = vld [vmem:[#allocation7 + $0x5ac] sm:$0xff]
    %v512 = vld [vmem:[#allocation7 + $0x5b4] sm:$0xf]
    %v513 = vld [vmem:[#allocation7 + $0x5b8] sm:$0xff]
    %v514 = vld [vmem:[#allocation7 + $0x5c0] sm:$0xf]
    %v515 = vld [vmem:[#allocation7 + $0x5c4] sm:$0xff]
    %v516 = vld [vmem:[#allocation7 + $0x5cc] sm:$0xf]
    %v517 = vld [vmem:[#allocation7 + $0x5d0] sm:$0xff]
    %v518 = vld [vmem:[#allocation7 + $0x5d8] sm:$0xf]
    %v519 = vld [vmem:[#allocation7 + $0x5dc] sm:$0xff]
    %v520 = vld [vmem:[#allocation7 + $0x5e4] sm:$0xf]
    %v521 = vld [vmem:[#allocation7 + $0x5e8] sm:$0xff]
    %v522 = vld [vmem:[#allocation7 + $0x5f0] sm:$0xf]
    %v523 = vld [vmem:[#allocation7 + $0x5f4] sm:$0xff]
    %v524 = vld [vmem:[#allocation7 + $0x5fc] sm:$0xf]
    %v781 = vunpack.c.l.b16 %v269
    %v782 = vunpack.c.h.b16 %v269
    %v783 = vunpack.c.l.b16 %v270
    %v784 = vunpack.c.l.b16 %v271
    %v785 = vunpack.c.h.b16 %v271
    %v786 = vunpack.c.l.b16 %v272
    %v787 = vunpack.c.l.b16 %v273
    %v788 = vunpack.c.h.b16 %v273
    %v789 = vunpack.c.l.b16 %v274
    %v790 = vunpack.c.l.b16 %v275
    %v791 = vunpack.c.h.b16 %v275
    %v792 = vunpack.c.l.b16 %v276
    %v793 = vunpack.c.l.b16 %v277
    %v794 = vunpack.c.h.b16 %v277
    %v795 = vunpack.c.l.b16 %v278
    %v796 = vunpack.c.l.b16 %v279
    %v797 = vunpack.c.h.b16 %v279
    %v798 = vunpack.c.l.b16 %v280
    %v799 = vunpack.c.l.b16 %v281
    %v800 = vunpack.c.h.b16 %v281
    %v801 = vunpack.c.l.b16 %v282
    %v802 = vunpack.c.l.b16 %v283
    %v803 = vunpack.c.h.b16 %v283
    %v804 = vunpack.c.l.b16 %v284
    %v805 = vunpack.c.l.b16 %v285
    %v806 = vunpack.c.h.b16 %v285
    %v807 = vunpack.c.l.b16 %v286
    %v808 = vunpack.c.l.b16 %v287
    %v809 = vunpack.c.h.b16 %v287
    %v810 = vunpack.c.l.b16 %v288
    %v811 = vunpack.c.l.b16 %v289
    %v812 = vunpack.c.h.b16 %v289
    %v813 = vunpack.c.l.b16 %v290
    %v814 = vunpack.c.l.b16 %v291
    %v815 = vunpack.c.h.b16 %v291
    %v816 = vunpack.c.l.b16 %v292
    %v817 = vunpack.c.l.b16 %v293
    %v818 = vunpack.c.h.b16 %v293
    %v819 = vunpack.c.l.b16 %v294
    %v820 = vunpack.c.l.b16 %v295
    %v821 = vunpack.c.h.b16 %v295
    %v822 = vunpack.c.l.b16 %v296
    %v823 = vunpack.c.l.b16 %v297
    %v824 = vunpack.c.h.b16 %v297
    %v825 = vunpack.c.l.b16 %v298
    %v826 = vunpack.c.l.b16 %v299
    %v827 = vunpack.c.h.b16 %v299
    %v828 = vunpack.c.l.b16 %v300
    %v829 = vunpack.c.l.b16 %v301
    %v830 = vunpack.c.h.b16 %v301
    %v831 = vunpack.c.l.b16 %v302
    %v832 = vunpack.c.l.b16 %v303
    %v833 = vunpack.c.h.b16 %v303
    %v834 = vunpack.c.l.b16 %v304
    %v835 = vunpack.c.l.b16 %v305
    %v836 = vunpack.c.h.b16 %v305
    %v837 = vunpack.c.l.b16 %v306
    %v838 = vunpack.c.l.b16 %v307
    %v839 = vunpack.c.h.b16 %v307
    %v840 = vunpack.c.l.b16 %v308
    %v841 = vunpack.c.l.b16 %v309
    %v842 = vunpack.c.h.b16 %v309
    %v843 = vunpack.c.l.b16 %v310
    %v844 = vunpack.c.l.b16 %v311
    %v845 = vunpack.c.h.b16 %v311
    %v846 = vunpack.c.l.b16 %v312
    %v847 = vunpack.c.l.b16 %v313
    %v848 = vunpack.c.h.b16 %v313
    %v849 = vunpack.c.l.b16 %v314
    %v850 = vunpack.c.l.b16 %v315
    %v851 = vunpack.c.h.b16 %v315
    %v852 = vunpack.c.l.b16 %v316
    %v853 = vunpack.c.l.b16 %v317
    %v854 = vunpack.c.h.b16 %v317
    %v855 = vunpack.c.l.b16 %v318
    %v856 = vunpack.c.l.b16 %v319
    %v857 = vunpack.c.h.b16 %v319
    %v858 = vunpack.c.l.b16 %v320
    %v859 = vunpack.c.l.b16 %v321
    %v860 = vunpack.c.h.b16 %v321
    %v861 = vunpack.c.l.b16 %v322
    %v862 = vunpack.c.l.b16 %v323
    %v863 = vunpack.c.h.b16 %v323
    %v864 = vunpack.c.l.b16 %v324
    %v865 = vunpack.c.l.b16 %v325
    %v866 = vunpack.c.h.b16 %v325
    %v867 = vunpack.c.l.b16 %v326
    %v868 = vunpack.c.l.b16 %v327
    %v869 = vunpack.c.h.b16 %v327
    %v870 = vunpack.c.l.b16 %v328
    %v871 = vunpack.c.l.b16 %v329
    %v872 = vunpack.c.h.b16 %v329
    %v873 = vunpack.c.l.b16 %v330
    %v874 = vunpack.c.l.b16 %v331
    %v875 = vunpack.c.h.b16 %v331
    %v876 = vunpack.c.l.b16 %v332
    %v877 = vunpack.c.l.b16 %v333
    %v878 = vunpack.c.h.b16 %v333
    %v879 = vunpack.c.l.b16 %v334
    %v880 = vunpack.c.l.b16 %v335
    %v881 = vunpack.c.h.b16 %v335
    %v882 = vunpack.c.l.b16 %v336
    %v883 = vunpack.c.l.b16 %v337
    %v884 = vunpack.c.h.b16 %v337
    %v885 = vunpack.c.l.b16 %v338
    %v886 = vunpack.c.l.b16 %v339
    %v887 = vunpack.c.h.b16 %v339
    %v888 = vunpack.c.l.b16 %v340
    %v889 = vunpack.c.l.b16 %v341
    %v890 = vunpack.c.h.b16 %v341
    %v891 = vunpack.c.l.b16 %v342
    %v892 = vunpack.c.l.b16 %v343
    %v893 = vunpack.c.h.b16 %v343
    %v894 = vunpack.c.l.b16 %v344
    %v895 = vunpack.c.l.b16 %v345
    %v896 = vunpack.c.h.b16 %v345
    %v897 = vunpack.c.l.b16 %v346
    %v898 = vunpack.c.l.b16 %v347
    %v899 = vunpack.c.h.b16 %v347
    %v900 = vunpack.c.l.b16 %v348
    %v901 = vunpack.c.l.b16 %v349
    %v902 = vunpack.c.h.b16 %v349
    %v903 = vunpack.c.l.b16 %v350
    %v904 = vunpack.c.l.b16 %v351
    %v905 = vunpack.c.h.b16 %v351
    %v906 = vunpack.c.l.b16 %v352
    %v907 = vunpack.c.l.b16 %v353
    %v908 = vunpack.c.h.b16 %v353
    %v909 = vunpack.c.l.b16 %v354
    %v910 = vunpack.c.l.b16 %v355
    %v911 = vunpack.c.h.b16 %v355
    %v912 = vunpack.c.l.b16 %v356
    %v913 = vunpack.c.l.b16 %v357
    %v914 = vunpack.c.h.b16 %v357
    %v915 = vunpack.c.l.b16 %v358
    %v916 = vunpack.c.l.b16 %v359
    %v917 = vunpack.c.h.b16 %v359
    %v918 = vunpack.c.l.b16 %v360
    %v919 = vunpack.c.l.b16 %v361
    %v920 = vunpack.c.h.b16 %v361
    %v921 = vunpack.c.l.b16 %v362
    %v922 = vunpack.c.l.b16 %v363
    %v923 = vunpack.c.h.b16 %v363
    %v924 = vunpack.c.l.b16 %v364
    %v925 = vunpack.c.l.b16 %v365
    %v926 = vunpack.c.h.b16 %v365
    %v927 = vunpack.c.l.b16 %v366
    %v928 = vunpack.c.l.b16 %v367
    %v929 = vunpack.c.h.b16 %v367
    %v930 = vunpack.c.l.b16 %v368
    %v931 = vunpack.c.l.b16 %v369
    %v932 = vunpack.c.h.b16 %v369
    %v933 = vunpack.c.l.b16 %v370
    %v934 = vunpack.c.l.b16 %v371
    %v935 = vunpack.c.h.b16 %v371
    %v936 = vunpack.c.l.b16 %v372
    %v937 = vunpack.c.l.b16 %v373
    %v938 = vunpack.c.h.b16 %v373
    %v939 = vunpack.c.l.b16 %v374
    %v940 = vunpack.c.l.b16 %v375
    %v941 = vunpack.c.h.b16 %v375
    %v942 = vunpack.c.l.b16 %v376
    %v943 = vunpack.c.l.b16 %v377
    %v944 = vunpack.c.h.b16 %v377
    %v945 = vunpack.c.l.b16 %v378
    %v946 = vunpack.c.l.b16 %v379
    %v947 = vunpack.c.h.b16 %v379
    %v948 = vunpack.c.l.b16 %v380
    %v949 = vunpack.c.l.b16 %v381
    %v950 = vunpack.c.h.b16 %v381
    %v951 = vunpack.c.l.b16 %v382
    %v952 = vunpack.c.l.b16 %v383
    %v953 = vunpack.c.h.b16 %v383
    %v954 = vunpack.c.l.b16 %v384
    %v955 = vunpack.c.l.b16 %v385
    %v956 = vunpack.c.h.b16 %v385
    %v957 = vunpack.c.l.b16 %v386
    %v958 = vunpack.c.l.b16 %v387
    %v959 = vunpack.c.h.b16 %v387
    %v960 = vunpack.c.l.b16 %v388
    %v961 = vunpack.c.l.b16 %v389
    %v962 = vunpack.c.h.b16 %v389
    %v963 = vunpack.c.l.b16 %v390
    %v964 = vunpack.c.l.b16 %v391
    %v965 = vunpack.c.h.b16 %v391
    %v966 = vunpack.c.l.b16 %v392
    %v967 = vunpack.c.l.b16 %v393
    %v968 = vunpack.c.h.b16 %v393
    %v969 = vunpack.c.l.b16 %v394
    %v970 = vunpack.c.l.b16 %v395
    %v971 = vunpack.c.h.b16 %v395
    %v972 = vunpack.c.l.b16 %v396
    %v973 = vunpack.c.l.b16 %v397
    %v974 = vunpack.c.h.b16 %v397
    %v975 = vunpack.c.l.b16 %v398
    %v976 = vunpack.c.l.b16 %v399
    %v977 = vunpack.c.h.b16 %v399
    %v978 = vunpack.c.l.b16 %v400
    %v979 = vunpack.c.l.b16 %v401
    %v980 = vunpack.c.h.b16 %v401
    %v981 = vunpack.c.l.b16 %v402
    %v982 = vunpack.c.l.b16 %v403
    %v983 = vunpack.c.h.b16 %v403
    %v984 = vunpack.c.l.b16 %v404
    %v985 = vunpack.c.l.b16 %v405
    %v986 = vunpack.c.h.b16 %v405
    %v987 = vunpack.c.l.b16 %v406
    %v988 = vunpack.c.l.b16 %v407
    %v989 = vunpack.c.h.b16 %v407
    %v990 = vunpack.c.l.b16 %v408
    %v991 = vunpack.c.l.b16 %v409
    %v992 = vunpack.c.h.b16 %v409
    %v993 = vunpack.c.l.b16 %v410
    %v994 = vunpack.c.l.b16 %v411
    %v995 = vunpack.c.h.b16 %v411
    %v996 = vunpack.c.l.b16 %v412
    %v997 = vunpack.c.l.b16 %v413
    %v998 = vunpack.c.h.b16 %v413
    %v999 = vunpack.c.l.b16 %v414
    %v1000 = vunpack.c.l.b16 %v415
    %v1001 = vunpack.c.h.b16 %v415
    %v1002 = vunpack.c.l.b16 %v416
    %v1003 = vunpack.c.l.b16 %v417
    %v1004 = vunpack.c.h.b16 %v417
    %v1005 = vunpack.c.l.b16 %v418
    %v1006 = vunpack.c.l.b16 %v419
    %v1007 = vunpack.c.h.b16 %v419
    %v1008 = vunpack.c.l.b16 %v420
    %v1009 = vunpack.c.l.b16 %v421
    %v1010 = vunpack.c.h.b16 %v421
    %v1011 = vunpack.c.l.b16 %v422
    %v1012 = vunpack.c.l.b16 %v423
    %v1013 = vunpack.c.h.b16 %v423
    %v1014 = vunpack.c.l.b16 %v424
    %v1015 = vunpack.c.l.b16 %v425
    %v1016 = vunpack.c.h.b16 %v425
    %v1017 = vunpack.c.l.b16 %v426
    %v1018 = vunpack.c.l.b16 %v427
    %v1019 = vunpack.c.h.b16 %v427
    %v1020 = vunpack.c.l.b16 %v428
    %v1021 = vunpack.c.l.b16 %v429
    %v1022 = vunpack.c.h.b16 %v429
    %v1023 = vunpack.c.l.b16 %v430
    %v1024 = vunpack.c.l.b16 %v431
    %v1025 = vunpack.c.h.b16 %v431
    %v1026 = vunpack.c.l.b16 %v432
    %v1027 = vunpack.c.l.b16 %v433
    %v1028 = vunpack.c.h.b16 %v433
    %v1029 = vunpack.c.l.b16 %v434
    %v1030 = vunpack.c.l.b16 %v435
    %v1031 = vunpack.c.h.b16 %v435
    %v1032 = vunpack.c.l.b16 %v436
    %v1033 = vunpack.c.l.b16 %v437
    %v1034 = vunpack.c.h.b16 %v437
    %v1035 = vunpack.c.l.b16 %v438
    %v1036 = vunpack.c.l.b16 %v439
    %v1037 = vunpack.c.h.b16 %v439
    %v1038 = vunpack.c.l.b16 %v440
    %v1039 = vunpack.c.l.b16 %v441
    %v1040 = vunpack.c.h.b16 %v441
    %v1041 = vunpack.c.l.b16 %v442
    %v1042 = vunpack.c.l.b16 %v443
    %v1043 = vunpack.c.h.b16 %v443
    %v1044 = vunpack.c.l.b16 %v444
    %v1045 = vunpack.c.l.b16 %v445
    %v1046 = vunpack.c.h.b16 %v445
    %v1047 = vunpack.c.l.b16 %v446
    %v1048 = vunpack.c.l.b16 %v447
    %v1049 = vunpack.c.h.b16 %v447
    %v1050 = vunpack.c.l.b16 %v448
    %v1051 = vunpack.c.l.b16 %v449
    %v1052 = vunpack.c.h.b16 %v449
    %v1053 = vunpack.c.l.b16 %v450
    %v1054 = vunpack.c.l.b16 %v451
    %v1055 = vunpack.c.h.b16 %v451
    %v1056 = vunpack.c.l.b16 %v452
    %v1057 = vunpack.c.l.b16 %v453
    %v1058 = vunpack.c.h.b16 %v453
    %v1059 = vunpack.c.l.b16 %v454
    %v1060 = vunpack.c.l.b16 %v455
    %v1061 = vunpack.c.h.b16 %v455
    %v1062 = vunpack.c.l.b16 %v456
    %v1063 = vunpack.c.l.b16 %v457
    %v1064 = vunpack.c.h.b16 %v457
    %v1065 = vunpack.c.l.b16 %v458
    %v1066 = vunpack.c.l.b16 %v459
    %v1067 = vunpack.c.h.b16 %v459
    %v1068 = vunpack.c.l.b16 %v460
    %v1069 = vunpack.c.l.b16 %v461
    %v1070 = vunpack.c.h.b16 %v461
    %v1071 = vunpack.c.l.b16 %v462
    %v1072 = vunpack.c.l.b16 %v463
    %v1073 = vunpack.c.h.b16 %v463
    %v1074 = vunpack.c.l.b16 %v464
    %v1075 = vunpack.c.l.b16 %v465
    %v1076 = vunpack.c.h.b16 %v465
    %v1077 = vunpack.c.l.b16 %v466
    %v1078 = vunpack.c.l.b16 %v467
    %v1079 = vunpack.c.h.b16 %v467
    %v1080 = vunpack.c.l.b16 %v468
    %v1081 = vunpack.c.l.b16 %v469
    %v1082 = vunpack.c.h.b16 %v469
    %v1083 = vunpack.c.l.b16 %v470
    %v1084 = vunpack.c.l.b16 %v471
    %v1085 = vunpack.c.h.b16 %v471
    %v1086 = vunpack.c.l.b16 %v472
    %v1087 = vunpack.c.l.b16 %v473
    %v1088 = vunpack.c.h.b16 %v473
    %v1089 = vunpack.c.l.b16 %v474
    %v1090 = vunpack.c.l.b16 %v475
    %v1091 = vunpack.c.h.b16 %v475
    %v1092 = vunpack.c.l.b16 %v476
    %v1093 = vunpack.c.l.b16 %v477
    %v1094 = vunpack.c.h.b16 %v477
    %v1095 = vunpack.c.l.b16 %v478
    %v1096 = vunpack.c.l.b16 %v479
    %v1097 = vunpack.c.h.b16 %v479
    %v1098 = vunpack.c.l.b16 %v480
    %v1099 = vunpack.c.l.b16 %v481
    %v1100 = vunpack.c.h.b16 %v481
    %v1101 = vunpack.c.l.b16 %v482
    %v1102 = vunpack.c.l.b16 %v483
    %v1103 = vunpack.c.h.b16 %v483
    %v1104 = vunpack.c.l.b16 %v484
    %v1105 = vunpack.c.l.b16 %v485
    %v1106 = vunpack.c.h.b16 %v485
    %v1107 = vunpack.c.l.b16 %v486
    %v1108 = vunpack.c.l.b16 %v487
    %v1109 = vunpack.c.h.b16 %v487
    %v1110 = vunpack.c.l.b16 %v488
    %v1111 = vunpack.c.l.b16 %v489
    %v1112 = vunpack.c.h.b16 %v489
    %v1113 = vunpack.c.l.b16 %v490
    %v1114 = vunpack.c.l.b16 %v491
    %v1115 = vunpack.c.h.b16 %v491
    %v1116 = vunpack.c.l.b16 %v492
    %v1117 = vunpack.c.l.b16 %v493
    %v1118 = vunpack.c.h.b16 %v493
    %v1119 = vunpack.c.l.b16 %v494
    %v1120 = vunpack.c.l.b16 %v495
    %v1121 = vunpack.c.h.b16 %v495
    %v1122 = vunpack.c.l.b16 %v496
    %v1123 = vunpack.c.l.b16 %v497
    %v1124 = vunpack.c.h.b16 %v497
    %v1125 = vunpack.c.l.b16 %v498
    %v1126 = vunpack.c.l.b16 %v499
    %v1127 = vunpack.c.h.b16 %v499
    %v1128 = vunpack.c.l.b16 %v500
    %v1129 = vunpack.c.l.b16 %v501
    %v1130 = vunpack.c.h.b16 %v501
    %v1131 = vunpack.c.l.b16 %v502
    %v1132 = vunpack.c.l.b16 %v503
    %v1133 = vunpack.c.h.b16 %v503
    %v1134 = vunpack.c.l.b16 %v504
    %v1135 = vunpack.c.l.b16 %v505
    %v1136 = vunpack.c.h.b16 %v505
    %v1137 = vunpack.c.l.b16 %v506
    %v1138 = vunpack.c.l.b16 %v507
    %v1139 = vunpack.c.h.b16 %v507
    %v1140 = vunpack.c.l.b16 %v508
    %v1141 = vunpack.c.l.b16 %v509
    %v1142 = vunpack.c.h.b16 %v509
    %v1143 = vunpack.c.l.b16 %v510
    %v1144 = vunpack.c.l.b16 %v511
    %v1145 = vunpack.c.h.b16 %v511
    %v1146 = vunpack.c.l.b16 %v512
    %v1147 = vunpack.c.l.b16 %v513
    %v1148 = vunpack.c.h.b16 %v513
    %v1149 = vunpack.c.l.b16 %v514
    %v1150 = vunpack.c.l.b16 %v515
    %v1151 = vunpack.c.h.b16 %v515
    %v1152 = vunpack.c.l.b16 %v516
    %v1153 = vunpack.c.l.b16 %v517
    %v1154 = vunpack.c.h.b16 %v517
    %v1155 = vunpack.c.l.b16 %v518
    %v1156 = vunpack.c.l.b16 %v519
    %v1157 = vunpack.c.h.b16 %v519
    %v1158 = vunpack.c.l.b16 %v520
    %v1159 = vunpack.c.l.b16 %v521
    %v1160 = vunpack.c.h.b16 %v521
    %v1161 = vunpack.c.l.b16 %v522
    %v1162 = vunpack.c.l.b16 %v523
    %v1163 = vunpack.c.h.b16 %v523
    %v1164 = vunpack.c.l.b16 %v524
    %v1165 = vpack.c.b16 %v784, %v781
    %v1166 = vpack.c.b16 %v785, %v782
    %v1167 = vpack.c.b16 %v786, %v783
    %v1168 = vpack.c.b16 %v790, %v787
    %v1169 = vpack.c.b16 %v791, %v788
    %v1170 = vpack.c.b16 %v792, %v789
    %v1171 = vpack.c.b16 %v796, %v793
    %v1172 = vpack.c.b16 %v797, %v794
    %v1173 = vpack.c.b16 %v798, %v795
    %v1174 = vpack.c.b16 %v802, %v799
    %v1175 = vpack.c.b16 %v803, %v800
    %v1176 = vpack.c.b16 %v804, %v801
    %v1177 = vpack.c.b16 %v808, %v805
    %v1178 = vpack.c.b16 %v809, %v806
    %v1179 = vpack.c.b16 %v810, %v807
    %v1180 = vpack.c.b16 %v814, %v811
    %v1181 = vpack.c.b16 %v815, %v812
    %v1182 = vpack.c.b16 %v816, %v813
    %v1183 = vpack.c.b16 %v820, %v817
    %v1184 = vpack.c.b16 %v821, %v818
    %v1185 = vpack.c.b16 %v822, %v819
    %v1186 = vpack.c.b16 %v826, %v823
    %v1187 = vpack.c.b16 %v827, %v824
    %v1188 = vpack.c.b16 %v828, %v825
    %v1189 = vpack.c.b16 %v832, %v829
    %v1190 = vpack.c.b16 %v833, %v830
    %v1191 = vpack.c.b16 %v834, %v831
    %v1192 = vpack.c.b16 %v838, %v835
    %v1193 = vpack.c.b16 %v839, %v836
    %v1194 = vpack.c.b16 %v840, %v837
    %v1195 = vpack.c.b16 %v844, %v841
    %v1196 = vpack.c.b16 %v845, %v842
    %v1197 = vpack.c.b16 %v846, %v843
    %v1198 = vpack.c.b16 %v850, %v847
    %v1199 = vpack.c.b16 %v851, %v848
    %v1200 = vpack.c.b16 %v852, %v849
    %v1201 = vpack.c.b16 %v856, %v853
    %v1202 = vpack.c.b16 %v857, %v854
    %v1203 = vpack.c.b16 %v858, %v855
    %v1204 = vpack.c.b16 %v862, %v859
    %v1205 = vpack.c.b16 %v863, %v860
    %v1206 = vpack.c.b16 %v864, %v861
    %v1207 = vpack.c.b16 %v868, %v865
    %v1208 = vpack.c.b16 %v869, %v866
    %v1209 = vpack.c.b16 %v870, %v867
    %v1210 = vpack.c.b16 %v874, %v871
    %v1211 = vpack.c.b16 %v875, %v872
    %v1212 = vpack.c.b16 %v876, %v873
    %v1213 = vpack.c.b16 %v880, %v877
    %v1214 = vpack.c.b16 %v881, %v878
    %v1215 = vpack.c.b16 %v882, %v879
    %v1216 = vpack.c.b16 %v886, %v883
    %v1217 = vpack.c.b16 %v887, %v884
    %v1218 = vpack.c.b16 %v888, %v885
    %v1219 = vpack.c.b16 %v892, %v889
    %v1220 = vpack.c.b16 %v893, %v890
    %v1221 = vpack.c.b16 %v894, %v891
    %v1222 = vpack.c.b16 %v898, %v895
    %v1223 = vpack.c.b16 %v899, %v896
    %v1224 = vpack.c.b16 %v900, %v897
    %v1225 = vpack.c.b16 %v904, %v901
    %v1226 = vpack.c.b16 %v905, %v902
    %v1227 = vpack.c.b16 %v906, %v903
    %v1228 = vpack.c.b16 %v910, %v907
    %v1229 = vpack.c.b16 %v911, %v908
    %v1230 = vpack.c.b16 %v912, %v909
    %v1231 = vpack.c.b16 %v916, %v913
    %v1232 = vpack.c.b16 %v917, %v914
    %v1233 = vpack.c.b16 %v918, %v915
    %v1234 = vpack.c.b16 %v922, %v919
    %v1235 = vpack.c.b16 %v923, %v920
    %v1236 = vpack.c.b16 %v924, %v921
    %v1237 = vpack.c.b16 %v928, %v925
    %v1238 = vpack.c.b16 %v929, %v926
    %v1239 = vpack.c.b16 %v930, %v927
    %v1240 = vpack.c.b16 %v934, %v931
    %v1241 = vpack.c.b16 %v935, %v932
    %v1242 = vpack.c.b16 %v936, %v933
    %v1243 = vpack.c.b16 %v940, %v937
    %v1244 = vpack.c.b16 %v941, %v938
    %v1245 = vpack.c.b16 %v942, %v939
    %v1246 = vpack.c.b16 %v946, %v943
    %v1247 = vpack.c.b16 %v947, %v944
    %v1248 = vpack.c.b16 %v948, %v945
    %v1249 = vpack.c.b16 %v952, %v949
    %v1250 = vpack.c.b16 %v953, %v950
    %v1251 = vpack.c.b16 %v954, %v951
    %v1252 = vpack.c.b16 %v958, %v955
    %v1253 = vpack.c.b16 %v959, %v956
    %v1254 = vpack.c.b16 %v960, %v957
    %v1255 = vpack.c.b16 %v964, %v961
    %v1256 = vpack.c.b16 %v965, %v962
    %v1257 = vpack.c.b16 %v966, %v963
    %v1258 = vpack.c.b16 %v970, %v967
    %v1259 = vpack.c.b16 %v971, %v968
    %v1260 = vpack.c.b16 %v972, %v969
    %v1261 = vpack.c.b16 %v976, %v973
    %v1262 = vpack.c.b16 %v977, %v974
    %v1263 = vpack.c.b16 %v978, %v975
    %v1264 = vpack.c.b16 %v982, %v979
    %v1265 = vpack.c.b16 %v983, %v980
    %v1266 = vpack.c.b16 %v984, %v981
    %v1267 = vpack.c.b16 %v988, %v985
    %v1268 = vpack.c.b16 %v989, %v986
    %v1269 = vpack.c.b16 %v990, %v987
    %v1270 = vpack.c.b16 %v994, %v991
    %v1271 = vpack.c.b16 %v995, %v992
    %v1272 = vpack.c.b16 %v996, %v993
    %v1273 = vpack.c.b16 %v1000, %v997
    %v1274 = vpack.c.b16 %v1001, %v998
    %v1275 = vpack.c.b16 %v1002, %v999
    %v1276 = vpack.c.b16 %v1006, %v1003
    %v1277 = vpack.c.b16 %v1007, %v1004
    %v1278 = vpack.c.b16 %v1008, %v1005
    %v1279 = vpack.c.b16 %v1012, %v1009
    %v1280 = vpack.c.b16 %v1013, %v1010
    %v1281 = vpack.c.b16 %v1014, %v1011
    %v1282 = vpack.c.b16 %v1018, %v1015
    %v1283 = vpack.c.b16 %v1019, %v1016
    %v1284 = vpack.c.b16 %v1020, %v1017
    %v1285 = vpack.c.b16 %v1024, %v1021
    %v1286 = vpack.c.b16 %v1025, %v1022
    %v1287 = vpack.c.b16 %v1026, %v1023
    %v1288 = vpack.c.b16 %v1030, %v1027
    %v1289 = vpack.c.b16 %v1031, %v1028
    %v1290 = vpack.c.b16 %v1032, %v1029
    %v1291 = vpack.c.b16 %v1036, %v1033
    %v1292 = vpack.c.b16 %v1037, %v1034
    %v1293 = vpack.c.b16 %v1038, %v1035
    %v1294 = vpack.c.b16 %v1042, %v1039
    %v1295 = vpack.c.b16 %v1043, %v1040
    %v1296 = vpack.c.b16 %v1044, %v1041
    %v1297 = vpack.c.b16 %v1048, %v1045
    %v1298 = vpack.c.b16 %v1049, %v1046
    %v1299 = vpack.c.b16 %v1050, %v1047
    %v1300 = vpack.c.b16 %v1054, %v1051
    %v1301 = vpack.c.b16 %v1055, %v1052
    %v1302 = vpack.c.b16 %v1056, %v1053
    %v1303 = vpack.c.b16 %v1060, %v1057
    %v1304 = vpack.c.b16 %v1061, %v1058
    %v1305 = vpack.c.b16 %v1062, %v1059
    %v1306 = vpack.c.b16 %v1066, %v1063
    %v1307 = vpack.c.b16 %v1067, %v1064
    %v1308 = vpack.c.b16 %v1068, %v1065
    %v1309 = vpack.c.b16 %v1072, %v1069
    %v1310 = vpack.c.b16 %v1073, %v1070
    %v1311 = vpack.c.b16 %v1074, %v1071
    %v1312 = vpack.c.b16 %v1078, %v1075
    %v1313 = vpack.c.b16 %v1079, %v1076
    %v1314 = vpack.c.b16 %v1080, %v1077
    %v1315 = vpack.c.b16 %v1084, %v1081
    %v1316 = vpack.c.b16 %v1085, %v1082
    %v1317 = vpack.c.b16 %v1086, %v1083
    %v1318 = vpack.c.b16 %v1090, %v1087
    %v1319 = vpack.c.b16 %v1091, %v1088
    %v1320 = vpack.c.b16 %v1092, %v1089
    %v1321 = vpack.c.b16 %v1096, %v1093
    %v1322 = vpack.c.b16 %v1097, %v1094
    %v1323 = vpack.c.b16 %v1098, %v1095
    %v1324 = vpack.c.b16 %v1102, %v1099
    %v1325 = vpack.c.b16 %v1103, %v1100
    %v1326 = vpack.c.b16 %v1104, %v1101
    %v1327 = vpack.c.b16 %v1108, %v1105
    %v1328 = vpack.c.b16 %v1109, %v1106
    %v1329 = vpack.c.b16 %v1110, %v1107
    %v1330 = vpack.c.b16 %v1114, %v1111
    %v1331 = vpack.c.b16 %v1115, %v1112
    %v1332 = vpack.c.b16 %v1116, %v1113
    %v1333 = vpack.c.b16 %v1120, %v1117
    %v1334 = vpack.c.b16 %v1121, %v1118
    %v1335 = vpack.c.b16 %v1122, %v1119
    %v1336 = vpack.c.b16 %v1126, %v1123
    %v1337 = vpack.c.b16 %v1127, %v1124
    %v1338 = vpack.c.b16 %v1128, %v1125
    %v1339 = vpack.c.b16 %v1132, %v1129
    %v1340 = vpack.c.b16 %v1133, %v1130
    %v1341 = vpack.c.b16 %v1134, %v1131
    %v1342 = vpack.c.b16 %v1138, %v1135
    %v1343 = vpack.c.b16 %v1139, %v1136
    %v1344 = vpack.c.b16 %v1140, %v1137
    %v1345 = vpack.c.b16 %v1144, %v1141
    %v1346 = vpack.c.b16 %v1145, %v1142
    %v1347 = vpack.c.b16 %v1146, %v1143
    %v1348 = vpack.c.b16 %v1150, %v1147
    %v1349 = vpack.c.b16 %v1151, %v1148
    %v1350 = vpack.c.b16 %v1152, %v1149
    %v1351 = vpack.c.b16 %v1156, %v1153
    %v1352 = vpack.c.b16 %v1157, %v1154
    %v1353 = vpack.c.b16 %v1158, %v1155
    %v1354 = vpack.c.b16 %v1162, %v1159
    %v1355 = vpack.c.b16 %v1163, %v1160
    %v1356 = vpack.c.b16 %v1164, %v1161
    %1549 = vmatpush.bf16.msra.mxu0 %v1186
    %1550 = vmatpush.bf16.msra.mxu0 %v1183
    %1551 = vmatpush.bf16.msra.mxu0 %v1180
    %1552 = vmatpush.bf16.msra.mxu0 %v1177
    %1553 = vmatpush.bf16.msra.mxu0 %v1174
    %1554 = vmatpush.bf16.msra.mxu0 %v1171
    %1555 = vmatpush.bf16.msra.mxu0 %v1168
    %1556 = vmatpush.bf16.msra.mxu0 %v1165
    %1557 = vmatmul.bf16.gmra.mxu0 %v261
    %v1558 = vpop.f32.mrf.mxu0
    %v1559 = vadd.f32 0.0, %v1558
    %v1560 = vpop.f32.mrf.mxu0
    %v1561 = vadd.f32 0.0, %v1560
    %1562 = vdwg.mxu0
    %1563 = vmatpush.bf16.msra.mxu0 %v1210
    %1564 = vmatpush.bf16.msra.mxu0 %v1207
    %1565 = vmatpush.bf16.msra.mxu0 %v1204
    %1566 = vmatpush.bf16.msra.mxu0 %v1201
    %1567 = vmatpush.bf16.msra.mxu0 %v1198
    %1568 = vmatpush.bf16.msra.mxu0 %v1195
    %1569 = vmatpush.bf16.msra.mxu0 %v1192
    %1570 = vmatpush.bf16.msra.mxu0 %v1189
    %1571 = vmatmul.bf16.gmra.mxu0 %v262
    %v1572 = vpop.f32.mrf.mxu0
    %v1573 = vadd.f32 %v1559, %v1572
    %v1574 = vpop.f32.mrf.mxu0
    %v1575 = vadd.f32 %v1561, %v1574
    %1576 = vdwg.mxu0
    %1577 = vmatpush.bf16.msra.mxu0 %v1234
    %1578 = vmatpush.bf16.msra.mxu0 %v1231
    %1579 = vmatpush.bf16.msra.mxu0 %v1228
    %1580 = vmatpush.bf16.msra.mxu0 %v1225
    %1581 = vmatpush.bf16.msra.mxu0 %v1222
    %1582 = vmatpush.bf16.msra.mxu0 %v1219
    %1583 = vmatpush.bf16.msra.mxu0 %v1216
    %1584 = vmatpush.bf16.msra.mxu0 %v1213
    %1585 = vmatmul.bf16.gmra.mxu0 %v263
    %v1586 = vpop.f32.mrf.mxu0
    %v1587 = vadd.f32 %v1573, %v1586
    %v1588 = vpop.f32.mrf.mxu0
    %v1589 = vadd.f32 %v1575, %v1588
    %1590 = vdwg.mxu0
    %1591 = vmatpush.bf16.msra.mxu0 %v1258
    %1592 = vmatpush.bf16.msra.mxu0 %v1255
    %1593 = vmatpush.bf16.msra.mxu0 %v1252
    %1594 = vmatpush.bf16.msra.mxu0 %v1249
    %1595 = vmatpush.bf16.msra.mxu0 %v1246
    %1596 = vmatpush.bf16.msra.mxu0 %v1243
    %1597 = vmatpush.bf16.msra.mxu0 %v1240
    %1598 = vmatpush.bf16.msra.mxu0 %v1237
    %1599 = vmatmul.bf16.gmra.mxu0 %v264
    %v1600 = vpop.f32.mrf.mxu0
    %v1601 = vadd.f32 %v1587, %v1600
    %v1602 = vpop.f32.mrf.mxu0
    %v1603 = vadd.f32 %v1589, %v1602
    %1604 = vdwg.mxu0
    %1605 = vmatpush.bf16.msra.mxu0 %v1282
    %1606 = vmatpush.bf16.msra.mxu0 %v1279
    %1607 = vmatpush.bf16.msra.mxu0 %v1276
    %1608 = vmatpush.bf16.msra.mxu0 %v1273
    %1609 = vmatpush.bf16.msra.mxu0 %v1270
    %1610 = vmatpush.bf16.msra.mxu0 %v1267
    %1611 = vmatpush.bf16.msra.mxu0 %v1264
    %1612 = vmatpush.bf16.msra.mxu0 %v1261
    %1613 = vmatmul.bf16.gmra.mxu0 %v265
    %v1614 = vpop.f32.mrf.mxu0
    %v1615 = vadd.f32 %v1601, %v1614
    %v1616 = vpop.f32.mrf.mxu0
    %v1617 = vadd.f32 %v1603, %v1616
    %1618 = vdwg.mxu0
    %1619 = vmatpush.bf16.msra.mxu0 %v1306
    %1620 = vmatpush.bf16.msra.mxu0 %v1303
    %1621 = vmatpush.bf16.msra.mxu0 %v1300
    %1622 = vmatpush.bf16.msra.mxu0 %v1297
    %1623 = vmatpush.bf16.msra.mxu0 %v1294
    %1624 = vmatpush.bf16.msra.mxu0 %v1291
    %1625 = vmatpush.bf16.msra.mxu0 %v1288
    %1626 = vmatpush.bf16.msra.mxu0 %v1285
    %1627 = vmatmul.bf16.gmra.mxu0 %v266
    %v1628 = vpop.f32.mrf.mxu0
    %v1629 = vadd.f32 %v1615, %v1628
    %v1630 = vpop.f32.mrf.mxu0
    %v1631 = vadd.f32 %v1617, %v1630
    %1632 = vdwg.mxu0
    %1633 = vmatpush.bf16.msra.mxu0 %v1330
    %1634 = vmatpush.bf16.msra.mxu0 %v1327
    %1635 = vmatpush.bf16.msra.mxu0 %v1324
    %1636 = vmatpush.bf16.msra.mxu0 %v1321
    %1637 = vmatpush.bf16.msra.mxu0 %v1318
    %1638 = vmatpush.bf16.msra.mxu0 %v1315
    %1639 = vmatpush.bf16.msra.mxu0 %v1312
    %1640 = vmatpush.bf16.msra.mxu0 %v1309
    %1641 = vmatmul.bf16.gmra.mxu0 %v267
    %v1642 = vpop.f32.mrf.mxu0
    %v1643 = vadd.f32 %v1629, %v1642
    %v1644 = vpop.f32.mrf.mxu0
    %v1645 = vadd.f32 %v1631, %v1644
    %1646 = vdwg.mxu0
    %1647 = vmatpush.bf16.msra.mxu0 %v1354
    %1648 = vmatpush.bf16.msra.mxu0 %v1351
    %1649 = vmatpush.bf16.msra.mxu0 %v1348
    %1650 = vmatpush.bf16.msra.mxu0 %v1345
    %1651 = vmatpush.bf16.msra.mxu0 %v1342
    %1652 = vmatpush.bf16.msra.mxu0 %v1339
    %1653 = vmatpush.bf16.msra.mxu0 %v1336
    %1654 = vmatpush.bf16.msra.mxu0 %v1333
    %1655 = vmatmul.bf16.gmra.mxu0 %v268
    %v1656 = vpop.f32.mrf.mxu0
    %v1657 = vadd.f32 %v1643, %v1656
    %v1658 = vpop.f32.mrf.mxu0
    %v1659 = vadd.f32 %v1645, %v1658
    %1660 = vdwg.mxu0
    %1661 = vmatpush.bf16.msra.mxu0 %v1187
    %1662 = vmatpush.bf16.msra.mxu0 %v1184
    %1663 = vmatpush.bf16.msra.mxu0 %v1181
    %1664 = vmatpush.bf16.msra.mxu0 %v1178
    %1665 = vmatpush.bf16.msra.mxu0 %v1175
    %1666 = vmatpush.bf16.msra.mxu0 %v1172
    %1667 = vmatpush.bf16.msra.mxu0 %v1169
    %1668 = vmatpush.bf16.msra.mxu0 %v1166
    %1669 = vmatmul.bf16.gmra.mxu0 %v261
    %v1670 = vpop.f32.mrf.mxu0
    %v1671 = vadd.f32 0.0, %v1670
    %v1672 = vpop.f32.mrf.mxu0
    %v1673 = vadd.f32 0.0, %v1672
    %1674 = vdwg.mxu0
    %1675 = vmatpush.bf16.msra.mxu0 %v1211
    %1676 = vmatpush.bf16.msra.mxu0 %v1208
    %1677 = vmatpush.bf16.msra.mxu0 %v1205
    %1678 = vmatpush.bf16.msra.mxu0 %v1202
    %1679 = vmatpush.bf16.msra.mxu0 %v1199
    %1680 = vmatpush.bf16.msra.mxu0 %v1196
    %1681 = vmatpush.bf16.msra.mxu0 %v1193
    %1682 = vmatpush.bf16.msra.mxu0 %v1190
    %1683 = vmatmul.bf16.gmra.mxu0 %v262
    %v1684 = vpop.f32.mrf.mxu0
    %v1685 = vadd.f32 %v1671, %v1684
    %v1686 = vpop.f32.mrf.mxu0
    %v1687 = vadd.f32 %v1673, %v1686
    %1688 = vdwg.mxu0
    %1689 = vmatpush.bf16.msra.mxu0 %v1235
    %1690 = vmatpush.bf16.msra.mxu0 %v1232
    %1691 = vmatpush.bf16.msra.mxu0 %v1229
    %1692 = vmatpush.bf16.msra.mxu0 %v1226
    %1693 = vmatpush.bf16.msra.mxu0 %v1223
    %1694 = vmatpush.bf16.msra.mxu0 %v1220
    %1695 = vmatpush.bf16.msra.mxu0 %v1217
    %1696 = vmatpush.bf16.msra.mxu0 %v1214
    %1697 = vmatmul.bf16.gmra.mxu0 %v263
    %v1698 = vpop.f32.mrf.mxu0
    %v1699 = vadd.f32 %v1685, %v1698
    %v1700 = vpop.f32.mrf.mxu0
    %v1701 = vadd.f32 %v1687, %v1700
    %1702 = vdwg.mxu0
    %1703 = vmatpush.bf16.msra.mxu0 %v1259
    %1704 = vmatpush.bf16.msra.mxu0 %v1256
    %1705 = vmatpush.bf16.msra.mxu0 %v1253
    %1706 = vmatpush.bf16.msra.mxu0 %v1250
    %1707 = vmatpush.bf16.msra.mxu0 %v1247
    %1708 = vmatpush.bf16.msra.mxu0 %v1244
    %1709 = vmatpush.bf16.msra.mxu0 %v1241
    %1710 = vmatpush.bf16.msra.mxu0 %v1238
    %1711 = vmatmul.bf16.gmra.mxu0 %v264
    %v1712 = vpop.f32.mrf.mxu0
    %v1713 = vadd.f32 %v1699, %v1712
    %v1714 = vpop.f32.mrf.mxu0
    %v1715 = vadd.f32 %v1701, %v1714
    %1716 = vdwg.mxu0
    %1717 = vmatpush.bf16.msra.mxu0 %v1283
    %1718 = vmatpush.bf16.msra.mxu0 %v1280
    %1719 = vmatpush.bf16.msra.mxu0 %v1277
    %1720 = vmatpush.bf16.msra.mxu0 %v1274
    %1721 = vmatpush.bf16.msra.mxu0 %v1271
    %1722 = vmatpush.bf16.msra.mxu0 %v1268
    %1723 = vmatpush.bf16.msra.mxu0 %v1265
    %1724 = vmatpush.bf16.msra.mxu0 %v1262
    %1725 = vmatmul.bf16.gmra.mxu0 %v265
    %v1726 = vpop.f32.mrf.mxu0
    %v1727 = vadd.f32 %v1713, %v1726
    %v1728 = vpop.f32.mrf.mxu0
    %v1729 = vadd.f32 %v1715, %v1728
    %1730 = vdwg.mxu0
    %1731 = vmatpush.bf16.msra.mxu0 %v1307
    %1732 = vmatpush.bf16.msra.mxu0 %v1304
    %1733 = vmatpush.bf16.msra.mxu0 %v1301
    %1734 = vmatpush.bf16.msra.mxu0 %v1298
    %1735 = vmatpush.bf16.msra.mxu0 %v1295
    %1736 = vmatpush.bf16.msra.mxu0 %v1292
    %1737 = vmatpush.bf16.msra.mxu0 %v1289
    %1738 = vmatpush.bf16.msra.mxu0 %v1286
    %1739 = vmatmul.bf16.gmra.mxu0 %v266
    %v1740 = vpop.f32.mrf.mxu0
    %v1741 = vadd.f32 %v1727, %v1740
    %v1742 = vpop.f32.mrf.mxu0
    %v1743 = vadd.f32 %v1729, %v1742
    %1744 = vdwg.mxu0
    %1745 = vmatpush.bf16.msra.mxu0 %v1331
    %1746 = vmatpush.bf16.msra.mxu0 %v1328
    %1747 = vmatpush.bf16.msra.mxu0 %v1325
    %1748 = vmatpush.bf16.msra.mxu0 %v1322
    %1749 = vmatpush.bf16.msra.mxu0 %v1319
    %1750 = vmatpush.bf16.msra.mxu0 %v1316
    %1751 = vmatpush.bf16.msra.mxu0 %v1313
    %1752 = vmatpush.bf16.msra.mxu0 %v1310
    %1753 = vmatmul.bf16.gmra.mxu0 %v267
    %v1754 = vpop.f32.mrf.mxu0
    %v1755 = vadd.f32 %v1741, %v1754
    %v1756 = vpop.f32.mrf.mxu0
    %v1757 = vadd.f32 %v1743, %v1756
    %1758 = vdwg.mxu0
    %1759 = vmatpush.bf16.msra.mxu0 %v1355
    %1760 = vmatpush.bf16.msra.mxu0 %v1352
    %1761 = vmatpush.bf16.msra.mxu0 %v1349
    %1762 = vmatpush.bf16.msra.mxu0 %v1346
    %1763 = vmatpush.bf16.msra.mxu0 %v1343
    %1764 = vmatpush.bf16.msra.mxu0 %v1340
    %1765 = vmatpush.bf16.msra.mxu0 %v1337
    %1766 = vmatpush.bf16.msra.mxu0 %v1334
    %1767 = vmatmul.bf16.gmra.mxu0 %v268
    %v1768 = vpop.f32.mrf.mxu0
    %v1769 = vadd.f32 %v1755, %v1768
    %v1770 = vpop.f32.mrf.mxu0
    %v1771 = vadd.f32 %v1757, %v1770
    %1772 = vdwg.mxu0
    %1773 = vmatpush.bf16.msra.mxu0 %v1188
    %1774 = vmatpush.bf16.msra.mxu0 %v1185
    %1775 = vmatpush.bf16.msra.mxu0 %v1182
    %1776 = vmatpush.bf16.msra.mxu0 %v1179
    %1777 = vmatpush.bf16.msra.mxu0 %v1176
    %1778 = vmatpush.bf16.msra.mxu0 %v1173
    %1779 = vmatpush.bf16.msra.mxu0 %v1170
    %1780 = vmatpush.bf16.msra.mxu0 %v1167
    %1781 = vmatmul.bf16.gmra.mxu0 %v261
    %v1782 = vpop.f32.mrf.mxu0
    %v1783 = vadd.f32 0.0, %v1782
    %v1784 = vpop.f32.mrf.mxu0
    %v1785 = vadd.f32 0.0, %v1784
    %1786 = vdwg.mxu0
    %1787 = vmatpush.bf16.msra.mxu0 %v1212
    %1788 = vmatpush.bf16.msra.mxu0 %v1209
    %1789 = vmatpush.bf16.msra.mxu0 %v1206
    %1790 = vmatpush.bf16.msra.mxu0 %v1203
    %1791 = vmatpush.bf16.msra.mxu0 %v1200
    %1792 = vmatpush.bf16.msra.mxu0 %v1197
    %1793 = vmatpush.bf16.msra.mxu0 %v1194
    %1794 = vmatpush.bf16.msra.mxu0 %v1191
    %1795 = vmatmul.bf16.gmra.mxu0 %v262
    %v1796 = vpop.f32.mrf.mxu0
    %v1797 = vadd.f32 %v1783, %v1796
    %v1798 = vpop.f32.mrf.mxu0
    %v1799 = vadd.f32 %v1785, %v1798
    %1800 = vdwg.mxu0
    %1801 = vmatpush.bf16.msra.mxu0 %v1236
    %1802 = vmatpush.bf16.msra.mxu0 %v1233
    %1803 = vmatpush.bf16.msra.mxu0 %v1230
    %1804 = vmatpush.bf16.msra.mxu0 %v1227
    %1805 = vmatpush.bf16.msra.mxu0 %v1224
    %1806 = vmatpush.bf16.msra.mxu0 %v1221
    %1807 = vmatpush.bf16.msra.mxu0 %v1218
    %1808 = vmatpush.bf16.msra.mxu0 %v1215
    %1809 = vmatmul.bf16.gmra.mxu0 %v263
    %v1810 = vpop.f32.mrf.mxu0
    %v1811 = vadd.f32 %v1797, %v1810
    %v1812 = vpop.f32.mrf.mxu0
    %v1813 = vadd.f32 %v1799, %v1812
    %1814 = vdwg.mxu0
    %1815 = vmatpush.bf16.msra.mxu0 %v1260
    %1816 = vmatpush.bf16.msra.mxu0 %v1257
    %1817 = vmatpush.bf16.msra.mxu0 %v1254
    %1818 = vmatpush.bf16.msra.mxu0 %v1251
    %1819 = vmatpush.bf16.msra.mxu0 %v1248
    %1820 = vmatpush.bf16.msra.mxu0 %v1245
    %1821 = vmatpush.bf16.msra.mxu0 %v1242
    %1822 = vmatpush.bf16.msra.mxu0 %v1239
    %1823 = vmatmul.bf16.gmra.mxu0 %v264
    %v1824 = vpop.f32.mrf.mxu0
    %v1825 = vadd.f32 %v1811, %v1824
    %v1826 = vpop.f32.mrf.mxu0
    %v1827 = vadd.f32 %v1813, %v1826
    %1828 = vdwg.mxu0
    %1829 = vmatpush.bf16.msra.mxu0 %v1284
    %1830 = vmatpush.bf16.msra.mxu0 %v1281
    %1831 = vmatpush.bf16.msra.mxu0 %v1278
    %1832 = vmatpush.bf16.msra.mxu0 %v1275
    %1833 = vmatpush.bf16.msra.mxu0 %v1272
    %1834 = vmatpush.bf16.msra.mxu0 %v1269
    %1835 = vmatpush.bf16.msra.mxu0 %v1266
    %1836 = vmatpush.bf16.msra.mxu0 %v1263
    %1837 = vmatmul.bf16.gmra.mxu0 %v265
    %v1838 = vpop.f32.mrf.mxu0
    %v1839 = vadd.f32 %v1825, %v1838
    %v1840 = vpop.f32.mrf.mxu0
    %v1841 = vadd.f32 %v1827, %v1840
    %1842 = vdwg.mxu0
    %1843 = vmatpush.bf16.msra.mxu0 %v1308
    %1844 = vmatpush.bf16.msra.mxu0 %v1305
    %1845 = vmatpush.bf16.msra.mxu0 %v1302
    %1846 = vmatpush.bf16.msra.mxu0 %v1299
    %1847 = vmatpush.bf16.msra.mxu0 %v1296
    %1848 = vmatpush.bf16.msra.mxu0 %v1293
    %1849 = vmatpush.bf16.msra.mxu0 %v1290
    %1850 = vmatpush.bf16.msra.mxu0 %v1287
    %1851 = vmatmul.bf16.gmra.mxu0 %v266
    %v1852 = vpop.f32.mrf.mxu0
    %v1853 = vadd.f32 %v1839, %v1852
    %v1854 = vpop.f32.mrf.mxu0
    %v1855 = vadd.f32 %v1841, %v1854
    %1856 = vdwg.mxu0
    %1857 = vmatpush.bf16.msra.mxu0 %v1332
    %1858 = vmatpush.bf16.msra.mxu0 %v1329
    %1859 = vmatpush.bf16.msra.mxu0 %v1326
    %1860 = vmatpush.bf16.msra.mxu0 %v1323
    %1861 = vmatpush.bf16.msra.mxu0 %v1320
    %1862 = vmatpush.bf16.msra.mxu0 %v1317
    %1863 = vmatpush.bf16.msra.mxu0 %v1314
    %1864 = vmatpush.bf16.msra.mxu0 %v1311
    %1865 = vmatmul.bf16.gmra.mxu0 %v267
    %v1866 = vpop.f32.mrf.mxu0
    %v1867 = vadd.f32 %v1853, %v1866
    %v1868 = vpop.f32.mrf.mxu0
    %v1869 = vadd.f32 %v1855, %v1868
    %1870 = vdwg.mxu0
    %1871 = vmatpush.bf16.msra.mxu0 %v1356
    %1872 = vmatpush.bf16.msra.mxu0 %v1353
    %1873 = vmatpush.bf16.msra.mxu0 %v1350
    %1874 = vmatpush.bf16.msra.mxu0 %v1347
    %1875 = vmatpush.bf16.msra.mxu0 %v1344
    %1876 = vmatpush.bf16.msra.mxu0 %v1341
    %1877 = vmatpush.bf16.msra.mxu0 %v1338
    %1878 = vmatpush.bf16.msra.mxu0 %v1335
    %1879 = vmatmul.bf16.gmra.mxu0 %v268
    %v1880 = vpop.f32.mrf.mxu0
    %v1881 = vadd.f32 %v1867, %v1880
    %v1882 = vpop.f32.mrf.mxu0
    %v1883 = vadd.f32 %v1869, %v1882
    %1884 = vdwg.mxu0
    %v1885 = vpack.c.bf16 %v1657, %v1657
    %v1886 = vpack.c.bf16 %v1659, %v1659
    %v1887 = vpack.c.bf16 %v1769, %v1769
    %v1888 = vpack.c.bf16 %v1771, %v1771
    %v1889 = vpack.c.bf16 %v1881, %v1881
    %v1890 = vpack.c.bf16 %v1883, %v1883
    %1891 = vmatpush.bf16.xpose.msra.mxu0 0
    %1892 = vmatpush.bf16.xpose.msra.mxu0 0
    %1893 = vmatpush.bf16.xpose.msra.mxu0 0
    %1894 = vmatpush.bf16.xpose.msra.mxu0 0
    %1895 = vmatpush.bf16.xpose.msra.mxu0 0
    %1896 = vmatpush.bf16.xpose.msra.mxu0 0
    %1897 = vmatpush.bf16.xpose.msra.mxu0 0
    %1898 = vmatpush.bf16.xpose.msra.mxu0 %v1887
    %1899 = vmatmul.bf16.gmra.mxu0 %v1885
    %v1900 = vpop.f32.mrf.mxu0
    %v1901 = vadd.f32 0.0, %v1900
    %v1902 = vpop.f32.mrf.mxu0
    %1903 = vdwg.mxu0
    %1904 = vmatpush.bf16.xpose.msra.mxu0 0
    %1905 = vmatpush.bf16.xpose.msra.mxu0 0
    %1906 = vmatpush.bf16.xpose.msra.mxu0 0
    %1907 = vmatpush.bf16.xpose.msra.mxu0 0
    %1908 = vmatpush.bf16.xpose.msra.mxu0 0
    %1909 = vmatpush.bf16.xpose.msra.mxu0 0
    %1910 = vmatpush.bf16.xpose.msra.mxu0 0
    %1911 = vmatpush.bf16.xpose.msra.mxu0 %v1888
    %1912 = vmatmul.bf16.gmra.mxu0 %v1886
    %v1913 = vpop.f32.mrf.mxu0
    %v1914 = vadd.f32 0.0, %v1913
    %v1915 = vpop.f32.mrf.mxu0
    %1916 = vdwg.mxu0
    %v1917 = vmul.f32 %v1901, 0.088388346
    %v1918 = vmul.f32 %v1914, 0.088388346
    %v1919 = vld [vmem:[#allocation5] sm:$0x3]
    %v1921 = vrot.slane %v1919, 1
    %v1922 = vperm.slane %v1919, 0
    %v1923 = vperm.slane %v1921, 0
    %v1926 = vadd.f32 %v1917, %v1922
    %v1927 = vadd.f32 %v1918, %v1923
    %vm1928 = vcmask 64512
    %v1929 = vsel %vm1928, %v1926, -inf
    %1930 = vmax.xlane.f32.xlu0 %v1929
    %v1931 = vpop.xlane.xlu0 %1930
    %v1932 = vsel %vm1928, %v1927, -inf
    %1933 = vmax.xlane.f32.xlu0 %v1932
    %v1934 = vpop.xlane.xlu0 %1933
    %v1935 = vsub.f32 %v1926, %v1931
    %v1936 = vsub.f32 %v1927, %v1934
    %v1937 = vmul.f32 %v1935, 1.442695
    %v1938 = vpow.pop %v1937
    %v1939 = vmul.f32 %v1936, 1.442695
    %v1940 = vpow.pop %v1939
    %v1941 = vsel %vm1928, %v1938, 0.0
    %1942 = vadd.xlane.f32.xlu0 %v1941
    %v1943 = vpop.xlane.xlu0 %1942
    %v1944 = vsel %vm1928, %v1940, 0.0
    %1945 = vadd.xlane.f32.xlu0 %v1944
    %v1946 = vpop.xlane.xlu0 %1945
    %v1947 = vrcp.pop %v1943
    %v1948 = vrcp.pop %v1946
    %v1949 = vmul.f32 %v1938, %v1947
    %v1950 = vmul.f32 %v1940, %v1948
    %v1951 = vpack.c.bf16 %v1949, %v1949
    %v1952 = vpack.c.bf16 %v1950, %v1950
    %v1954 = vsel %vm1928, %v1951, 0
    %vm1956 = vcmask 1043456
    %v1958 = vsel %vm1956, %v1889, 0
    %1960 = vmatpush.bf16.msra.mxu0 0
    %1961 = vmatpush.bf16.msra.mxu0 0
    %1962 = vmatpush.bf16.msra.mxu0 0
    %1963 = vmatpush.bf16.msra.mxu0 0
    %1964 = vmatpush.bf16.msra.mxu0 0
    %1965 = vmatpush.bf16.msra.mxu0 0
    %1966 = vmatpush.bf16.msra.mxu0 0
    %1967 = vmatpush.bf16.msra.mxu0 %v1958
    %1968 = vmatmul.bf16.gmra.mxu0 %v1954
    %v1969 = vpop.f32.mrf.mxu0
    %v1970 = vadd.f32 0.0, %v1969
    %v1971 = vpop.f32.mrf.mxu0
    %1972 = vdwg.mxu0
    %v1974 = vsel %vm1928, %v1952, 0
    %v1977 = vsel %vm1956, %v1890, 0
    %1979 = vmatpush.bf16.msra.mxu0 0
    %1980 = vmatpush.bf16.msra.mxu0 0
    %1981 = vmatpush.bf16.msra.mxu0 0
    %1982 = vmatpush.bf16.msra.mxu0 0
    %1983 = vmatpush.bf16.msra.mxu0 0
    %1984 = vmatpush.bf16.msra.mxu0 0
    %1985 = vmatpush.bf16.msra.mxu0 0
    %1986 = vmatpush.bf16.msra.mxu0 %v1977
    %1987 = vmatmul.bf16.gmra.mxu0 %v1974
    %v1988 = vpop.f32.mrf.mxu0
    %v1989 = vadd.f32 0.0, %v1988
    %v1990 = vpop.f32.mrf.mxu0
    %1991 = vdwg.mxu0
    %v1992 = vpack.c.bf16 %v1989, %v1970
    %v1993 = vld [vmem:[#allocation8] sm:$0xff]
    %v1994 = vld [vmem:[#allocation8 + $0x8] sm:$0xff]
    %v1995 = vld [vmem:[#allocation8 + $0x10] sm:$0xff]
    %v1996 = vld [vmem:[#allocation8 + $0x18] sm:$0xff]
    %v1997 = vld [vmem:[#allocation8 + $0x20] sm:$0xff]
    %v1998 = vld [vmem:[#allocation8 + $0x28] sm:$0xff]
    %v1999 = vld [vmem:[#allocation8 + $0x30] sm:$0xff]
    %v2000 = vld [vmem:[#allocation8 + $0x38] sm:$0xff]
    %v2001 = vld [vmem:[#allocation8 + $0x40] sm:$0xff]
    %v2002 = vld [vmem:[#allocation8 + $0x48] sm:$0xff]
    %v2003 = vld [vmem:[#allocation8 + $0x50] sm:$0xff]
    %v2004 = vld [vmem:[#allocation8 + $0x58] sm:$0xff]
    %v2005 = vld [vmem:[#allocation8 + $0x60] sm:$0xff]
    %v2006 = vld [vmem:[#allocation8 + $0x68] sm:$0xff]
    %v2007 = vld [vmem:[#allocation8 + $0x70] sm:$0xff]
    %v2008 = vld [vmem:[#allocation8 + $0x78] sm:$0xff]
    %v2009 = vld [vmem:[#allocation8 + $0x80] sm:$0xff]
    %v2010 = vld [vmem:[#allocation8 + $0x88] sm:$0xff]
    %v2011 = vld [vmem:[#allocation8 + $0x90] sm:$0xff]
    %v2012 = vld [vmem:[#allocation8 + $0x98] sm:$0xff]
    %v2013 = vld [vmem:[#allocation8 + $0xa0] sm:$0xff]
    %v2014 = vld [vmem:[#allocation8 + $0xa8] sm:$0xff]
    %v2015 = vld [vmem:[#allocation8 + $0xb0] sm:$0xff]
    %v2016 = vld [vmem:[#allocation8 + $0xb8] sm:$0xff]
    %v2017 = vld [vmem:[#allocation8 + $0xc0] sm:$0xff]
    %v2018 = vld [vmem:[#allocation8 + $0xc8] sm:$0xff]
    %v2019 = vld [vmem:[#allocation8 + $0xd0] sm:$0xff]
    %v2020 = vld [vmem:[#allocation8 + $0xd8] sm:$0xff]
    %v2021 = vld [vmem:[#allocation8 + $0xe0] sm:$0xff]
    %v2022 = vld [vmem:[#allocation8 + $0xe8] sm:$0xff]
    %v2023 = vld [vmem:[#allocation8 + $0xf0] sm:$0xff]
    %v2024 = vld [vmem:[#allocation8 + $0xf8] sm:$0xff]
    %v2025 = vld [vmem:[#allocation8 + $0x100] sm:$0xff]
    %v2026 = vld [vmem:[#allocation8 + $0x108] sm:$0xff]
    %v2027 = vld [vmem:[#allocation8 + $0x110] sm:$0xff]
    %v2028 = vld [vmem:[#allocation8 + $0x118] sm:$0xff]
    %v2029 = vld [vmem:[#allocation8 + $0x120] sm:$0xff]
    %v2030 = vld [vmem:[#allocation8 + $0x128] sm:$0xff]
    %v2031 = vld [vmem:[#allocation8 + $0x130] sm:$0xff]
    %v2032 = vld [vmem:[#allocation8 + $0x138] sm:$0xff]
    %v2033 = vld [vmem:[#allocation8 + $0x140] sm:$0xff]
    %v2034 = vld [vmem:[#allocation8 + $0x148] sm:$0xff]
    %v2035 = vld [vmem:[#allocation8 + $0x150] sm:$0xff]
    %v2036 = vld [vmem:[#allocation8 + $0x158] sm:$0xff]
    %v2037 = vld [vmem:[#allocation8 + $0x160] sm:$0xff]
    %v2038 = vld [vmem:[#allocation8 + $0x168] sm:$0xff]
    %v2039 = vld [vmem:[#allocation8 + $0x170] sm:$0xff]
    %v2040 = vld [vmem:[#allocation8 + $0x178] sm:$0xff]
    %v2041 = vld [vmem:[#allocation8 + $0x180] sm:$0xff]
    %v2042 = vld [vmem:[#allocation8 + $0x188] sm:$0xff]
    %v2043 = vld [vmem:[#allocation8 + $0x190] sm:$0xff]
    %v2044 = vld [vmem:[#allocation8 + $0x198] sm:$0xff]
    %v2045 = vld [vmem:[#allocation8 + $0x1a0] sm:$0xff]
    %v2046 = vld [vmem:[#allocation8 + $0x1a8] sm:$0xff]
    %v2047 = vld [vmem:[#allocation8 + $0x1b0] sm:$0xff]
    %v2048 = vld [vmem:[#allocation8 + $0x1b8] sm:$0xff]
    %v2049 = vld [vmem:[#allocation8 + $0x1c0] sm:$0xff]
    %v2050 = vld [vmem:[#allocation8 + $0x1c8] sm:$0xff]
    %v2051 = vld [vmem:[#allocation8 + $0x1d0] sm:$0xff]
    %v2052 = vld [vmem:[#allocation8 + $0x1d8] sm:$0xff]
    %v2053 = vld [vmem:[#allocation8 + $0x1e0] sm:$0xff]
    %v2054 = vld [vmem:[#allocation8 + $0x1e8] sm:$0xff]
    %v2055 = vld [vmem:[#allocation8 + $0x1f0] sm:$0xff]
    %v2056 = vld [vmem:[#allocation8 + $0x1f8] sm:$0xff]
    %v2121 = vunpack.c.l.b16 %v1993
    %v2122 = vunpack.c.h.b16 %v1993
    %v2123 = vunpack.c.l.b16 %v1994
    %v2124 = vunpack.c.h.b16 %v1994
    %v2125 = vunpack.c.l.b16 %v1995
    %v2126 = vunpack.c.h.b16 %v1995
    %v2127 = vunpack.c.l.b16 %v1996
    %v2128 = vunpack.c.h.b16 %v1996
    %v2129 = vunpack.c.l.b16 %v1997
    %v2130 = vunpack.c.h.b16 %v1997
    %v2131 = vunpack.c.l.b16 %v1998
    %v2132 = vunpack.c.h.b16 %v1998
    %v2133 = vunpack.c.l.b16 %v1999
    %v2134 = vunpack.c.h.b16 %v1999
    %v2135 = vunpack.c.l.b16 %v2000
    %v2136 = vunpack.c.h.b16 %v2000
    %v2137 = vunpack.c.l.b16 %v2001
    %v2138 = vunpack.c.h.b16 %v2001
    %v2139 = vunpack.c.l.b16 %v2002
    %v2140 = vunpack.c.h.b16 %v2002
    %v2141 = vunpack.c.l.b16 %v2003
    %v2142 = vunpack.c.h.b16 %v2003
    %v2143 = vunpack.c.l.b16 %v2004
    %v2144 = vunpack.c.h.b16 %v2004
    %v2145 = vunpack.c.l.b16 %v2005
    %v2146 = vunpack.c.h.b16 %v2005
    %v2147 = vunpack.c.l.b16 %v2006
    %v2148 = vunpack.c.h.b16 %v2006
    %v2149 = vunpack.c.l.b16 %v2007
    %v2150 = vunpack.c.h.b16 %v2007
    %v2151 = vunpack.c.l.b16 %v2008
    %v2152 = vunpack.c.h.b16 %v2008
    %v2153 = vunpack.c.l.b16 %v2009
    %v2154 = vunpack.c.h.b16 %v2009
    %v2155 = vunpack.c.l.b16 %v2010
    %v2156 = vunpack.c.h.b16 %v2010
    %v2157 = vunpack.c.l.b16 %v2011
    %v2158 = vunpack.c.h.b16 %v2011
    %v2159 = vunpack.c.l.b16 %v2012
    %v2160 = vunpack.c.h.b16 %v2012
    %v2161 = vunpack.c.l.b16 %v2013
    %v2162 = vunpack.c.h.b16 %v2013
    %v2163 = vunpack.c.l.b16 %v2014
    %v2164 = vunpack.c.h.b16 %v2014
    %v2165 = vunpack.c.l.b16 %v2015
    %v2166 = vunpack.c.h.b16 %v2015
    %v2167 = vunpack.c.l.b16 %v2016
    %v2168 = vunpack.c.h.b16 %v2016
    %v2169 = vunpack.c.l.b16 %v2017
    %v2170 = vunpack.c.h.b16 %v2017
    %v2171 = vunpack.c.l.b16 %v2018
    %v2172 = vunpack.c.h.b16 %v2018
    %v2173 = vunpack.c.l.b16 %v2019
    %v2174 = vunpack.c.h.b16 %v2019
    %v2175 = vunpack.c.l.b16 %v2020
    %v2176 = vunpack.c.h.b16 %v2020
    %v2177 = vunpack.c.l.b16 %v2021
    %v2178 = vunpack.c.h.b16 %v2021
    %v2179 = vunpack.c.l.b16 %v2022
    %v2180 = vunpack.c.h.b16 %v2022
    %v2181 = vunpack.c.l.b16 %v2023
    %v2182 = vunpack.c.h.b16 %v2023
    %v2183 = vunpack.c.l.b16 %v2024
    %v2184 = vunpack.c.h.b16 %v2024
    %v2185 = vunpack.c.l.b16 %v2025
    %v2186 = vunpack.c.h.b16 %v2025
    %v2187 = vunpack.c.l.b16 %v2026
    %v2188 = vunpack.c.h.b16 %v2026
    %v2189 = vunpack.c.l.b16 %v2027
    %v2190 = vunpack.c.h.b16 %v2027
    %v2191 = vunpack.c.l.b16 %v2028
    %v2192 = vunpack.c.h.b16 %v2028
    %v2193 = vunpack.c.l.b16 %v2029
    %v2194 = vunpack.c.h.b16 %v2029
    %v2195 = vunpack.c.l.b16 %v2030
    %v2196 = vunpack.c.h.b16 %v2030
    %v2197 = vunpack.c.l.b16 %v2031
    %v2198 = vunpack.c.h.b16 %v2031
    %v2199 = vunpack.c.l.b16 %v2032
    %v2200 = vunpack.c.h.b16 %v2032
    %v2201 = vunpack.c.l.b16 %v2033
    %v2202 = vunpack.c.h.b16 %v2033
    %v2203 = vunpack.c.l.b16 %v2034
    %v2204 = vunpack.c.h.b16 %v2034
    %v2205 = vunpack.c.l.b16 %v2035
    %v2206 = vunpack.c.h.b16 %v2035
    %v2207 = vunpack.c.l.b16 %v2036
    %v2208 = vunpack.c.h.b16 %v2036
    %v2209 = vunpack.c.l.b16 %v2037
    %v2210 = vunpack.c.h.b16 %v2037
    %v2211 = vunpack.c.l.b16 %v2038
    %v2212 = vunpack.c.h.b16 %v2038
    %v2213 = vunpack.c.l.b16 %v2039
    %v2214 = vunpack.c.h.b16 %v2039
    %v2215 = vunpack.c.l.b16 %v2040
    %v2216 = vunpack.c.h.b16 %v2040
    %v2217 = vunpack.c.l.b16 %v2041
    %v2218 = vunpack.c.h.b16 %v2041
    %v2219 = vunpack.c.l.b16 %v2042
    %v2220 = vunpack.c.h.b16 %v2042
    %v2221 = vunpack.c.l.b16 %v2043
    %v2222 = vunpack.c.h.b16 %v2043
    %v2223 = vunpack.c.l.b16 %v2044
    %v2224 = vunpack.c.h.b16 %v2044
    %v2225 = vunpack.c.l.b16 %v2045
    %v2226 = vunpack.c.h.b16 %v2045
    %v2227 = vunpack.c.l.b16 %v2046
    %v2228 = vunpack.c.h.b16 %v2046
    %v2229 = vunpack.c.l.b16 %v2047
    %v2230 = vunpack.c.h.b16 %v2047
    %v2231 = vunpack.c.l.b16 %v2048
    %v2232 = vunpack.c.h.b16 %v2048
    %v2233 = vunpack.c.l.b16 %v2049
    %v2234 = vunpack.c.h.b16 %v2049
    %v2235 = vunpack.c.l.b16 %v2050
    %v2236 = vunpack.c.h.b16 %v2050
    %v2237 = vunpack.c.l.b16 %v2051
    %v2238 = vunpack.c.h.b16 %v2051
    %v2239 = vunpack.c.l.b16 %v2052
    %v2240 = vunpack.c.h.b16 %v2052
    %v2241 = vunpack.c.l.b16 %v2053
    %v2242 = vunpack.c.h.b16 %v2053
    %v2243 = vunpack.c.l.b16 %v2054
    %v2244 = vunpack.c.h.b16 %v2054
    %v2245 = vunpack.c.l.b16 %v2055
    %v2246 = vunpack.c.h.b16 %v2055
    %v2247 = vunpack.c.l.b16 %v2056
    %v2248 = vunpack.c.h.b16 %v2056
    %v2249 = vpack.c.b16 %v2129, %v2121
    %v2250 = vpack.c.b16 %v2130, %v2122
    %v2251 = vpack.c.b16 %v2131, %v2123
    %v2252 = vpack.c.b16 %v2132, %v2124
    %v2253 = vpack.c.b16 %v2133, %v2125
    %v2254 = vpack.c.b16 %v2134, %v2126
    %v2255 = vpack.c.b16 %v2135, %v2127
    %v2256 = vpack.c.b16 %v2136, %v2128
    %v2257 = vpack.c.b16 %v2145, %v2137
    %v2258 = vpack.c.b16 %v2146, %v2138
    %v2259 = vpack.c.b16 %v2147, %v2139
    %v2260 = vpack.c.b16 %v2148, %v2140
    %v2261 = vpack.c.b16 %v2149, %v2141
    %v2262 = vpack.c.b16 %v2150, %v2142
    %v2263 = vpack.c.b16 %v2151, %v2143
    %v2264 = vpack.c.b16 %v2152, %v2144
    %v2265 = vpack.c.b16 %v2161, %v2153
    %v2266 = vpack.c.b16 %v2162, %v2154
    %v2267 = vpack.c.b16 %v2163, %v2155
    %v2268 = vpack.c.b16 %v2164, %v2156
    %v2269 = vpack.c.b16 %v2165, %v2157
    %v2270 = vpack.c.b16 %v2166, %v2158
    %v2271 = vpack.c.b16 %v2167, %v2159
    %v2272 = vpack.c.b16 %v2168, %v2160
    %v2273 = vpack.c.b16 %v2177, %v2169
    %v2274 = vpack.c.b16 %v2178, %v2170
    %v2275 = vpack.c.b16 %v2179, %v2171
    %v2276 = vpack.c.b16 %v2180, %v2172
    %v2277 = vpack.c.b16 %v2181, %v2173
    %v2278 = vpack.c.b16 %v2182, %v2174
    %v2279 = vpack.c.b16 %v2183, %v2175
    %v2280 = vpack.c.b16 %v2184, %v2176
    %v2281 = vpack.c.b16 %v2193, %v2185
    %v2282 = vpack.c.b16 %v2194, %v2186
    %v2283 = vpack.c.b16 %v2195, %v2187
    %v2284 = vpack.c.b16 %v2196, %v2188
    %v2285 = vpack.c.b16 %v2197, %v2189
    %v2286 = vpack.c.b16 %v2198, %v2190
    %v2287 = vpack.c.b16 %v2199, %v2191
    %v2288 = vpack.c.b16 %v2200, %v2192
    %v2289 = vpack.c.b16 %v2209, %v2201
    %v2290 = vpack.c.b16 %v2210, %v2202
    %v2291 = vpack.c.b16 %v2211, %v2203
    %v2292 = vpack.c.b16 %v2212, %v2204
    %v2293 = vpack.c.b16 %v2213, %v2205
    %v2294 = vpack.c.b16 %v2214, %v2206
    %v2295 = vpack.c.b16 %v2215, %v2207
    %v2296 = vpack.c.b16 %v2216, %v2208
    %v2297 = vpack.c.b16 %v2225, %v2217
    %v2298 = vpack.c.b16 %v2226, %v2218
    %v2299 = vpack.c.b16 %v2227, %v2219
    %v2300 = vpack.c.b16 %v2228, %v2220
    %v2301 = vpack.c.b16 %v2229, %v2221
    %v2302 = vpack.c.b16 %v2230, %v2222
    %v2303 = vpack.c.b16 %v2231, %v2223
    %v2304 = vpack.c.b16 %v2232, %v2224
    %v2305 = vpack.c.b16 %v2241, %v2233
    %v2306 = vpack.c.b16 %v2242, %v2234
    %v2307 = vpack.c.b16 %v2243, %v2235
    %v2308 = vpack.c.b16 %v2244, %v2236
    %v2309 = vpack.c.b16 %v2245, %v2237
    %v2310 = vpack.c.b16 %v2246, %v2238
    %v2311 = vpack.c.b16 %v2247, %v2239
    %v2312 = vpack.c.b16 %v2248, %v2240
    %2377 = vmatpush.bf16.msra.mxu0 %v2305
    %2378 = vmatpush.bf16.msra.mxu0 %v2297
    %2379 = vmatpush.bf16.msra.mxu0 %v2289
    %2380 = vmatpush.bf16.msra.mxu0 %v2281
    %2381 = vmatpush.bf16.msra.mxu0 %v2273
    %2382 = vmatpush.bf16.msra.mxu0 %v2265
    %2383 = vmatpush.bf16.msra.mxu0 %v2257
    %2384 = vmatpush.bf16.msra.mxu0 %v2249
    %2385 = vmatmul.bf16.gmra.mxu0 %v1992
    %v2386 = vpop.f32.mrf.mxu0
    %v2387 = vadd.f32 0.0, %v2386
    %v2388 = vpop.f32.mrf.mxu0
    %v2389 = vadd.f32 0.0, %v2388
    %2390 = vdwg.mxu0
    %2391 = vmatpush.bf16.msra.mxu0 %v2306
    %2392 = vmatpush.bf16.msra.mxu0 %v2298
    %2393 = vmatpush.bf16.msra.mxu0 %v2290
    %2394 = vmatpush.bf16.msra.mxu0 %v2282
    %2395 = vmatpush.bf16.msra.mxu0 %v2274
    %2396 = vmatpush.bf16.msra.mxu0 %v2266
    %2397 = vmatpush.bf16.msra.mxu0 %v2258
    %2398 = vmatpush.bf16.msra.mxu0 %v2250
    %2399 = vmatmul.bf16.gmra.mxu0 %v1992
    %v2400 = vpop.f32.mrf.mxu0
    %v2401 = vadd.f32 0.0, %v2400
    %v2402 = vpop.f32.mrf.mxu0
    %v2403 = vadd.f32 0.0, %v2402
    %2404 = vdwg.mxu0
    %2405 = vmatpush.bf16.msra.mxu0 %v2307
    %2406 = vmatpush.bf16.msra.mxu0 %v2299
    %2407 = vmatpush.bf16.msra.mxu0 %v2291
    %2408 = vmatpush.bf16.msra.mxu0 %v2283
    %2409 = vmatpush.bf16.msra.mxu0 %v2275
    %2410 = vmatpush.bf16.msra.mxu0 %v2267
    %2411 = vmatpush.bf16.msra.mxu0 %v2259
    %2412 = vmatpush.bf16.msra.mxu0 %v2251
    %2413 = vmatmul.bf16.gmra.mxu0 %v1992
    %v2414 = vpop.f32.mrf.mxu0
    %v2415 = vadd.f32 0.0, %v2414
    %v2416 = vpop.f32.mrf.mxu0
    %v2417 = vadd.f32 0.0, %v2416
    %2418 = vdwg.mxu0
    %2419 = vmatpush.bf16.msra.mxu0 %v2308
    %2420 = vmatpush.bf16.msra.mxu0 %v2300
    %2421 = vmatpush.bf16.msra.mxu0 %v2292
    %2422 = vmatpush.bf16.msra.mxu0 %v2284
    %2423 = vmatpush.bf16.msra.mxu0 %v2276
    %2424 = vmatpush.bf16.msra.mxu0 %v2268
    %2425 = vmatpush.bf16.msra.mxu0 %v2260
    %2426 = vmatpush.bf16.msra.mxu0 %v2252
    %2427 = vmatmul.bf16.gmra.mxu0 %v1992
    %v2428 = vpop.f32.mrf.mxu0
    %v2429 = vadd.f32 0.0, %v2428
    %v2430 = vpop.f32.mrf.mxu0
    %v2431 = vadd.f32 0.0, %v2430
    %2432 = vdwg.mxu0
    %2433 = vmatpush.bf16.msra.mxu0 %v2309
    %2434 = vmatpush.bf16.msra.mxu0 %v2301
    %2435 = vmatpush.bf16.msra.mxu0 %v2293
    %2436 = vmatpush.bf16.msra.mxu0 %v2285
    %2437 = vmatpush.bf16.msra.mxu0 %v2277
    %2438 = vmatpush.bf16.msra.mxu0 %v2269
    %2439 = vmatpush.bf16.msra.mxu0 %v2261
    %2440 = vmatpush.bf16.msra.mxu0 %v2253
    %2441 = vmatmul.bf16.gmra.mxu0 %v1992
    %v2442 = vpop.f32.mrf.mxu0
    %v2443 = vadd.f32 0.0, %v2442
    %v2444 = vpop.f32.mrf.mxu0
    %v2445 = vadd.f32 0.0, %v2444
    %2446 = vdwg.mxu0
    %2447 = vmatpush.bf16.msra.mxu0 %v2310
    %2448 = vmatpush.bf16.msra.mxu0 %v2302
    %2449 = vmatpush.bf16.msra.mxu0 %v2294
    %2450 = vmatpush.bf16.msra.mxu0 %v2286
    %2451 = vmatpush.bf16.msra.mxu0 %v2278
    %2452 = vmatpush.bf16.msra.mxu0 %v2270
    %2453 = vmatpush.bf16.msra.mxu0 %v2262
    %2454 = vmatpush.bf16.msra.mxu0 %v2254
    %2455 = vmatmul.bf16.gmra.mxu0 %v1992
    %v2456 = vpop.f32.mrf.mxu0
    %v2457 = vadd.f32 0.0, %v2456
    %v2458 = vpop.f32.mrf.mxu0
    %v2459 = vadd.f32 0.0, %v2458
    %2460 = vdwg.mxu0
    %2461 = vmatpush.bf16.msra.mxu0 %v2311
    %2462 = vmatpush.bf16.msra.mxu0 %v2303
    %2463 = vmatpush.bf16.msra.mxu0 %v2295
    %2464 = vmatpush.bf16.msra.mxu0 %v2287
    %2465 = vmatpush.bf16.msra.mxu0 %v2279
    %2466 = vmatpush.bf16.msra.mxu0 %v2271
    %2467 = vmatpush.bf16.msra.mxu0 %v2263
    %2468 = vmatpush.bf16.msra.mxu0 %v2255
    %2469 = vmatmul.bf16.gmra.mxu0 %v1992
    %v2470 = vpop.f32.mrf.mxu0
    %v2471 = vadd.f32 0.0, %v2470
    %v2472 = vpop.f32.mrf.mxu0
    %v2473 = vadd.f32 0.0, %v2472
    %2474 = vdwg.mxu0
    %2475 = vmatpush.bf16.msra.mxu0 %v2312
    %2476 = vmatpush.bf16.msra.mxu0 %v2304
    %2477 = vmatpush.bf16.msra.mxu0 %v2296
    %2478 = vmatpush.bf16.msra.mxu0 %v2288
    %2479 = vmatpush.bf16.msra.mxu0 %v2280
    %2480 = vmatpush.bf16.msra.mxu0 %v2272
    %2481 = vmatpush.bf16.msra.mxu0 %v2264
    %2482 = vmatpush.bf16.msra.mxu0 %v2256
    %2483 = vmatmul.bf16.gmra.mxu0 %v1992
    %v2484 = vpop.f32.mrf.mxu0
    %v2485 = vadd.f32 0.0, %v2484
    %v2486 = vpop.f32.mrf.mxu0
    %v2487 = vadd.f32 0.0, %v2486
    %2488 = vdwg.mxu0
    %v2489 = vadd.f32 %v245, %v2387
    %v2490 = vadd.f32 %v246, %v2401
    %v2491 = vadd.f32 %v247, %v2415
    %v2492 = vadd.f32 %v248, %v2429
    %v2493 = vadd.f32 %v249, %v2443
    %v2494 = vadd.f32 %v250, %v2457
    %v2495 = vadd.f32 %v251, %v2471
    %v2496 = vadd.f32 %v252, %v2485
    %v2497 = vadd.f32 %v253, %v2389
    %v2498 = vadd.f32 %v254, %v2403
    %v2499 = vadd.f32 %v255, %v2417
    %v2500 = vadd.f32 %v256, %v2431
    %v2501 = vadd.f32 %v257, %v2445
    %v2502 = vadd.f32 %v258, %v2459
    %v2503 = vadd.f32 %v259, %v2473
    %v2504 = vadd.f32 %v260, %v2487
    %v2505 = vadd.f32 %v2489, %v2490
    %v2506 = vadd.f32 %v2505, %v2491
    %v2507 = vadd.f32 %v2506, %v2492
    %v2508 = vadd.f32 %v2507, %v2493
    %v2509 = vadd.f32 %v2508, %v2494
    %v2510 = vadd.f32 %v2509, %v2495
    %v2511 = vadd.f32 %v2510, %v2496
    %2512 = vadd.xlane.f32.xlu0 %v2511
    %v2513 = vpop.xlane.xlu0 %2512
    %v2514 = vadd.f32 %v2497, %v2498
    %v2515 = vadd.f32 %v2514, %v2499
    %v2516 = vadd.f32 %v2515, %v2500
    %v2517 = vadd.f32 %v2516, %v2501
    %v2518 = vadd.f32 %v2517, %v2502
    %v2519 = vadd.f32 %v2518, %v2503
    %v2520 = vadd.f32 %v2519, %v2504
    %2521 = vadd.xlane.f32.xlu0 %v2520
    %v2522 = vpop.xlane.xlu0 %2521
    %v2523 = vrcp.pop 1024.0
    %v2524 = vmul.f32 1024.0, %v2523
    %v2525 = vsub.f32 1.0, %v2524
    %v2526 = vmul.f32 %v2523, %v2525
    %v2527 = vadd.f32 %v2523, %v2526
    %vm2528 = vweird.f32 %v2523
    %v2529 = vsel %vm2528, %v2523, %v2527
    %v2530 = vmul.f32 %v2513, %v2529
    %v2531 = vmul.f32 %v2522, %v2529
    %v2532 = vsub.f32 %v2489, %v2530
    %v2533 = vsub.f32 %v2490, %v2530
    %v2534 = vsub.f32 %v2491, %v2530
    %v2535 = vsub.f32 %v2492, %v2530
    %v2536 = vsub.f32 %v2493, %v2530
    %v2537 = vsub.f32 %v2494, %v2530
    %v2538 = vsub.f32 %v2495, %v2530
    %v2539 = vsub.f32 %v2496, %v2530
    %v2540 = vsub.f32 %v2497, %v2531
    %v2541 = vsub.f32 %v2498, %v2531
    %v2542 = vsub.f32 %v2499, %v2531
    %v2543 = vsub.f32 %v2500, %v2531
    %v2544 = vsub.f32 %v2501, %v2531
    %v2545 = vsub.f32 %v2502, %v2531
    %v2546 = vsub.f32 %v2503, %v2531
    %v2547 = vsub.f32 %v2504, %v2531
    %v2548 = vmul.f32 %v2532, %v2532
    %v2549 = vmul.f32 %v2533, %v2533
    %v2550 = vmul.f32 %v2534, %v2534
    %v2551 = vmul.f32 %v2535, %v2535
    %v2552 = vmul.f32 %v2536, %v2536
    %v2553 = vmul.f32 %v2537, %v2537
    %v2554 = vmul.f32 %v2538, %v2538
    %v2555 = vmul.f32 %v2539, %v2539
    %v2556 = vmul.f32 %v2540, %v2540
    %v2557 = vmul.f32 %v2541, %v2541
    %v2558 = vmul.f32 %v2542, %v2542
    %v2559 = vmul.f32 %v2543, %v2543
    %v2560 = vmul.f32 %v2544, %v2544
    %v2561 = vmul.f32 %v2545, %v2545
    %v2562 = vmul.f32 %v2546, %v2546
    %v2563 = vmul.f32 %v2547, %v2547
    %v2564 = vadd.f32 %v2548, %v2549
    %v2565 = vadd.f32 %v2564, %v2550
    %v2566 = vadd.f32 %v2565, %v2551
    %v2567 = vadd.f32 %v2566, %v2552
    %v2568 = vadd.f32 %v2567, %v2553
    %v2569 = vadd.f32 %v2568, %v2554
    %v2570 = vadd.f32 %v2569, %v2555
    %2571 = vadd.xlane.f32.xlu0 %v2570
    %v2572 = vpop.xlane.xlu0 %2571
    %v2573 = vadd.f32 %v2556, %v2557
    %v2574 = vadd.f32 %v2573, %v2558
    %v2575 = vadd.f32 %v2574, %v2559
    %v2576 = vadd.f32 %v2575, %v2560
    %v2577 = vadd.f32 %v2576, %v2561
    %v2578 = vadd.f32 %v2577, %v2562
    %v2579 = vadd.f32 %v2578, %v2563
    %2580 = vadd.xlane.f32.xlu0 %v2579
    %v2581 = vpop.xlane.xlu0 %2580
    %v2582 = vmul.f32 %v2572, %v2529
    %v2583 = vmul.f32 %v2581, %v2529
    %v2584 = vadd.f32 %v2582, 1e-05
    %v2585 = vadd.f32 %v2583, 1e-05
    %v2586 = vrsqrt.pop %v2584
    %v2587 = vmul.f32 %v2586, %v2584
    %v2588 = vmul.f32 %v2587, %v2586
    %v2589 = vmul.f32 0.5, %v2588
    %v2590 = vsub.f32 1.5, %v2589
    %v2591 = vmul.f32 %v2586, %v2590
    %vm2592 = vweird.f32 %v2584
    %vm2593 = vweird.f32 %v2586
    %vm2594 = vmor %vm2592, %vm2593
    %v2595 = vsel %vm2594, %v2586, %v2591
    %v2596 = vrsqrt.pop %v2585
    %v2597 = vmul.f32 %v2596, %v2585
    %v2598 = vmul.f32 %v2597, %v2596
    %v2599 = vmul.f32 0.5, %v2598
    %v2600 = vsub.f32 1.5, %v2599
    %v2601 = vmul.f32 %v2596, %v2600
    %vm2602 = vweird.f32 %v2585
    %vm2603 = vweird.f32 %v2596
    %vm2604 = vmor %vm2602, %vm2603
    %v2605 = vsel %vm2604, %v2596, %v2601
    %v2606 = vmul.f32 %v2532, %v2595
    %v2607 = vmul.f32 %v2533, %v2595
    %v2608 = vmul.f32 %v2534, %v2595
    %v2609 = vmul.f32 %v2535, %v2595
    %v2610 = vmul.f32 %v2536, %v2595
    %v2611 = vmul.f32 %v2537, %v2595
    %v2612 = vmul.f32 %v2538, %v2595
    %v2613 = vmul.f32 %v2539, %v2595
    %v2614 = vmul.f32 %v2540, %v2605
    %v2615 = vmul.f32 %v2541, %v2605
    %v2616 = vmul.f32 %v2542, %v2605
    %v2617 = vmul.f32 %v2543, %v2605
    %v2618 = vmul.f32 %v2544, %v2605
    %v2619 = vmul.f32 %v2545, %v2605
    %v2620 = vmul.f32 %v2546, %v2605
    %v2621 = vmul.f32 %v2547, %v2605
    %v2622 = vld [vmem:[#allocation16] sm:$0xff]
    %v2624 = vperm.slane %v2622, 0
    %v2625 = vperm.slane %v2622, 1
    %v2626 = vperm.slane %v2622, 2
    %v2627 = vperm.slane %v2622, 3
    %v2628 = vperm.slane %v2622, 4
    %v2629 = vperm.slane %v2622, 5
    %v2630 = vperm.slane %v2622, 6
    %v2631 = vperm.slane %v2622, 7
    %v2640 = vmul.f32 %v2606, %v2624
    %v2641 = vmul.f32 %v2607, %v2625
    %v2642 = vmul.f32 %v2608, %v2626
    %v2643 = vmul.f32 %v2609, %v2627
    %v2644 = vmul.f32 %v2610, %v2628
    %v2645 = vmul.f32 %v2611, %v2629
    %v2646 = vmul.f32 %v2612, %v2630
    %v2647 = vmul.f32 %v2613, %v2631
    %v2648 = vmul.f32 %v2614, %v2624
    %v2649 = vmul.f32 %v2615, %v2625
    %v2650 = vmul.f32 %v2616, %v2626
    %v2651 = vmul.f32 %v2617, %v2627
    %v2652 = vmul.f32 %v2618, %v2628
    %v2653 = vmul.f32 %v2619, %v2629
    %v2654 = vmul.f32 %v2620, %v2630
    %v2655 = vmul.f32 %v2621, %v2631
    %v2656 = vld [vmem:[%s9] sm:$0xff]
    %v2658 = vperm.slane %v2656, 0
    %v2659 = vperm.slane %v2656, 1
    %v2660 = vperm.slane %v2656, 2
    %v2661 = vperm.slane %v2656, 3
    %v2662 = vperm.slane %v2656, 4
    %v2663 = vperm.slane %v2656, 5
    %v2664 = vperm.slane %v2656, 6
    %v2665 = vperm.slane %v2656, 7
    %v2674 = vadd.f32 %v2640, %v2658
    %v2675 = vadd.f32 %v2641, %v2659
    %v2676 = vadd.f32 %v2642, %v2660
    %v2677 = vadd.f32 %v2643, %v2661
    %v2678 = vadd.f32 %v2644, %v2662
    %v2679 = vadd.f32 %v2645, %v2663
    %v2680 = vadd.f32 %v2646, %v2664
    %v2681 = vadd.f32 %v2647, %v2665
    %v2682 = vadd.f32 %v2648, %v2658
    %v2683 = vadd.f32 %v2649, %v2659
    %v2684 = vadd.f32 %v2650, %v2660
    %v2685 = vadd.f32 %v2651, %v2661
    %v2686 = vadd.f32 %v2652, %v2662
    %v2687 = vadd.f32 %v2653, %v2663
    %v2688 = vadd.f32 %v2654, %v2664
    %v2689 = vadd.f32 %v2655, %v2665
    %v2690 = vpack.c.bf16 %v2682, %v2674
    %v2691 = vpack.c.bf16 %v2683, %v2675
    %v2692 = vpack.c.bf16 %v2684, %v2676
    %v2693 = vpack.c.bf16 %v2685, %v2677
    %v2694 = vpack.c.bf16 %v2686, %v2678
    %v2695 = vpack.c.bf16 %v2687, %v2679
    %v2696 = vpack.c.bf16 %v2688, %v2680
    %v2697 = vpack.c.bf16 %v2689, %v2681
    %v2698 = vld [vmem:[#allocation10] sm:$0xff]
    %v2699 = vld [vmem:[#allocation10 + $0x8] sm:$0xff]
    %v2700 = vld [vmem:[#allocation10 + $0x10] sm:$0xff]
    %v2701 = vld [vmem:[#allocation10 + $0x18] sm:$0xff]
    %v2702 = vld [vmem:[#allocation10 + $0x20] sm:$0xff]
    %v2703 = vld [vmem:[#allocation10 + $0x28] sm:$0xff]
    %v2704 = vld [vmem:[#allocation10 + $0x30] sm:$0xff]
    %v2705 = vld [vmem:[#allocation10 + $0x38] sm:$0xff]
    %v2706 = vld [vmem:[#allocation10 + $0x40] sm:$0xff]
    %v2707 = vld [vmem:[#allocation10 + $0x48] sm:$0xff]
    %v2708 = vld [vmem:[#allocation10 + $0x50] sm:$0xff]
    %v2709 = vld [vmem:[#allocation10 + $0x58] sm:$0xff]
    %v2710 = vld [vmem:[#allocation10 + $0x60] sm:$0xff]
    %v2711 = vld [vmem:[#allocation10 + $0x68] sm:$0xff]
    %v2712 = vld [vmem:[#allocation10 + $0x70] sm:$0xff]
    %v2713 = vld [vmem:[#allocation10 + $0x78] sm:$0xff]
    %v2714 = vld [vmem:[#allocation10 + $0x80] sm:$0xff]
    %v2715 = vld [vmem:[#allocation10 + $0x88] sm:$0xff]
    %v2716 = vld [vmem:[#allocation10 + $0x90] sm:$0xff]
    %v2717 = vld [vmem:[#allocation10 + $0x98] sm:$0xff]
    %v2718 = vld [vmem:[#allocation10 + $0xa0] sm:$0xff]
    %v2719 = vld [vmem:[#allocation10 + $0xa8] sm:$0xff]
    %v2720 = vld [vmem:[#allocation10 + $0xb0] sm:$0xff]
    %v2721 = vld [vmem:[#allocation10 + $0xb8] sm:$0xff]
    %v2722 = vld [vmem:[#allocation10 + $0xc0] sm:$0xff]
    %v2723 = vld [vmem:[#allocation10 + $0xc8] sm:$0xff]
    %v2724 = vld [vmem:[#allocation10 + $0xd0] sm:$0xff]
    %v2725 = vld [vmem:[#allocation10 + $0xd8] sm:$0xff]
    %v2726 = vld [vmem:[#allocation10 + $0xe0] sm:$0xff]
    %v2727 = vld [vmem:[#allocation10 + $0xe8] sm:$0xff]
    %v2728 = vld [vmem:[#allocation10 + $0xf0] sm:$0xff]
    %v2729 = vld [vmem:[#allocation10 + $0xf8] sm:$0xff]
    %v2730 = vld [vmem:[#allocation10 + $0x100] sm:$0xff]
    %v2731 = vld [vmem:[#allocation10 + $0x108] sm:$0xff]
    %v2732 = vld [vmem:[#allocation10 + $0x110] sm:$0xff]
    %v2733 = vld [vmem:[#allocation10 + $0x118] sm:$0xff]
    %v2734 = vld [vmem:[#allocation10 + $0x120] sm:$0xff]
    %v2735 = vld [vmem:[#allocation10 + $0x128] sm:$0xff]
    %v2736 = vld [vmem:[#allocation10 + $0x130] sm:$0xff]
    %v2737 = vld [vmem:[#allocation10 + $0x138] sm:$0xff]
    %v2738 = vld [vmem:[#allocation10 + $0x140] sm:$0xff]
    %v2739 = vld [vmem:[#allocation10 + $0x148] sm:$0xff]
    %v2740 = vld [vmem:[#allocation10 + $0x150] sm:$0xff]
    %v2741 = vld [vmem:[#allocation10 + $0x158] sm:$0xff]
    %v2742 = vld [vmem:[#allocation10 + $0x160] sm:$0xff]
    %v2743 = vld [vmem:[#allocation10 + $0x168] sm:$0xff]
    %v2744 = vld [vmem:[#allocation10 + $0x170] sm:$0xff]
    %v2745 = vld [vmem:[#allocation10 + $0x178] sm:$0xff]
    %v2746 = vld [vmem:[#allocation10 + $0x180] sm:$0xff]
    %v2747 = vld [vmem:[#allocation10 + $0x188] sm:$0xff]
    %v2748 = vld [vmem:[#allocation10 + $0x190] sm:$0xff]
    %v2749 = vld [vmem:[#allocation10 + $0x198] sm:$0xff]
    %v2750 = vld [vmem:[#allocation10 + $0x1a0] sm:$0xff]
    %v2751 = vld [vmem:[#allocation10 + $0x1a8] sm:$0xff]
    %v2752 = vld [vmem:[#allocation10 + $0x1b0] sm:$0xff]
    %v2753 = vld [vmem:[#allocation10 + $0x1b8] sm:$0xff]
    %v2754 = vld [vmem:[#allocation10 + $0x1c0] sm:$0xff]
    %v2755 = vld [vmem:[#allocation10 + $0x1c8] sm:$0xff]
    %v2756 = vld [vmem:[#allocation10 + $0x1d0] sm:$0xff]
    %v2757 = vld [vmem:[#allocation10 + $0x1d8] sm:$0xff]
    %v2758 = vld [vmem:[#allocation10 + $0x1e0] sm:$0xff]
    %v2759 = vld [vmem:[#allocation10 + $0x1e8] sm:$0xff]
    %v2760 = vld [vmem:[#allocation10 + $0x1f0] sm:$0xff]
    %v2761 = vld [vmem:[#allocation10 + $0x1f8] sm:$0xff]
    %v2762 = vld [vmem:[#allocation10 + $0x200] sm:$0xff]
    %v2763 = vld [vmem:[#allocation10 + $0x208] sm:$0xff]
    %v2764 = vld [vmem:[#allocation10 + $0x210] sm:$0xff]
    %v2765 = vld [vmem:[#allocation10 + $0x218] sm:$0xff]
    %v2766 = vld [vmem:[#allocation10 + $0x220] sm:$0xff]
    %v2767 = vld [vmem:[#allocation10 + $0x228] sm:$0xff]
    %v2768 = vld [vmem:[#allocation10 + $0x230] sm:$0xff]
    %v2769 = vld [vmem:[#allocation10 + $0x238] sm:$0xff]
    %v2770 = vld [vmem:[#allocation10 + $0x240] sm:$0xff]
    %v2771 = vld [vmem:[#allocation10 + $0x248] sm:$0xff]
    %v2772 = vld [vmem:[#allocation10 + $0x250] sm:$0xff]
    %v2773 = vld [vmem:[#allocation10 + $0x258] sm:$0xff]
    %v2774 = vld [vmem:[#allocation10 + $0x260] sm:$0xff]
    %v2775 = vld [vmem:[#allocation10 + $0x268] sm:$0xff]
    %v2776 = vld [vmem:[#allocation10 + $0x270] sm:$0xff]
    %v2777 = vld [vmem:[#allocation10 + $0x278] sm:$0xff]
    %v2778 = vld [vmem:[#allocation10 + $0x280] sm:$0xff]
    %v2779 = vld [vmem:[#allocation10 + $0x288] sm:$0xff]
    %v2780 = vld [vmem:[#allocation10 + $0x290] sm:$0xff]
    %v2781 = vld [vmem:[#allocation10 + $0x298] sm:$0xff]
    %v2782 = vld [vmem:[#allocation10 + $0x2a0] sm:$0xff]
    %v2783 = vld [vmem:[#allocation10 + $0x2a8] sm:$0xff]
    %v2784 = vld [vmem:[#allocation10 + $0x2b0] sm:$0xff]
    %v2785 = vld [vmem:[#allocation10 + $0x2b8] sm:$0xff]
    %v2786 = vld [vmem:[#allocation10 + $0x2c0] sm:$0xff]
    %v2787 = vld [vmem:[#allocation10 + $0x2c8] sm:$0xff]
    %v2788 = vld [vmem:[#allocation10 + $0x2d0] sm:$0xff]
    %v2789 = vld [vmem:[#allocation10 + $0x2d8] sm:$0xff]
    %v2790 = vld [vmem:[#allocation10 + $0x2e0] sm:$0xff]
    %v2791 = vld [vmem:[#allocation10 + $0x2e8] sm:$0xff]
    %v2792 = vld [vmem:[#allocation10 + $0x2f0] sm:$0xff]
    %v2793 = vld [vmem:[#allocation10 + $0x2f8] sm:$0xff]
    %v2794 = vld [vmem:[#allocation10 + $0x300] sm:$0xff]
    %v2795 = vld [vmem:[#allocation10 + $0x308] sm:$0xff]
    %v2796 = vld [vmem:[#allocation10 + $0x310] sm:$0xff]
    %v2797 = vld [vmem:[#allocation10 + $0x318] sm:$0xff]
    %v2798 = vld [vmem:[#allocation10 + $0x320] sm:$0xff]
    %v2799 = vld [vmem:[#allocation10 + $0x328] sm:$0xff]
    %v2800 = vld [vmem:[#allocation10 + $0x330] sm:$0xff]
    %v2801 = vld [vmem:[#allocation10 + $0x338] sm:$0xff]
    %v2802 = vld [vmem:[#allocation10 + $0x340] sm:$0xff]
    %v2803 = vld [vmem:[#allocation10 + $0x348] sm:$0xff]
    %v2804 = vld [vmem:[#allocation10 + $0x350] sm:$0xff]
    %v2805 = vld [vmem:[#allocation10 + $0x358] sm:$0xff]
    %v2806 = vld [vmem:[#allocation10 + $0x360] sm:$0xff]
    %v2807 = vld [vmem:[#allocation10 + $0x368] sm:$0xff]
    %v2808 = vld [vmem:[#allocation10 + $0x370] sm:$0xff]
    %v2809 = vld [vmem:[#allocation10 + $0x378] sm:$0xff]
    %v2810 = vld [vmem:[#allocation10 + $0x380] sm:$0xff]
    %v2811 = vld [vmem:[#allocation10 + $0x388] sm:$0xff]
    %v2812 = vld [vmem:[#allocation10 + $0x390] sm:$0xff]
    %v2813 = vld [vmem:[#allocation10 + $0x398] sm:$0xff]
    %v2814 = vld [vmem:[#allocation10 + $0x3a0] sm:$0xff]
    %v2815 = vld [vmem:[#allocation10 + $0x3a8] sm:$0xff]
    %v2816 = vld [vmem:[#allocation10 + $0x3b0] sm:$0xff]
    %v2817 = vld [vmem:[#allocation10 + $0x3b8] sm:$0xff]
    %v2818 = vld [vmem:[#allocation10 + $0x3c0] sm:$0xff]
    %v2819 = vld [vmem:[#allocation10 + $0x3c8] sm:$0xff]
    %v2820 = vld [vmem:[#allocation10 + $0x3d0] sm:$0xff]
    %v2821 = vld [vmem:[#allocation10 + $0x3d8] sm:$0xff]
    %v2822 = vld [vmem:[#allocation10 + $0x3e0] sm:$0xff]
    %v2823 = vld [vmem:[#allocation10 + $0x3e8] sm:$0xff]
    %v2824 = vld [vmem:[#allocation10 + $0x3f0] sm:$0xff]
    %v2825 = vld [vmem:[#allocation10 + $0x3f8] sm:$0xff]
    %v2826 = vld [vmem:[#allocation10 + $0x400] sm:$0xff]
    %v2827 = vld [vmem:[#allocation10 + $0x408] sm:$0xff]
    %v2828 = vld [vmem:[#allocation10 + $0x410] sm:$0xff]
    %v2829 = vld [vmem:[#allocation10 + $0x418] sm:$0xff]
    %v2830 = vld [vmem:[#allocation10 + $0x420] sm:$0xff]
    %v2831 = vld [vmem:[#allocation10 + $0x428] sm:$0xff]
    %v2832 = vld [vmem:[#allocation10 + $0x430] sm:$0xff]
    %v2833 = vld [vmem:[#allocation10 + $0x438] sm:$0xff]
    %v2834 = vld [vmem:[#allocation10 + $0x440] sm:$0xff]
    %v2835 = vld [vmem:[#allocation10 + $0x448] sm:$0xff]
    %v2836 = vld [vmem:[#allocation10 + $0x450] sm:$0xff]
    %v2837 = vld [vmem:[#allocation10 + $0x458] sm:$0xff]
    %v2838 = vld [vmem:[#allocation10 + $0x460] sm:$0xff]
    %v2839 = vld [vmem:[#allocation10 + $0x468] sm:$0xff]
    %v2840 = vld [vmem:[#allocation10 + $0x470] sm:$0xff]
    %v2841 = vld [vmem:[#allocation10 + $0x478] sm:$0xff]
    %v2842 = vld [vmem:[#allocation10 + $0x480] sm:$0xff]
    %v2843 = vld [vmem:[#allocation10 + $0x488] sm:$0xff]
    %v2844 = vld [vmem:[#allocation10 + $0x490] sm:$0xff]
    %v2845 = vld [vmem:[#allocation10 + $0x498] sm:$0xff]
    %v2846 = vld [vmem:[#allocation10 + $0x4a0] sm:$0xff]
    %v2847 = vld [vmem:[#allocation10 + $0x4a8] sm:$0xff]
    %v2848 = vld [vmem:[#allocation10 + $0x4b0] sm:$0xff]
    %v2849 = vld [vmem:[#allocation10 + $0x4b8] sm:$0xff]
    %v2850 = vld [vmem:[#allocation10 + $0x4c0] sm:$0xff]
    %v2851 = vld [vmem:[#allocation10 + $0x4c8] sm:$0xff]
    %v2852 = vld [vmem:[#allocation10 + $0x4d0] sm:$0xff]
    %v2853 = vld [vmem:[#allocation10 + $0x4d8] sm:$0xff]
    %v2854 = vld [vmem:[#allocation10 + $0x4e0] sm:$0xff]
    %v2855 = vld [vmem:[#allocation10 + $0x4e8] sm:$0xff]
    %v2856 = vld [vmem:[#allocation10 + $0x4f0] sm:$0xff]
    %v2857 = vld [vmem:[#allocation10 + $0x4f8] sm:$0xff]
    %v2858 = vld [vmem:[#allocation10 + $0x500] sm:$0xff]
    %v2859 = vld [vmem:[#allocation10 + $0x508] sm:$0xff]
    %v2860 = vld [vmem:[#allocation10 + $0x510] sm:$0xff]
    %v2861 = vld [vmem:[#allocation10 + $0x518] sm:$0xff]
    %v2862 = vld [vmem:[#allocation10 + $0x520] sm:$0xff]
    %v2863 = vld [vmem:[#allocation10 + $0x528] sm:$0xff]
    %v2864 = vld [vmem:[#allocation10 + $0x530] sm:$0xff]
    %v2865 = vld [vmem:[#allocation10 + $0x538] sm:$0xff]
    %v2866 = vld [vmem:[#allocation10 + $0x540] sm:$0xff]
    %v2867 = vld [vmem:[#allocation10 + $0x548] sm:$0xff]
    %v2868 = vld [vmem:[#allocation10 + $0x550] sm:$0xff]
    %v2869 = vld [vmem:[#allocation10 + $0x558] sm:$0xff]
    %v2870 = vld [vmem:[#allocation10 + $0x560] sm:$0xff]
    %v2871 = vld [vmem:[#allocation10 + $0x568] sm:$0xff]
    %v2872 = vld [vmem:[#allocation10 + $0x570] sm:$0xff]
    %v2873 = vld [vmem:[#allocation10 + $0x578] sm:$0xff]
    %v2874 = vld [vmem:[#allocation10 + $0x580] sm:$0xff]
    %v2875 = vld [vmem:[#allocation10 + $0x588] sm:$0xff]
    %v2876 = vld [vmem:[#allocation10 + $0x590] sm:$0xff]
    %v2877 = vld [vmem:[#allocation10 + $0x598] sm:$0xff]
    %v2878 = vld [vmem:[#allocation10 + $0x5a0] sm:$0xff]
    %v2879 = vld [vmem:[#allocation10 + $0x5a8] sm:$0xff]
    %v2880 = vld [vmem:[#allocation10 + $0x5b0] sm:$0xff]
    %v2881 = vld [vmem:[#allocation10 + $0x5b8] sm:$0xff]
    %v2882 = vld [vmem:[#allocation10 + $0x5c0] sm:$0xff]
    %v2883 = vld [vmem:[#allocation10 + $0x5c8] sm:$0xff]
    %v2884 = vld [vmem:[#allocation10 + $0x5d0] sm:$0xff]
    %v2885 = vld [vmem:[#allocation10 + $0x5d8] sm:$0xff]
    %v2886 = vld [vmem:[#allocation10 + $0x5e0] sm:$0xff]
    %v2887 = vld [vmem:[#allocation10 + $0x5e8] sm:$0xff]
    %v2888 = vld [vmem:[#allocation10 + $0x5f0] sm:$0xff]
    %v2889 = vld [vmem:[#allocation10 + $0x5f8] sm:$0xff]
    %v2890 = vld [vmem:[#allocation10 + $0x600] sm:$0xff]
    %v2891 = vld [vmem:[#allocation10 + $0x608] sm:$0xff]
    %v2892 = vld [vmem:[#allocation10 + $0x610] sm:$0xff]
    %v2893 = vld [vmem:[#allocation10 + $0x618] sm:$0xff]
    %v2894 = vld [vmem:[#allocation10 + $0x620] sm:$0xff]
    %v2895 = vld [vmem:[#allocation10 + $0x628] sm:$0xff]
    %v2896 = vld [vmem:[#allocation10 + $0x630] sm:$0xff]
    %v2897 = vld [vmem:[#allocation10 + $0x638] sm:$0xff]
    %v2898 = vld [vmem:[#allocation10 + $0x640] sm:$0xff]
    %v2899 = vld [vmem:[#allocation10 + $0x648] sm:$0xff]
    %v2900 = vld [vmem:[#allocation10 + $0x650] sm:$0xff]
    %v2901 = vld [vmem:[#allocation10 + $0x658] sm:$0xff]
    %v2902 = vld [vmem:[#allocation10 + $0x660] sm:$0xff]
    %v2903 = vld [vmem:[#allocation10 + $0x668] sm:$0xff]
    %v2904 = vld [vmem:[#allocation10 + $0x670] sm:$0xff]
    %v2905 = vld [vmem:[#allocation10 + $0x678] sm:$0xff]
    %v2906 = vld [vmem:[#allocation10 + $0x680] sm:$0xff]
    %v2907 = vld [vmem:[#allocation10 + $0x688] sm:$0xff]
    %v2908 = vld [vmem:[#allocation10 + $0x690] sm:$0xff]
    %v2909 = vld [vmem:[#allocation10 + $0x698] sm:$0xff]
    %v2910 = vld [vmem:[#allocation10 + $0x6a0] sm:$0xff]
    %v2911 = vld [vmem:[#allocation10 + $0x6a8] sm:$0xff]
    %v2912 = vld [vmem:[#allocation10 + $0x6b0] sm:$0xff]
    %v2913 = vld [vmem:[#allocation10 + $0x6b8] sm:$0xff]
    %v2914 = vld [vmem:[#allocation10 + $0x6c0] sm:$0xff]
    %v2915 = vld [vmem:[#allocation10 + $0x6c8] sm:$0xff]
    %v2916 = vld [vmem:[#allocation10 + $0x6d0] sm:$0xff]
    %v2917 = vld [vmem:[#allocation10 + $0x6d8] sm:$0xff]
    %v2918 = vld [vmem:[#allocation10 + $0x6e0] sm:$0xff]
    %v2919 = vld [vmem:[#allocation10 + $0x6e8] sm:$0xff]
    %v2920 = vld [vmem:[#allocation10 + $0x6f0] sm:$0xff]
    %v2921 = vld [vmem:[#allocation10 + $0x6f8] sm:$0xff]
    %v2922 = vld [vmem:[#allocation10 + $0x700] sm:$0xff]
    %v2923 = vld [vmem:[#allocation10 + $0x708] sm:$0xff]
    %v2924 = vld [vmem:[#allocation10 + $0x710] sm:$0xff]
    %v2925 = vld [vmem:[#allocation10 + $0x718] sm:$0xff]
    %v2926 = vld [vmem:[#allocation10 + $0x720] sm:$0xff]
    %v2927 = vld [vmem:[#allocation10 + $0x728] sm:$0xff]
    %v2928 = vld [vmem:[#allocation10 + $0x730] sm:$0xff]
    %v2929 = vld [vmem:[#allocation10 + $0x738] sm:$0xff]
    %v2930 = vld [vmem:[#allocation10 + $0x740] sm:$0xff]
    %v2931 = vld [vmem:[#allocation10 + $0x748] sm:$0xff]
    %v2932 = vld [vmem:[#allocation10 + $0x750] sm:$0xff]
    %v2933 = vld [vmem:[#allocation10 + $0x758] sm:$0xff]
    %v2934 = vld [vmem:[#allocation10 + $0x760] sm:$0xff]
    %v2935 = vld [vmem:[#allocation10 + $0x768] sm:$0xff]
    %v2936 = vld [vmem:[#allocation10 + $0x770] sm:$0xff]
    %v2937 = vld [vmem:[#allocation10 + $0x778] sm:$0xff]
    %v2938 = vld [vmem:[#allocation10 + $0x780] sm:$0xff]
    %v2939 = vld [vmem:[#allocation10 + $0x788] sm:$0xff]
    %v2940 = vld [vmem:[#allocation10 + $0x790] sm:$0xff]
    %v2941 = vld [vmem:[#allocation10 + $0x798] sm:$0xff]
    %v2942 = vld [vmem:[#allocation10 + $0x7a0] sm:$0xff]
    %v2943 = vld [vmem:[#allocation10 + $0x7a8] sm:$0xff]
    %v2944 = vld [vmem:[#allocation10 + $0x7b0] sm:$0xff]
    %v2945 = vld [vmem:[#allocation10 + $0x7b8] sm:$0xff]
    %v2946 = vld [vmem:[#allocation10 + $0x7c0] sm:$0xff]
    %v2947 = vld [vmem:[#allocation10 + $0x7c8] sm:$0xff]
    %v2948 = vld [vmem:[#allocation10 + $0x7d0] sm:$0xff]
    %v2949 = vld [vmem:[#allocation10 + $0x7d8] sm:$0xff]
    %v2950 = vld [vmem:[#allocation10 + $0x7e0] sm:$0xff]
    %v2951 = vld [vmem:[#allocation10 + $0x7e8] sm:$0xff]
    %v2952 = vld [vmem:[#allocation10 + $0x7f0] sm:$0xff]
    %v2953 = vld [vmem:[#allocation10 + $0x7f8] sm:$0xff]
    %v2954 = vld [vmem:[#allocation11] sm:$0xf]
    %v2956 = vperm.slane %v2954, 0
    %v2957 = vperm.slane %v2954, 1
    %v2958 = vperm.slane %v2954, 2
    %v2959 = vperm.slane %v2954, 3
    %v3220 = vunpack.c.l.b16 %v2698
    %v3221 = vunpack.c.h.b16 %v2698
    %v3222 = vunpack.c.l.b16 %v2699
    %v3223 = vunpack.c.h.b16 %v2699
    %v3224 = vunpack.c.l.b16 %v2700
    %v3225 = vunpack.c.h.b16 %v2700
    %v3226 = vunpack.c.l.b16 %v2701
    %v3227 = vunpack.c.h.b16 %v2701
    %v3228 = vunpack.c.l.b16 %v2702
    %v3229 = vunpack.c.h.b16 %v2702
    %v3230 = vunpack.c.l.b16 %v2703
    %v3231 = vunpack.c.h.b16 %v2703
    %v3232 = vunpack.c.l.b16 %v2704
    %v3233 = vunpack.c.h.b16 %v2704
    %v3234 = vunpack.c.l.b16 %v2705
    %v3235 = vunpack.c.h.b16 %v2705
    %v3236 = vunpack.c.l.b16 %v2706
    %v3237 = vunpack.c.h.b16 %v2706
    %v3238 = vunpack.c.l.b16 %v2707
    %v3239 = vunpack.c.h.b16 %v2707
    %v3240 = vunpack.c.l.b16 %v2708
    %v3241 = vunpack.c.h.b16 %v2708
    %v3242 = vunpack.c.l.b16 %v2709
    %v3243 = vunpack.c.h.b16 %v2709
    %v3244 = vunpack.c.l.b16 %v2710
    %v3245 = vunpack.c.h.b16 %v2710
    %v3246 = vunpack.c.l.b16 %v2711
    %v3247 = vunpack.c.h.b16 %v2711
    %v3248 = vunpack.c.l.b16 %v2712
    %v3249 = vunpack.c.h.b16 %v2712
    %v3250 = vunpack.c.l.b16 %v2713
    %v3251 = vunpack.c.h.b16 %v2713
    %v3252 = vunpack.c.l.b16 %v2714
    %v3253 = vunpack.c.h.b16 %v2714
    %v3254 = vunpack.c.l.b16 %v2715
    %v3255 = vunpack.c.h.b16 %v2715
    %v3256 = vunpack.c.l.b16 %v2716
    %v3257 = vunpack.c.h.b16 %v2716
    %v3258 = vunpack.c.l.b16 %v2717
    %v3259 = vunpack.c.h.b16 %v2717
    %v3260 = vunpack.c.l.b16 %v2718
    %v3261 = vunpack.c.h.b16 %v2718
    %v3262 = vunpack.c.l.b16 %v2719
    %v3263 = vunpack.c.h.b16 %v2719
    %v3264 = vunpack.c.l.b16 %v2720
    %v3265 = vunpack.c.h.b16 %v2720
    %v3266 = vunpack.c.l.b16 %v2721
    %v3267 = vunpack.c.h.b16 %v2721
    %v3268 = vunpack.c.l.b16 %v2722
    %v3269 = vunpack.c.h.b16 %v2722
    %v3270 = vunpack.c.l.b16 %v2723
    %v3271 = vunpack.c.h.b16 %v2723
    %v3272 = vunpack.c.l.b16 %v2724
    %v3273 = vunpack.c.h.b16 %v2724
    %v3274 = vunpack.c.l.b16 %v2725
    %v3275 = vunpack.c.h.b16 %v2725
    %v3276 = vunpack.c.l.b16 %v2726
    %v3277 = vunpack.c.h.b16 %v2726
    %v3278 = vunpack.c.l.b16 %v2727
    %v3279 = vunpack.c.h.b16 %v2727
    %v3280 = vunpack.c.l.b16 %v2728
    %v3281 = vunpack.c.h.b16 %v2728
    %v3282 = vunpack.c.l.b16 %v2729
    %v3283 = vunpack.c.h.b16 %v2729
    %v3284 = vunpack.c.l.b16 %v2730
    %v3285 = vunpack.c.h.b16 %v2730
    %v3286 = vunpack.c.l.b16 %v2731
    %v3287 = vunpack.c.h.b16 %v2731
    %v3288 = vunpack.c.l.b16 %v2732
    %v3289 = vunpack.c.h.b16 %v2732
    %v3290 = vunpack.c.l.b16 %v2733
    %v3291 = vunpack.c.h.b16 %v2733
    %v3292 = vunpack.c.l.b16 %v2734
    %v3293 = vunpack.c.h.b16 %v2734
    %v3294 = vunpack.c.l.b16 %v2735
    %v3295 = vunpack.c.h.b16 %v2735
    %v3296 = vunpack.c.l.b16 %v2736
    %v3297 = vunpack.c.h.b16 %v2736
    %v3298 = vunpack.c.l.b16 %v2737
    %v3299 = vunpack.c.h.b16 %v2737
    %v3300 = vunpack.c.l.b16 %v2738
    %v3301 = vunpack.c.h.b16 %v2738
    %v3302 = vunpack.c.l.b16 %v2739
    %v3303 = vunpack.c.h.b16 %v2739
    %v3304 = vunpack.c.l.b16 %v2740
    %v3305 = vunpack.c.h.b16 %v2740
    %v3306 = vunpack.c.l.b16 %v2741
    %v3307 = vunpack.c.h.b16 %v2741
    %v3308 = vunpack.c.l.b16 %v2742
    %v3309 = vunpack.c.h.b16 %v2742
    %v3310 = vunpack.c.l.b16 %v2743
    %v3311 = vunpack.c.h.b16 %v2743
    %v3312 = vunpack.c.l.b16 %v2744
    %v3313 = vunpack.c.h.b16 %v2744
    %v3314 = vunpack.c.l.b16 %v2745
    %v3315 = vunpack.c.h.b16 %v2745
    %v3316 = vunpack.c.l.b16 %v2746
    %v3317 = vunpack.c.h.b16 %v2746
    %v3318 = vunpack.c.l.b16 %v2747
    %v3319 = vunpack.c.h.b16 %v2747
    %v3320 = vunpack.c.l.b16 %v2748
    %v3321 = vunpack.c.h.b16 %v2748
    %v3322 = vunpack.c.l.b16 %v2749
    %v3323 = vunpack.c.h.b16 %v2749
    %v3324 = vunpack.c.l.b16 %v2750
    %v3325 = vunpack.c.h.b16 %v2750
    %v3326 = vunpack.c.l.b16 %v2751
    %v3327 = vunpack.c.h.b16 %v2751
    %v3328 = vunpack.c.l.b16 %v2752
    %v3329 = vunpack.c.h.b16 %v2752
    %v3330 = vunpack.c.l.b16 %v2753
    %v3331 = vunpack.c.h.b16 %v2753
    %v3332 = vunpack.c.l.b16 %v2754
    %v3333 = vunpack.c.h.b16 %v2754
    %v3334 = vunpack.c.l.b16 %v2755
    %v3335 = vunpack.c.h.b16 %v2755
    %v3336 = vunpack.c.l.b16 %v2756
    %v3337 = vunpack.c.h.b16 %v2756
    %v3338 = vunpack.c.l.b16 %v2757
    %v3339 = vunpack.c.h.b16 %v2757
    %v3340 = vunpack.c.l.b16 %v2758
    %v3341 = vunpack.c.h.b16 %v2758
    %v3342 = vunpack.c.l.b16 %v2759
    %v3343 = vunpack.c.h.b16 %v2759
    %v3344 = vunpack.c.l.b16 %v2760
    %v3345 = vunpack.c.h.b16 %v2760
    %v3346 = vunpack.c.l.b16 %v2761
    %v3347 = vunpack.c.h.b16 %v2761
    %v3348 = vunpack.c.l.b16 %v2762
    %v3349 = vunpack.c.h.b16 %v2762
    %v3350 = vunpack.c.l.b16 %v2763
    %v3351 = vunpack.c.h.b16 %v2763
    %v3352 = vunpack.c.l.b16 %v2764
    %v3353 = vunpack.c.h.b16 %v2764
    %v3354 = vunpack.c.l.b16 %v2765
    %v3355 = vunpack.c.h.b16 %v2765
    %v3356 = vunpack.c.l.b16 %v2766
    %v3357 = vunpack.c.h.b16 %v2766
    %v3358 = vunpack.c.l.b16 %v2767
    %v3359 = vunpack.c.h.b16 %v2767
    %v3360 = vunpack.c.l.b16 %v2768
    %v3361 = vunpack.c.h.b16 %v2768
    %v3362 = vunpack.c.l.b16 %v2769
    %v3363 = vunpack.c.h.b16 %v2769
    %v3364 = vunpack.c.l.b16 %v2770
    %v3365 = vunpack.c.h.b16 %v2770
    %v3366 = vunpack.c.l.b16 %v2771
    %v3367 = vunpack.c.h.b16 %v2771
    %v3368 = vunpack.c.l.b16 %v2772
    %v3369 = vunpack.c.h.b16 %v2772
    %v3370 = vunpack.c.l.b16 %v2773
    %v3371 = vunpack.c.h.b16 %v2773
    %v3372 = vunpack.c.l.b16 %v2774
    %v3373 = vunpack.c.h.b16 %v2774
    %v3374 = vunpack.c.l.b16 %v2775
    %v3375 = vunpack.c.h.b16 %v2775
    %v3376 = vunpack.c.l.b16 %v2776
    %v3377 = vunpack.c.h.b16 %v2776
    %v3378 = vunpack.c.l.b16 %v2777
    %v3379 = vunpack.c.h.b16 %v2777
    %v3380 = vunpack.c.l.b16 %v2778
    %v3381 = vunpack.c.h.b16 %v2778
    %v3382 = vunpack.c.l.b16 %v2779
    %v3383 = vunpack.c.h.b16 %v2779
    %v3384 = vunpack.c.l.b16 %v2780
    %v3385 = vunpack.c.h.b16 %v2780
    %v3386 = vunpack.c.l.b16 %v2781
    %v3387 = vunpack.c.h.b16 %v2781
    %v3388 = vunpack.c.l.b16 %v2782
    %v3389 = vunpack.c.h.b16 %v2782
    %v3390 = vunpack.c.l.b16 %v2783
    %v3391 = vunpack.c.h.b16 %v2783
    %v3392 = vunpack.c.l.b16 %v2784
    %v3393 = vunpack.c.h.b16 %v2784
    %v3394 = vunpack.c.l.b16 %v2785
    %v3395 = vunpack.c.h.b16 %v2785
    %v3396 = vunpack.c.l.b16 %v2786
    %v3397 = vunpack.c.h.b16 %v2786
    %v3398 = vunpack.c.l.b16 %v2787
    %v3399 = vunpack.c.h.b16 %v2787
    %v3400 = vunpack.c.l.b16 %v2788
    %v3401 = vunpack.c.h.b16 %v2788
    %v3402 = vunpack.c.l.b16 %v2789
    %v3403 = vunpack.c.h.b16 %v2789
    %v3404 = vunpack.c.l.b16 %v2790
    %v3405 = vunpack.c.h.b16 %v2790
    %v3406 = vunpack.c.l.b16 %v2791
    %v3407 = vunpack.c.h.b16 %v2791
    %v3408 = vunpack.c.l.b16 %v2792
    %v3409 = vunpack.c.h.b16 %v2792
    %v3410 = vunpack.c.l.b16 %v2793
    %v3411 = vunpack.c.h.b16 %v2793
    %v3412 = vunpack.c.l.b16 %v2794
    %v3413 = vunpack.c.h.b16 %v2794
    %v3414 = vunpack.c.l.b16 %v2795
    %v3415 = vunpack.c.h.b16 %v2795
    %v3416 = vunpack.c.l.b16 %v2796
    %v3417 = vunpack.c.h.b16 %v2796
    %v3418 = vunpack.c.l.b16 %v2797
    %v3419 = vunpack.c.h.b16 %v2797
    %v3420 = vunpack.c.l.b16 %v2798
    %v3421 = vunpack.c.h.b16 %v2798
    %v3422 = vunpack.c.l.b16 %v2799
    %v3423 = vunpack.c.h.b16 %v2799
    %v3424 = vunpack.c.l.b16 %v2800
    %v3425 = vunpack.c.h.b16 %v2800
    %v3426 = vunpack.c.l.b16 %v2801
    %v3427 = vunpack.c.h.b16 %v2801
    %v3428 = vunpack.c.l.b16 %v2802
    %v3429 = vunpack.c.h.b16 %v2802
    %v3430 = vunpack.c.l.b16 %v2803
    %v3431 = vunpack.c.h.b16 %v2803
    %v3432 = vunpack.c.l.b16 %v2804
    %v3433 = vunpack.c.h.b16 %v2804
    %v3434 = vunpack.c.l.b16 %v2805
    %v3435 = vunpack.c.h.b16 %v2805
    %v3436 = vunpack.c.l.b16 %v2806
    %v3437 = vunpack.c.h.b16 %v2806
    %v3438 = vunpack.c.l.b16 %v2807
    %v3439 = vunpack.c.h.b16 %v2807
    %v3440 = vunpack.c.l.b16 %v2808
    %v3441 = vunpack.c.h.b16 %v2808
    %v3442 = vunpack.c.l.b16 %v2809
    %v3443 = vunpack.c.h.b16 %v2809
    %v3444 = vunpack.c.l.b16 %v2810
    %v3445 = vunpack.c.h.b16 %v2810
    %v3446 = vunpack.c.l.b16 %v2811
    %v3447 = vunpack.c.h.b16 %v2811
    %v3448 = vunpack.c.l.b16 %v2812
    %v3449 = vunpack.c.h.b16 %v2812
    %v3450 = vunpack.c.l.b16 %v2813
    %v3451 = vunpack.c.h.b16 %v2813
    %v3452 = vunpack.c.l.b16 %v2814
    %v3453 = vunpack.c.h.b16 %v2814
    %v3454 = vunpack.c.l.b16 %v2815
    %v3455 = vunpack.c.h.b16 %v2815
    %v3456 = vunpack.c.l.b16 %v2816
    %v3457 = vunpack.c.h.b16 %v2816
    %v3458 = vunpack.c.l.b16 %v2817
    %v3459 = vunpack.c.h.b16 %v2817
    %v3460 = vunpack.c.l.b16 %v2818
    %v3461 = vunpack.c.h.b16 %v2818
    %v3462 = vunpack.c.l.b16 %v2819
    %v3463 = vunpack.c.h.b16 %v2819
    %v3464 = vunpack.c.l.b16 %v2820
    %v3465 = vunpack.c.h.b16 %v2820
    %v3466 = vunpack.c.l.b16 %v2821
    %v3467 = vunpack.c.h.b16 %v2821
    %v3468 = vunpack.c.l.b16 %v2822
    %v3469 = vunpack.c.h.b16 %v2822
    %v3470 = vunpack.c.l.b16 %v2823
    %v3471 = vunpack.c.h.b16 %v2823
    %v3472 = vunpack.c.l.b16 %v2824
    %v3473 = vunpack.c.h.b16 %v2824
    %v3474 = vunpack.c.l.b16 %v2825
    %v3475 = vunpack.c.h.b16 %v2825
    %v3476 = vunpack.c.l.b16 %v2826
    %v3477 = vunpack.c.h.b16 %v2826
    %v3478 = vunpack.c.l.b16 %v2827
    %v3479 = vunpack.c.h.b16 %v2827
    %v3480 = vunpack.c.l.b16 %v2828
    %v3481 = vunpack.c.h.b16 %v2828
    %v3482 = vunpack.c.l.b16 %v2829
    %v3483 = vunpack.c.h.b16 %v2829
    %v3484 = vunpack.c.l.b16 %v2830
    %v3485 = vunpack.c.h.b16 %v2830
    %v3486 = vunpack.c.l.b16 %v2831
    %v3487 = vunpack.c.h.b16 %v2831
    %v3488 = vunpack.c.l.b16 %v2832
    %v3489 = vunpack.c.h.b16 %v2832
    %v3490 = vunpack.c.l.b16 %v2833
    %v3491 = vunpack.c.h.b16 %v2833
    %v3492 = vunpack.c.l.b16 %v2834
    %v3493 = vunpack.c.h.b16 %v2834
    %v3494 = vunpack.c.l.b16 %v2835
    %v3495 = vunpack.c.h.b16 %v2835
    %v3496 = vunpack.c.l.b16 %v2836
    %v3497 = vunpack.c.h.b16 %v2836
    %v3498 = vunpack.c.l.b16 %v2837
    %v3499 = vunpack.c.h.b16 %v2837
    %v3500 = vunpack.c.l.b16 %v2838
    %v3501 = vunpack.c.h.b16 %v2838
    %v3502 = vunpack.c.l.b16 %v2839
    %v3503 = vunpack.c.h.b16 %v2839
    %v3504 = vunpack.c.l.b16 %v2840
    %v3505 = vunpack.c.h.b16 %v2840
    %v3506 = vunpack.c.l.b16 %v2841
    %v3507 = vunpack.c.h.b16 %v2841
    %v3508 = vunpack.c.l.b16 %v2842
    %v3509 = vunpack.c.h.b16 %v2842
    %v3510 = vunpack.c.l.b16 %v2843
    %v3511 = vunpack.c.h.b16 %v2843
    %v3512 = vunpack.c.l.b16 %v2844
    %v3513 = vunpack.c.h.b16 %v2844
    %v3514 = vunpack.c.l.b16 %v2845
    %v3515 = vunpack.c.h.b16 %v2845
    %v3516 = vunpack.c.l.b16 %v2846
    %v3517 = vunpack.c.h.b16 %v2846
    %v3518 = vunpack.c.l.b16 %v2847
    %v3519 = vunpack.c.h.b16 %v2847
    %v3520 = vunpack.c.l.b16 %v2848
    %v3521 = vunpack.c.h.b16 %v2848
    %v3522 = vunpack.c.l.b16 %v2849
    %v3523 = vunpack.c.h.b16 %v2849
    %v3524 = vunpack.c.l.b16 %v2850
    %v3525 = vunpack.c.h.b16 %v2850
    %v3526 = vunpack.c.l.b16 %v2851
    %v3527 = vunpack.c.h.b16 %v2851
    %v3528 = vunpack.c.l.b16 %v2852
    %v3529 = vunpack.c.h.b16 %v2852
    %v3530 = vunpack.c.l.b16 %v2853
    %v3531 = vunpack.c.h.b16 %v2853
    %v3532 = vunpack.c.l.b16 %v2854
    %v3533 = vunpack.c.h.b16 %v2854
    %v3534 = vunpack.c.l.b16 %v2855
    %v3535 = vunpack.c.h.b16 %v2855
    %v3536 = vunpack.c.l.b16 %v2856
    %v3537 = vunpack.c.h.b16 %v2856
    %v3538 = vunpack.c.l.b16 %v2857
    %v3539 = vunpack.c.h.b16 %v2857
    %v3540 = vunpack.c.l.b16 %v2858
    %v3541 = vunpack.c.h.b16 %v2858
    %v3542 = vunpack.c.l.b16 %v2859
    %v3543 = vunpack.c.h.b16 %v2859
    %v3544 = vunpack.c.l.b16 %v2860
    %v3545 = vunpack.c.h.b16 %v2860
    %v3546 = vunpack.c.l.b16 %v2861
    %v3547 = vunpack.c.h.b16 %v2861
    %v3548 = vunpack.c.l.b16 %v2862
    %v3549 = vunpack.c.h.b16 %v2862
    %v3550 = vunpack.c.l.b16 %v2863
    %v3551 = vunpack.c.h.b16 %v2863
    %v3552 = vunpack.c.l.b16 %v2864
    %v3553 = vunpack.c.h.b16 %v2864
    %v3554 = vunpack.c.l.b16 %v2865
    %v3555 = vunpack.c.h.b16 %v2865
    %v3556 = vunpack.c.l.b16 %v2866
    %v3557 = vunpack.c.h.b16 %v2866
    %v3558 = vunpack.c.l.b16 %v2867
    %v3559 = vunpack.c.h.b16 %v2867
    %v3560 = vunpack.c.l.b16 %v2868
    %v3561 = vunpack.c.h.b16 %v2868
    %v3562 = vunpack.c.l.b16 %v2869
    %v3563 = vunpack.c.h.b16 %v2869
    %v3564 = vunpack.c.l.b16 %v2870
    %v3565 = vunpack.c.h.b16 %v2870
    %v3566 = vunpack.c.l.b16 %v2871
    %v3567 = vunpack.c.h.b16 %v2871
    %v3568 = vunpack.c.l.b16 %v2872
    %v3569 = vunpack.c.h.b16 %v2872
    %v3570 = vunpack.c.l.b16 %v2873
    %v3571 = vunpack.c.h.b16 %v2873
    %v3572 = vunpack.c.l.b16 %v2874
    %v3573 = vunpack.c.h.b16 %v2874
    %v3574 = vunpack.c.l.b16 %v2875
    %v3575 = vunpack.c.h.b16 %v2875
    %v3576 = vunpack.c.l.b16 %v2876
    %v3577 = vunpack.c.h.b16 %v2876
    %v3578 = vunpack.c.l.b16 %v2877
    %v3579 = vunpack.c.h.b16 %v2877
    %v3580 = vunpack.c.l.b16 %v2878
    %v3581 = vunpack.c.h.b16 %v2878
    %v3582 = vunpack.c.l.b16 %v2879
    %v3583 = vunpack.c.h.b16 %v2879
    %v3584 = vunpack.c.l.b16 %v2880
    %v3585 = vunpack.c.h.b16 %v2880
    %v3586 = vunpack.c.l.b16 %v2881
    %v3587 = vunpack.c.h.b16 %v2881
    %v3588 = vunpack.c.l.b16 %v2882
    %v3589 = vunpack.c.h.b16 %v2882
    %v3590 = vunpack.c.l.b16 %v2883
    %v3591 = vunpack.c.h.b16 %v2883
    %v3592 = vunpack.c.l.b16 %v2884
    %v3593 = vunpack.c.h.b16 %v2884
    %v3594 = vunpack.c.l.b16 %v2885
    %v3595 = vunpack.c.h.b16 %v2885
    %v3596 = vunpack.c.l.b16 %v2886
    %v3597 = vunpack.c.h.b16 %v2886
    %v3598 = vunpack.c.l.b16 %v2887
    %v3599 = vunpack.c.h.b16 %v2887
    %v3600 = vunpack.c.l.b16 %v2888
    %v3601 = vunpack.c.h.b16 %v2888
    %v3602 = vunpack.c.l.b16 %v2889
    %v3603 = vunpack.c.h.b16 %v2889
    %v3604 = vunpack.c.l.b16 %v2890
    %v3605 = vunpack.c.h.b16 %v2890
    %v3606 = vunpack.c.l.b16 %v2891
    %v3607 = vunpack.c.h.b16 %v2891
    %v3608 = vunpack.c.l.b16 %v2892
    %v3609 = vunpack.c.h.b16 %v2892
    %v3610 = vunpack.c.l.b16 %v2893
    %v3611 = vunpack.c.h.b16 %v2893
    %v3612 = vunpack.c.l.b16 %v2894
    %v3613 = vunpack.c.h.b16 %v2894
    %v3614 = vunpack.c.l.b16 %v2895
    %v3615 = vunpack.c.h.b16 %v2895
    %v3616 = vunpack.c.l.b16 %v2896
    %v3617 = vunpack.c.h.b16 %v2896
    %v3618 = vunpack.c.l.b16 %v2897
    %v3619 = vunpack.c.h.b16 %v2897
    %v3620 = vunpack.c.l.b16 %v2898
    %v3621 = vunpack.c.h.b16 %v2898
    %v3622 = vunpack.c.l.b16 %v2899
    %v3623 = vunpack.c.h.b16 %v2899
    %v3624 = vunpack.c.l.b16 %v2900
    %v3625 = vunpack.c.h.b16 %v2900
    %v3626 = vunpack.c.l.b16 %v2901
    %v3627 = vunpack.c.h.b16 %v2901
    %v3628 = vunpack.c.l.b16 %v2902
    %v3629 = vunpack.c.h.b16 %v2902
    %v3630 = vunpack.c.l.b16 %v2903
    %v3631 = vunpack.c.h.b16 %v2903
    %v3632 = vunpack.c.l.b16 %v2904
    %v3633 = vunpack.c.h.b16 %v2904
    %v3634 = vunpack.c.l.b16 %v2905
    %v3635 = vunpack.c.h.b16 %v2905
    %v3636 = vunpack.c.l.b16 %v2906
    %v3637 = vunpack.c.h.b16 %v2906
    %v3638 = vunpack.c.l.b16 %v2907
    %v3639 = vunpack.c.h.b16 %v2907
    %v3640 = vunpack.c.l.b16 %v2908
    %v3641 = vunpack.c.h.b16 %v2908
    %v3642 = vunpack.c.l.b16 %v2909
    %v3643 = vunpack.c.h.b16 %v2909
    %v3644 = vunpack.c.l.b16 %v2910
    %v3645 = vunpack.c.h.b16 %v2910
    %v3646 = vunpack.c.l.b16 %v2911
    %v3647 = vunpack.c.h.b16 %v2911
    %v3648 = vunpack.c.l.b16 %v2912
    %v3649 = vunpack.c.h.b16 %v2912
    %v3650 = vunpack.c.l.b16 %v2913
    %v3651 = vunpack.c.h.b16 %v2913
    %v3652 = vunpack.c.l.b16 %v2914
    %v3653 = vunpack.c.h.b16 %v2914
    %v3654 = vunpack.c.l.b16 %v2915
    %v3655 = vunpack.c.h.b16 %v2915
    %v3656 = vunpack.c.l.b16 %v2916
    %v3657 = vunpack.c.h.b16 %v2916
    %v3658 = vunpack.c.l.b16 %v2917
    %v3659 = vunpack.c.h.b16 %v2917
    %v3660 = vunpack.c.l.b16 %v2918
    %v3661 = vunpack.c.h.b16 %v2918
    %v3662 = vunpack.c.l.b16 %v2919
    %v3663 = vunpack.c.h.b16 %v2919
    %v3664 = vunpack.c.l.b16 %v2920
    %v3665 = vunpack.c.h.b16 %v2920
    %v3666 = vunpack.c.l.b16 %v2921
    %v3667 = vunpack.c.h.b16 %v2921
    %v3668 = vunpack.c.l.b16 %v2922
    %v3669 = vunpack.c.h.b16 %v2922
    %v3670 = vunpack.c.l.b16 %v2923
    %v3671 = vunpack.c.h.b16 %v2923
    %v3672 = vunpack.c.l.b16 %v2924
    %v3673 = vunpack.c.h.b16 %v2924
    %v3674 = vunpack.c.l.b16 %v2925
    %v3675 = vunpack.c.h.b16 %v2925
    %v3676 = vunpack.c.l.b16 %v2926
    %v3677 = vunpack.c.h.b16 %v2926
    %v3678 = vunpack.c.l.b16 %v2927
    %v3679 = vunpack.c.h.b16 %v2927
    %v3680 = vunpack.c.l.b16 %v2928
    %v3681 = vunpack.c.h.b16 %v2928
    %v3682 = vunpack.c.l.b16 %v2929
    %v3683 = vunpack.c.h.b16 %v2929
    %v3684 = vunpack.c.l.b16 %v2930
    %v3685 = vunpack.c.h.b16 %v2930
    %v3686 = vunpack.c.l.b16 %v2931
    %v3687 = vunpack.c.h.b16 %v2931
    %v3688 = vunpack.c.l.b16 %v2932
    %v3689 = vunpack.c.h.b16 %v2932
    %v3690 = vunpack.c.l.b16 %v2933
    %v3691 = vunpack.c.h.b16 %v2933
    %v3692 = vunpack.c.l.b16 %v2934
    %v3693 = vunpack.c.h.b16 %v2934
    %v3694 = vunpack.c.l.b16 %v2935
    %v3695 = vunpack.c.h.b16 %v2935
    %v3696 = vunpack.c.l.b16 %v2936
    %v3697 = vunpack.c.h.b16 %v2936
    %v3698 = vunpack.c.l.b16 %v2937
    %v3699 = vunpack.c.h.b16 %v2937
    %v3700 = vunpack.c.l.b16 %v2938
    %v3701 = vunpack.c.h.b16 %v2938
    %v3702 = vunpack.c.l.b16 %v2939
    %v3703 = vunpack.c.h.b16 %v2939
    %v3704 = vunpack.c.l.b16 %v2940
    %v3705 = vunpack.c.h.b16 %v2940
    %v3706 = vunpack.c.l.b16 %v2941
    %v3707 = vunpack.c.h.b16 %v2941
    %v3708 = vunpack.c.l.b16 %v2942
    %v3709 = vunpack.c.h.b16 %v2942
    %v3710 = vunpack.c.l.b16 %v2943
    %v3711 = vunpack.c.h.b16 %v2943
    %v3712 = vunpack.c.l.b16 %v2944
    %v3713 = vunpack.c.h.b16 %v2944
    %v3714 = vunpack.c.l.b16 %v2945
    %v3715 = vunpack.c.h.b16 %v2945
    %v3716 = vunpack.c.l.b16 %v2946
    %v3717 = vunpack.c.h.b16 %v2946
    %v3718 = vunpack.c.l.b16 %v2947
    %v3719 = vunpack.c.h.b16 %v2947
    %v3720 = vunpack.c.l.b16 %v2948
    %v3721 = vunpack.c.h.b16 %v2948
    %v3722 = vunpack.c.l.b16 %v2949
    %v3723 = vunpack.c.h.b16 %v2949
    %v3724 = vunpack.c.l.b16 %v2950
    %v3725 = vunpack.c.h.b16 %v2950
    %v3726 = vunpack.c.l.b16 %v2951
    %v3727 = vunpack.c.h.b16 %v2951
    %v3728 = vunpack.c.l.b16 %v2952
    %v3729 = vunpack.c.h.b16 %v2952
    %v3730 = vunpack.c.l.b16 %v2953
    %v3731 = vunpack.c.h.b16 %v2953
    %v3732 = vpack.c.b16 %v3224, %v3220
    %v3733 = vpack.c.b16 %v3225, %v3221
    %v3734 = vpack.c.b16 %v3226, %v3222
    %v3735 = vpack.c.b16 %v3227, %v3223
    %v3736 = vpack.c.b16 %v3232, %v3228
    %v3737 = vpack.c.b16 %v3233, %v3229
    %v3738 = vpack.c.b16 %v3234, %v3230
    %v3739 = vpack.c.b16 %v3235, %v3231
    %v3740 = vpack.c.b16 %v3240, %v3236
    %v3741 = vpack.c.b16 %v3241, %v3237
    %v3742 = vpack.c.b16 %v3242, %v3238
    %v3743 = vpack.c.b16 %v3243, %v3239
    %v3744 = vpack.c.b16 %v3248, %v3244
    %v3745 = vpack.c.b16 %v3249, %v3245
    %v3746 = vpack.c.b16 %v3250, %v3246
    %v3747 = vpack.c.b16 %v3251, %v3247
    %v3748 = vpack.c.b16 %v3256, %v3252
    %v3749 = vpack.c.b16 %v3257, %v3253
    %v3750 = vpack.c.b16 %v3258, %v3254
    %v3751 = vpack.c.b16 %v3259, %v3255
    %v3752 = vpack.c.b16 %v3264, %v3260
    %v3753 = vpack.c.b16 %v3265, %v3261
    %v3754 = vpack.c.b16 %v3266, %v3262
    %v3755 = vpack.c.b16 %v3267, %v3263
    %v3756 = vpack.c.b16 %v3272, %v3268
    %v3757 = vpack.c.b16 %v3273, %v3269
    %v3758 = vpack.c.b16 %v3274, %v3270
    %v3759 = vpack.c.b16 %v3275, %v3271
    %v3760 = vpack.c.b16 %v3280, %v3276
    %v3761 = vpack.c.b16 %v3281, %v3277
    %v3762 = vpack.c.b16 %v3282, %v3278
    %v3763 = vpack.c.b16 %v3283, %v3279
    %v3764 = vpack.c.b16 %v3288, %v3284
    %v3765 = vpack.c.b16 %v3289, %v3285
    %v3766 = vpack.c.b16 %v3290, %v3286
    %v3767 = vpack.c.b16 %v3291, %v3287
    %v3768 = vpack.c.b16 %v3296, %v3292
    %v3769 = vpack.c.b16 %v3297, %v3293
    %v3770 = vpack.c.b16 %v3298, %v3294
    %v3771 = vpack.c.b16 %v3299, %v3295
    %v3772 = vpack.c.b16 %v3304, %v3300
    %v3773 = vpack.c.b16 %v3305, %v3301
    %v3774 = vpack.c.b16 %v3306, %v3302
    %v3775 = vpack.c.b16 %v3307, %v3303
    %v3776 = vpack.c.b16 %v3312, %v3308
    %v3777 = vpack.c.b16 %v3313, %v3309
    %v3778 = vpack.c.b16 %v3314, %v3310
    %v3779 = vpack.c.b16 %v3315, %v3311
    %v3780 = vpack.c.b16 %v3320, %v3316
    %v3781 = vpack.c.b16 %v3321, %v3317
    %v3782 = vpack.c.b16 %v3322, %v3318
    %v3783 = vpack.c.b16 %v3323, %v3319
    %v3784 = vpack.c.b16 %v3328, %v3324
    %v3785 = vpack.c.b16 %v3329, %v3325
    %v3786 = vpack.c.b16 %v3330, %v3326
    %v3787 = vpack.c.b16 %v3331, %v3327
    %v3788 = vpack.c.b16 %v3336, %v3332
    %v3789 = vpack.c.b16 %v3337, %v3333
    %v3790 = vpack.c.b16 %v3338, %v3334
    %v3791 = vpack.c.b16 %v3339, %v3335
    %v3792 = vpack.c.b16 %v3344, %v3340
    %v3793 = vpack.c.b16 %v3345, %v3341
    %v3794 = vpack.c.b16 %v3346, %v3342
    %v3795 = vpack.c.b16 %v3347, %v3343
    %v3796 = vpack.c.b16 %v3352, %v3348
    %v3797 = vpack.c.b16 %v3353, %v3349
    %v3798 = vpack.c.b16 %v3354, %v3350
    %v3799 = vpack.c.b16 %v3355, %v3351
    %v3800 = vpack.c.b16 %v3360, %v3356
    %v3801 = vpack.c.b16 %v3361, %v3357
    %v3802 = vpack.c.b16 %v3362, %v3358
    %v3803 = vpack.c.b16 %v3363, %v3359
    %v3804 = vpack.c.b16 %v3368, %v3364
    %v3805 = vpack.c.b16 %v3369, %v3365
    %v3806 = vpack.c.b16 %v3370, %v3366
    %v3807 = vpack.c.b16 %v3371, %v3367
    %v3808 = vpack.c.b16 %v3376, %v3372
    %v3809 = vpack.c.b16 %v3377, %v3373
    %v3810 = vpack.c.b16 %v3378, %v3374
    %v3811 = vpack.c.b16 %v3379, %v3375
    %v3812 = vpack.c.b16 %v3384, %v3380
    %v3813 = vpack.c.b16 %v3385, %v3381
    %v3814 = vpack.c.b16 %v3386, %v3382
    %v3815 = vpack.c.b16 %v3387, %v3383
    %v3816 = vpack.c.b16 %v3392, %v3388
    %v3817 = vpack.c.b16 %v3393, %v3389
    %v3818 = vpack.c.b16 %v3394, %v3390
    %v3819 = vpack.c.b16 %v3395, %v3391
    %v3820 = vpack.c.b16 %v3400, %v3396
    %v3821 = vpack.c.b16 %v3401, %v3397
    %v3822 = vpack.c.b16 %v3402, %v3398
    %v3823 = vpack.c.b16 %v3403, %v3399
    %v3824 = vpack.c.b16 %v3408, %v3404
    %v3825 = vpack.c.b16 %v3409, %v3405
    %v3826 = vpack.c.b16 %v3410, %v3406
    %v3827 = vpack.c.b16 %v3411, %v3407
    %v3828 = vpack.c.b16 %v3416, %v3412
    %v3829 = vpack.c.b16 %v3417, %v3413
    %v3830 = vpack.c.b16 %v3418, %v3414
    %v3831 = vpack.c.b16 %v3419, %v3415
    %v3832 = vpack.c.b16 %v3424, %v3420
    %v3833 = vpack.c.b16 %v3425, %v3421
    %v3834 = vpack.c.b16 %v3426, %v3422
    %v3835 = vpack.c.b16 %v3427, %v3423
    %v3836 = vpack.c.b16 %v3432, %v3428
    %v3837 = vpack.c.b16 %v3433, %v3429
    %v3838 = vpack.c.b16 %v3434, %v3430
    %v3839 = vpack.c.b16 %v3435, %v3431
    %v3840 = vpack.c.b16 %v3440, %v3436
    %v3841 = vpack.c.b16 %v3441, %v3437
    %v3842 = vpack.c.b16 %v3442, %v3438
    %v3843 = vpack.c.b16 %v3443, %v3439
    %v3844 = vpack.c.b16 %v3448, %v3444
    %v3845 = vpack.c.b16 %v3449, %v3445
    %v3846 = vpack.c.b16 %v3450, %v3446
    %v3847 = vpack.c.b16 %v3451, %v3447
    %v3848 = vpack.c.b16 %v3456, %v3452
    %v3849 = vpack.c.b16 %v3457, %v3453
    %v3850 = vpack.c.b16 %v3458, %v3454
    %v3851 = vpack.c.b16 %v3459, %v3455
    %v3852 = vpack.c.b16 %v3464, %v3460
    %v3853 = vpack.c.b16 %v3465, %v3461
    %v3854 = vpack.c.b16 %v3466, %v3462
    %v3855 = vpack.c.b16 %v3467, %v3463
    %v3856 = vpack.c.b16 %v3472, %v3468
    %v3857 = vpack.c.b16 %v3473, %v3469
    %v3858 = vpack.c.b16 %v3474, %v3470
    %v3859 = vpack.c.b16 %v3475, %v3471
    %v3860 = vpack.c.b16 %v3480, %v3476
    %v3861 = vpack.c.b16 %v3481, %v3477
    %v3862 = vpack.c.b16 %v3482, %v3478
    %v3863 = vpack.c.b16 %v3483, %v3479
    %v3864 = vpack.c.b16 %v3488, %v3484
    %v3865 = vpack.c.b16 %v3489, %v3485
    %v3866 = vpack.c.b16 %v3490, %v3486
    %v3867 = vpack.c.b16 %v3491, %v3487
    %v3868 = vpack.c.b16 %v3496, %v3492
    %v3869 = vpack.c.b16 %v3497, %v3493
    %v3870 = vpack.c.b16 %v3498, %v3494
    %v3871 = vpack.c.b16 %v3499, %v3495
    %v3872 = vpack.c.b16 %v3504, %v3500
    %v3873 = vpack.c.b16 %v3505, %v3501
    %v3874 = vpack.c.b16 %v3506, %v3502
    %v3875 = vpack.c.b16 %v3507, %v3503
    %v3876 = vpack.c.b16 %v3512, %v3508
    %v3877 = vpack.c.b16 %v3513, %v3509
    %v3878 = vpack.c.b16 %v3514, %v3510
    %v3879 = vpack.c.b16 %v3515, %v3511
    %v3880 = vpack.c.b16 %v3520, %v3516
    %v3881 = vpack.c.b16 %v3521, %v3517
    %v3882 = vpack.c.b16 %v3522, %v3518
    %v3883 = vpack.c.b16 %v3523, %v3519
    %v3884 = vpack.c.b16 %v3528, %v3524
    %v3885 = vpack.c.b16 %v3529, %v3525
    %v3886 = vpack.c.b16 %v3530, %v3526
    %v3887 = vpack.c.b16 %v3531, %v3527
    %v3888 = vpack.c.b16 %v3536, %v3532
    %v3889 = vpack.c.b16 %v3537, %v3533
    %v3890 = vpack.c.b16 %v3538, %v3534
    %v3891 = vpack.c.b16 %v3539, %v3535
    %v3892 = vpack.c.b16 %v3544, %v3540
    %v3893 = vpack.c.b16 %v3545, %v3541
    %v3894 = vpack.c.b16 %v3546, %v3542
    %v3895 = vpack.c.b16 %v3547, %v3543
    %v3896 = vpack.c.b16 %v3552, %v3548
    %v3897 = vpack.c.b16 %v3553, %v3549
    %v3898 = vpack.c.b16 %v3554, %v3550
    %v3899 = vpack.c.b16 %v3555, %v3551
    %v3900 = vpack.c.b16 %v3560, %v3556
    %v3901 = vpack.c.b16 %v3561, %v3557
    %v3902 = vpack.c.b16 %v3562, %v3558
    %v3903 = vpack.c.b16 %v3563, %v3559
    %v3904 = vpack.c.b16 %v3568, %v3564
    %v3905 = vpack.c.b16 %v3569, %v3565
    %v3906 = vpack.c.b16 %v3570, %v3566
    %v3907 = vpack.c.b16 %v3571, %v3567
    %v3908 = vpack.c.b16 %v3576, %v3572
    %v3909 = vpack.c.b16 %v3577, %v3573
    %v3910 = vpack.c.b16 %v3578, %v3574
    %v3911 = vpack.c.b16 %v3579, %v3575
    %v3912 = vpack.c.b16 %v3584, %v3580
    %v3913 = vpack.c.b16 %v3585, %v3581
    %v3914 = vpack.c.b16 %v3586, %v3582
    %v3915 = vpack.c.b16 %v3587, %v3583
    %v3916 = vpack.c.b16 %v3592, %v3588
    %v3917 = vpack.c.b16 %v3593, %v3589
    %v3918 = vpack.c.b16 %v3594, %v3590
    %v3919 = vpack.c.b16 %v3595, %v3591
    %v3920 = vpack.c.b16 %v3600, %v3596
    %v3921 = vpack.c.b16 %v3601, %v3597
    %v3922 = vpack.c.b16 %v3602, %v3598
    %v3923 = vpack.c.b16 %v3603, %v3599
    %v3924 = vpack.c.b16 %v3608, %v3604
    %v3925 = vpack.c.b16 %v3609, %v3605
    %v3926 = vpack.c.b16 %v3610, %v3606
    %v3927 = vpack.c.b16 %v3611, %v3607
    %v3928 = vpack.c.b16 %v3616, %v3612
    %v3929 = vpack.c.b16 %v3617, %v3613
    %v3930 = vpack.c.b16 %v3618, %v3614
    %v3931 = vpack.c.b16 %v3619, %v3615
    %v3932 = vpack.c.b16 %v3624, %v3620
    %v3933 = vpack.c.b16 %v3625, %v3621
    %v3934 = vpack.c.b16 %v3626, %v3622
    %v3935 = vpack.c.b16 %v3627, %v3623
    %v3936 = vpack.c.b16 %v3632, %v3628
    %v3937 = vpack.c.b16 %v3633, %v3629
    %v3938 = vpack.c.b16 %v3634, %v3630
    %v3939 = vpack.c.b16 %v3635, %v3631
    %v3940 = vpack.c.b16 %v3640, %v3636
    %v3941 = vpack.c.b16 %v3641, %v3637
    %v3942 = vpack.c.b16 %v3642, %v3638
    %v3943 = vpack.c.b16 %v3643, %v3639
    %v3944 = vpack.c.b16 %v3648, %v3644
    %v3945 = vpack.c.b16 %v3649, %v3645
    %v3946 = vpack.c.b16 %v3650, %v3646
    %v3947 = vpack.c.b16 %v3651, %v3647
    %v3948 = vpack.c.b16 %v3656, %v3652
    %v3949 = vpack.c.b16 %v3657, %v3653
    %v3950 = vpack.c.b16 %v3658, %v3654
    %v3951 = vpack.c.b16 %v3659, %v3655
    %v3952 = vpack.c.b16 %v3664, %v3660
    %v3953 = vpack.c.b16 %v3665, %v3661
    %v3954 = vpack.c.b16 %v3666, %v3662
    %v3955 = vpack.c.b16 %v3667, %v3663
    %v3956 = vpack.c.b16 %v3672, %v3668
    %v3957 = vpack.c.b16 %v3673, %v3669
    %v3958 = vpack.c.b16 %v3674, %v3670
    %v3959 = vpack.c.b16 %v3675, %v3671
    %v3960 = vpack.c.b16 %v3680, %v3676
    %v3961 = vpack.c.b16 %v3681, %v3677
    %v3962 = vpack.c.b16 %v3682, %v3678
    %v3963 = vpack.c.b16 %v3683, %v3679
    %v3964 = vpack.c.b16 %v3688, %v3684
    %v3965 = vpack.c.b16 %v3689, %v3685
    %v3966 = vpack.c.b16 %v3690, %v3686
    %v3967 = vpack.c.b16 %v3691, %v3687
    %v3968 = vpack.c.b16 %v3696, %v3692
    %v3969 = vpack.c.b16 %v3697, %v3693
    %v3970 = vpack.c.b16 %v3698, %v3694
    %v3971 = vpack.c.b16 %v3699, %v3695
    %v3972 = vpack.c.b16 %v3704, %v3700
    %v3973 = vpack.c.b16 %v3705, %v3701
    %v3974 = vpack.c.b16 %v3706, %v3702
    %v3975 = vpack.c.b16 %v3707, %v3703
    %v3976 = vpack.c.b16 %v3712, %v3708
    %v3977 = vpack.c.b16 %v3713, %v3709
    %v3978 = vpack.c.b16 %v3714, %v3710
    %v3979 = vpack.c.b16 %v3715, %v3711
    %v3980 = vpack.c.b16 %v3720, %v3716
    %v3981 = vpack.c.b16 %v3721, %v3717
    %v3982 = vpack.c.b16 %v3722, %v3718
    %v3983 = vpack.c.b16 %v3723, %v3719
    %v3984 = vpack.c.b16 %v3728, %v3724
    %v3985 = vpack.c.b16 %v3729, %v3725
    %v3986 = vpack.c.b16 %v3730, %v3726
    %v3987 = vpack.c.b16 %v3731, %v3727
    %4244 = vmatpush.bf16.msra.mxu0 %v3760
    %4245 = vmatpush.bf16.msra.mxu0 %v3756
    %4246 = vmatpush.bf16.msra.mxu0 %v3752
    %4247 = vmatpush.bf16.msra.mxu0 %v3748
    %4248 = vmatpush.bf16.msra.mxu0 %v3744
    %4249 = vmatpush.bf16.msra.mxu0 %v3740
    %4250 = vmatpush.bf16.msra.mxu0 %v3736
    %4251 = vmatpush.bf16.msra.mxu0 %v3732
    %4252 = vmatmul.bf16.gmra.mxu0 %v2690
    %v4253 = vpop.f32.mrf.mxu0
    %v4254 = vadd.f32 %v2956, %v4253
    %v4255 = vpop.f32.mrf.mxu0
    %v4256 = vadd.f32 %v2956, %v4255
    %4257 = vdwg.mxu0
    %4258 = vmatpush.bf16.msra.mxu0 %v3792
    %4259 = vmatpush.bf16.msra.mxu0 %v3788
    %4260 = vmatpush.bf16.msra.mxu0 %v3784
    %4261 = vmatpush.bf16.msra.mxu0 %v3780
    %4262 = vmatpush.bf16.msra.mxu0 %v3776
    %4263 = vmatpush.bf16.msra.mxu0 %v3772
    %4264 = vmatpush.bf16.msra.mxu0 %v3768
    %4265 = vmatpush.bf16.msra.mxu0 %v3764
    %4266 = vmatmul.bf16.gmra.mxu0 %v2691
    %v4267 = vpop.f32.mrf.mxu0
    %v4268 = vadd.f32 %v4254, %v4267
    %v4269 = vpop.f32.mrf.mxu0
    %v4270 = vadd.f32 %v4256, %v4269
    %4271 = vdwg.mxu0
    %4272 = vmatpush.bf16.msra.mxu0 %v3824
    %4273 = vmatpush.bf16.msra.mxu0 %v3820
    %4274 = vmatpush.bf16.msra.mxu0 %v3816
    %4275 = vmatpush.bf16.msra.mxu0 %v3812
    %4276 = vmatpush.bf16.msra.mxu0 %v3808
    %4277 = vmatpush.bf16.msra.mxu0 %v3804
    %4278 = vmatpush.bf16.msra.mxu0 %v3800
    %4279 = vmatpush.bf16.msra.mxu0 %v3796
    %4280 = vmatmul.bf16.gmra.mxu0 %v2692
    %v4281 = vpop.f32.mrf.mxu0
    %v4282 = vadd.f32 %v4268, %v4281
    %v4283 = vpop.f32.mrf.mxu0
    %v4284 = vadd.f32 %v4270, %v4283
    %4285 = vdwg.mxu0
    %4286 = vmatpush.bf16.msra.mxu0 %v3856
    %4287 = vmatpush.bf16.msra.mxu0 %v3852
    %4288 = vmatpush.bf16.msra.mxu0 %v3848
    %4289 = vmatpush.bf16.msra.mxu0 %v3844
    %4290 = vmatpush.bf16.msra.mxu0 %v3840
    %4291 = vmatpush.bf16.msra.mxu0 %v3836
    %4292 = vmatpush.bf16.msra.mxu0 %v3832
    %4293 = vmatpush.bf16.msra.mxu0 %v3828
    %4294 = vmatmul.bf16.gmra.mxu0 %v2693
    %v4295 = vpop.f32.mrf.mxu0
    %v4296 = vadd.f32 %v4282, %v4295
    %v4297 = vpop.f32.mrf.mxu0
    %v4298 = vadd.f32 %v4284, %v4297
    %4299 = vdwg.mxu0
    %4300 = vmatpush.bf16.msra.mxu0 %v3888
    %4301 = vmatpush.bf16.msra.mxu0 %v3884
    %4302 = vmatpush.bf16.msra.mxu0 %v3880
    %4303 = vmatpush.bf16.msra.mxu0 %v3876
    %4304 = vmatpush.bf16.msra.mxu0 %v3872
    %4305 = vmatpush.bf16.msra.mxu0 %v3868
    %4306 = vmatpush.bf16.msra.mxu0 %v3864
    %4307 = vmatpush.bf16.msra.mxu0 %v3860
    %4308 = vmatmul.bf16.gmra.mxu0 %v2694
    %v4309 = vpop.f32.mrf.mxu0
    %v4310 = vadd.f32 %v4296, %v4309
    %v4311 = vpop.f32.mrf.mxu0
    %v4312 = vadd.f32 %v4298, %v4311
    %4313 = vdwg.mxu0
    %4314 = vmatpush.bf16.msra.mxu0 %v3920
    %4315 = vmatpush.bf16.msra.mxu0 %v3916
    %4316 = vmatpush.bf16.msra.mxu0 %v3912
    %4317 = vmatpush.bf16.msra.mxu0 %v3908
    %4318 = vmatpush.bf16.msra.mxu0 %v3904
    %4319 = vmatpush.bf16.msra.mxu0 %v3900
    %4320 = vmatpush.bf16.msra.mxu0 %v3896
    %4321 = vmatpush.bf16.msra.mxu0 %v3892
    %4322 = vmatmul.bf16.gmra.mxu0 %v2695
    %v4323 = vpop.f32.mrf.mxu0
    %v4324 = vadd.f32 %v4310, %v4323
    %v4325 = vpop.f32.mrf.mxu0
    %v4326 = vadd.f32 %v4312, %v4325
    %4327 = vdwg.mxu0
    %4328 = vmatpush.bf16.msra.mxu0 %v3952
    %4329 = vmatpush.bf16.msra.mxu0 %v3948
    %4330 = vmatpush.bf16.msra.mxu0 %v3944
    %4331 = vmatpush.bf16.msra.mxu0 %v3940
    %4332 = vmatpush.bf16.msra.mxu0 %v3936
    %4333 = vmatpush.bf16.msra.mxu0 %v3932
    %4334 = vmatpush.bf16.msra.mxu0 %v3928
    %4335 = vmatpush.bf16.msra.mxu0 %v3924
    %4336 = vmatmul.bf16.gmra.mxu0 %v2696
    %v4337 = vpop.f32.mrf.mxu0
    %v4338 = vadd.f32 %v4324, %v4337
    %v4339 = vpop.f32.mrf.mxu0
    %v4340 = vadd.f32 %v4326, %v4339
    %4341 = vdwg.mxu0
    %4342 = vmatpush.bf16.msra.mxu0 %v3984
    %4343 = vmatpush.bf16.msra.mxu0 %v3980
    %4344 = vmatpush.bf16.msra.mxu0 %v3976
    %4345 = vmatpush.bf16.msra.mxu0 %v3972
    %4346 = vmatpush.bf16.msra.mxu0 %v3968
    %4347 = vmatpush.bf16.msra.mxu0 %v3964
    %4348 = vmatpush.bf16.msra.mxu0 %v3960
    %4349 = vmatpush.bf16.msra.mxu0 %v3956
    %4350 = vmatmul.bf16.gmra.mxu0 %v2697
    %v4351 = vpop.f32.mrf.mxu0
    %v4352 = vadd.f32 %v4338, %v4351
    %v4353 = vpop.f32.mrf.mxu0
    %v4354 = vadd.f32 %v4340, %v4353
    %4355 = vdwg.mxu0
    %4356 = vmatpush.bf16.msra.mxu0 %v3761
    %4357 = vmatpush.bf16.msra.mxu0 %v3757
    %4358 = vmatpush.bf16.msra.mxu0 %v3753
    %4359 = vmatpush.bf16.msra.mxu0 %v3749
    %4360 = vmatpush.bf16.msra.mxu0 %v3745
    %4361 = vmatpush.bf16.msra.mxu0 %v3741
    %4362 = vmatpush.bf16.msra.mxu0 %v3737
    %4363 = vmatpush.bf16.msra.mxu0 %v3733
    %4364 = vmatmul.bf16.gmra.mxu0 %v2690
    %v4365 = vpop.f32.mrf.mxu0
    %v4366 = vadd.f32 %v2957, %v4365
    %v4367 = vpop.f32.mrf.mxu0
    %v4368 = vadd.f32 %v2957, %v4367
    %4369 = vdwg.mxu0
    %4370 = vmatpush.bf16.msra.mxu0 %v3793
    %4371 = vmatpush.bf16.msra.mxu0 %v3789
    %4372 = vmatpush.bf16.msra.mxu0 %v3785
    %4373 = vmatpush.bf16.msra.mxu0 %v3781
    %4374 = vmatpush.bf16.msra.mxu0 %v3777
    %4375 = vmatpush.bf16.msra.mxu0 %v3773
    %4376 = vmatpush.bf16.msra.mxu0 %v3769
    %4377 = vmatpush.bf16.msra.mxu0 %v3765
    %4378 = vmatmul.bf16.gmra.mxu0 %v2691
    %v4379 = vpop.f32.mrf.mxu0
    %v4380 = vadd.f32 %v4366, %v4379
    %v4381 = vpop.f32.mrf.mxu0
    %v4382 = vadd.f32 %v4368, %v4381
    %4383 = vdwg.mxu0
    %4384 = vmatpush.bf16.msra.mxu0 %v3825
    %4385 = vmatpush.bf16.msra.mxu0 %v3821
    %4386 = vmatpush.bf16.msra.mxu0 %v3817
    %4387 = vmatpush.bf16.msra.mxu0 %v3813
    %4388 = vmatpush.bf16.msra.mxu0 %v3809
    %4389 = vmatpush.bf16.msra.mxu0 %v3805
    %4390 = vmatpush.bf16.msra.mxu0 %v3801
    %4391 = vmatpush.bf16.msra.mxu0 %v3797
    %4392 = vmatmul.bf16.gmra.mxu0 %v2692
    %v4393 = vpop.f32.mrf.mxu0
    %v4394 = vadd.f32 %v4380, %v4393
    %v4395 = vpop.f32.mrf.mxu0
    %v4396 = vadd.f32 %v4382, %v4395
    %4397 = vdwg.mxu0
    %4398 = vmatpush.bf16.msra.mxu0 %v3857
    %4399 = vmatpush.bf16.msra.mxu0 %v3853
    %4400 = vmatpush.bf16.msra.mxu0 %v3849
    %4401 = vmatpush.bf16.msra.mxu0 %v3845
    %4402 = vmatpush.bf16.msra.mxu0 %v3841
    %4403 = vmatpush.bf16.msra.mxu0 %v3837
    %4404 = vmatpush.bf16.msra.mxu0 %v3833
    %4405 = vmatpush.bf16.msra.mxu0 %v3829
    %4406 = vmatmul.bf16.gmra.mxu0 %v2693
    %v4407 = vpop.f32.mrf.mxu0
    %v4408 = vadd.f32 %v4394, %v4407
    %v4409 = vpop.f32.mrf.mxu0
    %v4410 = vadd.f32 %v4396, %v4409
    %4411 = vdwg.mxu0
    %4412 = vmatpush.bf16.msra.mxu0 %v3889
    %4413 = vmatpush.bf16.msra.mxu0 %v3885
    %4414 = vmatpush.bf16.msra.mxu0 %v3881
    %4415 = vmatpush.bf16.msra.mxu0 %v3877
    %4416 = vmatpush.bf16.msra.mxu0 %v3873
    %4417 = vmatpush.bf16.msra.mxu0 %v3869
    %4418 = vmatpush.bf16.msra.mxu0 %v3865
    %4419 = vmatpush.bf16.msra.mxu0 %v3861
    %4420 = vmatmul.bf16.gmra.mxu0 %v2694
    %v4421 = vpop.f32.mrf.mxu0
    %v4422 = vadd.f32 %v4408, %v4421
    %v4423 = vpop.f32.mrf.mxu0
    %v4424 = vadd.f32 %v4410, %v4423
    %4425 = vdwg.mxu0
    %4426 = vmatpush.bf16.msra.mxu0 %v3921
    %4427 = vmatpush.bf16.msra.mxu0 %v3917
    %4428 = vmatpush.bf16.msra.mxu0 %v3913
    %4429 = vmatpush.bf16.msra.mxu0 %v3909
    %4430 = vmatpush.bf16.msra.mxu0 %v3905
    %4431 = vmatpush.bf16.msra.mxu0 %v3901
    %4432 = vmatpush.bf16.msra.mxu0 %v3897
    %4433 = vmatpush.bf16.msra.mxu0 %v3893
    %4434 = vmatmul.bf16.gmra.mxu0 %v2695
    %v4435 = vpop.f32.mrf.mxu0
    %v4436 = vadd.f32 %v4422, %v4435
    %v4437 = vpop.f32.mrf.mxu0
    %v4438 = vadd.f32 %v4424, %v4437
    %4439 = vdwg.mxu0
    %4440 = vmatpush.bf16.msra.mxu0 %v3953
    %4441 = vmatpush.bf16.msra.mxu0 %v3949
    %4442 = vmatpush.bf16.msra.mxu0 %v3945
    %4443 = vmatpush.bf16.msra.mxu0 %v3941
    %4444 = vmatpush.bf16.msra.mxu0 %v3937
    %4445 = vmatpush.bf16.msra.mxu0 %v3933
    %4446 = vmatpush.bf16.msra.mxu0 %v3929
    %4447 = vmatpush.bf16.msra.mxu0 %v3925
    %4448 = vmatmul.bf16.gmra.mxu0 %v2696
    %v4449 = vpop.f32.mrf.mxu0
    %v4450 = vadd.f32 %v4436, %v4449
    %v4451 = vpop.f32.mrf.mxu0
    %v4452 = vadd.f32 %v4438, %v4451
    %4453 = vdwg.mxu0
    %4454 = vmatpush.bf16.msra.mxu0 %v3985
    %4455 = vmatpush.bf16.msra.mxu0 %v3981
    %4456 = vmatpush.bf16.msra.mxu0 %v3977
    %4457 = vmatpush.bf16.msra.mxu0 %v3973
    %4458 = vmatpush.bf16.msra.mxu0 %v3969
    %4459 = vmatpush.bf16.msra.mxu0 %v3965
    %4460 = vmatpush.bf16.msra.mxu0 %v3961
    %4461 = vmatpush.bf16.msra.mxu0 %v3957
    %4462 = vmatmul.bf16.gmra.mxu0 %v2697
    %v4463 = vpop.f32.mrf.mxu0
    %v4464 = vadd.f32 %v4450, %v4463
    %v4465 = vpop.f32.mrf.mxu0
    %v4466 = vadd.f32 %v4452, %v4465
    %4467 = vdwg.mxu0
    %4468 = vmatpush.bf16.msra.mxu0 %v3762
    %4469 = vmatpush.bf16.msra.mxu0 %v3758
    %4470 = vmatpush.bf16.msra.mxu0 %v3754
    %4471 = vmatpush.bf16.msra.mxu0 %v3750
    %4472 = vmatpush.bf16.msra.mxu0 %v3746
    %4473 = vmatpush.bf16.msra.mxu0 %v3742
    %4474 = vmatpush.bf16.msra.mxu0 %v3738
    %4475 = vmatpush.bf16.msra.mxu0 %v3734
    %4476 = vmatmul.bf16.gmra.mxu0 %v2690
    %v4477 = vpop.f32.mrf.mxu0
    %v4478 = vadd.f32 %v2958, %v4477
    %v4479 = vpop.f32.mrf.mxu0
    %v4480 = vadd.f32 %v2958, %v4479
    %4481 = vdwg.mxu0
    %4482 = vmatpush.bf16.msra.mxu0 %v3794
    %4483 = vmatpush.bf16.msra.mxu0 %v3790
    %4484 = vmatpush.bf16.msra.mxu0 %v3786
    %4485 = vmatpush.bf16.msra.mxu0 %v3782
    %4486 = vmatpush.bf16.msra.mxu0 %v3778
    %4487 = vmatpush.bf16.msra.mxu0 %v3774
    %4488 = vmatpush.bf16.msra.mxu0 %v3770
    %4489 = vmatpush.bf16.msra.mxu0 %v3766
    %4490 = vmatmul.bf16.gmra.mxu0 %v2691
    %v4491 = vpop.f32.mrf.mxu0
    %v4492 = vadd.f32 %v4478, %v4491
    %v4493 = vpop.f32.mrf.mxu0
    %v4494 = vadd.f32 %v4480, %v4493
    %4495 = vdwg.mxu0
    %4496 = vmatpush.bf16.msra.mxu0 %v3826
    %4497 = vmatpush.bf16.msra.mxu0 %v3822
    %4498 = vmatpush.bf16.msra.mxu0 %v3818
    %4499 = vmatpush.bf16.msra.mxu0 %v3814
    %4500 = vmatpush.bf16.msra.mxu0 %v3810
    %4501 = vmatpush.bf16.msra.mxu0 %v3806
    %4502 = vmatpush.bf16.msra.mxu0 %v3802
    %4503 = vmatpush.bf16.msra.mxu0 %v3798
    %4504 = vmatmul.bf16.gmra.mxu0 %v2692
    %v4505 = vpop.f32.mrf.mxu0
    %v4506 = vadd.f32 %v4492, %v4505
    %v4507 = vpop.f32.mrf.mxu0
    %v4508 = vadd.f32 %v4494, %v4507
    %4509 = vdwg.mxu0
    %4510 = vmatpush.bf16.msra.mxu0 %v3858
    %4511 = vmatpush.bf16.msra.mxu0 %v3854
    %4512 = vmatpush.bf16.msra.mxu0 %v3850
    %4513 = vmatpush.bf16.msra.mxu0 %v3846
    %4514 = vmatpush.bf16.msra.mxu0 %v3842
    %4515 = vmatpush.bf16.msra.mxu0 %v3838
    %4516 = vmatpush.bf16.msra.mxu0 %v3834
    %4517 = vmatpush.bf16.msra.mxu0 %v3830
    %4518 = vmatmul.bf16.gmra.mxu0 %v2693
    %v4519 = vpop.f32.mrf.mxu0
    %v4520 = vadd.f32 %v4506, %v4519
    %v4521 = vpop.f32.mrf.mxu0
    %v4522 = vadd.f32 %v4508, %v4521
    %4523 = vdwg.mxu0
    %4524 = vmatpush.bf16.msra.mxu0 %v3890
    %4525 = vmatpush.bf16.msra.mxu0 %v3886
    %4526 = vmatpush.bf16.msra.mxu0 %v3882
    %4527 = vmatpush.bf16.msra.mxu0 %v3878
    %4528 = vmatpush.bf16.msra.mxu0 %v3874
    %4529 = vmatpush.bf16.msra.mxu0 %v3870
    %4530 = vmatpush.bf16.msra.mxu0 %v3866
    %4531 = vmatpush.bf16.msra.mxu0 %v3862
    %4532 = vmatmul.bf16.gmra.mxu0 %v2694
    %v4533 = vpop.f32.mrf.mxu0
    %v4534 = vadd.f32 %v4520, %v4533
    %v4535 = vpop.f32.mrf.mxu0
    %v4536 = vadd.f32 %v4522, %v4535
    %4537 = vdwg.mxu0
    %4538 = vmatpush.bf16.msra.mxu0 %v3922
    %4539 = vmatpush.bf16.msra.mxu0 %v3918
    %4540 = vmatpush.bf16.msra.mxu0 %v3914
    %4541 = vmatpush.bf16.msra.mxu0 %v3910
    %4542 = vmatpush.bf16.msra.mxu0 %v3906
    %4543 = vmatpush.bf16.msra.mxu0 %v3902
    %4544 = vmatpush.bf16.msra.mxu0 %v3898
    %4545 = vmatpush.bf16.msra.mxu0 %v3894
    %4546 = vmatmul.bf16.gmra.mxu0 %v2695
    %v4547 = vpop.f32.mrf.mxu0
    %v4548 = vadd.f32 %v4534, %v4547
    %v4549 = vpop.f32.mrf.mxu0
    %v4550 = vadd.f32 %v4536, %v4549
    %4551 = vdwg.mxu0
    %4552 = vmatpush.bf16.msra.mxu0 %v3954
    %4553 = vmatpush.bf16.msra.mxu0 %v3950
    %4554 = vmatpush.bf16.msra.mxu0 %v3946
    %4555 = vmatpush.bf16.msra.mxu0 %v3942
    %4556 = vmatpush.bf16.msra.mxu0 %v3938
    %4557 = vmatpush.bf16.msra.mxu0 %v3934
    %4558 = vmatpush.bf16.msra.mxu0 %v3930
    %4559 = vmatpush.bf16.msra.mxu0 %v3926
    %4560 = vmatmul.bf16.gmra.mxu0 %v2696
    %v4561 = vpop.f32.mrf.mxu0
    %v4562 = vadd.f32 %v4548, %v4561
    %v4563 = vpop.f32.mrf.mxu0
    %v4564 = vadd.f32 %v4550, %v4563
    %4565 = vdwg.mxu0
    %4566 = vmatpush.bf16.msra.mxu0 %v3986
    %4567 = vmatpush.bf16.msra.mxu0 %v3982
    %4568 = vmatpush.bf16.msra.mxu0 %v3978
    %4569 = vmatpush.bf16.msra.mxu0 %v3974
    %4570 = vmatpush.bf16.msra.mxu0 %v3970
    %4571 = vmatpush.bf16.msra.mxu0 %v3966
    %4572 = vmatpush.bf16.msra.mxu0 %v3962
    %4573 = vmatpush.bf16.msra.mxu0 %v3958
    %4574 = vmatmul.bf16.gmra.mxu0 %v2697
    %v4575 = vpop.f32.mrf.mxu0
    %v4576 = vadd.f32 %v4562, %v4575
    %v4577 = vpop.f32.mrf.mxu0
    %v4578 = vadd.f32 %v4564, %v4577
    %4579 = vdwg.mxu0
    %4580 = vmatpush.bf16.msra.mxu0 %v3763
    %4581 = vmatpush.bf16.msra.mxu0 %v3759
    %4582 = vmatpush.bf16.msra.mxu0 %v3755
    %4583 = vmatpush.bf16.msra.mxu0 %v3751
    %4584 = vmatpush.bf16.msra.mxu0 %v3747
    %4585 = vmatpush.bf16.msra.mxu0 %v3743
    %4586 = vmatpush.bf16.msra.mxu0 %v3739
    %4587 = vmatpush.bf16.msra.mxu0 %v3735
    %4588 = vmatmul.bf16.gmra.mxu0 %v2690
    %v4589 = vpop.f32.mrf.mxu0
    %v4590 = vadd.f32 %v2959, %v4589
    %v4591 = vpop.f32.mrf.mxu0
    %v4592 = vadd.f32 %v2959, %v4591
    %4593 = vdwg.mxu0
    %4594 = vmatpush.bf16.msra.mxu0 %v3795
    %4595 = vmatpush.bf16.msra.mxu0 %v3791
    %4596 = vmatpush.bf16.msra.mxu0 %v3787
    %4597 = vmatpush.bf16.msra.mxu0 %v3783
    %4598 = vmatpush.bf16.msra.mxu0 %v3779
    %4599 = vmatpush.bf16.msra.mxu0 %v3775
    %4600 = vmatpush.bf16.msra.mxu0 %v3771
    %4601 = vmatpush.bf16.msra.mxu0 %v3767
    %4602 = vmatmul.bf16.gmra.mxu0 %v2691
    %v4603 = vpop.f32.mrf.mxu0
    %v4604 = vadd.f32 %v4590, %v4603
    %v4605 = vpop.f32.mrf.mxu0
    %v4606 = vadd.f32 %v4592, %v4605
    %4607 = vdwg.mxu0
    %4608 = vmatpush.bf16.msra.mxu0 %v3827
    %4609 = vmatpush.bf16.msra.mxu0 %v3823
    %4610 = vmatpush.bf16.msra.mxu0 %v3819
    %4611 = vmatpush.bf16.msra.mxu0 %v3815
    %4612 = vmatpush.bf16.msra.mxu0 %v3811
    %4613 = vmatpush.bf16.msra.mxu0 %v3807
    %4614 = vmatpush.bf16.msra.mxu0 %v3803
    %4615 = vmatpush.bf16.msra.mxu0 %v3799
    %4616 = vmatmul.bf16.gmra.mxu0 %v2692
    %v4617 = vpop.f32.mrf.mxu0
    %v4618 = vadd.f32 %v4604, %v4617
    %v4619 = vpop.f32.mrf.mxu0
    %v4620 = vadd.f32 %v4606, %v4619
    %4621 = vdwg.mxu0
    %4622 = vmatpush.bf16.msra.mxu0 %v3859
    %4623 = vmatpush.bf16.msra.mxu0 %v3855
    %4624 = vmatpush.bf16.msra.mxu0 %v3851
    %4625 = vmatpush.bf16.msra.mxu0 %v3847
    %4626 = vmatpush.bf16.msra.mxu0 %v3843
    %4627 = vmatpush.bf16.msra.mxu0 %v3839
    %4628 = vmatpush.bf16.msra.mxu0 %v3835
    %4629 = vmatpush.bf16.msra.mxu0 %v3831
    %4630 = vmatmul.bf16.gmra.mxu0 %v2693
    %v4631 = vpop.f32.mrf.mxu0
    %v4632 = vadd.f32 %v4618, %v4631
    %v4633 = vpop.f32.mrf.mxu0
    %v4634 = vadd.f32 %v4620, %v4633
    %4635 = vdwg.mxu0
    %4636 = vmatpush.bf16.msra.mxu0 %v3891
    %4637 = vmatpush.bf16.msra.mxu0 %v3887
    %4638 = vmatpush.bf16.msra.mxu0 %v3883
    %4639 = vmatpush.bf16.msra.mxu0 %v3879
    %4640 = vmatpush.bf16.msra.mxu0 %v3875
    %4641 = vmatpush.bf16.msra.mxu0 %v3871
    %4642 = vmatpush.bf16.msra.mxu0 %v3867
    %4643 = vmatpush.bf16.msra.mxu0 %v3863
    %4644 = vmatmul.bf16.gmra.mxu0 %v2694
    %v4645 = vpop.f32.mrf.mxu0
    %v4646 = vadd.f32 %v4632, %v4645
    %v4647 = vpop.f32.mrf.mxu0
    %v4648 = vadd.f32 %v4634, %v4647
    %4649 = vdwg.mxu0
    %4650 = vmatpush.bf16.msra.mxu0 %v3923
    %4651 = vmatpush.bf16.msra.mxu0 %v3919
    %4652 = vmatpush.bf16.msra.mxu0 %v3915
    %4653 = vmatpush.bf16.msra.mxu0 %v3911
    %4654 = vmatpush.bf16.msra.mxu0 %v3907
    %4655 = vmatpush.bf16.msra.mxu0 %v3903
    %4656 = vmatpush.bf16.msra.mxu0 %v3899
    %4657 = vmatpush.bf16.msra.mxu0 %v3895
    %4658 = vmatmul.bf16.gmra.mxu0 %v2695
    %v4659 = vpop.f32.mrf.mxu0
    %v4660 = vadd.f32 %v4646, %v4659
    %v4661 = vpop.f32.mrf.mxu0
    %v4662 = vadd.f32 %v4648, %v4661
    %4663 = vdwg.mxu0
    %4664 = vmatpush.bf16.msra.mxu0 %v3955
    %4665 = vmatpush.bf16.msra.mxu0 %v3951
    %4666 = vmatpush.bf16.msra.mxu0 %v3947
    %4667 = vmatpush.bf16.msra.mxu0 %v3943
    %4668 = vmatpush.bf16.msra.mxu0 %v3939
    %4669 = vmatpush.bf16.msra.mxu0 %v3935
    %4670 = vmatpush.bf16.msra.mxu0 %v3931
    %4671 = vmatpush.bf16.msra.mxu0 %v3927
    %4672 = vmatmul.bf16.gmra.mxu0 %v2696
    %v4673 = vpop.f32.mrf.mxu0
    %v4674 = vadd.f32 %v4660, %v4673
    %v4675 = vpop.f32.mrf.mxu0
    %v4676 = vadd.f32 %v4662, %v4675
    %4677 = vdwg.mxu0
    %4678 = vmatpush.bf16.msra.mxu0 %v3987
    %4679 = vmatpush.bf16.msra.mxu0 %v3983
    %4680 = vmatpush.bf16.msra.mxu0 %v3979
    %4681 = vmatpush.bf16.msra.mxu0 %v3975
    %4682 = vmatpush.bf16.msra.mxu0 %v3971
    %4683 = vmatpush.bf16.msra.mxu0 %v3967
    %4684 = vmatpush.bf16.msra.mxu0 %v3963
    %4685 = vmatpush.bf16.msra.mxu0 %v3959
    %4686 = vmatmul.bf16.gmra.mxu0 %v2697
    %v4687 = vpop.f32.mrf.mxu0
    %v4688 = vadd.f32 %v4674, %v4687
    %v4689 = vpop.f32.mrf.mxu0
    %v4690 = vadd.f32 %v4676, %v4689
    %4691 = vdwg.mxu0
    %v4692 = vmul.f32 %v4352, 0.5
    %v4693 = vmul.f32 %v4464, 0.5
    %v4694 = vmul.f32 %v4576, 0.5
    %v4695 = vmul.f32 %v4688, 0.5
    %v4696 = vmul.f32 %v4354, 0.5
    %v4697 = vmul.f32 %v4466, 0.5
    %v4698 = vmul.f32 %v4578, 0.5
    %v4699 = vmul.f32 %v4690, 0.5
    %v4700 = vmul.f32 %v4352, 0.044715
    %v4701 = vmul.f32 %v4464, 0.044715
    %v4702 = vmul.f32 %v4576, 0.044715
    %v4703 = vmul.f32 %v4688, 0.044715
    %v4704 = vmul.f32 %v4354, 0.044715
    %v4705 = vmul.f32 %v4466, 0.044715
    %v4706 = vmul.f32 %v4578, 0.044715
    %v4707 = vmul.f32 %v4690, 0.044715
    %v4708 = vmul.f32 %v4700, %v4352
    %v4709 = vmul.f32 %v4701, %v4464
    %v4710 = vmul.f32 %v4702, %v4576
    %v4711 = vmul.f32 %v4703, %v4688
    %v4712 = vmul.f32 %v4704, %v4354
    %v4713 = vmul.f32 %v4705, %v4466
    %v4714 = vmul.f32 %v4706, %v4578
    %v4715 = vmul.f32 %v4707, %v4690
    %v4716 = vmul.f32 %v4708, %v4352
    %v4717 = vmul.f32 %v4709, %v4464
    %v4718 = vmul.f32 %v4710, %v4576
    %v4719 = vmul.f32 %v4711, %v4688
    %v4720 = vmul.f32 %v4712, %v4354
    %v4721 = vmul.f32 %v4713, %v4466
    %v4722 = vmul.f32 %v4714, %v4578
    %v4723 = vmul.f32 %v4715, %v4690
    %v4724 = vadd.f32 %v4352, %v4716
    %v4725 = vadd.f32 %v4464, %v4717
    %v4726 = vadd.f32 %v4576, %v4718
    %v4727 = vadd.f32 %v4688, %v4719
    %v4728 = vadd.f32 %v4354, %v4720
    %v4729 = vadd.f32 %v4466, %v4721
    %v4730 = vadd.f32 %v4578, %v4722
    %v4731 = vadd.f32 %v4690, %v4723
    %v4732 = vmul.f32 %v4724, 0.7978846
    %v4733 = vmul.f32 %v4725, 0.7978846
    %v4734 = vmul.f32 %v4726, 0.7978846
    %v4735 = vmul.f32 %v4727, 0.7978846
    %v4736 = vmul.f32 %v4728, 0.7978846
    %v4737 = vmul.f32 %v4729, 0.7978846
    %v4738 = vmul.f32 %v4730, 0.7978846
    %v4739 = vmul.f32 %v4731, 0.7978846
    %v4740 = vtanh.pop %v4732
    %v4741 = vtanh.pop %v4733
    %v4742 = vtanh.pop %v4734
    %v4743 = vtanh.pop %v4735
    %v4744 = vtanh.pop %v4736
    %v4745 = vtanh.pop %v4737
    %v4746 = vtanh.pop %v4738
    %v4747 = vtanh.pop %v4739
    %v4748 = vadd.f32 %v4740, 1.0
    %v4749 = vadd.f32 %v4741, 1.0
    %v4750 = vadd.f32 %v4742, 1.0
    %v4751 = vadd.f32 %v4743, 1.0
    %v4752 = vadd.f32 %v4744, 1.0
    %v4753 = vadd.f32 %v4745, 1.0
    %v4754 = vadd.f32 %v4746, 1.0
    %v4755 = vadd.f32 %v4747, 1.0
    %v4756 = vmul.f32 %v4692, %v4748
    %v4757 = vmul.f32 %v4693, %v4749
    %v4758 = vmul.f32 %v4694, %v4750
    %v4759 = vmul.f32 %v4695, %v4751
    %v4760 = vmul.f32 %v4696, %v4752
    %v4761 = vmul.f32 %v4697, %v4753
    %v4762 = vmul.f32 %v4698, %v4754
    %v4763 = vmul.f32 %v4699, %v4755
    %v4764 = vpack.c.bf16 %v4760, %v4756
    %v4765 = vpack.c.bf16 %v4761, %v4757
    %v4766 = vpack.c.bf16 %v4762, %v4758
    %v4767 = vpack.c.bf16 %v4763, %v4759
    %v4768 = vld [vmem:[#allocation13] sm:$0xff]
    %v4769 = vld [vmem:[#allocation13 + $0x8] sm:$0xff]
    %v4770 = vld [vmem:[#allocation13 + $0x10] sm:$0xff]
    %v4771 = vld [vmem:[#allocation13 + $0x18] sm:$0xff]
    %v4772 = vld [vmem:[#allocation13 + $0x20] sm:$0xff]
    %v4773 = vld [vmem:[#allocation13 + $0x28] sm:$0xff]
    %v4774 = vld [vmem:[#allocation13 + $0x30] sm:$0xff]
    %v4775 = vld [vmem:[#allocation13 + $0x38] sm:$0xff]
    %v4776 = vld [vmem:[#allocation13 + $0x40] sm:$0xff]
    %v4777 = vld [vmem:[#allocation13 + $0x48] sm:$0xff]
    %v4778 = vld [vmem:[#allocation13 + $0x50] sm:$0xff]
    %v4779 = vld [vmem:[#allocation13 + $0x58] sm:$0xff]
    %v4780 = vld [vmem:[#allocation13 + $0x60] sm:$0xff]
    %v4781 = vld [vmem:[#allocation13 + $0x68] sm:$0xff]
    %v4782 = vld [vmem:[#allocation13 + $0x70] sm:$0xff]
    %v4783 = vld [vmem:[#allocation13 + $0x78] sm:$0xff]
    %v4784 = vld [vmem:[#allocation13 + $0x80] sm:$0xff]
    %v4785 = vld [vmem:[#allocation13 + $0x88] sm:$0xff]
    %v4786 = vld [vmem:[#allocation13 + $0x90] sm:$0xff]
    %v4787 = vld [vmem:[#allocation13 + $0x98] sm:$0xff]
    %v4788 = vld [vmem:[#allocation13 + $0xa0] sm:$0xff]
    %v4789 = vld [vmem:[#allocation13 + $0xa8] sm:$0xff]
    %v4790 = vld [vmem:[#allocation13 + $0xb0] sm:$0xff]
    %v4791 = vld [vmem:[#allocation13 + $0xb8] sm:$0xff]
    %v4792 = vld [vmem:[#allocation13 + $0xc0] sm:$0xff]
    %v4793 = vld [vmem:[#allocation13 + $0xc8] sm:$0xff]
    %v4794 = vld [vmem:[#allocation13 + $0xd0] sm:$0xff]
    %v4795 = vld [vmem:[#allocation13 + $0xd8] sm:$0xff]
    %v4796 = vld [vmem:[#allocation13 + $0xe0] sm:$0xff]
    %v4797 = vld [vmem:[#allocation13 + $0xe8] sm:$0xff]
    %v4798 = vld [vmem:[#allocation13 + $0xf0] sm:$0xff]
    %v4799 = vld [vmem:[#allocation13 + $0xf8] sm:$0xff]
    %v4800 = vld [vmem:[#allocation13 + $0x100] sm:$0xff]
    %v4801 = vld [vmem:[#allocation13 + $0x108] sm:$0xff]
    %v4802 = vld [vmem:[#allocation13 + $0x110] sm:$0xff]
    %v4803 = vld [vmem:[#allocation13 + $0x118] sm:$0xff]
    %v4804 = vld [vmem:[#allocation13 + $0x120] sm:$0xff]
    %v4805 = vld [vmem:[#allocation13 + $0x128] sm:$0xff]
    %v4806 = vld [vmem:[#allocation13 + $0x130] sm:$0xff]
    %v4807 = vld [vmem:[#allocation13 + $0x138] sm:$0xff]
    %v4808 = vld [vmem:[#allocation13 + $0x140] sm:$0xff]
    %v4809 = vld [vmem:[#allocation13 + $0x148] sm:$0xff]
    %v4810 = vld [vmem:[#allocation13 + $0x150] sm:$0xff]
    %v4811 = vld [vmem:[#allocation13 + $0x158] sm:$0xff]
    %v4812 = vld [vmem:[#allocation13 + $0x160] sm:$0xff]
    %v4813 = vld [vmem:[#allocation13 + $0x168] sm:$0xff]
    %v4814 = vld [vmem:[#allocation13 + $0x170] sm:$0xff]
    %v4815 = vld [vmem:[#allocation13 + $0x178] sm:$0xff]
    %v4816 = vld [vmem:[#allocation13 + $0x180] sm:$0xff]
    %v4817 = vld [vmem:[#allocation13 + $0x188] sm:$0xff]
    %v4818 = vld [vmem:[#allocation13 + $0x190] sm:$0xff]
    %v4819 = vld [vmem:[#allocation13 + $0x198] sm:$0xff]
    %v4820 = vld [vmem:[#allocation13 + $0x1a0] sm:$0xff]
    %v4821 = vld [vmem:[#allocation13 + $0x1a8] sm:$0xff]
    %v4822 = vld [vmem:[#allocation13 + $0x1b0] sm:$0xff]
    %v4823 = vld [vmem:[#allocation13 + $0x1b8] sm:$0xff]
    %v4824 = vld [vmem:[#allocation13 + $0x1c0] sm:$0xff]
    %v4825 = vld [vmem:[#allocation13 + $0x1c8] sm:$0xff]
    %v4826 = vld [vmem:[#allocation13 + $0x1d0] sm:$0xff]
    %v4827 = vld [vmem:[#allocation13 + $0x1d8] sm:$0xff]
    %v4828 = vld [vmem:[#allocation13 + $0x1e0] sm:$0xff]
    %v4829 = vld [vmem:[#allocation13 + $0x1e8] sm:$0xff]
    %v4830 = vld [vmem:[#allocation13 + $0x1f0] sm:$0xff]
    %v4831 = vld [vmem:[#allocation13 + $0x1f8] sm:$0xff]
    %v4832 = vld [vmem:[#allocation13 + $0x200] sm:$0xff]
    %v4833 = vld [vmem:[#allocation13 + $0x208] sm:$0xff]
    %v4834 = vld [vmem:[#allocation13 + $0x210] sm:$0xff]
    %v4835 = vld [vmem:[#allocation13 + $0x218] sm:$0xff]
    %v4836 = vld [vmem:[#allocation13 + $0x220] sm:$0xff]
    %v4837 = vld [vmem:[#allocation13 + $0x228] sm:$0xff]
    %v4838 = vld [vmem:[#allocation13 + $0x230] sm:$0xff]
    %v4839 = vld [vmem:[#allocation13 + $0x238] sm:$0xff]
    %v4840 = vld [vmem:[#allocation13 + $0x240] sm:$0xff]
    %v4841 = vld [vmem:[#allocation13 + $0x248] sm:$0xff]
    %v4842 = vld [vmem:[#allocation13 + $0x250] sm:$0xff]
    %v4843 = vld [vmem:[#allocation13 + $0x258] sm:$0xff]
    %v4844 = vld [vmem:[#allocation13 + $0x260] sm:$0xff]
    %v4845 = vld [vmem:[#allocation13 + $0x268] sm:$0xff]
    %v4846 = vld [vmem:[#allocation13 + $0x270] sm:$0xff]
    %v4847 = vld [vmem:[#allocation13 + $0x278] sm:$0xff]
    %v4848 = vld [vmem:[#allocation13 + $0x280] sm:$0xff]
    %v4849 = vld [vmem:[#allocation13 + $0x288] sm:$0xff]
    %v4850 = vld [vmem:[#allocation13 + $0x290] sm:$0xff]
    %v4851 = vld [vmem:[#allocation13 + $0x298] sm:$0xff]
    %v4852 = vld [vmem:[#allocation13 + $0x2a0] sm:$0xff]
    %v4853 = vld [vmem:[#allocation13 + $0x2a8] sm:$0xff]
    %v4854 = vld [vmem:[#allocation13 + $0x2b0] sm:$0xff]
    %v4855 = vld [vmem:[#allocation13 + $0x2b8] sm:$0xff]
    %v4856 = vld [vmem:[#allocation13 + $0x2c0] sm:$0xff]
    %v4857 = vld [vmem:[#allocation13 + $0x2c8] sm:$0xff]
    %v4858 = vld [vmem:[#allocation13 + $0x2d0] sm:$0xff]
    %v4859 = vld [vmem:[#allocation13 + $0x2d8] sm:$0xff]
    %v4860 = vld [vmem:[#allocation13 + $0x2e0] sm:$0xff]
    %v4861 = vld [vmem:[#allocation13 + $0x2e8] sm:$0xff]
    %v4862 = vld [vmem:[#allocation13 + $0x2f0] sm:$0xff]
    %v4863 = vld [vmem:[#allocation13 + $0x2f8] sm:$0xff]
    %v4864 = vld [vmem:[#allocation13 + $0x300] sm:$0xff]
    %v4865 = vld [vmem:[#allocation13 + $0x308] sm:$0xff]
    %v4866 = vld [vmem:[#allocation13 + $0x310] sm:$0xff]
    %v4867 = vld [vmem:[#allocation13 + $0x318] sm:$0xff]
    %v4868 = vld [vmem:[#allocation13 + $0x320] sm:$0xff]
    %v4869 = vld [vmem:[#allocation13 + $0x328] sm:$0xff]
    %v4870 = vld [vmem:[#allocation13 + $0x330] sm:$0xff]
    %v4871 = vld [vmem:[#allocation13 + $0x338] sm:$0xff]
    %v4872 = vld [vmem:[#allocation13 + $0x340] sm:$0xff]
    %v4873 = vld [vmem:[#allocation13 + $0x348] sm:$0xff]
    %v4874 = vld [vmem:[#allocation13 + $0x350] sm:$0xff]
    %v4875 = vld [vmem:[#allocation13 + $0x358] sm:$0xff]
    %v4876 = vld [vmem:[#allocation13 + $0x360] sm:$0xff]
    %v4877 = vld [vmem:[#allocation13 + $0x368] sm:$0xff]
    %v4878 = vld [vmem:[#allocation13 + $0x370] sm:$0xff]
    %v4879 = vld [vmem:[#allocation13 + $0x378] sm:$0xff]
    %v4880 = vld [vmem:[#allocation13 + $0x380] sm:$0xff]
    %v4881 = vld [vmem:[#allocation13 + $0x388] sm:$0xff]
    %v4882 = vld [vmem:[#allocation13 + $0x390] sm:$0xff]
    %v4883 = vld [vmem:[#allocation13 + $0x398] sm:$0xff]
    %v4884 = vld [vmem:[#allocation13 + $0x3a0] sm:$0xff]
    %v4885 = vld [vmem:[#allocation13 + $0x3a8] sm:$0xff]
    %v4886 = vld [vmem:[#allocation13 + $0x3b0] sm:$0xff]
    %v4887 = vld [vmem:[#allocation13 + $0x3b8] sm:$0xff]
    %v4888 = vld [vmem:[#allocation13 + $0x3c0] sm:$0xff]
    %v4889 = vld [vmem:[#allocation13 + $0x3c8] sm:$0xff]
    %v4890 = vld [vmem:[#allocation13 + $0x3d0] sm:$0xff]
    %v4891 = vld [vmem:[#allocation13 + $0x3d8] sm:$0xff]
    %v4892 = vld [vmem:[#allocation13 + $0x3e0] sm:$0xff]
    %v4893 = vld [vmem:[#allocation13 + $0x3e8] sm:$0xff]
    %v4894 = vld [vmem:[#allocation13 + $0x3f0] sm:$0xff]
    %v4895 = vld [vmem:[#allocation13 + $0x3f8] sm:$0xff]
    %v4896 = vld [vmem:[#allocation13 + $0x400] sm:$0xff]
    %v4897 = vld [vmem:[#allocation13 + $0x408] sm:$0xff]
    %v4898 = vld [vmem:[#allocation13 + $0x410] sm:$0xff]
    %v4899 = vld [vmem:[#allocation13 + $0x418] sm:$0xff]
    %v4900 = vld [vmem:[#allocation13 + $0x420] sm:$0xff]
    %v4901 = vld [vmem:[#allocation13 + $0x428] sm:$0xff]
    %v4902 = vld [vmem:[#allocation13 + $0x430] sm:$0xff]
    %v4903 = vld [vmem:[#allocation13 + $0x438] sm:$0xff]
    %v4904 = vld [vmem:[#allocation13 + $0x440] sm:$0xff]
    %v4905 = vld [vmem:[#allocation13 + $0x448] sm:$0xff]
    %v4906 = vld [vmem:[#allocation13 + $0x450] sm:$0xff]
    %v4907 = vld [vmem:[#allocation13 + $0x458] sm:$0xff]
    %v4908 = vld [vmem:[#allocation13 + $0x460] sm:$0xff]
    %v4909 = vld [vmem:[#allocation13 + $0x468] sm:$0xff]
    %v4910 = vld [vmem:[#allocation13 + $0x470] sm:$0xff]
    %v4911 = vld [vmem:[#allocation13 + $0x478] sm:$0xff]
    %v4912 = vld [vmem:[#allocation13 + $0x480] sm:$0xff]
    %v4913 = vld [vmem:[#allocation13 + $0x488] sm:$0xff]
    %v4914 = vld [vmem:[#allocation13 + $0x490] sm:$0xff]
    %v4915 = vld [vmem:[#allocation13 + $0x498] sm:$0xff]
    %v4916 = vld [vmem:[#allocation13 + $0x4a0] sm:$0xff]
    %v4917 = vld [vmem:[#allocation13 + $0x4a8] sm:$0xff]
    %v4918 = vld [vmem:[#allocation13 + $0x4b0] sm:$0xff]
    %v4919 = vld [vmem:[#allocation13 + $0x4b8] sm:$0xff]
    %v4920 = vld [vmem:[#allocation13 + $0x4c0] sm:$0xff]
    %v4921 = vld [vmem:[#allocation13 + $0x4c8] sm:$0xff]
    %v4922 = vld [vmem:[#allocation13 + $0x4d0] sm:$0xff]
    %v4923 = vld [vmem:[#allocation13 + $0x4d8] sm:$0xff]
    %v4924 = vld [vmem:[#allocation13 + $0x4e0] sm:$0xff]
    %v4925 = vld [vmem:[#allocation13 + $0x4e8] sm:$0xff]
    %v4926 = vld [vmem:[#allocation13 + $0x4f0] sm:$0xff]
    %v4927 = vld [vmem:[#allocation13 + $0x4f8] sm:$0xff]
    %v4928 = vld [vmem:[#allocation13 + $0x500] sm:$0xff]
    %v4929 = vld [vmem:[#allocation13 + $0x508] sm:$0xff]
    %v4930 = vld [vmem:[#allocation13 + $0x510] sm:$0xff]
    %v4931 = vld [vmem:[#allocation13 + $0x518] sm:$0xff]
    %v4932 = vld [vmem:[#allocation13 + $0x520] sm:$0xff]
    %v4933 = vld [vmem:[#allocation13 + $0x528] sm:$0xff]
    %v4934 = vld [vmem:[#allocation13 + $0x530] sm:$0xff]
    %v4935 = vld [vmem:[#allocation13 + $0x538] sm:$0xff]
    %v4936 = vld [vmem:[#allocation13 + $0x540] sm:$0xff]
    %v4937 = vld [vmem:[#allocation13 + $0x548] sm:$0xff]
    %v4938 = vld [vmem:[#allocation13 + $0x550] sm:$0xff]
    %v4939 = vld [vmem:[#allocation13 + $0x558] sm:$0xff]
    %v4940 = vld [vmem:[#allocation13 + $0x560] sm:$0xff]
    %v4941 = vld [vmem:[#allocation13 + $0x568] sm:$0xff]
    %v4942 = vld [vmem:[#allocation13 + $0x570] sm:$0xff]
    %v4943 = vld [vmem:[#allocation13 + $0x578] sm:$0xff]
    %v4944 = vld [vmem:[#allocation13 + $0x580] sm:$0xff]
    %v4945 = vld [vmem:[#allocation13 + $0x588] sm:$0xff]
    %v4946 = vld [vmem:[#allocation13 + $0x590] sm:$0xff]
    %v4947 = vld [vmem:[#allocation13 + $0x598] sm:$0xff]
    %v4948 = vld [vmem:[#allocation13 + $0x5a0] sm:$0xff]
    %v4949 = vld [vmem:[#allocation13 + $0x5a8] sm:$0xff]
    %v4950 = vld [vmem:[#allocation13 + $0x5b0] sm:$0xff]
    %v4951 = vld [vmem:[#allocation13 + $0x5b8] sm:$0xff]
    %v4952 = vld [vmem:[#allocation13 + $0x5c0] sm:$0xff]
    %v4953 = vld [vmem:[#allocation13 + $0x5c8] sm:$0xff]
    %v4954 = vld [vmem:[#allocation13 + $0x5d0] sm:$0xff]
    %v4955 = vld [vmem:[#allocation13 + $0x5d8] sm:$0xff]
    %v4956 = vld [vmem:[#allocation13 + $0x5e0] sm:$0xff]
    %v4957 = vld [vmem:[#allocation13 + $0x5e8] sm:$0xff]
    %v4958 = vld [vmem:[#allocation13 + $0x5f0] sm:$0xff]
    %v4959 = vld [vmem:[#allocation13 + $0x5f8] sm:$0xff]
    %v4960 = vld [vmem:[#allocation13 + $0x600] sm:$0xff]
    %v4961 = vld [vmem:[#allocation13 + $0x608] sm:$0xff]
    %v4962 = vld [vmem:[#allocation13 + $0x610] sm:$0xff]
    %v4963 = vld [vmem:[#allocation13 + $0x618] sm:$0xff]
    %v4964 = vld [vmem:[#allocation13 + $0x620] sm:$0xff]
    %v4965 = vld [vmem:[#allocation13 + $0x628] sm:$0xff]
    %v4966 = vld [vmem:[#allocation13 + $0x630] sm:$0xff]
    %v4967 = vld [vmem:[#allocation13 + $0x638] sm:$0xff]
    %v4968 = vld [vmem:[#allocation13 + $0x640] sm:$0xff]
    %v4969 = vld [vmem:[#allocation13 + $0x648] sm:$0xff]
    %v4970 = vld [vmem:[#allocation13 + $0x650] sm:$0xff]
    %v4971 = vld [vmem:[#allocation13 + $0x658] sm:$0xff]
    %v4972 = vld [vmem:[#allocation13 + $0x660] sm:$0xff]
    %v4973 = vld [vmem:[#allocation13 + $0x668] sm:$0xff]
    %v4974 = vld [vmem:[#allocation13 + $0x670] sm:$0xff]
    %v4975 = vld [vmem:[#allocation13 + $0x678] sm:$0xff]
    %v4976 = vld [vmem:[#allocation13 + $0x680] sm:$0xff]
    %v4977 = vld [vmem:[#allocation13 + $0x688] sm:$0xff]
    %v4978 = vld [vmem:[#allocation13 + $0x690] sm:$0xff]
    %v4979 = vld [vmem:[#allocation13 + $0x698] sm:$0xff]
    %v4980 = vld [vmem:[#allocation13 + $0x6a0] sm:$0xff]
    %v4981 = vld [vmem:[#allocation13 + $0x6a8] sm:$0xff]
    %v4982 = vld [vmem:[#allocation13 + $0x6b0] sm:$0xff]
    %v4983 = vld [vmem:[#allocation13 + $0x6b8] sm:$0xff]
    %v4984 = vld [vmem:[#allocation13 + $0x6c0] sm:$0xff]
    %v4985 = vld [vmem:[#allocation13 + $0x6c8] sm:$0xff]
    %v4986 = vld [vmem:[#allocation13 + $0x6d0] sm:$0xff]
    %v4987 = vld [vmem:[#allocation13 + $0x6d8] sm:$0xff]
    %v4988 = vld [vmem:[#allocation13 + $0x6e0] sm:$0xff]
    %v4989 = vld [vmem:[#allocation13 + $0x6e8] sm:$0xff]
    %v4990 = vld [vmem:[#allocation13 + $0x6f0] sm:$0xff]
    %v4991 = vld [vmem:[#allocation13 + $0x6f8] sm:$0xff]
    %v4992 = vld [vmem:[#allocation13 + $0x700] sm:$0xff]
    %v4993 = vld [vmem:[#allocation13 + $0x708] sm:$0xff]
    %v4994 = vld [vmem:[#allocation13 + $0x710] sm:$0xff]
    %v4995 = vld [vmem:[#allocation13 + $0x718] sm:$0xff]
    %v4996 = vld [vmem:[#allocation13 + $0x720] sm:$0xff]
    %v4997 = vld [vmem:[#allocation13 + $0x728] sm:$0xff]
    %v4998 = vld [vmem:[#allocation13 + $0x730] sm:$0xff]
    %v4999 = vld [vmem:[#allocation13 + $0x738] sm:$0xff]
    %v5000 = vld [vmem:[#allocation13 + $0x740] sm:$0xff]
    %v5001 = vld [vmem:[#allocation13 + $0x748] sm:$0xff]
    %v5002 = vld [vmem:[#allocation13 + $0x750] sm:$0xff]
    %v5003 = vld [vmem:[#allocation13 + $0x758] sm:$0xff]
    %v5004 = vld [vmem:[#allocation13 + $0x760] sm:$0xff]
    %v5005 = vld [vmem:[#allocation13 + $0x768] sm:$0xff]
    %v5006 = vld [vmem:[#allocation13 + $0x770] sm:$0xff]
    %v5007 = vld [vmem:[#allocation13 + $0x778] sm:$0xff]
    %v5008 = vld [vmem:[#allocation13 + $0x780] sm:$0xff]
    %v5009 = vld [vmem:[#allocation13 + $0x788] sm:$0xff]
    %v5010 = vld [vmem:[#allocation13 + $0x790] sm:$0xff]
    %v5011 = vld [vmem:[#allocation13 + $0x798] sm:$0xff]
    %v5012 = vld [vmem:[#allocation13 + $0x7a0] sm:$0xff]
    %v5013 = vld [vmem:[#allocation13 + $0x7a8] sm:$0xff]
    %v5014 = vld [vmem:[#allocation13 + $0x7b0] sm:$0xff]
    %v5015 = vld [vmem:[#allocation13 + $0x7b8] sm:$0xff]
    %v5016 = vld [vmem:[#allocation13 + $0x7c0] sm:$0xff]
    %v5017 = vld [vmem:[#allocation13 + $0x7c8] sm:$0xff]
    %v5018 = vld [vmem:[#allocation13 + $0x7d0] sm:$0xff]
    %v5019 = vld [vmem:[#allocation13 + $0x7d8] sm:$0xff]
    %v5020 = vld [vmem:[#allocation13 + $0x7e0] sm:$0xff]
    %v5021 = vld [vmem:[#allocation13 + $0x7e8] sm:$0xff]
    %v5022 = vld [vmem:[#allocation13 + $0x7f0] sm:$0xff]
    %v5023 = vld [vmem:[#allocation13 + $0x7f8] sm:$0xff]
    %v5024 = vld [vmem:[#allocation14] sm:$0xff]
    %v5026 = vperm.slane %v5024, 0
    %v5027 = vperm.slane %v5024, 1
    %v5028 = vperm.slane %v5024, 2
    %v5029 = vperm.slane %v5024, 3
    %v5030 = vperm.slane %v5024, 4
    %v5031 = vperm.slane %v5024, 5
    %v5032 = vperm.slane %v5024, 6
    %v5033 = vperm.slane %v5024, 7
    %v5298 = vunpack.c.l.b16 %v4768
    %v5299 = vunpack.c.h.b16 %v4768
    %v5300 = vunpack.c.l.b16 %v4769
    %v5301 = vunpack.c.h.b16 %v4769
    %v5302 = vunpack.c.l.b16 %v4770
    %v5303 = vunpack.c.h.b16 %v4770
    %v5304 = vunpack.c.l.b16 %v4771
    %v5305 = vunpack.c.h.b16 %v4771
    %v5306 = vunpack.c.l.b16 %v4772
    %v5307 = vunpack.c.h.b16 %v4772
    %v5308 = vunpack.c.l.b16 %v4773
    %v5309 = vunpack.c.h.b16 %v4773
    %v5310 = vunpack.c.l.b16 %v4774
    %v5311 = vunpack.c.h.b16 %v4774
    %v5312 = vunpack.c.l.b16 %v4775
    %v5313 = vunpack.c.h.b16 %v4775
    %v5314 = vunpack.c.l.b16 %v4776
    %v5315 = vunpack.c.h.b16 %v4776
    %v5316 = vunpack.c.l.b16 %v4777
    %v5317 = vunpack.c.h.b16 %v4777
    %v5318 = vunpack.c.l.b16 %v4778
    %v5319 = vunpack.c.h.b16 %v4778
    %v5320 = vunpack.c.l.b16 %v4779
    %v5321 = vunpack.c.h.b16 %v4779
    %v5322 = vunpack.c.l.b16 %v4780
    %v5323 = vunpack.c.h.b16 %v4780
    %v5324 = vunpack.c.l.b16 %v4781
    %v5325 = vunpack.c.h.b16 %v4781
    %v5326 = vunpack.c.l.b16 %v4782
    %v5327 = vunpack.c.h.b16 %v4782
    %v5328 = vunpack.c.l.b16 %v4783
    %v5329 = vunpack.c.h.b16 %v4783
    %v5330 = vunpack.c.l.b16 %v4784
    %v5331 = vunpack.c.h.b16 %v4784
    %v5332 = vunpack.c.l.b16 %v4785
    %v5333 = vunpack.c.h.b16 %v4785
    %v5334 = vunpack.c.l.b16 %v4786
    %v5335 = vunpack.c.h.b16 %v4786
    %v5336 = vunpack.c.l.b16 %v4787
    %v5337 = vunpack.c.h.b16 %v4787
    %v5338 = vunpack.c.l.b16 %v4788
    %v5339 = vunpack.c.h.b16 %v4788
    %v5340 = vunpack.c.l.b16 %v4789
    %v5341 = vunpack.c.h.b16 %v4789
    %v5342 = vunpack.c.l.b16 %v4790
    %v5343 = vunpack.c.h.b16 %v4790
    %v5344 = vunpack.c.l.b16 %v4791
    %v5345 = vunpack.c.h.b16 %v4791
    %v5346 = vunpack.c.l.b16 %v4792
    %v5347 = vunpack.c.h.b16 %v4792
    %v5348 = vunpack.c.l.b16 %v4793
    %v5349 = vunpack.c.h.b16 %v4793
    %v5350 = vunpack.c.l.b16 %v4794
    %v5351 = vunpack.c.h.b16 %v4794
    %v5352 = vunpack.c.l.b16 %v4795
    %v5353 = vunpack.c.h.b16 %v4795
    %v5354 = vunpack.c.l.b16 %v4796
    %v5355 = vunpack.c.h.b16 %v4796
    %v5356 = vunpack.c.l.b16 %v4797
    %v5357 = vunpack.c.h.b16 %v4797
    %v5358 = vunpack.c.l.b16 %v4798
    %v5359 = vunpack.c.h.b16 %v4798
    %v5360 = vunpack.c.l.b16 %v4799
    %v5361 = vunpack.c.h.b16 %v4799
    %v5362 = vunpack.c.l.b16 %v4800
    %v5363 = vunpack.c.h.b16 %v4800
    %v5364 = vunpack.c.l.b16 %v4801
    %v5365 = vunpack.c.h.b16 %v4801
    %v5366 = vunpack.c.l.b16 %v4802
    %v5367 = vunpack.c.h.b16 %v4802
    %v5368 = vunpack.c.l.b16 %v4803
    %v5369 = vunpack.c.h.b16 %v4803
    %v5370 = vunpack.c.l.b16 %v4804
    %v5371 = vunpack.c.h.b16 %v4804
    %v5372 = vunpack.c.l.b16 %v4805
    %v5373 = vunpack.c.h.b16 %v4805
    %v5374 = vunpack.c.l.b16 %v4806
    %v5375 = vunpack.c.h.b16 %v4806
    %v5376 = vunpack.c.l.b16 %v4807
    %v5377 = vunpack.c.h.b16 %v4807
    %v5378 = vunpack.c.l.b16 %v4808
    %v5379 = vunpack.c.h.b16 %v4808
    %v5380 = vunpack.c.l.b16 %v4809
    %v5381 = vunpack.c.h.b16 %v4809
    %v5382 = vunpack.c.l.b16 %v4810
    %v5383 = vunpack.c.h.b16 %v4810
    %v5384 = vunpack.c.l.b16 %v4811
    %v5385 = vunpack.c.h.b16 %v4811
    %v5386 = vunpack.c.l.b16 %v4812
    %v5387 = vunpack.c.h.b16 %v4812
    %v5388 = vunpack.c.l.b16 %v4813
    %v5389 = vunpack.c.h.b16 %v4813
    %v5390 = vunpack.c.l.b16 %v4814
    %v5391 = vunpack.c.h.b16 %v4814
    %v5392 = vunpack.c.l.b16 %v4815
    %v5393 = vunpack.c.h.b16 %v4815
    %v5394 = vunpack.c.l.b16 %v4816
    %v5395 = vunpack.c.h.b16 %v4816
    %v5396 = vunpack.c.l.b16 %v4817
    %v5397 = vunpack.c.h.b16 %v4817
    %v5398 = vunpack.c.l.b16 %v4818
    %v5399 = vunpack.c.h.b16 %v4818
    %v5400 = vunpack.c.l.b16 %v4819
    %v5401 = vunpack.c.h.b16 %v4819
    %v5402 = vunpack.c.l.b16 %v4820
    %v5403 = vunpack.c.h.b16 %v4820
    %v5404 = vunpack.c.l.b16 %v4821
    %v5405 = vunpack.c.h.b16 %v4821
    %v5406 = vunpack.c.l.b16 %v4822
    %v5407 = vunpack.c.h.b16 %v4822
    %v5408 = vunpack.c.l.b16 %v4823
    %v5409 = vunpack.c.h.b16 %v4823
    %v5410 = vunpack.c.l.b16 %v4824
    %v5411 = vunpack.c.h.b16 %v4824
    %v5412 = vunpack.c.l.b16 %v4825
    %v5413 = vunpack.c.h.b16 %v4825
    %v5414 = vunpack.c.l.b16 %v4826
    %v5415 = vunpack.c.h.b16 %v4826
    %v5416 = vunpack.c.l.b16 %v4827
    %v5417 = vunpack.c.h.b16 %v4827
    %v5418 = vunpack.c.l.b16 %v4828
    %v5419 = vunpack.c.h.b16 %v4828
    %v5420 = vunpack.c.l.b16 %v4829
    %v5421 = vunpack.c.h.b16 %v4829
    %v5422 = vunpack.c.l.b16 %v4830
    %v5423 = vunpack.c.h.b16 %v4830
    %v5424 = vunpack.c.l.b16 %v4831
    %v5425 = vunpack.c.h.b16 %v4831
    %v5426 = vunpack.c.l.b16 %v4832
    %v5427 = vunpack.c.h.b16 %v4832
    %v5428 = vunpack.c.l.b16 %v4833
    %v5429 = vunpack.c.h.b16 %v4833
    %v5430 = vunpack.c.l.b16 %v4834
    %v5431 = vunpack.c.h.b16 %v4834
    %v5432 = vunpack.c.l.b16 %v4835
    %v5433 = vunpack.c.h.b16 %v4835
    %v5434 = vunpack.c.l.b16 %v4836
    %v5435 = vunpack.c.h.b16 %v4836
    %v5436 = vunpack.c.l.b16 %v4837
    %v5437 = vunpack.c.h.b16 %v4837
    %v5438 = vunpack.c.l.b16 %v4838
    %v5439 = vunpack.c.h.b16 %v4838
    %v5440 = vunpack.c.l.b16 %v4839
    %v5441 = vunpack.c.h.b16 %v4839
    %v5442 = vunpack.c.l.b16 %v4840
    %v5443 = vunpack.c.h.b16 %v4840
    %v5444 = vunpack.c.l.b16 %v4841
    %v5445 = vunpack.c.h.b16 %v4841
    %v5446 = vunpack.c.l.b16 %v4842
    %v5447 = vunpack.c.h.b16 %v4842
    %v5448 = vunpack.c.l.b16 %v4843
    %v5449 = vunpack.c.h.b16 %v4843
    %v5450 = vunpack.c.l.b16 %v4844
    %v5451 = vunpack.c.h.b16 %v4844
    %v5452 = vunpack.c.l.b16 %v4845
    %v5453 = vunpack.c.h.b16 %v4845
    %v5454 = vunpack.c.l.b16 %v4846
    %v5455 = vunpack.c.h.b16 %v4846
    %v5456 = vunpack.c.l.b16 %v4847
    %v5457 = vunpack.c.h.b16 %v4847
    %v5458 = vunpack.c.l.b16 %v4848
    %v5459 = vunpack.c.h.b16 %v4848
    %v5460 = vunpack.c.l.b16 %v4849
    %v5461 = vunpack.c.h.b16 %v4849
    %v5462 = vunpack.c.l.b16 %v4850
    %v5463 = vunpack.c.h.b16 %v4850
    %v5464 = vunpack.c.l.b16 %v4851
    %v5465 = vunpack.c.h.b16 %v4851
    %v5466 = vunpack.c.l.b16 %v4852
    %v5467 = vunpack.c.h.b16 %v4852
    %v5468 = vunpack.c.l.b16 %v4853
    %v5469 = vunpack.c.h.b16 %v4853
    %v5470 = vunpack.c.l.b16 %v4854
    %v5471 = vunpack.c.h.b16 %v4854
    %v5472 = vunpack.c.l.b16 %v4855
    %v5473 = vunpack.c.h.b16 %v4855
    %v5474 = vunpack.c.l.b16 %v4856
    %v5475 = vunpack.c.h.b16 %v4856
    %v5476 = vunpack.c.l.b16 %v4857
    %v5477 = vunpack.c.h.b16 %v4857
    %v5478 = vunpack.c.l.b16 %v4858
    %v5479 = vunpack.c.h.b16 %v4858
    %v5480 = vunpack.c.l.b16 %v4859
    %v5481 = vunpack.c.h.b16 %v4859
    %v5482 = vunpack.c.l.b16 %v4860
    %v5483 = vunpack.c.h.b16 %v4860
    %v5484 = vunpack.c.l.b16 %v4861
    %v5485 = vunpack.c.h.b16 %v4861
    %v5486 = vunpack.c.l.b16 %v4862
    %v5487 = vunpack.c.h.b16 %v4862
    %v5488 = vunpack.c.l.b16 %v4863
    %v5489 = vunpack.c.h.b16 %v4863
    %v5490 = vunpack.c.l.b16 %v4864
    %v5491 = vunpack.c.h.b16 %v4864
    %v5492 = vunpack.c.l.b16 %v4865
    %v5493 = vunpack.c.h.b16 %v4865
    %v5494 = vunpack.c.l.b16 %v4866
    %v5495 = vunpack.c.h.b16 %v4866
    %v5496 = vunpack.c.l.b16 %v4867
    %v5497 = vunpack.c.h.b16 %v4867
    %v5498 = vunpack.c.l.b16 %v4868
    %v5499 = vunpack.c.h.b16 %v4868
    %v5500 = vunpack.c.l.b16 %v4869
    %v5501 = vunpack.c.h.b16 %v4869
    %v5502 = vunpack.c.l.b16 %v4870
    %v5503 = vunpack.c.h.b16 %v4870
    %v5504 = vunpack.c.l.b16 %v4871
    %v5505 = vunpack.c.h.b16 %v4871
    %v5506 = vunpack.c.l.b16 %v4872
    %v5507 = vunpack.c.h.b16 %v4872
    %v5508 = vunpack.c.l.b16 %v4873
    %v5509 = vunpack.c.h.b16 %v4873
    %v5510 = vunpack.c.l.b16 %v4874
    %v5511 = vunpack.c.h.b16 %v4874
    %v5512 = vunpack.c.l.b16 %v4875
    %v5513 = vunpack.c.h.b16 %v4875
    %v5514 = vunpack.c.l.b16 %v4876
    %v5515 = vunpack.c.h.b16 %v4876
    %v5516 = vunpack.c.l.b16 %v4877
    %v5517 = vunpack.c.h.b16 %v4877
    %v5518 = vunpack.c.l.b16 %v4878
    %v5519 = vunpack.c.h.b16 %v4878
    %v5520 = vunpack.c.l.b16 %v4879
    %v5521 = vunpack.c.h.b16 %v4879
    %v5522 = vunpack.c.l.b16 %v4880
    %v5523 = vunpack.c.h.b16 %v4880
    %v5524 = vunpack.c.l.b16 %v4881
    %v5525 = vunpack.c.h.b16 %v4881
    %v5526 = vunpack.c.l.b16 %v4882
    %v5527 = vunpack.c.h.b16 %v4882
    %v5528 = vunpack.c.l.b16 %v4883
    %v5529 = vunpack.c.h.b16 %v4883
    %v5530 = vunpack.c.l.b16 %v4884
    %v5531 = vunpack.c.h.b16 %v4884
    %v5532 = vunpack.c.l.b16 %v4885
    %v5533 = vunpack.c.h.b16 %v4885
    %v5534 = vunpack.c.l.b16 %v4886
    %v5535 = vunpack.c.h.b16 %v4886
    %v5536 = vunpack.c.l.b16 %v4887
    %v5537 = vunpack.c.h.b16 %v4887
    %v5538 = vunpack.c.l.b16 %v4888
    %v5539 = vunpack.c.h.b16 %v4888
    %v5540 = vunpack.c.l.b16 %v4889
    %v5541 = vunpack.c.h.b16 %v4889
    %v5542 = vunpack.c.l.b16 %v4890
    %v5543 = vunpack.c.h.b16 %v4890
    %v5544 = vunpack.c.l.b16 %v4891
    %v5545 = vunpack.c.h.b16 %v4891
    %v5546 = vunpack.c.l.b16 %v4892
    %v5547 = vunpack.c.h.b16 %v4892
    %v5548 = vunpack.c.l.b16 %v4893
    %v5549 = vunpack.c.h.b16 %v4893
    %v5550 = vunpack.c.l.b16 %v4894
    %v5551 = vunpack.c.h.b16 %v4894
    %v5552 = vunpack.c.l.b16 %v4895
    %v5553 = vunpack.c.h.b16 %v4895
    %v5554 = vunpack.c.l.b16 %v4896
    %v5555 = vunpack.c.h.b16 %v4896
    %v5556 = vunpack.c.l.b16 %v4897
    %v5557 = vunpack.c.h.b16 %v4897
    %v5558 = vunpack.c.l.b16 %v4898
    %v5559 = vunpack.c.h.b16 %v4898
    %v5560 = vunpack.c.l.b16 %v4899
    %v5561 = vunpack.c.h.b16 %v4899
    %v5562 = vunpack.c.l.b16 %v4900
    %v5563 = vunpack.c.h.b16 %v4900
    %v5564 = vunpack.c.l.b16 %v4901
    %v5565 = vunpack.c.h.b16 %v4901
    %v5566 = vunpack.c.l.b16 %v4902
    %v5567 = vunpack.c.h.b16 %v4902
    %v5568 = vunpack.c.l.b16 %v4903
    %v5569 = vunpack.c.h.b16 %v4903
    %v5570 = vunpack.c.l.b16 %v4904
    %v5571 = vunpack.c.h.b16 %v4904
    %v5572 = vunpack.c.l.b16 %v4905
    %v5573 = vunpack.c.h.b16 %v4905
    %v5574 = vunpack.c.l.b16 %v4906
    %v5575 = vunpack.c.h.b16 %v4906
    %v5576 = vunpack.c.l.b16 %v4907
    %v5577 = vunpack.c.h.b16 %v4907
    %v5578 = vunpack.c.l.b16 %v4908
    %v5579 = vunpack.c.h.b16 %v4908
    %v5580 = vunpack.c.l.b16 %v4909
    %v5581 = vunpack.c.h.b16 %v4909
    %v5582 = vunpack.c.l.b16 %v4910
    %v5583 = vunpack.c.h.b16 %v4910
    %v5584 = vunpack.c.l.b16 %v4911
    %v5585 = vunpack.c.h.b16 %v4911
    %v5586 = vunpack.c.l.b16 %v4912
    %v5587 = vunpack.c.h.b16 %v4912
    %v5588 = vunpack.c.l.b16 %v4913
    %v5589 = vunpack.c.h.b16 %v4913
    %v5590 = vunpack.c.l.b16 %v4914
    %v5591 = vunpack.c.h.b16 %v4914
    %v5592 = vunpack.c.l.b16 %v4915
    %v5593 = vunpack.c.h.b16 %v4915
    %v5594 = vunpack.c.l.b16 %v4916
    %v5595 = vunpack.c.h.b16 %v4916
    %v5596 = vunpack.c.l.b16 %v4917
    %v5597 = vunpack.c.h.b16 %v4917
    %v5598 = vunpack.c.l.b16 %v4918
    %v5599 = vunpack.c.h.b16 %v4918
    %v5600 = vunpack.c.l.b16 %v4919
    %v5601 = vunpack.c.h.b16 %v4919
    %v5602 = vunpack.c.l.b16 %v4920
    %v5603 = vunpack.c.h.b16 %v4920
    %v5604 = vunpack.c.l.b16 %v4921
    %v5605 = vunpack.c.h.b16 %v4921
    %v5606 = vunpack.c.l.b16 %v4922
    %v5607 = vunpack.c.h.b16 %v4922
    %v5608 = vunpack.c.l.b16 %v4923
    %v5609 = vunpack.c.h.b16 %v4923
    %v5610 = vunpack.c.l.b16 %v4924
    %v5611 = vunpack.c.h.b16 %v4924
    %v5612 = vunpack.c.l.b16 %v4925
    %v5613 = vunpack.c.h.b16 %v4925
    %v5614 = vunpack.c.l.b16 %v4926
    %v5615 = vunpack.c.h.b16 %v4926
    %v5616 = vunpack.c.l.b16 %v4927
    %v5617 = vunpack.c.h.b16 %v4927
    %v5618 = vunpack.c.l.b16 %v4928
    %v5619 = vunpack.c.h.b16 %v4928
    %v5620 = vunpack.c.l.b16 %v4929
    %v5621 = vunpack.c.h.b16 %v4929
    %v5622 = vunpack.c.l.b16 %v4930
    %v5623 = vunpack.c.h.b16 %v4930
    %v5624 = vunpack.c.l.b16 %v4931
    %v5625 = vunpack.c.h.b16 %v4931
    %v5626 = vunpack.c.l.b16 %v4932
    %v5627 = vunpack.c.h.b16 %v4932
    %v5628 = vunpack.c.l.b16 %v4933
    %v5629 = vunpack.c.h.b16 %v4933
    %v5630 = vunpack.c.l.b16 %v4934
    %v5631 = vunpack.c.h.b16 %v4934
    %v5632 = vunpack.c.l.b16 %v4935
    %v5633 = vunpack.c.h.b16 %v4935
    %v5634 = vunpack.c.l.b16 %v4936
    %v5635 = vunpack.c.h.b16 %v4936
    %v5636 = vunpack.c.l.b16 %v4937
    %v5637 = vunpack.c.h.b16 %v4937
    %v5638 = vunpack.c.l.b16 %v4938
    %v5639 = vunpack.c.h.b16 %v4938
    %v5640 = vunpack.c.l.b16 %v4939
    %v5641 = vunpack.c.h.b16 %v4939
    %v5642 = vunpack.c.l.b16 %v4940
    %v5643 = vunpack.c.h.b16 %v4940
    %v5644 = vunpack.c.l.b16 %v4941
    %v5645 = vunpack.c.h.b16 %v4941
    %v5646 = vunpack.c.l.b16 %v4942
    %v5647 = vunpack.c.h.b16 %v4942
    %v5648 = vunpack.c.l.b16 %v4943
    %v5649 = vunpack.c.h.b16 %v4943
    %v5650 = vunpack.c.l.b16 %v4944
    %v5651 = vunpack.c.h.b16 %v4944
    %v5652 = vunpack.c.l.b16 %v4945
    %v5653 = vunpack.c.h.b16 %v4945
    %v5654 = vunpack.c.l.b16 %v4946
    %v5655 = vunpack.c.h.b16 %v4946
    %v5656 = vunpack.c.l.b16 %v4947
    %v5657 = vunpack.c.h.b16 %v4947
    %v5658 = vunpack.c.l.b16 %v4948
    %v5659 = vunpack.c.h.b16 %v4948
    %v5660 = vunpack.c.l.b16 %v4949
    %v5661 = vunpack.c.h.b16 %v4949
    %v5662 = vunpack.c.l.b16 %v4950
    %v5663 = vunpack.c.h.b16 %v4950
    %v5664 = vunpack.c.l.b16 %v4951
    %v5665 = vunpack.c.h.b16 %v4951
    %v5666 = vunpack.c.l.b16 %v4952
    %v5667 = vunpack.c.h.b16 %v4952
    %v5668 = vunpack.c.l.b16 %v4953
    %v5669 = vunpack.c.h.b16 %v4953
    %v5670 = vunpack.c.l.b16 %v4954
    %v5671 = vunpack.c.h.b16 %v4954
    %v5672 = vunpack.c.l.b16 %v4955
    %v5673 = vunpack.c.h.b16 %v4955
    %v5674 = vunpack.c.l.b16 %v4956
    %v5675 = vunpack.c.h.b16 %v4956
    %v5676 = vunpack.c.l.b16 %v4957
    %v5677 = vunpack.c.h.b16 %v4957
    %v5678 = vunpack.c.l.b16 %v4958
    %v5679 = vunpack.c.h.b16 %v4958
    %v5680 = vunpack.c.l.b16 %v4959
    %v5681 = vunpack.c.h.b16 %v4959
    %v5682 = vunpack.c.l.b16 %v4960
    %v5683 = vunpack.c.h.b16 %v4960
    %v5684 = vunpack.c.l.b16 %v4961
    %v5685 = vunpack.c.h.b16 %v4961
    %v5686 = vunpack.c.l.b16 %v4962
    %v5687 = vunpack.c.h.b16 %v4962
    %v5688 = vunpack.c.l.b16 %v4963
    %v5689 = vunpack.c.h.b16 %v4963
    %v5690 = vunpack.c.l.b16 %v4964
    %v5691 = vunpack.c.h.b16 %v4964
    %v5692 = vunpack.c.l.b16 %v4965
    %v5693 = vunpack.c.h.b16 %v4965
    %v5694 = vunpack.c.l.b16 %v4966
    %v5695 = vunpack.c.h.b16 %v4966
    %v5696 = vunpack.c.l.b16 %v4967
    %v5697 = vunpack.c.h.b16 %v4967
    %v5698 = vunpack.c.l.b16 %v4968
    %v5699 = vunpack.c.h.b16 %v4968
    %v5700 = vunpack.c.l.b16 %v4969
    %v5701 = vunpack.c.h.b16 %v4969
    %v5702 = vunpack.c.l.b16 %v4970
    %v5703 = vunpack.c.h.b16 %v4970
    %v5704 = vunpack.c.l.b16 %v4971
    %v5705 = vunpack.c.h.b16 %v4971
    %v5706 = vunpack.c.l.b16 %v4972
    %v5707 = vunpack.c.h.b16 %v4972
    %v5708 = vunpack.c.l.b16 %v4973
    %v5709 = vunpack.c.h.b16 %v4973
    %v5710 = vunpack.c.l.b16 %v4974
    %v5711 = vunpack.c.h.b16 %v4974
    %v5712 = vunpack.c.l.b16 %v4975
    %v5713 = vunpack.c.h.b16 %v4975
    %v5714 = vunpack.c.l.b16 %v4976
    %v5715 = vunpack.c.h.b16 %v4976
    %v5716 = vunpack.c.l.b16 %v4977
    %v5717 = vunpack.c.h.b16 %v4977
    %v5718 = vunpack.c.l.b16 %v4978
    %v5719 = vunpack.c.h.b16 %v4978
    %v5720 = vunpack.c.l.b16 %v4979
    %v5721 = vunpack.c.h.b16 %v4979
    %v5722 = vunpack.c.l.b16 %v4980
    %v5723 = vunpack.c.h.b16 %v4980
    %v5724 = vunpack.c.l.b16 %v4981
    %v5725 = vunpack.c.h.b16 %v4981
    %v5726 = vunpack.c.l.b16 %v4982
    %v5727 = vunpack.c.h.b16 %v4982
    %v5728 = vunpack.c.l.b16 %v4983
    %v5729 = vunpack.c.h.b16 %v4983
    %v5730 = vunpack.c.l.b16 %v4984
    %v5731 = vunpack.c.h.b16 %v4984
    %v5732 = vunpack.c.l.b16 %v4985
    %v5733 = vunpack.c.h.b16 %v4985
    %v5734 = vunpack.c.l.b16 %v4986
    %v5735 = vunpack.c.h.b16 %v4986
    %v5736 = vunpack.c.l.b16 %v4987
    %v5737 = vunpack.c.h.b16 %v4987
    %v5738 = vunpack.c.l.b16 %v4988
    %v5739 = vunpack.c.h.b16 %v4988
    %v5740 = vunpack.c.l.b16 %v4989
    %v5741 = vunpack.c.h.b16 %v4989
    %v5742 = vunpack.c.l.b16 %v4990
    %v5743 = vunpack.c.h.b16 %v4990
    %v5744 = vunpack.c.l.b16 %v4991
    %v5745 = vunpack.c.h.b16 %v4991
    %v5746 = vunpack.c.l.b16 %v4992
    %v5747 = vunpack.c.h.b16 %v4992
    %v5748 = vunpack.c.l.b16 %v4993
    %v5749 = vunpack.c.h.b16 %v4993
    %v5750 = vunpack.c.l.b16 %v4994
    %v5751 = vunpack.c.h.b16 %v4994
    %v5752 = vunpack.c.l.b16 %v4995
    %v5753 = vunpack.c.h.b16 %v4995
    %v5754 = vunpack.c.l.b16 %v4996
    %v5755 = vunpack.c.h.b16 %v4996
    %v5756 = vunpack.c.l.b16 %v4997
    %v5757 = vunpack.c.h.b16 %v4997
    %v5758 = vunpack.c.l.b16 %v4998
    %v5759 = vunpack.c.h.b16 %v4998
    %v5760 = vunpack.c.l.b16 %v4999
    %v5761 = vunpack.c.h.b16 %v4999
    %v5762 = vunpack.c.l.b16 %v5000
    %v5763 = vunpack.c.h.b16 %v5000
    %v5764 = vunpack.c.l.b16 %v5001
    %v5765 = vunpack.c.h.b16 %v5001
    %v5766 = vunpack.c.l.b16 %v5002
    %v5767 = vunpack.c.h.b16 %v5002
    %v5768 = vunpack.c.l.b16 %v5003
    %v5769 = vunpack.c.h.b16 %v5003
    %v5770 = vunpack.c.l.b16 %v5004
    %v5771 = vunpack.c.h.b16 %v5004
    %v5772 = vunpack.c.l.b16 %v5005
    %v5773 = vunpack.c.h.b16 %v5005
    %v5774 = vunpack.c.l.b16 %v5006
    %v5775 = vunpack.c.h.b16 %v5006
    %v5776 = vunpack.c.l.b16 %v5007
    %v5777 = vunpack.c.h.b16 %v5007
    %v5778 = vunpack.c.l.b16 %v5008
    %v5779 = vunpack.c.h.b16 %v5008
    %v5780 = vunpack.c.l.b16 %v5009
    %v5781 = vunpack.c.h.b16 %v5009
    %v5782 = vunpack.c.l.b16 %v5010
    %v5783 = vunpack.c.h.b16 %v5010
    %v5784 = vunpack.c.l.b16 %v5011
    %v5785 = vunpack.c.h.b16 %v5011
    %v5786 = vunpack.c.l.b16 %v5012
    %v5787 = vunpack.c.h.b16 %v5012
    %v5788 = vunpack.c.l.b16 %v5013
    %v5789 = vunpack.c.h.b16 %v5013
    %v5790 = vunpack.c.l.b16 %v5014
    %v5791 = vunpack.c.h.b16 %v5014
    %v5792 = vunpack.c.l.b16 %v5015
    %v5793 = vunpack.c.h.b16 %v5015
    %v5794 = vunpack.c.l.b16 %v5016
    %v5795 = vunpack.c.h.b16 %v5016
    %v5796 = vunpack.c.l.b16 %v5017
    %v5797 = vunpack.c.h.b16 %v5017
    %v5798 = vunpack.c.l.b16 %v5018
    %v5799 = vunpack.c.h.b16 %v5018
    %v5800 = vunpack.c.l.b16 %v5019
    %v5801 = vunpack.c.h.b16 %v5019
    %v5802 = vunpack.c.l.b16 %v5020
    %v5803 = vunpack.c.h.b16 %v5020
    %v5804 = vunpack.c.l.b16 %v5021
    %v5805 = vunpack.c.h.b16 %v5021
    %v5806 = vunpack.c.l.b16 %v5022
    %v5807 = vunpack.c.h.b16 %v5022
    %v5808 = vunpack.c.l.b16 %v5023
    %v5809 = vunpack.c.h.b16 %v5023
    %v5810 = vpack.c.b16 %v5306, %v5298
    %v5811 = vpack.c.b16 %v5307, %v5299
    %v5812 = vpack.c.b16 %v5308, %v5300
    %v5813 = vpack.c.b16 %v5309, %v5301
    %v5814 = vpack.c.b16 %v5310, %v5302
    %v5815 = vpack.c.b16 %v5311, %v5303
    %v5816 = vpack.c.b16 %v5312, %v5304
    %v5817 = vpack.c.b16 %v5313, %v5305
    %v5818 = vpack.c.b16 %v5322, %v5314
    %v5819 = vpack.c.b16 %v5323, %v5315
    %v5820 = vpack.c.b16 %v5324, %v5316
    %v5821 = vpack.c.b16 %v5325, %v5317
    %v5822 = vpack.c.b16 %v5326, %v5318
    %v5823 = vpack.c.b16 %v5327, %v5319
    %v5824 = vpack.c.b16 %v5328, %v5320
    %v5825 = vpack.c.b16 %v5329, %v5321
    %v5826 = vpack.c.b16 %v5338, %v5330
    %v5827 = vpack.c.b16 %v5339, %v5331
    %v5828 = vpack.c.b16 %v5340, %v5332
    %v5829 = vpack.c.b16 %v5341, %v5333
    %v5830 = vpack.c.b16 %v5342, %v5334
    %v5831 = vpack.c.b16 %v5343, %v5335
    %v5832 = vpack.c.b16 %v5344, %v5336
    %v5833 = vpack.c.b16 %v5345, %v5337
    %v5834 = vpack.c.b16 %v5354, %v5346
    %v5835 = vpack.c.b16 %v5355, %v5347
    %v5836 = vpack.c.b16 %v5356, %v5348
    %v5837 = vpack.c.b16 %v5357, %v5349
    %v5838 = vpack.c.b16 %v5358, %v5350
    %v5839 = vpack.c.b16 %v5359, %v5351
    %v5840 = vpack.c.b16 %v5360, %v5352
    %v5841 = vpack.c.b16 %v5361, %v5353
    %v5842 = vpack.c.b16 %v5370, %v5362
    %v5843 = vpack.c.b16 %v5371, %v5363
    %v5844 = vpack.c.b16 %v5372, %v5364
    %v5845 = vpack.c.b16 %v5373, %v5365
    %v5846 = vpack.c.b16 %v5374, %v5366
    %v5847 = vpack.c.b16 %v5375, %v5367
    %v5848 = vpack.c.b16 %v5376, %v5368
    %v5849 = vpack.c.b16 %v5377, %v5369
    %v5850 = vpack.c.b16 %v5386, %v5378
    %v5851 = vpack.c.b16 %v5387, %v5379
    %v5852 = vpack.c.b16 %v5388, %v5380
    %v5853 = vpack.c.b16 %v5389, %v5381
    %v5854 = vpack.c.b16 %v5390, %v5382
    %v5855 = vpack.c.b16 %v5391, %v5383
    %v5856 = vpack.c.b16 %v5392, %v5384
    %v5857 = vpack.c.b16 %v5393, %v5385
    %v5858 = vpack.c.b16 %v5402, %v5394
    %v5859 = vpack.c.b16 %v5403, %v5395
    %v5860 = vpack.c.b16 %v5404, %v5396
    %v5861 = vpack.c.b16 %v5405, %v5397
    %v5862 = vpack.c.b16 %v5406, %v5398
    %v5863 = vpack.c.b16 %v5407, %v5399
    %v5864 = vpack.c.b16 %v5408, %v5400
    %v5865 = vpack.c.b16 %v5409, %v5401
    %v5866 = vpack.c.b16 %v5418, %v5410
    %v5867 = vpack.c.b16 %v5419, %v5411
    %v5868 = vpack.c.b16 %v5420, %v5412
    %v5869 = vpack.c.b16 %v5421, %v5413
    %v5870 = vpack.c.b16 %v5422, %v5414
    %v5871 = vpack.c.b16 %v5423, %v5415
    %v5872 = vpack.c.b16 %v5424, %v5416
    %v5873 = vpack.c.b16 %v5425, %v5417
    %v5874 = vpack.c.b16 %v5434, %v5426
    %v5875 = vpack.c.b16 %v5435, %v5427
    %v5876 = vpack.c.b16 %v5436, %v5428
    %v5877 = vpack.c.b16 %v5437, %v5429
    %v5878 = vpack.c.b16 %v5438, %v5430
    %v5879 = vpack.c.b16 %v5439, %v5431
    %v5880 = vpack.c.b16 %v5440, %v5432
    %v5881 = vpack.c.b16 %v5441, %v5433
    %v5882 = vpack.c.b16 %v5450, %v5442
    %v5883 = vpack.c.b16 %v5451, %v5443
    %v5884 = vpack.c.b16 %v5452, %v5444
    %v5885 = vpack.c.b16 %v5453, %v5445
    %v5886 = vpack.c.b16 %v5454, %v5446
    %v5887 = vpack.c.b16 %v5455, %v5447
    %v5888 = vpack.c.b16 %v5456, %v5448
    %v5889 = vpack.c.b16 %v5457, %v5449
    %v5890 = vpack.c.b16 %v5466, %v5458
    %v5891 = vpack.c.b16 %v5467, %v5459
    %v5892 = vpack.c.b16 %v5468, %v5460
    %v5893 = vpack.c.b16 %v5469, %v5461
    %v5894 = vpack.c.b16 %v5470, %v5462
    %v5895 = vpack.c.b16 %v5471, %v5463
    %v5896 = vpack.c.b16 %v5472, %v5464
    %v5897 = vpack.c.b16 %v5473, %v5465
    %v5898 = vpack.c.b16 %v5482, %v5474
    %v5899 = vpack.c.b16 %v5483, %v5475
    %v5900 = vpack.c.b16 %v5484, %v5476
    %v5901 = vpack.c.b16 %v5485, %v5477
    %v5902 = vpack.c.b16 %v5486, %v5478
    %v5903 = vpack.c.b16 %v5487, %v5479
    %v5904 = vpack.c.b16 %v5488, %v5480
    %v5905 = vpack.c.b16 %v5489, %v5481
    %v5906 = vpack.c.b16 %v5498, %v5490
    %v5907 = vpack.c.b16 %v5499, %v5491
    %v5908 = vpack.c.b16 %v5500, %v5492
    %v5909 = vpack.c.b16 %v5501, %v5493
    %v5910 = vpack.c.b16 %v5502, %v5494
    %v5911 = vpack.c.b16 %v5503, %v5495
    %v5912 = vpack.c.b16 %v5504, %v5496
    %v5913 = vpack.c.b16 %v5505, %v5497
    %v5914 = vpack.c.b16 %v5514, %v5506
    %v5915 = vpack.c.b16 %v5515, %v5507
    %v5916 = vpack.c.b16 %v5516, %v5508
    %v5917 = vpack.c.b16 %v5517, %v5509
    %v5918 = vpack.c.b16 %v5518, %v5510
    %v5919 = vpack.c.b16 %v5519, %v5511
    %v5920 = vpack.c.b16 %v5520, %v5512
    %v5921 = vpack.c.b16 %v5521, %v5513
    %v5922 = vpack.c.b16 %v5530, %v5522
    %v5923 = vpack.c.b16 %v5531, %v5523
    %v5924 = vpack.c.b16 %v5532, %v5524
    %v5925 = vpack.c.b16 %v5533, %v5525
    %v5926 = vpack.c.b16 %v5534, %v5526
    %v5927 = vpack.c.b16 %v5535, %v5527
    %v5928 = vpack.c.b16 %v5536, %v5528
    %v5929 = vpack.c.b16 %v5537, %v5529
    %v5930 = vpack.c.b16 %v5546, %v5538
    %v5931 = vpack.c.b16 %v5547, %v5539
    %v5932 = vpack.c.b16 %v5548, %v5540
    %v5933 = vpack.c.b16 %v5549, %v5541
    %v5934 = vpack.c.b16 %v5550, %v5542
    %v5935 = vpack.c.b16 %v5551, %v5543
    %v5936 = vpack.c.b16 %v5552, %v5544
    %v5937 = vpack.c.b16 %v5553, %v5545
    %v5938 = vpack.c.b16 %v5562, %v5554
    %v5939 = vpack.c.b16 %v5563, %v5555
    %v5940 = vpack.c.b16 %v5564, %v5556
    %v5941 = vpack.c.b16 %v5565, %v5557
    %v5942 = vpack.c.b16 %v5566, %v5558
    %v5943 = vpack.c.b16 %v5567, %v5559
    %v5944 = vpack.c.b16 %v5568, %v5560
    %v5945 = vpack.c.b16 %v5569, %v5561
    %v5946 = vpack.c.b16 %v5578, %v5570
    %v5947 = vpack.c.b16 %v5579, %v5571
    %v5948 = vpack.c.b16 %v5580, %v5572
    %v5949 = vpack.c.b16 %v5581, %v5573
    %v5950 = vpack.c.b16 %v5582, %v5574
    %v5951 = vpack.c.b16 %v5583, %v5575
    %v5952 = vpack.c.b16 %v5584, %v5576
    %v5953 = vpack.c.b16 %v5585, %v5577
    %v5954 = vpack.c.b16 %v5594, %v5586
    %v5955 = vpack.c.b16 %v5595, %v5587
    %v5956 = vpack.c.b16 %v5596, %v5588
    %v5957 = vpack.c.b16 %v5597, %v5589
    %v5958 = vpack.c.b16 %v5598, %v5590
    %v5959 = vpack.c.b16 %v5599, %v5591
    %v5960 = vpack.c.b16 %v5600, %v5592
    %v5961 = vpack.c.b16 %v5601, %v5593
    %v5962 = vpack.c.b16 %v5610, %v5602
    %v5963 = vpack.c.b16 %v5611, %v5603
    %v5964 = vpack.c.b16 %v5612, %v5604
    %v5965 = vpack.c.b16 %v5613, %v5605
    %v5966 = vpack.c.b16 %v5614, %v5606
    %v5967 = vpack.c.b16 %v5615, %v5607
    %v5968 = vpack.c.b16 %v5616, %v5608
    %v5969 = vpack.c.b16 %v5617, %v5609
    %v5970 = vpack.c.b16 %v5626, %v5618
    %v5971 = vpack.c.b16 %v5627, %v5619
    %v5972 = vpack.c.b16 %v5628, %v5620
    %v5973 = vpack.c.b16 %v5629, %v5621
    %v5974 = vpack.c.b16 %v5630, %v5622
    %v5975 = vpack.c.b16 %v5631, %v5623
    %v5976 = vpack.c.b16 %v5632, %v5624
    %v5977 = vpack.c.b16 %v5633, %v5625
    %v5978 = vpack.c.b16 %v5642, %v5634
    %v5979 = vpack.c.b16 %v5643, %v5635
    %v5980 = vpack.c.b16 %v5644, %v5636
    %v5981 = vpack.c.b16 %v5645, %v5637
    %v5982 = vpack.c.b16 %v5646, %v5638
    %v5983 = vpack.c.b16 %v5647, %v5639
    %v5984 = vpack.c.b16 %v5648, %v5640
    %v5985 = vpack.c.b16 %v5649, %v5641
    %v5986 = vpack.c.b16 %v5658, %v5650
    %v5987 = vpack.c.b16 %v5659, %v5651
    %v5988 = vpack.c.b16 %v5660, %v5652
    %v5989 = vpack.c.b16 %v5661, %v5653
    %v5990 = vpack.c.b16 %v5662, %v5654
    %v5991 = vpack.c.b16 %v5663, %v5655
    %v5992 = vpack.c.b16 %v5664, %v5656
    %v5993 = vpack.c.b16 %v5665, %v5657
    %v5994 = vpack.c.b16 %v5674, %v5666
    %v5995 = vpack.c.b16 %v5675, %v5667
    %v5996 = vpack.c.b16 %v5676, %v5668
    %v5997 = vpack.c.b16 %v5677, %v5669
    %v5998 = vpack.c.b16 %v5678, %v5670
    %v5999 = vpack.c.b16 %v5679, %v5671
    %v6000 = vpack.c.b16 %v5680, %v5672
    %v6001 = vpack.c.b16 %v5681, %v5673
    %v6002 = vpack.c.b16 %v5690, %v5682
    %v6003 = vpack.c.b16 %v5691, %v5683
    %v6004 = vpack.c.b16 %v5692, %v5684
    %v6005 = vpack.c.b16 %v5693, %v5685
    %v6006 = vpack.c.b16 %v5694, %v5686
    %v6007 = vpack.c.b16 %v5695, %v5687
    %v6008 = vpack.c.b16 %v5696, %v5688
    %v6009 = vpack.c.b16 %v5697, %v5689
    %v6010 = vpack.c.b16 %v5706, %v5698
    %v6011 = vpack.c.b16 %v5707, %v5699
    %v6012 = vpack.c.b16 %v5708, %v5700
    %v6013 = vpack.c.b16 %v5709, %v5701
    %v6014 = vpack.c.b16 %v5710, %v5702
    %v6015 = vpack.c.b16 %v5711, %v5703
    %v6016 = vpack.c.b16 %v5712, %v5704
    %v6017 = vpack.c.b16 %v5713, %v5705
    %v6018 = vpack.c.b16 %v5722, %v5714
    %v6019 = vpack.c.b16 %v5723, %v5715
    %v6020 = vpack.c.b16 %v5724, %v5716
    %v6021 = vpack.c.b16 %v5725, %v5717
    %v6022 = vpack.c.b16 %v5726, %v5718
    %v6023 = vpack.c.b16 %v5727, %v5719
    %v6024 = vpack.c.b16 %v5728, %v5720
    %v6025 = vpack.c.b16 %v5729, %v5721
    %v6026 = vpack.c.b16 %v5738, %v5730
    %v6027 = vpack.c.b16 %v5739, %v5731
    %v6028 = vpack.c.b16 %v5740, %v5732
    %v6029 = vpack.c.b16 %v5741, %v5733
    %v6030 = vpack.c.b16 %v5742, %v5734
    %v6031 = vpack.c.b16 %v5743, %v5735
    %v6032 = vpack.c.b16 %v5744, %v5736
    %v6033 = vpack.c.b16 %v5745, %v5737
    %v6034 = vpack.c.b16 %v5754, %v5746
    %v6035 = vpack.c.b16 %v5755, %v5747
    %v6036 = vpack.c.b16 %v5756, %v5748
    %v6037 = vpack.c.b16 %v5757, %v5749
    %v6038 = vpack.c.b16 %v5758, %v5750
    %v6039 = vpack.c.b16 %v5759, %v5751
    %v6040 = vpack.c.b16 %v5760, %v5752
    %v6041 = vpack.c.b16 %v5761, %v5753
    %v6042 = vpack.c.b16 %v5770, %v5762
    %v6043 = vpack.c.b16 %v5771, %v5763
    %v6044 = vpack.c.b16 %v5772, %v5764
    %v6045 = vpack.c.b16 %v5773, %v5765
    %v6046 = vpack.c.b16 %v5774, %v5766
    %v6047 = vpack.c.b16 %v5775, %v5767
    %v6048 = vpack.c.b16 %v5776, %v5768
    %v6049 = vpack.c.b16 %v5777, %v5769
    %v6050 = vpack.c.b16 %v5786, %v5778
    %v6051 = vpack.c.b16 %v5787, %v5779
    %v6052 = vpack.c.b16 %v5788, %v5780
    %v6053 = vpack.c.b16 %v5789, %v5781
    %v6054 = vpack.c.b16 %v5790, %v5782
    %v6055 = vpack.c.b16 %v5791, %v5783
    %v6056 = vpack.c.b16 %v5792, %v5784
    %v6057 = vpack.c.b16 %v5793, %v5785
    %v6058 = vpack.c.b16 %v5802, %v5794
    %v6059 = vpack.c.b16 %v5803, %v5795
    %v6060 = vpack.c.b16 %v5804, %v5796
    %v6061 = vpack.c.b16 %v5805, %v5797
    %v6062 = vpack.c.b16 %v5806, %v5798
    %v6063 = vpack.c.b16 %v5807, %v5799
    %v6064 = vpack.c.b16 %v5808, %v5800
    %v6065 = vpack.c.b16 %v5809, %v5801
    %6322 = vmatpush.bf16.msra.mxu0 %v5866
    %6323 = vmatpush.bf16.msra.mxu0 %v5858
    %6324 = vmatpush.bf16.msra.mxu0 %v5850
    %6325 = vmatpush.bf16.msra.mxu0 %v5842
    %6326 = vmatpush.bf16.msra.mxu0 %v5834
    %6327 = vmatpush.bf16.msra.mxu0 %v5826
    %6328 = vmatpush.bf16.msra.mxu0 %v5818
    %6329 = vmatpush.bf16.msra.mxu0 %v5810
    %6330 = vmatmul.bf16.gmra.mxu0 %v4764
    %v6331 = vpop.f32.mrf.mxu0
    %v6332 = vadd.f32 %v5026, %v6331
    %v6333 = vpop.f32.mrf.mxu0
    %v6334 = vadd.f32 %v5026, %v6333
    %6335 = vdwg.mxu0
    %6336 = vmatpush.bf16.msra.mxu0 %v5930
    %6337 = vmatpush.bf16.msra.mxu0 %v5922
    %6338 = vmatpush.bf16.msra.mxu0 %v5914
    %6339 = vmatpush.bf16.msra.mxu0 %v5906
    %6340 = vmatpush.bf16.msra.mxu0 %v5898
    %6341 = vmatpush.bf16.msra.mxu0 %v5890
    %6342 = vmatpush.bf16.msra.mxu0 %v5882
    %6343 = vmatpush.bf16.msra.mxu0 %v5874
    %6344 = vmatmul.bf16.gmra.mxu0 %v4765
    %v6345 = vpop.f32.mrf.mxu0
    %v6346 = vadd.f32 %v6332, %v6345
    %v6347 = vpop.f32.mrf.mxu0
    %v6348 = vadd.f32 %v6334, %v6347
    %6349 = vdwg.mxu0
    %6350 = vmatpush.bf16.msra.mxu0 %v5994
    %6351 = vmatpush.bf16.msra.mxu0 %v5986
    %6352 = vmatpush.bf16.msra.mxu0 %v5978
    %6353 = vmatpush.bf16.msra.mxu0 %v5970
    %6354 = vmatpush.bf16.msra.mxu0 %v5962
    %6355 = vmatpush.bf16.msra.mxu0 %v5954
    %6356 = vmatpush.bf16.msra.mxu0 %v5946
    %6357 = vmatpush.bf16.msra.mxu0 %v5938
    %6358 = vmatmul.bf16.gmra.mxu0 %v4766
    %v6359 = vpop.f32.mrf.mxu0
    %v6360 = vadd.f32 %v6346, %v6359
    %v6361 = vpop.f32.mrf.mxu0
    %v6362 = vadd.f32 %v6348, %v6361
    %6363 = vdwg.mxu0
    %6364 = vmatpush.bf16.msra.mxu0 %v6058
    %6365 = vmatpush.bf16.msra.mxu0 %v6050
    %6366 = vmatpush.bf16.msra.mxu0 %v6042
    %6367 = vmatpush.bf16.msra.mxu0 %v6034
    %6368 = vmatpush.bf16.msra.mxu0 %v6026
    %6369 = vmatpush.bf16.msra.mxu0 %v6018
    %6370 = vmatpush.bf16.msra.mxu0 %v6010
    %6371 = vmatpush.bf16.msra.mxu0 %v6002
    %6372 = vmatmul.bf16.gmra.mxu0 %v4767
    %v6373 = vpop.f32.mrf.mxu0
    %v6374 = vadd.f32 %v6360, %v6373
    %v6375 = vpop.f32.mrf.mxu0
    %v6376 = vadd.f32 %v6362, %v6375
    %6377 = vdwg.mxu0
    %6378 = vmatpush.bf16.msra.mxu0 %v5867
    %6379 = vmatpush.bf16.msra.mxu0 %v5859
    %6380 = vmatpush.bf16.msra.mxu0 %v5851
    %6381 = vmatpush.bf16.msra.mxu0 %v5843
    %6382 = vmatpush.bf16.msra.mxu0 %v5835
    %6383 = vmatpush.bf16.msra.mxu0 %v5827
    %6384 = vmatpush.bf16.msra.mxu0 %v5819
    %6385 = vmatpush.bf16.msra.mxu0 %v5811
    %6386 = vmatmul.bf16.gmra.mxu0 %v4764
    %v6387 = vpop.f32.mrf.mxu0
    %v6388 = vadd.f32 %v5027, %v6387
    %v6389 = vpop.f32.mrf.mxu0
    %v6390 = vadd.f32 %v5027, %v6389
    %6391 = vdwg.mxu0
    %6392 = vmatpush.bf16.msra.mxu0 %v5931
    %6393 = vmatpush.bf16.msra.mxu0 %v5923
    %6394 = vmatpush.bf16.msra.mxu0 %v5915
    %6395 = vmatpush.bf16.msra.mxu0 %v5907
    %6396 = vmatpush.bf16.msra.mxu0 %v5899
    %6397 = vmatpush.bf16.msra.mxu0 %v5891
    %6398 = vmatpush.bf16.msra.mxu0 %v5883
    %6399 = vmatpush.bf16.msra.mxu0 %v5875
    %6400 = vmatmul.bf16.gmra.mxu0 %v4765
    %v6401 = vpop.f32.mrf.mxu0
    %v6402 = vadd.f32 %v6388, %v6401
    %v6403 = vpop.f32.mrf.mxu0
    %v6404 = vadd.f32 %v6390, %v6403
    %6405 = vdwg.mxu0
    %6406 = vmatpush.bf16.msra.mxu0 %v5995
    %6407 = vmatpush.bf16.msra.mxu0 %v5987
    %6408 = vmatpush.bf16.msra.mxu0 %v5979
    %6409 = vmatpush.bf16.msra.mxu0 %v5971
    %6410 = vmatpush.bf16.msra.mxu0 %v5963
    %6411 = vmatpush.bf16.msra.mxu0 %v5955
    %6412 = vmatpush.bf16.msra.mxu0 %v5947
    %6413 = vmatpush.bf16.msra.mxu0 %v5939
    %6414 = vmatmul.bf16.gmra.mxu0 %v4766
    %v6415 = vpop.f32.mrf.mxu0
    %v6416 = vadd.f32 %v6402, %v6415
    %v6417 = vpop.f32.mrf.mxu0
    %v6418 = vadd.f32 %v6404, %v6417
    %6419 = vdwg.mxu0
    %6420 = vmatpush.bf16.msra.mxu0 %v6059
    %6421 = vmatpush.bf16.msra.mxu0 %v6051
    %6422 = vmatpush.bf16.msra.mxu0 %v6043
    %6423 = vmatpush.bf16.msra.mxu0 %v6035
    %6424 = vmatpush.bf16.msra.mxu0 %v6027
    %6425 = vmatpush.bf16.msra.mxu0 %v6019
    %6426 = vmatpush.bf16.msra.mxu0 %v6011
    %6427 = vmatpush.bf16.msra.mxu0 %v6003
    %6428 = vmatmul.bf16.gmra.mxu0 %v4767
    %v6429 = vpop.f32.mrf.mxu0
    %v6430 = vadd.f32 %v6416, %v6429
    %v6431 = vpop.f32.mrf.mxu0
    %v6432 = vadd.f32 %v6418, %v6431
    %6433 = vdwg.mxu0
    %6434 = vmatpush.bf16.msra.mxu0 %v5868
    %6435 = vmatpush.bf16.msra.mxu0 %v5860
    %6436 = vmatpush.bf16.msra.mxu0 %v5852
    %6437 = vmatpush.bf16.msra.mxu0 %v5844
    %6438 = vmatpush.bf16.msra.mxu0 %v5836
    %6439 = vmatpush.bf16.msra.mxu0 %v5828
    %6440 = vmatpush.bf16.msra.mxu0 %v5820
    %6441 = vmatpush.bf16.msra.mxu0 %v5812
    %6442 = vmatmul.bf16.gmra.mxu0 %v4764
    %v6443 = vpop.f32.mrf.mxu0
    %v6444 = vadd.f32 %v5028, %v6443
    %v6445 = vpop.f32.mrf.mxu0
    %v6446 = vadd.f32 %v5028, %v6445
    %6447 = vdwg.mxu0
    %6448 = vmatpush.bf16.msra.mxu0 %v5932
    %6449 = vmatpush.bf16.msra.mxu0 %v5924
    %6450 = vmatpush.bf16.msra.mxu0 %v5916
    %6451 = vmatpush.bf16.msra.mxu0 %v5908
    %6452 = vmatpush.bf16.msra.mxu0 %v5900
    %6453 = vmatpush.bf16.msra.mxu0 %v5892
    %6454 = vmatpush.bf16.msra.mxu0 %v5884
    %6455 = vmatpush.bf16.msra.mxu0 %v5876
    %6456 = vmatmul.bf16.gmra.mxu0 %v4765
    %v6457 = vpop.f32.mrf.mxu0
    %v6458 = vadd.f32 %v6444, %v6457
    %v6459 = vpop.f32.mrf.mxu0
    %v6460 = vadd.f32 %v6446, %v6459
    %6461 = vdwg.mxu0
    %6462 = vmatpush.bf16.msra.mxu0 %v5996
    %6463 = vmatpush.bf16.msra.mxu0 %v5988
    %6464 = vmatpush.bf16.msra.mxu0 %v5980
    %6465 = vmatpush.bf16.msra.mxu0 %v5972
    %6466 = vmatpush.bf16.msra.mxu0 %v5964
    %6467 = vmatpush.bf16.msra.mxu0 %v5956
    %6468 = vmatpush.bf16.msra.mxu0 %v5948
    %6469 = vmatpush.bf16.msra.mxu0 %v5940
    %6470 = vmatmul.bf16.gmra.mxu0 %v4766
    %v6471 = vpop.f32.mrf.mxu0
    %v6472 = vadd.f32 %v6458, %v6471
    %v6473 = vpop.f32.mrf.mxu0
    %v6474 = vadd.f32 %v6460, %v6473
    %6475 = vdwg.mxu0
    %6476 = vmatpush.bf16.msra.mxu0 %v6060
    %6477 = vmatpush.bf16.msra.mxu0 %v6052
    %6478 = vmatpush.bf16.msra.mxu0 %v6044
    %6479 = vmatpush.bf16.msra.mxu0 %v6036
    %6480 = vmatpush.bf16.msra.mxu0 %v6028
    %6481 = vmatpush.bf16.msra.mxu0 %v6020
    %6482 = vmatpush.bf16.msra.mxu0 %v6012
    %6483 = vmatpush.bf16.msra.mxu0 %v6004
    %6484 = vmatmul.bf16.gmra.mxu0 %v4767
    %v6485 = vpop.f32.mrf.mxu0
    %v6486 = vadd.f32 %v6472, %v6485
    %v6487 = vpop.f32.mrf.mxu0
    %v6488 = vadd.f32 %v6474, %v6487
    %6489 = vdwg.mxu0
    %6490 = vmatpush.bf16.msra.mxu0 %v5869
    %6491 = vmatpush.bf16.msra.mxu0 %v5861
    %6492 = vmatpush.bf16.msra.mxu0 %v5853
    %6493 = vmatpush.bf16.msra.mxu0 %v5845
    %6494 = vmatpush.bf16.msra.mxu0 %v5837
    %6495 = vmatpush.bf16.msra.mxu0 %v5829
    %6496 = vmatpush.bf16.msra.mxu0 %v5821
    %6497 = vmatpush.bf16.msra.mxu0 %v5813
    %6498 = vmatmul.bf16.gmra.mxu0 %v4764
    %v6499 = vpop.f32.mrf.mxu0
    %v6500 = vadd.f32 %v5029, %v6499
    %v6501 = vpop.f32.mrf.mxu0
    %v6502 = vadd.f32 %v5029, %v6501
    %6503 = vdwg.mxu0
    %6504 = vmatpush.bf16.msra.mxu0 %v5933
    %6505 = vmatpush.bf16.msra.mxu0 %v5925
    %6506 = vmatpush.bf16.msra.mxu0 %v5917
    %6507 = vmatpush.bf16.msra.mxu0 %v5909
    %6508 = vmatpush.bf16.msra.mxu0 %v5901
    %6509 = vmatpush.bf16.msra.mxu0 %v5893
    %6510 = vmatpush.bf16.msra.mxu0 %v5885
    %6511 = vmatpush.bf16.msra.mxu0 %v5877
    %6512 = vmatmul.bf16.gmra.mxu0 %v4765
    %v6513 = vpop.f32.mrf.mxu0
    %v6514 = vadd.f32 %v6500, %v6513
    %v6515 = vpop.f32.mrf.mxu0
    %v6516 = vadd.f32 %v6502, %v6515
    %6517 = vdwg.mxu0
    %6518 = vmatpush.bf16.msra.mxu0 %v5997
    %6519 = vmatpush.bf16.msra.mxu0 %v5989
    %6520 = vmatpush.bf16.msra.mxu0 %v5981
    %6521 = vmatpush.bf16.msra.mxu0 %v5973
    %6522 = vmatpush.bf16.msra.mxu0 %v5965
    %6523 = vmatpush.bf16.msra.mxu0 %v5957
    %6524 = vmatpush.bf16.msra.mxu0 %v5949
    %6525 = vmatpush.bf16.msra.mxu0 %v5941
    %6526 = vmatmul.bf16.gmra.mxu0 %v4766
    %v6527 = vpop.f32.mrf.mxu0
    %v6528 = vadd.f32 %v6514, %v6527
    %v6529 = vpop.f32.mrf.mxu0
    %v6530 = vadd.f32 %v6516, %v6529
    %6531 = vdwg.mxu0
    %6532 = vmatpush.bf16.msra.mxu0 %v6061
    %6533 = vmatpush.bf16.msra.mxu0 %v6053
    %6534 = vmatpush.bf16.msra.mxu0 %v6045
    %6535 = vmatpush.bf16.msra.mxu0 %v6037
    %6536 = vmatpush.bf16.msra.mxu0 %v6029
    %6537 = vmatpush.bf16.msra.mxu0 %v6021
    %6538 = vmatpush.bf16.msra.mxu0 %v6013
    %6539 = vmatpush.bf16.msra.mxu0 %v6005
    %6540 = vmatmul.bf16.gmra.mxu0 %v4767
    %v6541 = vpop.f32.mrf.mxu0
    %v6542 = vadd.f32 %v6528, %v6541
    %v6543 = vpop.f32.mrf.mxu0
    %v6544 = vadd.f32 %v6530, %v6543
    %6545 = vdwg.mxu0
    %6546 = vmatpush.bf16.msra.mxu0 %v5870
    %6547 = vmatpush.bf16.msra.mxu0 %v5862
    %6548 = vmatpush.bf16.msra.mxu0 %v5854
    %6549 = vmatpush.bf16.msra.mxu0 %v5846
    %6550 = vmatpush.bf16.msra.mxu0 %v5838
    %6551 = vmatpush.bf16.msra.mxu0 %v5830
    %6552 = vmatpush.bf16.msra.mxu0 %v5822
    %6553 = vmatpush.bf16.msra.mxu0 %v5814
    %6554 = vmatmul.bf16.gmra.mxu0 %v4764
    %v6555 = vpop.f32.mrf.mxu0
    %v6556 = vadd.f32 %v5030, %v6555
    %v6557 = vpop.f32.mrf.mxu0
    %v6558 = vadd.f32 %v5030, %v6557
    %6559 = vdwg.mxu0
    %6560 = vmatpush.bf16.msra.mxu0 %v5934
    %6561 = vmatpush.bf16.msra.mxu0 %v5926
    %6562 = vmatpush.bf16.msra.mxu0 %v5918
    %6563 = vmatpush.bf16.msra.mxu0 %v5910
    %6564 = vmatpush.bf16.msra.mxu0 %v5902
    %6565 = vmatpush.bf16.msra.mxu0 %v5894
    %6566 = vmatpush.bf16.msra.mxu0 %v5886
    %6567 = vmatpush.bf16.msra.mxu0 %v5878
    %6568 = vmatmul.bf16.gmra.mxu0 %v4765
    %v6569 = vpop.f32.mrf.mxu0
    %v6570 = vadd.f32 %v6556, %v6569
    %v6571 = vpop.f32.mrf.mxu0
    %v6572 = vadd.f32 %v6558, %v6571
    %6573 = vdwg.mxu0
    %6574 = vmatpush.bf16.msra.mxu0 %v5998
    %6575 = vmatpush.bf16.msra.mxu0 %v5990
    %6576 = vmatpush.bf16.msra.mxu0 %v5982
    %6577 = vmatpush.bf16.msra.mxu0 %v5974
    %6578 = vmatpush.bf16.msra.mxu0 %v5966
    %6579 = vmatpush.bf16.msra.mxu0 %v5958
    %6580 = vmatpush.bf16.msra.mxu0 %v5950
    %6581 = vmatpush.bf16.msra.mxu0 %v5942
    %6582 = vmatmul.bf16.gmra.mxu0 %v4766
    %v6583 = vpop.f32.mrf.mxu0
    %v6584 = vadd.f32 %v6570, %v6583
    %v6585 = vpop.f32.mrf.mxu0
    %v6586 = vadd.f32 %v6572, %v6585
    %6587 = vdwg.mxu0
    %6588 = vmatpush.bf16.msra.mxu0 %v6062
    %6589 = vmatpush.bf16.msra.mxu0 %v6054
    %6590 = vmatpush.bf16.msra.mxu0 %v6046
    %6591 = vmatpush.bf16.msra.mxu0 %v6038
    %6592 = vmatpush.bf16.msra.mxu0 %v6030
    %6593 = vmatpush.bf16.msra.mxu0 %v6022
    %6594 = vmatpush.bf16.msra.mxu0 %v6014
    %6595 = vmatpush.bf16.msra.mxu0 %v6006
    %6596 = vmatmul.bf16.gmra.mxu0 %v4767
    %v6597 = vpop.f32.mrf.mxu0
    %v6598 = vadd.f32 %v6584, %v6597
    %v6599 = vpop.f32.mrf.mxu0
    %v6600 = vadd.f32 %v6586, %v6599
    %6601 = vdwg.mxu0
    %6602 = vmatpush.bf16.msra.mxu0 %v5871
    %6603 = vmatpush.bf16.msra.mxu0 %v5863
    %6604 = vmatpush.bf16.msra.mxu0 %v5855
    %6605 = vmatpush.bf16.msra.mxu0 %v5847
    %6606 = vmatpush.bf16.msra.mxu0 %v5839
    %6607 = vmatpush.bf16.msra.mxu0 %v5831
    %6608 = vmatpush.bf16.msra.mxu0 %v5823
    %6609 = vmatpush.bf16.msra.mxu0 %v5815
    %6610 = vmatmul.bf16.gmra.mxu0 %v4764
    %v6611 = vpop.f32.mrf.mxu0
    %v6612 = vadd.f32 %v5031, %v6611
    %v6613 = vpop.f32.mrf.mxu0
    %v6614 = vadd.f32 %v5031, %v6613
    %6615 = vdwg.mxu0
    %6616 = vmatpush.bf16.msra.mxu0 %v5935
    %6617 = vmatpush.bf16.msra.mxu0 %v5927
    %6618 = vmatpush.bf16.msra.mxu0 %v5919
    %6619 = vmatpush.bf16.msra.mxu0 %v5911
    %6620 = vmatpush.bf16.msra.mxu0 %v5903
    %6621 = vmatpush.bf16.msra.mxu0 %v5895
    %6622 = vmatpush.bf16.msra.mxu0 %v5887
    %6623 = vmatpush.bf16.msra.mxu0 %v5879
    %6624 = vmatmul.bf16.gmra.mxu0 %v4765
    %v6625 = vpop.f32.mrf.mxu0
    %v6626 = vadd.f32 %v6612, %v6625
    %v6627 = vpop.f32.mrf.mxu0
    %v6628 = vadd.f32 %v6614, %v6627
    %6629 = vdwg.mxu0
    %6630 = vmatpush.bf16.msra.mxu0 %v5999
    %6631 = vmatpush.bf16.msra.mxu0 %v5991
    %6632 = vmatpush.bf16.msra.mxu0 %v5983
    %6633 = vmatpush.bf16.msra.mxu0 %v5975
    %6634 = vmatpush.bf16.msra.mxu0 %v5967
    %6635 = vmatpush.bf16.msra.mxu0 %v5959
    %6636 = vmatpush.bf16.msra.mxu0 %v5951
    %6637 = vmatpush.bf16.msra.mxu0 %v5943
    %6638 = vmatmul.bf16.gmra.mxu0 %v4766
    %v6639 = vpop.f32.mrf.mxu0
    %v6640 = vadd.f32 %v6626, %v6639
    %v6641 = vpop.f32.mrf.mxu0
    %v6642 = vadd.f32 %v6628, %v6641
    %6643 = vdwg.mxu0
    %6644 = vmatpush.bf16.msra.mxu0 %v6063
    %6645 = vmatpush.bf16.msra.mxu0 %v6055
    %6646 = vmatpush.bf16.msra.mxu0 %v6047
    %6647 = vmatpush.bf16.msra.mxu0 %v6039
    %6648 = vmatpush.bf16.msra.mxu0 %v6031
    %6649 = vmatpush.bf16.msra.mxu0 %v6023
    %6650 = vmatpush.bf16.msra.mxu0 %v6015
    %6651 = vmatpush.bf16.msra.mxu0 %v6007
    %6652 = vmatmul.bf16.gmra.mxu0 %v4767
    %v6653 = vpop.f32.mrf.mxu0
    %v6654 = vadd.f32 %v6640, %v6653
    %v6655 = vpop.f32.mrf.mxu0
    %v6656 = vadd.f32 %v6642, %v6655
    %6657 = vdwg.mxu0
    %6658 = vmatpush.bf16.msra.mxu0 %v5872
    %6659 = vmatpush.bf16.msra.mxu0 %v5864
    %6660 = vmatpush.bf16.msra.mxu0 %v5856
    %6661 = vmatpush.bf16.msra.mxu0 %v5848
    %6662 = vmatpush.bf16.msra.mxu0 %v5840
    %6663 = vmatpush.bf16.msra.mxu0 %v5832
    %6664 = vmatpush.bf16.msra.mxu0 %v5824
    %6665 = vmatpush.bf16.msra.mxu0 %v5816
    %6666 = vmatmul.bf16.gmra.mxu0 %v4764
    %v6667 = vpop.f32.mrf.mxu0
    %v6668 = vadd.f32 %v5032, %v6667
    %v6669 = vpop.f32.mrf.mxu0
    %v6670 = vadd.f32 %v5032, %v6669
    %6671 = vdwg.mxu0
    %6672 = vmatpush.bf16.msra.mxu0 %v5936
    %6673 = vmatpush.bf16.msra.mxu0 %v5928
    %6674 = vmatpush.bf16.msra.mxu0 %v5920
    %6675 = vmatpush.bf16.msra.mxu0 %v5912
    %6676 = vmatpush.bf16.msra.mxu0 %v5904
    %6677 = vmatpush.bf16.msra.mxu0 %v5896
    %6678 = vmatpush.bf16.msra.mxu0 %v5888
    %6679 = vmatpush.bf16.msra.mxu0 %v5880
    %6680 = vmatmul.bf16.gmra.mxu0 %v4765
    %v6681 = vpop.f32.mrf.mxu0
    %v6682 = vadd.f32 %v6668, %v6681
    %v6683 = vpop.f32.mrf.mxu0
    %v6684 = vadd.f32 %v6670, %v6683
    %6685 = vdwg.mxu0
    %6686 = vmatpush.bf16.msra.mxu0 %v6000
    %6687 = vmatpush.bf16.msra.mxu0 %v5992
    %6688 = vmatpush.bf16.msra.mxu0 %v5984
    %6689 = vmatpush.bf16.msra.mxu0 %v5976
    %6690 = vmatpush.bf16.msra.mxu0 %v5968
    %6691 = vmatpush.bf16.msra.mxu0 %v5960
    %6692 = vmatpush.bf16.msra.mxu0 %v5952
    %6693 = vmatpush.bf16.msra.mxu0 %v5944
    %6694 = vmatmul.bf16.gmra.mxu0 %v4766
    %v6695 = vpop.f32.mrf.mxu0
    %v6696 = vadd.f32 %v6682, %v6695
    %v6697 = vpop.f32.mrf.mxu0
    %v6698 = vadd.f32 %v6684, %v6697
    %6699 = vdwg.mxu0
    %6700 = vmatpush.bf16.msra.mxu0 %v6064
    %6701 = vmatpush.bf16.msra.mxu0 %v6056
    %6702 = vmatpush.bf16.msra.mxu0 %v6048
    %6703 = vmatpush.bf16.msra.mxu0 %v6040
    %6704 = vmatpush.bf16.msra.mxu0 %v6032
    %6705 = vmatpush.bf16.msra.mxu0 %v6024
    %6706 = vmatpush.bf16.msra.mxu0 %v6016
    %6707 = vmatpush.bf16.msra.mxu0 %v6008
    %6708 = vmatmul.bf16.gmra.mxu0 %v4767
    %v6709 = vpop.f32.mrf.mxu0
    %v6710 = vadd.f32 %v6696, %v6709
    %v6711 = vpop.f32.mrf.mxu0
    %v6712 = vadd.f32 %v6698, %v6711
    %6713 = vdwg.mxu0
    %6714 = vmatpush.bf16.msra.mxu0 %v5873
    %6715 = vmatpush.bf16.msra.mxu0 %v5865
    %6716 = vmatpush.bf16.msra.mxu0 %v5857
    %6717 = vmatpush.bf16.msra.mxu0 %v5849
    %6718 = vmatpush.bf16.msra.mxu0 %v5841
    %6719 = vmatpush.bf16.msra.mxu0 %v5833
    %6720 = vmatpush.bf16.msra.mxu0 %v5825
    %6721 = vmatpush.bf16.msra.mxu0 %v5817
    %6722 = vmatmul.bf16.gmra.mxu0 %v4764
    %v6723 = vpop.f32.mrf.mxu0
    %v6724 = vadd.f32 %v5033, %v6723
    %v6725 = vpop.f32.mrf.mxu0
    %v6726 = vadd.f32 %v5033, %v6725
    %6727 = vdwg.mxu0
    %6728 = vmatpush.bf16.msra.mxu0 %v5937
    %6729 = vmatpush.bf16.msra.mxu0 %v5929
    %6730 = vmatpush.bf16.msra.mxu0 %v5921
    %6731 = vmatpush.bf16.msra.mxu0 %v5913
    %6732 = vmatpush.bf16.msra.mxu0 %v5905
    %6733 = vmatpush.bf16.msra.mxu0 %v5897
    %6734 = vmatpush.bf16.msra.mxu0 %v5889
    %6735 = vmatpush.bf16.msra.mxu0 %v5881
    %6736 = vmatmul.bf16.gmra.mxu0 %v4765
    %v6737 = vpop.f32.mrf.mxu0
    %v6738 = vadd.f32 %v6724, %v6737
    %v6739 = vpop.f32.mrf.mxu0
    %v6740 = vadd.f32 %v6726, %v6739
    %6741 = vdwg.mxu0
    %6742 = vmatpush.bf16.msra.mxu0 %v6001
    %6743 = vmatpush.bf16.msra.mxu0 %v5993
    %6744 = vmatpush.bf16.msra.mxu0 %v5985
    %6745 = vmatpush.bf16.msra.mxu0 %v5977
    %6746 = vmatpush.bf16.msra.mxu0 %v5969
    %6747 = vmatpush.bf16.msra.mxu0 %v5961
    %6748 = vmatpush.bf16.msra.mxu0 %v5953
    %6749 = vmatpush.bf16.msra.mxu0 %v5945
    %6750 = vmatmul.bf16.gmra.mxu0 %v4766
    %v6751 = vpop.f32.mrf.mxu0
    %v6752 = vadd.f32 %v6738, %v6751
    %v6753 = vpop.f32.mrf.mxu0
    %v6754 = vadd.f32 %v6740, %v6753
    %6755 = vdwg.mxu0
    %6756 = vmatpush.bf16.msra.mxu0 %v6065
    %6757 = vmatpush.bf16.msra.mxu0 %v6057
    %6758 = vmatpush.bf16.msra.mxu0 %v6049
    %6759 = vmatpush.bf16.msra.mxu0 %v6041
    %6760 = vmatpush.bf16.msra.mxu0 %v6033
    %6761 = vmatpush.bf16.msra.mxu0 %v6025
    %6762 = vmatpush.bf16.msra.mxu0 %v6017
    %6763 = vmatpush.bf16.msra.mxu0 %v6009
    %6764 = vmatmul.bf16.gmra.mxu0 %v4767
    %v6765 = vpop.f32.mrf.mxu0
    %v6766 = vadd.f32 %v6752, %v6765
    %v6767 = vpop.f32.mrf.mxu0
    %v6768 = vadd.f32 %v6754, %v6767
    %6769 = vdwg.mxu0
    %v6770 = vadd.f32 %v2674, %v6374
    %v6771 = vadd.f32 %v2675, %v6430
    %v6772 = vadd.f32 %v2676, %v6486
    %v6773 = vadd.f32 %v2677, %v6542
    %v6774 = vadd.f32 %v2678, %v6598
    %v6775 = vadd.f32 %v2679, %v6654
    %v6776 = vadd.f32 %v2680, %v6710
    %v6777 = vadd.f32 %v2681, %v6766
    %v6778 = vadd.f32 %v2682, %v6376
    %v6779 = vadd.f32 %v2683, %v6432
    %v6780 = vadd.f32 %v2684, %v6488
    %v6781 = vadd.f32 %v2685, %v6544
    %v6782 = vadd.f32 %v2686, %v6600
    %v6783 = vadd.f32 %v2687, %v6656
    %v6784 = vadd.f32 %v2688, %v6712
    %v6785 = vadd.f32 %v2689, %v6768
    %v6786 = vadd.f32 %v6770, %v6771
    %v6787 = vadd.f32 %v6786, %v6772
    %v6788 = vadd.f32 %v6787, %v6773
    %v6789 = vadd.f32 %v6788, %v6774
    %v6790 = vadd.f32 %v6789, %v6775
    %v6791 = vadd.f32 %v6790, %v6776
    %v6792 = vadd.f32 %v6791, %v6777
    %6793 = vadd.xlane.f32.xlu0 %v6792
    %v6794 = vpop.xlane.xlu0 %6793
    %v6795 = vadd.f32 %v6778, %v6779
    %v6796 = vadd.f32 %v6795, %v6780
    %v6797 = vadd.f32 %v6796, %v6781
    %v6798 = vadd.f32 %v6797, %v6782
    %v6799 = vadd.f32 %v6798, %v6783
    %v6800 = vadd.f32 %v6799, %v6784
    %v6801 = vadd.f32 %v6800, %v6785
    %6802 = vadd.xlane.f32.xlu0 %v6801
    %v6803 = vpop.xlane.xlu0 %6802
    %v6804 = vmul.f32 %v6794, %v2529
    %v6805 = vmul.f32 %v6803, %v2529
    %v6806 = vsub.f32 %v6770, %v6804
    %v6807 = vsub.f32 %v6771, %v6804
    %v6808 = vsub.f32 %v6772, %v6804
    %v6809 = vsub.f32 %v6773, %v6804
    %v6810 = vsub.f32 %v6774, %v6804
    %v6811 = vsub.f32 %v6775, %v6804
    %v6812 = vsub.f32 %v6776, %v6804
    %v6813 = vsub.f32 %v6777, %v6804
    %v6814 = vsub.f32 %v6778, %v6805
    %v6815 = vsub.f32 %v6779, %v6805
    %v6816 = vsub.f32 %v6780, %v6805
    %v6817 = vsub.f32 %v6781, %v6805
    %v6818 = vsub.f32 %v6782, %v6805
    %v6819 = vsub.f32 %v6783, %v6805
    %v6820 = vsub.f32 %v6784, %v6805
    %v6821 = vsub.f32 %v6785, %v6805
    %v6822 = vmul.f32 %v6806, %v6806
    %v6823 = vmul.f32 %v6807, %v6807
    %v6824 = vmul.f32 %v6808, %v6808
    %v6825 = vmul.f32 %v6809, %v6809
    %v6826 = vmul.f32 %v6810, %v6810
    %v6827 = vmul.f32 %v6811, %v6811
    %v6828 = vmul.f32 %v6812, %v6812
    %v6829 = vmul.f32 %v6813, %v6813
    %v6830 = vmul.f32 %v6814, %v6814
    %v6831 = vmul.f32 %v6815, %v6815
    %v6832 = vmul.f32 %v6816, %v6816
    %v6833 = vmul.f32 %v6817, %v6817
    %v6834 = vmul.f32 %v6818, %v6818
    %v6835 = vmul.f32 %v6819, %v6819
    %v6836 = vmul.f32 %v6820, %v6820
    %v6837 = vmul.f32 %v6821, %v6821
    %v6838 = vadd.f32 %v6822, %v6823
    %v6839 = vadd.f32 %v6838, %v6824
    %v6840 = vadd.f32 %v6839, %v6825
    %v6841 = vadd.f32 %v6840, %v6826
    %v6842 = vadd.f32 %v6841, %v6827
    %v6843 = vadd.f32 %v6842, %v6828
    %v6844 = vadd.f32 %v6843, %v6829
    %6845 = vadd.xlane.f32.xlu0 %v6844
    %v6846 = vpop.xlane.xlu0 %6845
    %v6847 = vadd.f32 %v6830, %v6831
    %v6848 = vadd.f32 %v6847, %v6832
    %v6849 = vadd.f32 %v6848, %v6833
    %v6850 = vadd.f32 %v6849, %v6834
    %v6851 = vadd.f32 %v6850, %v6835
    %v6852 = vadd.f32 %v6851, %v6836
    %v6853 = vadd.f32 %v6852, %v6837
    %6854 = vadd.xlane.f32.xlu0 %v6853
    %v6855 = vpop.xlane.xlu0 %6854
    %v6856 = vmul.f32 %v6846, %v2529
    %v6857 = vmul.f32 %v6855, %v2529
    %v6858 = vadd.f32 %v6856, 1e-05
    %v6859 = vadd.f32 %v6857, 1e-05
    %v6860 = vrsqrt.pop %v6858
    %v6861 = vmul.f32 %v6860, %v6858
    %v6862 = vmul.f32 %v6861, %v6860
    %v6863 = vmul.f32 0.5, %v6862
    %v6864 = vsub.f32 1.5, %v6863
    %v6865 = vmul.f32 %v6860, %v6864
    %vm6866 = vweird.f32 %v6858
    %vm6867 = vweird.f32 %v6860
    %vm6868 = vmor %vm6866, %vm6867
    %v6869 = vsel %vm6868, %v6860, %v6865
    %v6870 = vrsqrt.pop %v6859
    %v6871 = vmul.f32 %v6870, %v6859
    %v6872 = vmul.f32 %v6871, %v6870
    %v6873 = vmul.f32 0.5, %v6872
    %v6874 = vsub.f32 1.5, %v6873
    %v6875 = vmul.f32 %v6870, %v6874
    %vm6876 = vweird.f32 %v6859
    %vm6877 = vweird.f32 %v6870
    %vm6878 = vmor %vm6876, %vm6877
    %v6879 = vsel %vm6878, %v6870, %v6875
    %v6880 = vmul.f32 %v6806, %v6869
    %v6881 = vmul.f32 %v6807, %v6869
    %v6882 = vmul.f32 %v6808, %v6869
    %v6883 = vmul.f32 %v6809, %v6869
    %v6884 = vmul.f32 %v6810, %v6869
    %v6885 = vmul.f32 %v6811, %v6869
    %v6886 = vmul.f32 %v6812, %v6869
    %v6887 = vmul.f32 %v6813, %v6869
    %v6888 = vmul.f32 %v6814, %v6879
    %v6889 = vmul.f32 %v6815, %v6879
    %v6890 = vmul.f32 %v6816, %v6879
    %v6891 = vmul.f32 %v6817, %v6879
    %v6892 = vmul.f32 %v6818, %v6879
    %v6893 = vmul.f32 %v6819, %v6879
    %v6894 = vmul.f32 %v6820, %v6879
    %v6895 = vmul.f32 %v6821, %v6879
    %v6896 = vld [vmem:[#allocation17] sm:$0xff]
    %v6898 = vperm.slane %v6896, 0
    %v6899 = vperm.slane %v6896, 1
    %v6900 = vperm.slane %v6896, 2
    %v6901 = vperm.slane %v6896, 3
    %v6902 = vperm.slane %v6896, 4
    %v6903 = vperm.slane %v6896, 5
    %v6904 = vperm.slane %v6896, 6
    %v6905 = vperm.slane %v6896, 7
    %v6914 = vmul.f32 %v6880, %v6898
    %v6915 = vmul.f32 %v6881, %v6899
    %v6916 = vmul.f32 %v6882, %v6900
    %v6917 = vmul.f32 %v6883, %v6901
    %v6918 = vmul.f32 %v6884, %v6902
    %v6919 = vmul.f32 %v6885, %v6903
    %v6920 = vmul.f32 %v6886, %v6904
    %v6921 = vmul.f32 %v6887, %v6905
    %v6922 = vmul.f32 %v6888, %v6898
    %v6923 = vmul.f32 %v6889, %v6899
    %v6924 = vmul.f32 %v6890, %v6900
    %v6925 = vmul.f32 %v6891, %v6901
    %v6926 = vmul.f32 %v6892, %v6902
    %v6927 = vmul.f32 %v6893, %v6903
    %v6928 = vmul.f32 %v6894, %v6904
    %v6929 = vmul.f32 %v6895, %v6905
    %v6930 = vld [vmem:[#allocation19] sm:$0xff]
    %v6932 = vperm.slane %v6930, 0
    %v6933 = vperm.slane %v6930, 1
    %v6934 = vperm.slane %v6930, 2
    %v6935 = vperm.slane %v6930, 3
    %v6936 = vperm.slane %v6930, 4
    %v6937 = vperm.slane %v6930, 5
    %v6938 = vperm.slane %v6930, 6
    %v6939 = vperm.slane %v6930, 7
    %v6948 = vadd.f32 %v6914, %v6932
    %v6949 = vadd.f32 %v6915, %v6933
    %v6950 = vadd.f32 %v6916, %v6934
    %v6951 = vadd.f32 %v6917, %v6935
    %v6952 = vadd.f32 %v6918, %v6936
    %v6953 = vadd.f32 %v6919, %v6937
    %v6954 = vadd.f32 %v6920, %v6938
    %v6955 = vadd.f32 %v6921, %v6939
    %v6956 = vadd.f32 %v6922, %v6932
    %v6957 = vadd.f32 %v6923, %v6933
    %v6958 = vadd.f32 %v6924, %v6934
    %v6959 = vadd.f32 %v6925, %v6935
    %v6960 = vadd.f32 %v6926, %v6936
    %v6961 = vadd.f32 %v6927, %v6937
    %v6962 = vadd.f32 %v6928, %v6938
    %v6963 = vadd.f32 %v6929, %v6939
    %v6964 = vpack.c.bf16 %v6948, %v6948
    %v6965 = vpack.c.bf16 %v6949, %v6949
    %v6966 = vpack.c.bf16 %v6950, %v6950
    %v6967 = vpack.c.bf16 %v6951, %v6951
    %v6968 = vpack.c.bf16 %v6952, %v6952
    %v6969 = vpack.c.bf16 %v6953, %v6953
    %v6970 = vpack.c.bf16 %v6954, %v6954
    %v6971 = vpack.c.bf16 %v6955, %v6955
    %v6972 = vpack.c.bf16 %v6956, %v6956
    %v6973 = vpack.c.bf16 %v6957, %v6957
    %v6974 = vpack.c.bf16 %v6958, %v6958
    %v6975 = vpack.c.bf16 %v6959, %v6959
    %v6976 = vpack.c.bf16 %v6960, %v6960
    %v6977 = vpack.c.bf16 %v6961, %v6961
    %v6978 = vpack.c.bf16 %v6962, %v6962
    %v6979 = vpack.c.bf16 %v6963, %v6963
    %v6980 = vld [vmem:[#allocation20] sm:$0xff]
    %v6981 = vld [vmem:[#allocation20 + $0x8] sm:$0xff]
    %v6982 = vld [vmem:[#allocation20 + $0x10] sm:$0xff]
    %v6983 = vld [vmem:[#allocation20 + $0x18] sm:$0xff]
    %v6984 = vld [vmem:[#allocation20 + $0x20] sm:$0xff]
    %v6985 = vld [vmem:[#allocation20 + $0x28] sm:$0xff]
    %v6986 = vld [vmem:[#allocation20 + $0x30] sm:$0xff]
    %v6987 = vld [vmem:[#allocation20 + $0x38] sm:$0xff]
    %v6988 = vld [vmem:[#allocation20 + $0x40] sm:$0xff]
    %v6989 = vld [vmem:[#allocation20 + $0x48] sm:$0xff]
    %v6990 = vld [vmem:[#allocation20 + $0x50] sm:$0xff]
    %v6991 = vld [vmem:[#allocation20 + $0x58] sm:$0xff]
    %v6992 = vld [vmem:[#allocation20 + $0x60] sm:$0xff]
    %v6993 = vld [vmem:[#allocation20 + $0x68] sm:$0xff]
    %v6994 = vld [vmem:[#allocation20 + $0x70] sm:$0xff]
    %v6995 = vld [vmem:[#allocation20 + $0x78] sm:$0xff]
    %v6996 = vld [vmem:[#allocation20 + $0x80] sm:$0xff]
    %v6997 = vld [vmem:[#allocation20 + $0x88] sm:$0xff]
    %v6998 = vld [vmem:[#allocation20 + $0x90] sm:$0xff]
    %v6999 = vld [vmem:[#allocation20 + $0x98] sm:$0xff]
    %v7000 = vld [vmem:[#allocation20 + $0xa0] sm:$0xff]
    %v7001 = vld [vmem:[#allocation20 + $0xa8] sm:$0xff]
    %v7002 = vld [vmem:[#allocation20 + $0xb0] sm:$0xff]
    %v7003 = vld [vmem:[#allocation20 + $0xb8] sm:$0xff]
    %v7004 = vld [vmem:[#allocation20 + $0xc0] sm:$0xff]
    %v7005 = vld [vmem:[#allocation20 + $0xc8] sm:$0xff]
    %v7006 = vld [vmem:[#allocation20 + $0xd0] sm:$0xff]
    %v7007 = vld [vmem:[#allocation20 + $0xd8] sm:$0xff]
    %v7008 = vld [vmem:[#allocation20 + $0xe0] sm:$0xff]
    %v7009 = vld [vmem:[#allocation20 + $0xe8] sm:$0xff]
    %v7010 = vld [vmem:[#allocation20 + $0xf0] sm:$0xff]
    %v7011 = vld [vmem:[#allocation20 + $0xf8] sm:$0xff]
    %v7012 = vld [vmem:[#allocation20 + $0x100] sm:$0xff]
    %v7013 = vld [vmem:[#allocation20 + $0x108] sm:$0xff]
    %v7014 = vld [vmem:[#allocation20 + $0x110] sm:$0xff]
    %v7015 = vld [vmem:[#allocation20 + $0x118] sm:$0xff]
    %v7016 = vld [vmem:[#allocation20 + $0x120] sm:$0xff]
    %v7017 = vld [vmem:[#allocation20 + $0x128] sm:$0xff]
    %v7018 = vld [vmem:[#allocation20 + $0x130] sm:$0xff]
    %v7019 = vld [vmem:[#allocation20 + $0x138] sm:$0xff]
    %v7020 = vld [vmem:[#allocation20 + $0x140] sm:$0xff]
    %v7021 = vld [vmem:[#allocation20 + $0x148] sm:$0xff]
    %v7022 = vld [vmem:[#allocation20 + $0x150] sm:$0xff]
    %v7023 = vld [vmem:[#allocation20 + $0x158] sm:$0xff]
    %v7024 = vld [vmem:[#allocation20 + $0x160] sm:$0xff]
    %v7025 = vld [vmem:[#allocation20 + $0x168] sm:$0xff]
    %v7026 = vld [vmem:[#allocation20 + $0x170] sm:$0xff]
    %v7027 = vld [vmem:[#allocation20 + $0x178] sm:$0xff]
    %v7028 = vld [vmem:[#allocation20 + $0x180] sm:$0xff]
    %v7029 = vld [vmem:[#allocation20 + $0x188] sm:$0xff]
    %v7030 = vld [vmem:[#allocation20 + $0x190] sm:$0xff]
    %v7031 = vld [vmem:[#allocation20 + $0x198] sm:$0xff]
    %v7032 = vld [vmem:[#allocation20 + $0x1a0] sm:$0xff]
    %v7033 = vld [vmem:[#allocation20 + $0x1a8] sm:$0xff]
    %v7034 = vld [vmem:[#allocation20 + $0x1b0] sm:$0xff]
    %v7035 = vld [vmem:[#allocation20 + $0x1b8] sm:$0xff]
    %v7036 = vld [vmem:[#allocation20 + $0x1c0] sm:$0xff]
    %v7037 = vld [vmem:[#allocation20 + $0x1c8] sm:$0xff]
    %v7038 = vld [vmem:[#allocation20 + $0x1d0] sm:$0xff]
    %v7039 = vld [vmem:[#allocation20 + $0x1d8] sm:$0xff]
    %v7040 = vld [vmem:[#allocation20 + $0x1e0] sm:$0xff]
    %v7041 = vld [vmem:[#allocation20 + $0x1e8] sm:$0xff]
    %v7042 = vld [vmem:[#allocation20 + $0x1f0] sm:$0xff]
    %v7043 = vld [vmem:[#allocation20 + $0x1f8] sm:$0xff]
    %v7044 = vld [vmem:[#allocation20 + $0x200] sm:$0xff]
    %v7045 = vld [vmem:[#allocation20 + $0x208] sm:$0xff]
    %v7046 = vld [vmem:[#allocation20 + $0x210] sm:$0xff]
    %v7047 = vld [vmem:[#allocation20 + $0x218] sm:$0xff]
    %v7048 = vld [vmem:[#allocation20 + $0x220] sm:$0xff]
    %v7049 = vld [vmem:[#allocation20 + $0x228] sm:$0xff]
    %v7050 = vld [vmem:[#allocation20 + $0x230] sm:$0xff]
    %v7051 = vld [vmem:[#allocation20 + $0x238] sm:$0xff]
    %v7052 = vld [vmem:[#allocation20 + $0x240] sm:$0xff]
    %v7053 = vld [vmem:[#allocation20 + $0x248] sm:$0xff]
    %v7054 = vld [vmem:[#allocation20 + $0x250] sm:$0xff]
    %v7055 = vld [vmem:[#allocation20 + $0x258] sm:$0xff]
    %v7056 = vld [vmem:[#allocation20 + $0x260] sm:$0xff]
    %v7057 = vld [vmem:[#allocation20 + $0x268] sm:$0xff]
    %v7058 = vld [vmem:[#allocation20 + $0x270] sm:$0xff]
    %v7059 = vld [vmem:[#allocation20 + $0x278] sm:$0xff]
    %v7060 = vld [vmem:[#allocation20 + $0x280] sm:$0xff]
    %v7061 = vld [vmem:[#allocation20 + $0x288] sm:$0xff]
    %v7062 = vld [vmem:[#allocation20 + $0x290] sm:$0xff]
    %v7063 = vld [vmem:[#allocation20 + $0x298] sm:$0xff]
    %v7064 = vld [vmem:[#allocation20 + $0x2a0] sm:$0xff]
    %v7065 = vld [vmem:[#allocation20 + $0x2a8] sm:$0xff]
    %v7066 = vld [vmem:[#allocation20 + $0x2b0] sm:$0xff]
    %v7067 = vld [vmem:[#allocation20 + $0x2b8] sm:$0xff]
    %v7068 = vld [vmem:[#allocation20 + $0x2c0] sm:$0xff]
    %v7069 = vld [vmem:[#allocation20 + $0x2c8] sm:$0xff]
    %v7070 = vld [vmem:[#allocation20 + $0x2d0] sm:$0xff]
    %v7071 = vld [vmem:[#allocation20 + $0x2d8] sm:$0xff]
    %v7072 = vld [vmem:[#allocation20 + $0x2e0] sm:$0xff]
    %v7073 = vld [vmem:[#allocation20 + $0x2e8] sm:$0xff]
    %v7074 = vld [vmem:[#allocation20 + $0x2f0] sm:$0xff]
    %v7075 = vld [vmem:[#allocation20 + $0x2f8] sm:$0xff]
    %v7076 = vld [vmem:[#allocation20 + $0x300] sm:$0xff]
    %v7077 = vld [vmem:[#allocation20 + $0x308] sm:$0xff]
    %v7078 = vld [vmem:[#allocation20 + $0x310] sm:$0xff]
    %v7079 = vld [vmem:[#allocation20 + $0x318] sm:$0xff]
    %v7080 = vld [vmem:[#allocation20 + $0x320] sm:$0xff]
    %v7081 = vld [vmem:[#allocation20 + $0x328] sm:$0xff]
    %v7082 = vld [vmem:[#allocation20 + $0x330] sm:$0xff]
    %v7083 = vld [vmem:[#allocation20 + $0x338] sm:$0xff]
    %v7084 = vld [vmem:[#allocation20 + $0x340] sm:$0xff]
    %v7085 = vld [vmem:[#allocation20 + $0x348] sm:$0xff]
    %v7086 = vld [vmem:[#allocation20 + $0x350] sm:$0xff]
    %v7087 = vld [vmem:[#allocation20 + $0x358] sm:$0xff]
    %v7088 = vld [vmem:[#allocation20 + $0x360] sm:$0xff]
    %v7089 = vld [vmem:[#allocation20 + $0x368] sm:$0xff]
    %v7090 = vld [vmem:[#allocation20 + $0x370] sm:$0xff]
    %v7091 = vld [vmem:[#allocation20 + $0x378] sm:$0xff]
    %v7092 = vld [vmem:[#allocation20 + $0x380] sm:$0xff]
    %v7093 = vld [vmem:[#allocation20 + $0x388] sm:$0xff]
    %v7094 = vld [vmem:[#allocation20 + $0x390] sm:$0xff]
    %v7095 = vld [vmem:[#allocation20 + $0x398] sm:$0xff]
    %v7096 = vld [vmem:[#allocation20 + $0x3a0] sm:$0xff]
    %v7097 = vld [vmem:[#allocation20 + $0x3a8] sm:$0xff]
    %v7098 = vld [vmem:[#allocation20 + $0x3b0] sm:$0xff]
    %v7099 = vld [vmem:[#allocation20 + $0x3b8] sm:$0xff]
    %v7100 = vld [vmem:[#allocation20 + $0x3c0] sm:$0xff]
    %v7101 = vld [vmem:[#allocation20 + $0x3c8] sm:$0xff]
    %v7102 = vld [vmem:[#allocation20 + $0x3d0] sm:$0xff]
    %v7103 = vld [vmem:[#allocation20 + $0x3d8] sm:$0xff]
    %v7104 = vld [vmem:[#allocation20 + $0x3e0] sm:$0xff]
    %v7105 = vld [vmem:[#allocation20 + $0x3e8] sm:$0xff]
    %v7106 = vld [vmem:[#allocation20 + $0x3f0] sm:$0xff]
    %v7107 = vld [vmem:[#allocation20 + $0x3f8] sm:$0xff]
    %v7108 = vld [vmem:[#allocation20 + $0x400] sm:$0xff]
    %v7109 = vld [vmem:[#allocation20 + $0x408] sm:$0xff]
    %v7110 = vld [vmem:[#allocation20 + $0x410] sm:$0xff]
    %v7111 = vld [vmem:[#allocation20 + $0x418] sm:$0xff]
    %v7112 = vld [vmem:[#allocation20 + $0x420] sm:$0xff]
    %v7113 = vld [vmem:[#allocation20 + $0x428] sm:$0xff]
    %v7114 = vld [vmem:[#allocation20 + $0x430] sm:$0xff]
    %v7115 = vld [vmem:[#allocation20 + $0x438] sm:$0xff]
    %v7116 = vld [vmem:[#allocation20 + $0x440] sm:$0xff]
    %v7117 = vld [vmem:[#allocation20 + $0x448] sm:$0xff]
    %v7118 = vld [vmem:[#allocation20 + $0x450] sm:$0xff]
    %v7119 = vld [vmem:[#allocation20 + $0x458] sm:$0xff]
    %v7120 = vld [vmem:[#allocation20 + $0x460] sm:$0xff]
    %v7121 = vld [vmem:[#allocation20 + $0x468] sm:$0xff]
    %v7122 = vld [vmem:[#allocation20 + $0x470] sm:$0xff]
    %v7123 = vld [vmem:[#allocation20 + $0x478] sm:$0xff]
    %v7124 = vld [vmem:[#allocation20 + $0x480] sm:$0xff]
    %v7125 = vld [vmem:[#allocation20 + $0x488] sm:$0xff]
    %v7126 = vld [vmem:[#allocation20 + $0x490] sm:$0xff]
    %v7127 = vld [vmem:[#allocation20 + $0x498] sm:$0xff]
    %v7128 = vld [vmem:[#allocation20 + $0x4a0] sm:$0xff]
    %v7129 = vld [vmem:[#allocation20 + $0x4a8] sm:$0xff]
    %v7130 = vld [vmem:[#allocation20 + $0x4b0] sm:$0xff]
    %v7131 = vld [vmem:[#allocation20 + $0x4b8] sm:$0xff]
    %v7132 = vld [vmem:[#allocation20 + $0x4c0] sm:$0xff]
    %v7133 = vld [vmem:[#allocation20 + $0x4c8] sm:$0xff]
    %v7134 = vld [vmem:[#allocation20 + $0x4d0] sm:$0xff]
    %v7135 = vld [vmem:[#allocation20 + $0x4d8] sm:$0xff]
    %v7136 = vld [vmem:[#allocation20 + $0x4e0] sm:$0xff]
    %v7137 = vld [vmem:[#allocation20 + $0x4e8] sm:$0xff]
    %v7138 = vld [vmem:[#allocation20 + $0x4f0] sm:$0xff]
    %v7139 = vld [vmem:[#allocation20 + $0x4f8] sm:$0xff]
    %v7140 = vld [vmem:[#allocation20 + $0x500] sm:$0xff]
    %v7141 = vld [vmem:[#allocation20 + $0x508] sm:$0xff]
    %v7142 = vld [vmem:[#allocation20 + $0x510] sm:$0xff]
    %v7143 = vld [vmem:[#allocation20 + $0x518] sm:$0xff]
    %v7144 = vld [vmem:[#allocation20 + $0x520] sm:$0xff]
    %v7145 = vld [vmem:[#allocation20 + $0x528] sm:$0xff]
    %v7146 = vld [vmem:[#allocation20 + $0x530] sm:$0xff]
    %v7147 = vld [vmem:[#allocation20 + $0x538] sm:$0xff]
    %v7148 = vld [vmem:[#allocation20 + $0x540] sm:$0xff]
    %v7149 = vld [vmem:[#allocation20 + $0x548] sm:$0xff]
    %v7150 = vld [vmem:[#allocation20 + $0x550] sm:$0xff]
    %v7151 = vld [vmem:[#allocation20 + $0x558] sm:$0xff]
    %v7152 = vld [vmem:[#allocation20 + $0x560] sm:$0xff]
    %v7153 = vld [vmem:[#allocation20 + $0x568] sm:$0xff]
    %v7154 = vld [vmem:[#allocation20 + $0x570] sm:$0xff]
    %v7155 = vld [vmem:[#allocation20 + $0x578] sm:$0xff]
    %v7156 = vld [vmem:[#allocation20 + $0x580] sm:$0xff]
    %v7157 = vld [vmem:[#allocation20 + $0x588] sm:$0xff]
    %v7158 = vld [vmem:[#allocation20 + $0x590] sm:$0xff]
    %v7159 = vld [vmem:[#allocation20 + $0x598] sm:$0xff]
    %v7160 = vld [vmem:[#allocation20 + $0x5a0] sm:$0xff]
    %v7161 = vld [vmem:[#allocation20 + $0x5a8] sm:$0xff]
    %v7162 = vld [vmem:[#allocation20 + $0x5b0] sm:$0xff]
    %v7163 = vld [vmem:[#allocation20 + $0x5b8] sm:$0xff]
    %v7164 = vld [vmem:[#allocation20 + $0x5c0] sm:$0xff]
    %v7165 = vld [vmem:[#allocation20 + $0x5c8] sm:$0xff]
    %v7166 = vld [vmem:[#allocation20 + $0x5d0] sm:$0xff]
    %v7167 = vld [vmem:[#allocation20 + $0x5d8] sm:$0xff]
    %v7168 = vld [vmem:[#allocation20 + $0x5e0] sm:$0xff]
    %v7169 = vld [vmem:[#allocation20 + $0x5e8] sm:$0xff]
    %v7170 = vld [vmem:[#allocation20 + $0x5f0] sm:$0xff]
    %v7171 = vld [vmem:[#allocation20 + $0x5f8] sm:$0xff]
    %v7172 = vld [vmem:[#allocation20 + $0x600] sm:$0xff]
    %v7173 = vld [vmem:[#allocation20 + $0x608] sm:$0xff]
    %v7174 = vld [vmem:[#allocation20 + $0x610] sm:$0xff]
    %v7175 = vld [vmem:[#allocation20 + $0x618] sm:$0xff]
    %v7176 = vld [vmem:[#allocation20 + $0x620] sm:$0xff]
    %v7177 = vld [vmem:[#allocation20 + $0x628] sm:$0xff]
    %v7178 = vld [vmem:[#allocation20 + $0x630] sm:$0xff]
    %v7179 = vld [vmem:[#allocation20 + $0x638] sm:$0xff]
    %v7180 = vld [vmem:[#allocation20 + $0x640] sm:$0xff]
    %v7181 = vld [vmem:[#allocation20 + $0x648] sm:$0xff]
    %v7182 = vld [vmem:[#allocation20 + $0x650] sm:$0xff]
    %v7183 = vld [vmem:[#allocation20 + $0x658] sm:$0xff]
    %v7184 = vld [vmem:[#allocation20 + $0x660] sm:$0xff]
    %v7185 = vld [vmem:[#allocation20 + $0x668] sm:$0xff]
    %v7186 = vld [vmem:[#allocation20 + $0x670] sm:$0xff]
    %v7187 = vld [vmem:[#allocation20 + $0x678] sm:$0xff]
    %v7188 = vld [vmem:[#allocation20 + $0x680] sm:$0xff]
    %v7189 = vld [vmem:[#allocation20 + $0x688] sm:$0xff]
    %v7190 = vld [vmem:[#allocation20 + $0x690] sm:$0xff]
    %v7191 = vld [vmem:[#allocation20 + $0x698] sm:$0xff]
    %v7192 = vld [vmem:[#allocation20 + $0x6a0] sm:$0xff]
    %v7193 = vld [vmem:[#allocation20 + $0x6a8] sm:$0xff]
    %v7194 = vld [vmem:[#allocation20 + $0x6b0] sm:$0xff]
    %v7195 = vld [vmem:[#allocation20 + $0x6b8] sm:$0xff]
    %v7196 = vld [vmem:[#allocation20 + $0x6c0] sm:$0xff]
    %v7197 = vld [vmem:[#allocation20 + $0x6c8] sm:$0xff]
    %v7198 = vld [vmem:[#allocation20 + $0x6d0] sm:$0xff]
    %v7199 = vld [vmem:[#allocation20 + $0x6d8] sm:$0xff]
    %v7200 = vld [vmem:[#allocation20 + $0x6e0] sm:$0xff]
    %v7201 = vld [vmem:[#allocation20 + $0x6e8] sm:$0xff]
    %v7202 = vld [vmem:[#allocation20 + $0x6f0] sm:$0xff]
    %v7203 = vld [vmem:[#allocation20 + $0x6f8] sm:$0xff]
    %v7204 = vld [vmem:[#allocation20 + $0x700] sm:$0xff]
    %v7205 = vld [vmem:[#allocation20 + $0x708] sm:$0xff]
    %v7206 = vld [vmem:[#allocation20 + $0x710] sm:$0xff]
    %v7207 = vld [vmem:[#allocation20 + $0x718] sm:$0xff]
    %v7208 = vld [vmem:[#allocation20 + $0x720] sm:$0xff]
    %v7209 = vld [vmem:[#allocation20 + $0x728] sm:$0xff]
    %v7210 = vld [vmem:[#allocation20 + $0x730] sm:$0xff]
    %v7211 = vld [vmem:[#allocation20 + $0x738] sm:$0xff]
    %v7212 = vld [vmem:[#allocation20 + $0x740] sm:$0xff]
    %v7213 = vld [vmem:[#allocation20 + $0x748] sm:$0xff]
    %v7214 = vld [vmem:[#allocation20 + $0x750] sm:$0xff]
    %v7215 = vld [vmem:[#allocation20 + $0x758] sm:$0xff]
    %v7216 = vld [vmem:[#allocation20 + $0x760] sm:$0xff]
    %v7217 = vld [vmem:[#allocation20 + $0x768] sm:$0xff]
    %v7218 = vld [vmem:[#allocation20 + $0x770] sm:$0xff]
    %v7219 = vld [vmem:[#allocation20 + $0x778] sm:$0xff]
    %v7220 = vld [vmem:[#allocation20 + $0x780] sm:$0xff]
    %v7221 = vld [vmem:[#allocation20 + $0x788] sm:$0xff]
    %v7222 = vld [vmem:[#allocation20 + $0x790] sm:$0xff]
    %v7223 = vld [vmem:[#allocation20 + $0x798] sm:$0xff]
    %v7224 = vld [vmem:[#allocation20 + $0x7a0] sm:$0xff]
    %v7225 = vld [vmem:[#allocation20 + $0x7a8] sm:$0xff]
    %v7226 = vld [vmem:[#allocation20 + $0x7b0] sm:$0xff]
    %v7227 = vld [vmem:[#allocation20 + $0x7b8] sm:$0xff]
    %v7228 = vld [vmem:[#allocation20 + $0x7c0] sm:$0xff]
    %v7229 = vld [vmem:[#allocation20 + $0x7c8] sm:$0xff]
    %v7230 = vld [vmem:[#allocation20 + $0x7d0] sm:$0xff]
    %v7231 = vld [vmem:[#allocation20 + $0x7d8] sm:$0xff]
    %v7232 = vld [vmem:[#allocation20 + $0x7e0] sm:$0xff]
    %v7233 = vld [vmem:[#allocation20 + $0x7e8] sm:$0xff]
    %v7234 = vld [vmem:[#allocation20 + $0x7f0] sm:$0xff]
    %v7235 = vld [vmem:[#allocation20 + $0x7f8] sm:$0xff]
    %v7236 = vld [vmem:[%s13] sm:$0xf]
    %v7238 = vperm.slane %v7236, 0
    %v7239 = vperm.slane %v7236, 1
    %v7240 = vperm.slane %v7236, 2
    %v7241 = vperm.slane %v7236, 3
    %v7262 = vunpack.c.l.b16 %v6964
    %v7263 = vunpack.c.l.b16 %v6965
    %v7264 = vunpack.c.l.b16 %v6966
    %v7265 = vunpack.c.l.b16 %v6967
    %v7266 = vunpack.c.l.b16 %v6968
    %v7267 = vunpack.c.l.b16 %v6969
    %v7268 = vunpack.c.l.b16 %v6970
    %v7269 = vunpack.c.l.b16 %v6971
    %v7270 = vunpack.c.l.b16 %v6972
    %v7271 = vunpack.c.l.b16 %v6973
    %v7272 = vunpack.c.l.b16 %v6974
    %v7273 = vunpack.c.l.b16 %v6975
    %v7274 = vunpack.c.l.b16 %v6976
    %v7275 = vunpack.c.l.b16 %v6977
    %v7276 = vunpack.c.l.b16 %v6978
    %v7277 = vunpack.c.l.b16 %v6979
    %v7278 = vrot.slane %v7270, 7
    %vm7279 = vcmask 1041409
    %v7280 = vsel %vm7279, %v7278, %v7262
    %v7281 = vrot.slane %v7271, 7
    %v7282 = vsel %vm7279, %v7281, %v7263
    %v7283 = vrot.slane %v7272, 7
    %v7284 = vsel %vm7279, %v7283, %v7264
    %v7285 = vrot.slane %v7273, 7
    %v7286 = vsel %vm7279, %v7285, %v7265
    %v7287 = vrot.slane %v7274, 7
    %v7288 = vsel %vm7279, %v7287, %v7266
    %v7289 = vrot.slane %v7275, 7
    %v7290 = vsel %vm7279, %v7289, %v7267
    %v7291 = vrot.slane %v7276, 7
    %v7292 = vsel %vm7279, %v7291, %v7268
    %v7293 = vrot.slane %v7277, 7
    %v7294 = vsel %vm7279, %v7293, %v7269
    %v7295 = vpack.c.b16 %v7280, %v7280
    %v7296 = vpack.c.b16 %v7282, %v7282
    %v7297 = vpack.c.b16 %v7284, %v7284
    %v7298 = vpack.c.b16 %v7286, %v7286
    %v7299 = vpack.c.b16 %v7288, %v7288
    %v7300 = vpack.c.b16 %v7290, %v7290
    %v7301 = vpack.c.b16 %v7292, %v7292
    %v7302 = vpack.c.b16 %v7294, %v7294
    %v7567 = vunpack.c.l.b16 %v6980
    %v7568 = vunpack.c.h.b16 %v6980
    %v7569 = vunpack.c.l.b16 %v6981
    %v7570 = vunpack.c.h.b16 %v6981
    %v7571 = vunpack.c.l.b16 %v6982
    %v7572 = vunpack.c.h.b16 %v6982
    %v7573 = vunpack.c.l.b16 %v6983
    %v7574 = vunpack.c.h.b16 %v6983
    %v7575 = vunpack.c.l.b16 %v6984
    %v7576 = vunpack.c.h.b16 %v6984
    %v7577 = vunpack.c.l.b16 %v6985
    %v7578 = vunpack.c.h.b16 %v6985
    %v7579 = vunpack.c.l.b16 %v6986
    %v7580 = vunpack.c.h.b16 %v6986
    %v7581 = vunpack.c.l.b16 %v6987
    %v7582 = vunpack.c.h.b16 %v6987
    %v7583 = vunpack.c.l.b16 %v6988
    %v7584 = vunpack.c.h.b16 %v6988
    %v7585 = vunpack.c.l.b16 %v6989
    %v7586 = vunpack.c.h.b16 %v6989
    %v7587 = vunpack.c.l.b16 %v6990
    %v7588 = vunpack.c.h.b16 %v6990
    %v7589 = vunpack.c.l.b16 %v6991
    %v7590 = vunpack.c.h.b16 %v6991
    %v7591 = vunpack.c.l.b16 %v6992
    %v7592 = vunpack.c.h.b16 %v6992
    %v7593 = vunpack.c.l.b16 %v6993
    %v7594 = vunpack.c.h.b16 %v6993
    %v7595 = vunpack.c.l.b16 %v6994
    %v7596 = vunpack.c.h.b16 %v6994
    %v7597 = vunpack.c.l.b16 %v6995
    %v7598 = vunpack.c.h.b16 %v6995
    %v7599 = vunpack.c.l.b16 %v6996
    %v7600 = vunpack.c.h.b16 %v6996
    %v7601 = vunpack.c.l.b16 %v6997
    %v7602 = vunpack.c.h.b16 %v6997
    %v7603 = vunpack.c.l.b16 %v6998
    %v7604 = vunpack.c.h.b16 %v6998
    %v7605 = vunpack.c.l.b16 %v6999
    %v7606 = vunpack.c.h.b16 %v6999
    %v7607 = vunpack.c.l.b16 %v7000
    %v7608 = vunpack.c.h.b16 %v7000
    %v7609 = vunpack.c.l.b16 %v7001
    %v7610 = vunpack.c.h.b16 %v7001
    %v7611 = vunpack.c.l.b16 %v7002
    %v7612 = vunpack.c.h.b16 %v7002
    %v7613 = vunpack.c.l.b16 %v7003
    %v7614 = vunpack.c.h.b16 %v7003
    %v7615 = vunpack.c.l.b16 %v7004
    %v7616 = vunpack.c.h.b16 %v7004
    %v7617 = vunpack.c.l.b16 %v7005
    %v7618 = vunpack.c.h.b16 %v7005
    %v7619 = vunpack.c.l.b16 %v7006
    %v7620 = vunpack.c.h.b16 %v7006
    %v7621 = vunpack.c.l.b16 %v7007
    %v7622 = vunpack.c.h.b16 %v7007
    %v7623 = vunpack.c.l.b16 %v7008
    %v7624 = vunpack.c.h.b16 %v7008
    %v7625 = vunpack.c.l.b16 %v7009
    %v7626 = vunpack.c.h.b16 %v7009
    %v7627 = vunpack.c.l.b16 %v7010
    %v7628 = vunpack.c.h.b16 %v7010
    %v7629 = vunpack.c.l.b16 %v7011
    %v7630 = vunpack.c.h.b16 %v7011
    %v7631 = vunpack.c.l.b16 %v7012
    %v7632 = vunpack.c.h.b16 %v7012
    %v7633 = vunpack.c.l.b16 %v7013
    %v7634 = vunpack.c.h.b16 %v7013
    %v7635 = vunpack.c.l.b16 %v7014
    %v7636 = vunpack.c.h.b16 %v7014
    %v7637 = vunpack.c.l.b16 %v7015
    %v7638 = vunpack.c.h.b16 %v7015
    %v7639 = vunpack.c.l.b16 %v7016
    %v7640 = vunpack.c.h.b16 %v7016
    %v7641 = vunpack.c.l.b16 %v7017
    %v7642 = vunpack.c.h.b16 %v7017
    %v7643 = vunpack.c.l.b16 %v7018
    %v7644 = vunpack.c.h.b16 %v7018
    %v7645 = vunpack.c.l.b16 %v7019
    %v7646 = vunpack.c.h.b16 %v7019
    %v7647 = vunpack.c.l.b16 %v7020
    %v7648 = vunpack.c.h.b16 %v7020
    %v7649 = vunpack.c.l.b16 %v7021
    %v7650 = vunpack.c.h.b16 %v7021
    %v7651 = vunpack.c.l.b16 %v7022
    %v7652 = vunpack.c.h.b16 %v7022
    %v7653 = vunpack.c.l.b16 %v7023
    %v7654 = vunpack.c.h.b16 %v7023
    %v7655 = vunpack.c.l.b16 %v7024
    %v7656 = vunpack.c.h.b16 %v7024
    %v7657 = vunpack.c.l.b16 %v7025
    %v7658 = vunpack.c.h.b16 %v7025
    %v7659 = vunpack.c.l.b16 %v7026
    %v7660 = vunpack.c.h.b16 %v7026
    %v7661 = vunpack.c.l.b16 %v7027
    %v7662 = vunpack.c.h.b16 %v7027
    %v7663 = vunpack.c.l.b16 %v7028
    %v7664 = vunpack.c.h.b16 %v7028
    %v7665 = vunpack.c.l.b16 %v7029
    %v7666 = vunpack.c.h.b16 %v7029
    %v7667 = vunpack.c.l.b16 %v7030
    %v7668 = vunpack.c.h.b16 %v7030
    %v7669 = vunpack.c.l.b16 %v7031
    %v7670 = vunpack.c.h.b16 %v7031
    %v7671 = vunpack.c.l.b16 %v7032
    %v7672 = vunpack.c.h.b16 %v7032
    %v7673 = vunpack.c.l.b16 %v7033
    %v7674 = vunpack.c.h.b16 %v7033
    %v7675 = vunpack.c.l.b16 %v7034
    %v7676 = vunpack.c.h.b16 %v7034
    %v7677 = vunpack.c.l.b16 %v7035
    %v7678 = vunpack.c.h.b16 %v7035
    %v7679 = vunpack.c.l.b16 %v7036
    %v7680 = vunpack.c.h.b16 %v7036
    %v7681 = vunpack.c.l.b16 %v7037
    %v7682 = vunpack.c.h.b16 %v7037
    %v7683 = vunpack.c.l.b16 %v7038
    %v7684 = vunpack.c.h.b16 %v7038
    %v7685 = vunpack.c.l.b16 %v7039
    %v7686 = vunpack.c.h.b16 %v7039
    %v7687 = vunpack.c.l.b16 %v7040
    %v7688 = vunpack.c.h.b16 %v7040
    %v7689 = vunpack.c.l.b16 %v7041
    %v7690 = vunpack.c.h.b16 %v7041
    %v7691 = vunpack.c.l.b16 %v7042
    %v7692 = vunpack.c.h.b16 %v7042
    %v7693 = vunpack.c.l.b16 %v7043
    %v7694 = vunpack.c.h.b16 %v7043
    %v7695 = vunpack.c.l.b16 %v7044
    %v7696 = vunpack.c.h.b16 %v7044
    %v7697 = vunpack.c.l.b16 %v7045
    %v7698 = vunpack.c.h.b16 %v7045
    %v7699 = vunpack.c.l.b16 %v7046
    %v7700 = vunpack.c.h.b16 %v7046
    %v7701 = vunpack.c.l.b16 %v7047
    %v7702 = vunpack.c.h.b16 %v7047
    %v7703 = vunpack.c.l.b16 %v7048
    %v7704 = vunpack.c.h.b16 %v7048
    %v7705 = vunpack.c.l.b16 %v7049
    %v7706 = vunpack.c.h.b16 %v7049
    %v7707 = vunpack.c.l.b16 %v7050
    %v7708 = vunpack.c.h.b16 %v7050
    %v7709 = vunpack.c.l.b16 %v7051
    %v7710 = vunpack.c.h.b16 %v7051
    %v7711 = vunpack.c.l.b16 %v7052
    %v7712 = vunpack.c.h.b16 %v7052
    %v7713 = vunpack.c.l.b16 %v7053
    %v7714 = vunpack.c.h.b16 %v7053
    %v7715 = vunpack.c.l.b16 %v7054
    %v7716 = vunpack.c.h.b16 %v7054
    %v7717 = vunpack.c.l.b16 %v7055
    %v7718 = vunpack.c.h.b16 %v7055
    %v7719 = vunpack.c.l.b16 %v7056
    %v7720 = vunpack.c.h.b16 %v7056
    %v7721 = vunpack.c.l.b16 %v7057
    %v7722 = vunpack.c.h.b16 %v7057
    %v7723 = vunpack.c.l.b16 %v7058
    %v7724 = vunpack.c.h.b16 %v7058
    %v7725 = vunpack.c.l.b16 %v7059
    %v7726 = vunpack.c.h.b16 %v7059
    %v7727 = vunpack.c.l.b16 %v7060
    %v7728 = vunpack.c.h.b16 %v7060
    %v7729 = vunpack.c.l.b16 %v7061
    %v7730 = vunpack.c.h.b16 %v7061
    %v7731 = vunpack.c.l.b16 %v7062
    %v7732 = vunpack.c.h.b16 %v7062
    %v7733 = vunpack.c.l.b16 %v7063
    %v7734 = vunpack.c.h.b16 %v7063
    %v7735 = vunpack.c.l.b16 %v7064
    %v7736 = vunpack.c.h.b16 %v7064
    %v7737 = vunpack.c.l.b16 %v7065
    %v7738 = vunpack.c.h.b16 %v7065
    %v7739 = vunpack.c.l.b16 %v7066
    %v7740 = vunpack.c.h.b16 %v7066
    %v7741 = vunpack.c.l.b16 %v7067
    %v7742 = vunpack.c.h.b16 %v7067
    %v7743 = vunpack.c.l.b16 %v7068
    %v7744 = vunpack.c.h.b16 %v7068
    %v7745 = vunpack.c.l.b16 %v7069
    %v7746 = vunpack.c.h.b16 %v7069
    %v7747 = vunpack.c.l.b16 %v7070
    %v7748 = vunpack.c.h.b16 %v7070
    %v7749 = vunpack.c.l.b16 %v7071
    %v7750 = vunpack.c.h.b16 %v7071
    %v7751 = vunpack.c.l.b16 %v7072
    %v7752 = vunpack.c.h.b16 %v7072
    %v7753 = vunpack.c.l.b16 %v7073
    %v7754 = vunpack.c.h.b16 %v7073
    %v7755 = vunpack.c.l.b16 %v7074
    %v7756 = vunpack.c.h.b16 %v7074
    %v7757 = vunpack.c.l.b16 %v7075
    %v7758 = vunpack.c.h.b16 %v7075
    %v7759 = vunpack.c.l.b16 %v7076
    %v7760 = vunpack.c.h.b16 %v7076
    %v7761 = vunpack.c.l.b16 %v7077
    %v7762 = vunpack.c.h.b16 %v7077
    %v7763 = vunpack.c.l.b16 %v7078
    %v7764 = vunpack.c.h.b16 %v7078
    %v7765 = vunpack.c.l.b16 %v7079
    %v7766 = vunpack.c.h.b16 %v7079
    %v7767 = vunpack.c.l.b16 %v7080
    %v7768 = vunpack.c.h.b16 %v7080
    %v7769 = vunpack.c.l.b16 %v7081
    %v7770 = vunpack.c.h.b16 %v7081
    %v7771 = vunpack.c.l.b16 %v7082
    %v7772 = vunpack.c.h.b16 %v7082
    %v7773 = vunpack.c.l.b16 %v7083
    %v7774 = vunpack.c.h.b16 %v7083
    %v7775 = vunpack.c.l.b16 %v7084
    %v7776 = vunpack.c.h.b16 %v7084
    %v7777 = vunpack.c.l.b16 %v7085
    %v7778 = vunpack.c.h.b16 %v7085
    %v7779 = vunpack.c.l.b16 %v7086
    %v7780 = vunpack.c.h.b16 %v7086
    %v7781 = vunpack.c.l.b16 %v7087
    %v7782 = vunpack.c.h.b16 %v7087
    %v7783 = vunpack.c.l.b16 %v7088
    %v7784 = vunpack.c.h.b16 %v7088
    %v7785 = vunpack.c.l.b16 %v7089
    %v7786 = vunpack.c.h.b16 %v7089
    %v7787 = vunpack.c.l.b16 %v7090
    %v7788 = vunpack.c.h.b16 %v7090
    %v7789 = vunpack.c.l.b16 %v7091
    %v7790 = vunpack.c.h.b16 %v7091
    %v7791 = vunpack.c.l.b16 %v7092
    %v7792 = vunpack.c.h.b16 %v7092
    %v7793 = vunpack.c.l.b16 %v7093
    %v7794 = vunpack.c.h.b16 %v7093
    %v7795 = vunpack.c.l.b16 %v7094
    %v7796 = vunpack.c.h.b16 %v7094
    %v7797 = vunpack.c.l.b16 %v7095
    %v7798 = vunpack.c.h.b16 %v7095
    %v7799 = vunpack.c.l.b16 %v7096
    %v7800 = vunpack.c.h.b16 %v7096
    %v7801 = vunpack.c.l.b16 %v7097
    %v7802 = vunpack.c.h.b16 %v7097
    %v7803 = vunpack.c.l.b16 %v7098
    %v7804 = vunpack.c.h.b16 %v7098
    %v7805 = vunpack.c.l.b16 %v7099
    %v7806 = vunpack.c.h.b16 %v7099
    %v7807 = vunpack.c.l.b16 %v7100
    %v7808 = vunpack.c.h.b16 %v7100
    %v7809 = vunpack.c.l.b16 %v7101
    %v7810 = vunpack.c.h.b16 %v7101
    %v7811 = vunpack.c.l.b16 %v7102
    %v7812 = vunpack.c.h.b16 %v7102
    %v7813 = vunpack.c.l.b16 %v7103
    %v7814 = vunpack.c.h.b16 %v7103
    %v7815 = vunpack.c.l.b16 %v7104
    %v7816 = vunpack.c.h.b16 %v7104
    %v7817 = vunpack.c.l.b16 %v7105
    %v7818 = vunpack.c.h.b16 %v7105
    %v7819 = vunpack.c.l.b16 %v7106
    %v7820 = vunpack.c.h.b16 %v7106
    %v7821 = vunpack.c.l.b16 %v7107
    %v7822 = vunpack.c.h.b16 %v7107
    %v7823 = vunpack.c.l.b16 %v7108
    %v7824 = vunpack.c.h.b16 %v7108
    %v7825 = vunpack.c.l.b16 %v7109
    %v7826 = vunpack.c.h.b16 %v7109
    %v7827 = vunpack.c.l.b16 %v7110
    %v7828 = vunpack.c.h.b16 %v7110
    %v7829 = vunpack.c.l.b16 %v7111
    %v7830 = vunpack.c.h.b16 %v7111
    %v7831 = vunpack.c.l.b16 %v7112
    %v7832 = vunpack.c.h.b16 %v7112
    %v7833 = vunpack.c.l.b16 %v7113
    %v7834 = vunpack.c.h.b16 %v7113
    %v7835 = vunpack.c.l.b16 %v7114
    %v7836 = vunpack.c.h.b16 %v7114
    %v7837 = vunpack.c.l.b16 %v7115
    %v7838 = vunpack.c.h.b16 %v7115
    %v7839 = vunpack.c.l.b16 %v7116
    %v7840 = vunpack.c.h.b16 %v7116
    %v7841 = vunpack.c.l.b16 %v7117
    %v7842 = vunpack.c.h.b16 %v7117
    %v7843 = vunpack.c.l.b16 %v7118
    %v7844 = vunpack.c.h.b16 %v7118
    %v7845 = vunpack.c.l.b16 %v7119
    %v7846 = vunpack.c.h.b16 %v7119
    %v7847 = vunpack.c.l.b16 %v7120
    %v7848 = vunpack.c.h.b16 %v7120
    %v7849 = vunpack.c.l.b16 %v7121
    %v7850 = vunpack.c.h.b16 %v7121
    %v7851 = vunpack.c.l.b16 %v7122
    %v7852 = vunpack.c.h.b16 %v7122
    %v7853 = vunpack.c.l.b16 %v7123
    %v7854 = vunpack.c.h.b16 %v7123
    %v7855 = vunpack.c.l.b16 %v7124
    %v7856 = vunpack.c.h.b16 %v7124
    %v7857 = vunpack.c.l.b16 %v7125
    %v7858 = vunpack.c.h.b16 %v7125
    %v7859 = vunpack.c.l.b16 %v7126
    %v7860 = vunpack.c.h.b16 %v7126
    %v7861 = vunpack.c.l.b16 %v7127
    %v7862 = vunpack.c.h.b16 %v7127
    %v7863 = vunpack.c.l.b16 %v7128
    %v7864 = vunpack.c.h.b16 %v7128
    %v7865 = vunpack.c.l.b16 %v7129
    %v7866 = vunpack.c.h.b16 %v7129
    %v7867 = vunpack.c.l.b16 %v7130
    %v7868 = vunpack.c.h.b16 %v7130
    %v7869 = vunpack.c.l.b16 %v7131
    %v7870 = vunpack.c.h.b16 %v7131
    %v7871 = vunpack.c.l.b16 %v7132
    %v7872 = vunpack.c.h.b16 %v7132
    %v7873 = vunpack.c.l.b16 %v7133
    %v7874 = vunpack.c.h.b16 %v7133
    %v7875 = vunpack.c.l.b16 %v7134
    %v7876 = vunpack.c.h.b16 %v7134
    %v7877 = vunpack.c.l.b16 %v7135
    %v7878 = vunpack.c.h.b16 %v7135
    %v7879 = vunpack.c.l.b16 %v7136
    %v7880 = vunpack.c.h.b16 %v7136
    %v7881 = vunpack.c.l.b16 %v7137
    %v7882 = vunpack.c.h.b16 %v7137
    %v7883 = vunpack.c.l.b16 %v7138
    %v7884 = vunpack.c.h.b16 %v7138
    %v7885 = vunpack.c.l.b16 %v7139
    %v7886 = vunpack.c.h.b16 %v7139
    %v7887 = vunpack.c.l.b16 %v7140
    %v7888 = vunpack.c.h.b16 %v7140
    %v7889 = vunpack.c.l.b16 %v7141
    %v7890 = vunpack.c.h.b16 %v7141
    %v7891 = vunpack.c.l.b16 %v7142
    %v7892 = vunpack.c.h.b16 %v7142
    %v7893 = vunpack.c.l.b16 %v7143
    %v7894 = vunpack.c.h.b16 %v7143
    %v7895 = vunpack.c.l.b16 %v7144
    %v7896 = vunpack.c.h.b16 %v7144
    %v7897 = vunpack.c.l.b16 %v7145
    %v7898 = vunpack.c.h.b16 %v7145
    %v7899 = vunpack.c.l.b16 %v7146
    %v7900 = vunpack.c.h.b16 %v7146
    %v7901 = vunpack.c.l.b16 %v7147
    %v7902 = vunpack.c.h.b16 %v7147
    %v7903 = vunpack.c.l.b16 %v7148
    %v7904 = vunpack.c.h.b16 %v7148
    %v7905 = vunpack.c.l.b16 %v7149
    %v7906 = vunpack.c.h.b16 %v7149
    %v7907 = vunpack.c.l.b16 %v7150
    %v7908 = vunpack.c.h.b16 %v7150
    %v7909 = vunpack.c.l.b16 %v7151
    %v7910 = vunpack.c.h.b16 %v7151
    %v7911 = vunpack.c.l.b16 %v7152
    %v7912 = vunpack.c.h.b16 %v7152
    %v7913 = vunpack.c.l.b16 %v7153
    %v7914 = vunpack.c.h.b16 %v7153
    %v7915 = vunpack.c.l.b16 %v7154
    %v7916 = vunpack.c.h.b16 %v7154
    %v7917 = vunpack.c.l.b16 %v7155
    %v7918 = vunpack.c.h.b16 %v7155
    %v7919 = vunpack.c.l.b16 %v7156
    %v7920 = vunpack.c.h.b16 %v7156
    %v7921 = vunpack.c.l.b16 %v7157
    %v7922 = vunpack.c.h.b16 %v7157
    %v7923 = vunpack.c.l.b16 %v7158
    %v7924 = vunpack.c.h.b16 %v7158
    %v7925 = vunpack.c.l.b16 %v7159
    %v7926 = vunpack.c.h.b16 %v7159
    %v7927 = vunpack.c.l.b16 %v7160
    %v7928 = vunpack.c.h.b16 %v7160
    %v7929 = vunpack.c.l.b16 %v7161
    %v7930 = vunpack.c.h.b16 %v7161
    %v7931 = vunpack.c.l.b16 %v7162
    %v7932 = vunpack.c.h.b16 %v7162
    %v7933 = vunpack.c.l.b16 %v7163
    %v7934 = vunpack.c.h.b16 %v7163
    %v7935 = vunpack.c.l.b16 %v7164
    %v7936 = vunpack.c.h.b16 %v7164
    %v7937 = vunpack.c.l.b16 %v7165
    %v7938 = vunpack.c.h.b16 %v7165
    %v7939 = vunpack.c.l.b16 %v7166
    %v7940 = vunpack.c.h.b16 %v7166
    %v7941 = vunpack.c.l.b16 %v7167
    %v7942 = vunpack.c.h.b16 %v7167
    %v7943 = vunpack.c.l.b16 %v7168
    %v7944 = vunpack.c.h.b16 %v7168
    %v7945 = vunpack.c.l.b16 %v7169
    %v7946 = vunpack.c.h.b16 %v7169
    %v7947 = vunpack.c.l.b16 %v7170
    %v7948 = vunpack.c.h.b16 %v7170
    %v7949 = vunpack.c.l.b16 %v7171
    %v7950 = vunpack.c.h.b16 %v7171
    %v7951 = vunpack.c.l.b16 %v7172
    %v7952 = vunpack.c.h.b16 %v7172
    %v7953 = vunpack.c.l.b16 %v7173
    %v7954 = vunpack.c.h.b16 %v7173
    %v7955 = vunpack.c.l.b16 %v7174
    %v7956 = vunpack.c.h.b16 %v7174
    %v7957 = vunpack.c.l.b16 %v7175
    %v7958 = vunpack.c.h.b16 %v7175
    %v7959 = vunpack.c.l.b16 %v7176
    %v7960 = vunpack.c.h.b16 %v7176
    %v7961 = vunpack.c.l.b16 %v7177
    %v7962 = vunpack.c.h.b16 %v7177
    %v7963 = vunpack.c.l.b16 %v7178
    %v7964 = vunpack.c.h.b16 %v7178
    %v7965 = vunpack.c.l.b16 %v7179
    %v7966 = vunpack.c.h.b16 %v7179
    %v7967 = vunpack.c.l.b16 %v7180
    %v7968 = vunpack.c.h.b16 %v7180
    %v7969 = vunpack.c.l.b16 %v7181
    %v7970 = vunpack.c.h.b16 %v7181
    %v7971 = vunpack.c.l.b16 %v7182
    %v7972 = vunpack.c.h.b16 %v7182
    %v7973 = vunpack.c.l.b16 %v7183
    %v7974 = vunpack.c.h.b16 %v7183
    %v7975 = vunpack.c.l.b16 %v7184
    %v7976 = vunpack.c.h.b16 %v7184
    %v7977 = vunpack.c.l.b16 %v7185
    %v7978 = vunpack.c.h.b16 %v7185
    %v7979 = vunpack.c.l.b16 %v7186
    %v7980 = vunpack.c.h.b16 %v7186
    %v7981 = vunpack.c.l.b16 %v7187
    %v7982 = vunpack.c.h.b16 %v7187
    %v7983 = vunpack.c.l.b16 %v7188
    %v7984 = vunpack.c.h.b16 %v7188
    %v7985 = vunpack.c.l.b16 %v7189
    %v7986 = vunpack.c.h.b16 %v7189
    %v7987 = vunpack.c.l.b16 %v7190
    %v7988 = vunpack.c.h.b16 %v7190
    %v7989 = vunpack.c.l.b16 %v7191
    %v7990 = vunpack.c.h.b16 %v7191
    %v7991 = vunpack.c.l.b16 %v7192
    %v7992 = vunpack.c.h.b16 %v7192
    %v7993 = vunpack.c.l.b16 %v7193
    %v7994 = vunpack.c.h.b16 %v7193
    %v7995 = vunpack.c.l.b16 %v7194
    %v7996 = vunpack.c.h.b16 %v7194
    %v7997 = vunpack.c.l.b16 %v7195
    %v7998 = vunpack.c.h.b16 %v7195
    %v7999 = vunpack.c.l.b16 %v7196
    %v8000 = vunpack.c.h.b16 %v7196
    %v8001 = vunpack.c.l.b16 %v7197
    %v8002 = vunpack.c.h.b16 %v7197
    %v8003 = vunpack.c.l.b16 %v7198
    %v8004 = vunpack.c.h.b16 %v7198
    %v8005 = vunpack.c.l.b16 %v7199
    %v8006 = vunpack.c.h.b16 %v7199
    %v8007 = vunpack.c.l.b16 %v7200
    %v8008 = vunpack.c.h.b16 %v7200
    %v8009 = vunpack.c.l.b16 %v7201
    %v8010 = vunpack.c.h.b16 %v7201
    %v8011 = vunpack.c.l.b16 %v7202
    %v8012 = vunpack.c.h.b16 %v7202
    %v8013 = vunpack.c.l.b16 %v7203
    %v8014 = vunpack.c.h.b16 %v7203
    %v8015 = vunpack.c.l.b16 %v7204
    %v8016 = vunpack.c.h.b16 %v7204
    %v8017 = vunpack.c.l.b16 %v7205
    %v8018 = vunpack.c.h.b16 %v7205
    %v8019 = vunpack.c.l.b16 %v7206
    %v8020 = vunpack.c.h.b16 %v7206
    %v8021 = vunpack.c.l.b16 %v7207
    %v8022 = vunpack.c.h.b16 %v7207
    %v8023 = vunpack.c.l.b16 %v7208
    %v8024 = vunpack.c.h.b16 %v7208
    %v8025 = vunpack.c.l.b16 %v7209
    %v8026 = vunpack.c.h.b16 %v7209
    %v8027 = vunpack.c.l.b16 %v7210
    %v8028 = vunpack.c.h.b16 %v7210
    %v8029 = vunpack.c.l.b16 %v7211
    %v8030 = vunpack.c.h.b16 %v7211
    %v8031 = vunpack.c.l.b16 %v7212
    %v8032 = vunpack.c.h.b16 %v7212
    %v8033 = vunpack.c.l.b16 %v7213
    %v8034 = vunpack.c.h.b16 %v7213
    %v8035 = vunpack.c.l.b16 %v7214
    %v8036 = vunpack.c.h.b16 %v7214
    %v8037 = vunpack.c.l.b16 %v7215
    %v8038 = vunpack.c.h.b16 %v7215
    %v8039 = vunpack.c.l.b16 %v7216
    %v8040 = vunpack.c.h.b16 %v7216
    %v8041 = vunpack.c.l.b16 %v7217
    %v8042 = vunpack.c.h.b16 %v7217
    %v8043 = vunpack.c.l.b16 %v7218
    %v8044 = vunpack.c.h.b16 %v7218
    %v8045 = vunpack.c.l.b16 %v7219
    %v8046 = vunpack.c.h.b16 %v7219
    %v8047 = vunpack.c.l.b16 %v7220
    %v8048 = vunpack.c.h.b16 %v7220
    %v8049 = vunpack.c.l.b16 %v7221
    %v8050 = vunpack.c.h.b16 %v7221
    %v8051 = vunpack.c.l.b16 %v7222
    %v8052 = vunpack.c.h.b16 %v7222
    %v8053 = vunpack.c.l.b16 %v7223
    %v8054 = vunpack.c.h.b16 %v7223
    %v8055 = vunpack.c.l.b16 %v7224
    %v8056 = vunpack.c.h.b16 %v7224
    %v8057 = vunpack.c.l.b16 %v7225
    %v8058 = vunpack.c.h.b16 %v7225
    %v8059 = vunpack.c.l.b16 %v7226
    %v8060 = vunpack.c.h.b16 %v7226
    %v8061 = vunpack.c.l.b16 %v7227
    %v8062 = vunpack.c.h.b16 %v7227
    %v8063 = vunpack.c.l.b16 %v7228
    %v8064 = vunpack.c.h.b16 %v7228
    %v8065 = vunpack.c.l.b16 %v7229
    %v8066 = vunpack.c.h.b16 %v7229
    %v8067 = vunpack.c.l.b16 %v7230
    %v8068 = vunpack.c.h.b16 %v7230
    %v8069 = vunpack.c.l.b16 %v7231
    %v8070 = vunpack.c.h.b16 %v7231
    %v8071 = vunpack.c.l.b16 %v7232
    %v8072 = vunpack.c.h.b16 %v7232
    %v8073 = vunpack.c.l.b16 %v7233
    %v8074 = vunpack.c.h.b16 %v7233
    %v8075 = vunpack.c.l.b16 %v7234
    %v8076 = vunpack.c.h.b16 %v7234
    %v8077 = vunpack.c.l.b16 %v7235
    %v8078 = vunpack.c.h.b16 %v7235
    %v8079 = vpack.c.b16 %v7571, %v7567
    %v8080 = vpack.c.b16 %v7572, %v7568
    %v8081 = vpack.c.b16 %v7573, %v7569
    %v8082 = vpack.c.b16 %v7574, %v7570
    %v8083 = vpack.c.b16 %v7579, %v7575
    %v8084 = vpack.c.b16 %v7580, %v7576
    %v8085 = vpack.c.b16 %v7581, %v7577
    %v8086 = vpack.c.b16 %v7582, %v7578
    %v8087 = vpack.c.b16 %v7587, %v7583
    %v8088 = vpack.c.b16 %v7588, %v7584
    %v8089 = vpack.c.b16 %v7589, %v7585
    %v8090 = vpack.c.b16 %v7590, %v7586
    %v8091 = vpack.c.b16 %v7595, %v7591
    %v8092 = vpack.c.b16 %v7596, %v7592
    %v8093 = vpack.c.b16 %v7597, %v7593
    %v8094 = vpack.c.b16 %v7598, %v7594
    %v8095 = vpack.c.b16 %v7603, %v7599
    %v8096 = vpack.c.b16 %v7604, %v7600
    %v8097 = vpack.c.b16 %v7605, %v7601
    %v8098 = vpack.c.b16 %v7606, %v7602
    %v8099 = vpack.c.b16 %v7611, %v7607
    %v8100 = vpack.c.b16 %v7612, %v7608
    %v8101 = vpack.c.b16 %v7613, %v7609
    %v8102 = vpack.c.b16 %v7614, %v7610
    %v8103 = vpack.c.b16 %v7619, %v7615
    %v8104 = vpack.c.b16 %v7620, %v7616
    %v8105 = vpack.c.b16 %v7621, %v7617
    %v8106 = vpack.c.b16 %v7622, %v7618
    %v8107 = vpack.c.b16 %v7627, %v7623
    %v8108 = vpack.c.b16 %v7628, %v7624
    %v8109 = vpack.c.b16 %v7629, %v7625
    %v8110 = vpack.c.b16 %v7630, %v7626
    %v8111 = vpack.c.b16 %v7635, %v7631
    %v8112 = vpack.c.b16 %v7636, %v7632
    %v8113 = vpack.c.b16 %v7637, %v7633
    %v8114 = vpack.c.b16 %v7638, %v7634
    %v8115 = vpack.c.b16 %v7643, %v7639
    %v8116 = vpack.c.b16 %v7644, %v7640
    %v8117 = vpack.c.b16 %v7645, %v7641
    %v8118 = vpack.c.b16 %v7646, %v7642
    %v8119 = vpack.c.b16 %v7651, %v7647
    %v8120 = vpack.c.b16 %v7652, %v7648
    %v8121 = vpack.c.b16 %v7653, %v7649
    %v8122 = vpack.c.b16 %v7654, %v7650
    %v8123 = vpack.c.b16 %v7659, %v7655
    %v8124 = vpack.c.b16 %v7660, %v7656
    %v8125 = vpack.c.b16 %v7661, %v7657
    %v8126 = vpack.c.b16 %v7662, %v7658
    %v8127 = vpack.c.b16 %v7667, %v7663
    %v8128 = vpack.c.b16 %v7668, %v7664
    %v8129 = vpack.c.b16 %v7669, %v7665
    %v8130 = vpack.c.b16 %v7670, %v7666
    %v8131 = vpack.c.b16 %v7675, %v7671
    %v8132 = vpack.c.b16 %v7676, %v7672
    %v8133 = vpack.c.b16 %v7677, %v7673
    %v8134 = vpack.c.b16 %v7678, %v7674
    %v8135 = vpack.c.b16 %v7683, %v7679
    %v8136 = vpack.c.b16 %v7684, %v7680
    %v8137 = vpack.c.b16 %v7685, %v7681
    %v8138 = vpack.c.b16 %v7686, %v7682
    %v8139 = vpack.c.b16 %v7691, %v7687
    %v8140 = vpack.c.b16 %v7692, %v7688
    %v8141 = vpack.c.b16 %v7693, %v7689
    %v8142 = vpack.c.b16 %v7694, %v7690
    %v8143 = vpack.c.b16 %v7699, %v7695
    %v8144 = vpack.c.b16 %v7700, %v7696
    %v8145 = vpack.c.b16 %v7701, %v7697
    %v8146 = vpack.c.b16 %v7702, %v7698
    %v8147 = vpack.c.b16 %v7707, %v7703
    %v8148 = vpack.c.b16 %v7708, %v7704
    %v8149 = vpack.c.b16 %v7709, %v7705
    %v8150 = vpack.c.b16 %v7710, %v7706
    %v8151 = vpack.c.b16 %v7715, %v7711
    %v8152 = vpack.c.b16 %v7716, %v7712
    %v8153 = vpack.c.b16 %v7717, %v7713
    %v8154 = vpack.c.b16 %v7718, %v7714
    %v8155 = vpack.c.b16 %v7723, %v7719
    %v8156 = vpack.c.b16 %v7724, %v7720
    %v8157 = vpack.c.b16 %v7725, %v7721
    %v8158 = vpack.c.b16 %v7726, %v7722
    %v8159 = vpack.c.b16 %v7731, %v7727
    %v8160 = vpack.c.b16 %v7732, %v7728
    %v8161 = vpack.c.b16 %v7733, %v7729
    %v8162 = vpack.c.b16 %v7734, %v7730
    %v8163 = vpack.c.b16 %v7739, %v7735
    %v8164 = vpack.c.b16 %v7740, %v7736
    %v8165 = vpack.c.b16 %v7741, %v7737
    %v8166 = vpack.c.b16 %v7742, %v7738
    %v8167 = vpack.c.b16 %v7747, %v7743
    %v8168 = vpack.c.b16 %v7748, %v7744
    %v8169 = vpack.c.b16 %v7749, %v7745
    %v8170 = vpack.c.b16 %v7750, %v7746
    %v8171 = vpack.c.b16 %v7755, %v7751
    %v8172 = vpack.c.b16 %v7756, %v7752
    %v8173 = vpack.c.b16 %v7757, %v7753
    %v8174 = vpack.c.b16 %v7758, %v7754
    %v8175 = vpack.c.b16 %v7763, %v7759
    %v8176 = vpack.c.b16 %v7764, %v7760
    %v8177 = vpack.c.b16 %v7765, %v7761
    %v8178 = vpack.c.b16 %v7766, %v7762
    %v8179 = vpack.c.b16 %v7771, %v7767
    %v8180 = vpack.c.b16 %v7772, %v7768
    %v8181 = vpack.c.b16 %v7773, %v7769
    %v8182 = vpack.c.b16 %v7774, %v7770
    %v8183 = vpack.c.b16 %v7779, %v7775
    %v8184 = vpack.c.b16 %v7780, %v7776
    %v8185 = vpack.c.b16 %v7781, %v7777
    %v8186 = vpack.c.b16 %v7782, %v7778
    %v8187 = vpack.c.b16 %v7787, %v7783
    %v8188 = vpack.c.b16 %v7788, %v7784
    %v8189 = vpack.c.b16 %v7789, %v7785
    %v8190 = vpack.c.b16 %v7790, %v7786
    %v8191 = vpack.c.b16 %v7795, %v7791
    %v8192 = vpack.c.b16 %v7796, %v7792
    %v8193 = vpack.c.b16 %v7797, %v7793
    %v8194 = vpack.c.b16 %v7798, %v7794
    %v8195 = vpack.c.b16 %v7803, %v7799
    %v8196 = vpack.c.b16 %v7804, %v7800
    %v8197 = vpack.c.b16 %v7805, %v7801
    %v8198 = vpack.c.b16 %v7806, %v7802
    %v8199 = vpack.c.b16 %v7811, %v7807
    %v8200 = vpack.c.b16 %v7812, %v7808
    %v8201 = vpack.c.b16 %v7813, %v7809
    %v8202 = vpack.c.b16 %v7814, %v7810
    %v8203 = vpack.c.b16 %v7819, %v7815
    %v8204 = vpack.c.b16 %v7820, %v7816
    %v8205 = vpack.c.b16 %v7821, %v7817
    %v8206 = vpack.c.b16 %v7822, %v7818
    %v8207 = vpack.c.b16 %v7827, %v7823
    %v8208 = vpack.c.b16 %v7828, %v7824
    %v8209 = vpack.c.b16 %v7829, %v7825
    %v8210 = vpack.c.b16 %v7830, %v7826
    %v8211 = vpack.c.b16 %v7835, %v7831
    %v8212 = vpack.c.b16 %v7836, %v7832
    %v8213 = vpack.c.b16 %v7837, %v7833
    %v8214 = vpack.c.b16 %v7838, %v7834
    %v8215 = vpack.c.b16 %v7843, %v7839
    %v8216 = vpack.c.b16 %v7844, %v7840
    %v8217 = vpack.c.b16 %v7845, %v7841
    %v8218 = vpack.c.b16 %v7846, %v7842
    %v8219 = vpack.c.b16 %v7851, %v7847
    %v8220 = vpack.c.b16 %v7852, %v7848
    %v8221 = vpack.c.b16 %v7853, %v7849
    %v8222 = vpack.c.b16 %v7854, %v7850
    %v8223 = vpack.c.b16 %v7859, %v7855
    %v8224 = vpack.c.b16 %v7860, %v7856
    %v8225 = vpack.c.b16 %v7861, %v7857
    %v8226 = vpack.c.b16 %v7862, %v7858
    %v8227 = vpack.c.b16 %v7867, %v7863
    %v8228 = vpack.c.b16 %v7868, %v7864
    %v8229 = vpack.c.b16 %v7869, %v7865
    %v8230 = vpack.c.b16 %v7870, %v7866
    %v8231 = vpack.c.b16 %v7875, %v7871
    %v8232 = vpack.c.b16 %v7876, %v7872
    %v8233 = vpack.c.b16 %v7877, %v7873
    %v8234 = vpack.c.b16 %v7878, %v7874
    %v8235 = vpack.c.b16 %v7883, %v7879
    %v8236 = vpack.c.b16 %v7884, %v7880
    %v8237 = vpack.c.b16 %v7885, %v7881
    %v8238 = vpack.c.b16 %v7886, %v7882
    %v8239 = vpack.c.b16 %v7891, %v7887
    %v8240 = vpack.c.b16 %v7892, %v7888
    %v8241 = vpack.c.b16 %v7893, %v7889
    %v8242 = vpack.c.b16 %v7894, %v7890
    %v8243 = vpack.c.b16 %v7899, %v7895
    %v8244 = vpack.c.b16 %v7900, %v7896
    %v8245 = vpack.c.b16 %v7901, %v7897
    %v8246 = vpack.c.b16 %v7902, %v7898
    %v8247 = vpack.c.b16 %v7907, %v7903
    %v8248 = vpack.c.b16 %v7908, %v7904
    %v8249 = vpack.c.b16 %v7909, %v7905
    %v8250 = vpack.c.b16 %v7910, %v7906
    %v8251 = vpack.c.b16 %v7915, %v7911
    %v8252 = vpack.c.b16 %v7916, %v7912
    %v8253 = vpack.c.b16 %v7917, %v7913
    %v8254 = vpack.c.b16 %v7918, %v7914
    %v8255 = vpack.c.b16 %v7923, %v7919
    %v8256 = vpack.c.b16 %v7924, %v7920
    %v8257 = vpack.c.b16 %v7925, %v7921
    %v8258 = vpack.c.b16 %v7926, %v7922
    %v8259 = vpack.c.b16 %v7931, %v7927
    %v8260 = vpack.c.b16 %v7932, %v7928
    %v8261 = vpack.c.b16 %v7933, %v7929
    %v8262 = vpack.c.b16 %v7934, %v7930
    %v8263 = vpack.c.b16 %v7939, %v7935
    %v8264 = vpack.c.b16 %v7940, %v7936
    %v8265 = vpack.c.b16 %v7941, %v7937
    %v8266 = vpack.c.b16 %v7942, %v7938
    %v8267 = vpack.c.b16 %v7947, %v7943
    %v8268 = vpack.c.b16 %v7948, %v7944
    %v8269 = vpack.c.b16 %v7949, %v7945
    %v8270 = vpack.c.b16 %v7950, %v7946
    %v8271 = vpack.c.b16 %v7955, %v7951
    %v8272 = vpack.c.b16 %v7956, %v7952
    %v8273 = vpack.c.b16 %v7957, %v7953
    %v8274 = vpack.c.b16 %v7958, %v7954
    %v8275 = vpack.c.b16 %v7963, %v7959
    %v8276 = vpack.c.b16 %v7964, %v7960
    %v8277 = vpack.c.b16 %v7965, %v7961
    %v8278 = vpack.c.b16 %v7966, %v7962
    %v8279 = vpack.c.b16 %v7971, %v7967
    %v8280 = vpack.c.b16 %v7972, %v7968
    %v8281 = vpack.c.b16 %v7973, %v7969
    %v8282 = vpack.c.b16 %v7974, %v7970
    %v8283 = vpack.c.b16 %v7979, %v7975
    %v8284 = vpack.c.b16 %v7980, %v7976
    %v8285 = vpack.c.b16 %v7981, %v7977
    %v8286 = vpack.c.b16 %v7982, %v7978
    %v8287 = vpack.c.b16 %v7987, %v7983
    %v8288 = vpack.c.b16 %v7988, %v7984
    %v8289 = vpack.c.b16 %v7989, %v7985
    %v8290 = vpack.c.b16 %v7990, %v7986
    %v8291 = vpack.c.b16 %v7995, %v7991
    %v8292 = vpack.c.b16 %v7996, %v7992
    %v8293 = vpack.c.b16 %v7997, %v7993
    %v8294 = vpack.c.b16 %v7998, %v7994
    %v8295 = vpack.c.b16 %v8003, %v7999
    %v8296 = vpack.c.b16 %v8004, %v8000
    %v8297 = vpack.c.b16 %v8005, %v8001
    %v8298 = vpack.c.b16 %v8006, %v8002
    %v8299 = vpack.c.b16 %v8011, %v8007
    %v8300 = vpack.c.b16 %v8012, %v8008
    %v8301 = vpack.c.b16 %v8013, %v8009
    %v8302 = vpack.c.b16 %v8014, %v8010
    %v8303 = vpack.c.b16 %v8019, %v8015
    %v8304 = vpack.c.b16 %v8020, %v8016
    %v8305 = vpack.c.b16 %v8021, %v8017
    %v8306 = vpack.c.b16 %v8022, %v8018
    %v8307 = vpack.c.b16 %v8027, %v8023
    %v8308 = vpack.c.b16 %v8028, %v8024
    %v8309 = vpack.c.b16 %v8029, %v8025
    %v8310 = vpack.c.b16 %v8030, %v8026
    %v8311 = vpack.c.b16 %v8035, %v8031
    %v8312 = vpack.c.b16 %v8036, %v8032
    %v8313 = vpack.c.b16 %v8037, %v8033
    %v8314 = vpack.c.b16 %v8038, %v8034
    %v8315 = vpack.c.b16 %v8043, %v8039
    %v8316 = vpack.c.b16 %v8044, %v8040
    %v8317 = vpack.c.b16 %v8045, %v8041
    %v8318 = vpack.c.b16 %v8046, %v8042
    %v8319 = vpack.c.b16 %v8051, %v8047
    %v8320 = vpack.c.b16 %v8052, %v8048
    %v8321 = vpack.c.b16 %v8053, %v8049
    %v8322 = vpack.c.b16 %v8054, %v8050
    %v8323 = vpack.c.b16 %v8059, %v8055
    %v8324 = vpack.c.b16 %v8060, %v8056
    %v8325 = vpack.c.b16 %v8061, %v8057
    %v8326 = vpack.c.b16 %v8062, %v8058
    %v8327 = vpack.c.b16 %v8067, %v8063
    %v8328 = vpack.c.b16 %v8068, %v8064
    %v8329 = vpack.c.b16 %v8069, %v8065
    %v8330 = vpack.c.b16 %v8070, %v8066
    %v8331 = vpack.c.b16 %v8075, %v8071
    %v8332 = vpack.c.b16 %v8076, %v8072
    %v8333 = vpack.c.b16 %v8077, %v8073
    %v8334 = vpack.c.b16 %v8078, %v8074
    %8591 = vmatpush.bf16.msra.mxu0 %v8107
    %8592 = vmatpush.bf16.msra.mxu0 %v8103
    %8593 = vmatpush.bf16.msra.mxu0 %v8099
    %8594 = vmatpush.bf16.msra.mxu0 %v8095
    %8595 = vmatpush.bf16.msra.mxu0 %v8091
    %8596 = vmatpush.bf16.msra.mxu0 %v8087
    %8597 = vmatpush.bf16.msra.mxu0 %v8083
    %8598 = vmatpush.bf16.msra.mxu0 %v8079
    %8599 = vmatmul.bf16.gmra.mxu0 %v7295
    %v8600 = vpop.f32.mrf.mxu0
    %v8601 = vadd.f32 %v7238, %v8600
    %v8602 = vpop.f32.mrf.mxu0
    %8603 = vdwg.mxu0
    %8604 = vmatpush.bf16.msra.mxu0 %v8139
    %8605 = vmatpush.bf16.msra.mxu0 %v8135
    %8606 = vmatpush.bf16.msra.mxu0 %v8131
    %8607 = vmatpush.bf16.msra.mxu0 %v8127
    %8608 = vmatpush.bf16.msra.mxu0 %v8123
    %8609 = vmatpush.bf16.msra.mxu0 %v8119
    %8610 = vmatpush.bf16.msra.mxu0 %v8115
    %8611 = vmatpush.bf16.msra.mxu0 %v8111
    %8612 = vmatmul.bf16.gmra.mxu0 %v7296
    %v8613 = vpop.f32.mrf.mxu0
    %v8614 = vadd.f32 %v8601, %v8613
    %v8615 = vpop.f32.mrf.mxu0
    %8616 = vdwg.mxu0
    %8617 = vmatpush.bf16.msra.mxu0 %v8171
    %8618 = vmatpush.bf16.msra.mxu0 %v8167
    %8619 = vmatpush.bf16.msra.mxu0 %v8163
    %8620 = vmatpush.bf16.msra.mxu0 %v8159
    %8621 = vmatpush.bf16.msra.mxu0 %v8155
    %8622 = vmatpush.bf16.msra.mxu0 %v8151
    %8623 = vmatpush.bf16.msra.mxu0 %v8147
    %8624 = vmatpush.bf16.msra.mxu0 %v8143
    %8625 = vmatmul.bf16.gmra.mxu0 %v7297
    %v8626 = vpop.f32.mrf.mxu0
    %v8627 = vadd.f32 %v8614, %v8626
    %v8628 = vpop.f32.mrf.mxu0
    %8629 = vdwg.mxu0
    %8630 = vmatpush.bf16.msra.mxu0 %v8203
    %8631 = vmatpush.bf16.msra.mxu0 %v8199
    %8632 = vmatpush.bf16.msra.mxu0 %v8195
    %8633 = vmatpush.bf16.msra.mxu0 %v8191
    %8634 = vmatpush.bf16.msra.mxu0 %v8187
    %8635 = vmatpush.bf16.msra.mxu0 %v8183
    %8636 = vmatpush.bf16.msra.mxu0 %v8179
    %8637 = vmatpush.bf16.msra.mxu0 %v8175
    %8638 = vmatmul.bf16.gmra.mxu0 %v7298
    %v8639 = vpop.f32.mrf.mxu0
    %v8640 = vadd.f32 %v8627, %v8639
    %v8641 = vpop.f32.mrf.mxu0
    %8642 = vdwg.mxu0
    %8643 = vmatpush.bf16.msra.mxu0 %v8235
    %8644 = vmatpush.bf16.msra.mxu0 %v8231
    %8645 = vmatpush.bf16.msra.mxu0 %v8227
    %8646 = vmatpush.bf16.msra.mxu0 %v8223
    %8647 = vmatpush.bf16.msra.mxu0 %v8219
    %8648 = vmatpush.bf16.msra.mxu0 %v8215
    %8649 = vmatpush.bf16.msra.mxu0 %v8211
    %8650 = vmatpush.bf16.msra.mxu0 %v8207
    %8651 = vmatmul.bf16.gmra.mxu0 %v7299
    %v8652 = vpop.f32.mrf.mxu0
    %v8653 = vadd.f32 %v8640, %v8652
    %v8654 = vpop.f32.mrf.mxu0
    %8655 = vdwg.mxu0
    %8656 = vmatpush.bf16.msra.mxu0 %v8267
    %8657 = vmatpush.bf16.msra.mxu0 %v8263
    %8658 = vmatpush.bf16.msra.mxu0 %v8259
    %8659 = vmatpush.bf16.msra.mxu0 %v8255
    %8660 = vmatpush.bf16.msra.mxu0 %v8251
    %8661 = vmatpush.bf16.msra.mxu0 %v8247
    %8662 = vmatpush.bf16.msra.mxu0 %v8243
    %8663 = vmatpush.bf16.msra.mxu0 %v8239
    %8664 = vmatmul.bf16.gmra.mxu0 %v7300
    %v8665 = vpop.f32.mrf.mxu0
    %v8666 = vadd.f32 %v8653, %v8665
    %v8667 = vpop.f32.mrf.mxu0
    %8668 = vdwg.mxu0
    %8669 = vmatpush.bf16.msra.mxu0 %v8299
    %8670 = vmatpush.bf16.msra.mxu0 %v8295
    %8671 = vmatpush.bf16.msra.mxu0 %v8291
    %8672 = vmatpush.bf16.msra.mxu0 %v8287
    %8673 = vmatpush.bf16.msra.mxu0 %v8283
    %8674 = vmatpush.bf16.msra.mxu0 %v8279
    %8675 = vmatpush.bf16.msra.mxu0 %v8275
    %8676 = vmatpush.bf16.msra.mxu0 %v8271
    %8677 = vmatmul.bf16.gmra.mxu0 %v7301
    %v8678 = vpop.f32.mrf.mxu0
    %v8679 = vadd.f32 %v8666, %v8678
    %v8680 = vpop.f32.mrf.mxu0
    %8681 = vdwg.mxu0
    %8682 = vmatpush.bf16.msra.mxu0 %v8331
    %8683 = vmatpush.bf16.msra.mxu0 %v8327
    %8684 = vmatpush.bf16.msra.mxu0 %v8323
    %8685 = vmatpush.bf16.msra.mxu0 %v8319
    %8686 = vmatpush.bf16.msra.mxu0 %v8315
    %8687 = vmatpush.bf16.msra.mxu0 %v8311
    %8688 = vmatpush.bf16.msra.mxu0 %v8307
    %8689 = vmatpush.bf16.msra.mxu0 %v8303
    %8690 = vmatmul.bf16.gmra.mxu0 %v7302
    %v8691 = vpop.f32.mrf.mxu0
    %v8692 = vadd.f32 %v8679, %v8691
    %v8693 = vpop.f32.mrf.mxu0
    %8694 = vdwg.mxu0
    %8695 = vmatpush.bf16.msra.mxu0 %v8108
    %8696 = vmatpush.bf16.msra.mxu0 %v8104
    %8697 = vmatpush.bf16.msra.mxu0 %v8100
    %8698 = vmatpush.bf16.msra.mxu0 %v8096
    %8699 = vmatpush.bf16.msra.mxu0 %v8092
    %8700 = vmatpush.bf16.msra.mxu0 %v8088
    %8701 = vmatpush.bf16.msra.mxu0 %v8084
    %8702 = vmatpush.bf16.msra.mxu0 %v8080
    %8703 = vmatmul.bf16.gmra.mxu0 %v7295
    %v8704 = vpop.f32.mrf.mxu0
    %v8705 = vadd.f32 %v7239, %v8704
    %v8706 = vpop.f32.mrf.mxu0
    %8707 = vdwg.mxu0
    %8708 = vmatpush.bf16.msra.mxu0 %v8140
    %8709 = vmatpush.bf16.msra.mxu0 %v8136
    %8710 = vmatpush.bf16.msra.mxu0 %v8132
    %8711 = vmatpush.bf16.msra.mxu0 %v8128
    %8712 = vmatpush.bf16.msra.mxu0 %v8124
    %8713 = vmatpush.bf16.msra.mxu0 %v8120
    %8714 = vmatpush.bf16.msra.mxu0 %v8116
    %8715 = vmatpush.bf16.msra.mxu0 %v8112
    %8716 = vmatmul.bf16.gmra.mxu0 %v7296
    %v8717 = vpop.f32.mrf.mxu0
    %v8718 = vadd.f32 %v8705, %v8717
    %v8719 = vpop.f32.mrf.mxu0
    %8720 = vdwg.mxu0
    %8721 = vmatpush.bf16.msra.mxu0 %v8172
    %8722 = vmatpush.bf16.msra.mxu0 %v8168
    %8723 = vmatpush.bf16.msra.mxu0 %v8164
    %8724 = vmatpush.bf16.msra.mxu0 %v8160
    %8725 = vmatpush.bf16.msra.mxu0 %v8156
    %8726 = vmatpush.bf16.msra.mxu0 %v8152
    %8727 = vmatpush.bf16.msra.mxu0 %v8148
    %8728 = vmatpush.bf16.msra.mxu0 %v8144
    %8729 = vmatmul.bf16.gmra.mxu0 %v7297
    %v8730 = vpop.f32.mrf.mxu0
    %v8731 = vadd.f32 %v8718, %v8730
    %v8732 = vpop.f32.mrf.mxu0
    %8733 = vdwg.mxu0
    %8734 = vmatpush.bf16.msra.mxu0 %v8204
    %8735 = vmatpush.bf16.msra.mxu0 %v8200
    %8736 = vmatpush.bf16.msra.mxu0 %v8196
    %8737 = vmatpush.bf16.msra.mxu0 %v8192
    %8738 = vmatpush.bf16.msra.mxu0 %v8188
    %8739 = vmatpush.bf16.msra.mxu0 %v8184
    %8740 = vmatpush.bf16.msra.mxu0 %v8180
    %8741 = vmatpush.bf16.msra.mxu0 %v8176
    %8742 = vmatmul.bf16.gmra.mxu0 %v7298
    %v8743 = vpop.f32.mrf.mxu0
    %v8744 = vadd.f32 %v8731, %v8743
    %v8745 = vpop.f32.mrf.mxu0
    %8746 = vdwg.mxu0
    %8747 = vmatpush.bf16.msra.mxu0 %v8236
    %8748 = vmatpush.bf16.msra.mxu0 %v8232
    %8749 = vmatpush.bf16.msra.mxu0 %v8228
    %8750 = vmatpush.bf16.msra.mxu0 %v8224
    %8751 = vmatpush.bf16.msra.mxu0 %v8220
    %8752 = vmatpush.bf16.msra.mxu0 %v8216
    %8753 = vmatpush.bf16.msra.mxu0 %v8212
    %8754 = vmatpush.bf16.msra.mxu0 %v8208
    %8755 = vmatmul.bf16.gmra.mxu0 %v7299
    %v8756 = vpop.f32.mrf.mxu0
    %v8757 = vadd.f32 %v8744, %v8756
    %v8758 = vpop.f32.mrf.mxu0
    %8759 = vdwg.mxu0
    %8760 = vmatpush.bf16.msra.mxu0 %v8268
    %8761 = vmatpush.bf16.msra.mxu0 %v8264
    %8762 = vmatpush.bf16.msra.mxu0 %v8260
    %8763 = vmatpush.bf16.msra.mxu0 %v8256
    %8764 = vmatpush.bf16.msra.mxu0 %v8252
    %8765 = vmatpush.bf16.msra.mxu0 %v8248
    %8766 = vmatpush.bf16.msra.mxu0 %v8244
    %8767 = vmatpush.bf16.msra.mxu0 %v8240
    %8768 = vmatmul.bf16.gmra.mxu0 %v7300
    %v8769 = vpop.f32.mrf.mxu0
    %v8770 = vadd.f32 %v8757, %v8769
    %v8771 = vpop.f32.mrf.mxu0
    %8772 = vdwg.mxu0
    %8773 = vmatpush.bf16.msra.mxu0 %v8300
    %8774 = vmatpush.bf16.msra.mxu0 %v8296
    %8775 = vmatpush.bf16.msra.mxu0 %v8292
    %8776 = vmatpush.bf16.msra.mxu0 %v8288
    %8777 = vmatpush.bf16.msra.mxu0 %v8284
    %8778 = vmatpush.bf16.msra.mxu0 %v8280
    %8779 = vmatpush.bf16.msra.mxu0 %v8276
    %8780 = vmatpush.bf16.msra.mxu0 %v8272
    %8781 = vmatmul.bf16.gmra.mxu0 %v7301
    %v8782 = vpop.f32.mrf.mxu0
    %v8783 = vadd.f32 %v8770, %v8782
    %v8784 = vpop.f32.mrf.mxu0
    %8785 = vdwg.mxu0
    %8786 = vmatpush.bf16.msra.mxu0 %v8332
    %8787 = vmatpush.bf16.msra.mxu0 %v8328
    %8788 = vmatpush.bf16.msra.mxu0 %v8324
    %8789 = vmatpush.bf16.msra.mxu0 %v8320
    %8790 = vmatpush.bf16.msra.mxu0 %v8316
    %8791 = vmatpush.bf16.msra.mxu0 %v8312
    %8792 = vmatpush.bf16.msra.mxu0 %v8308
    %8793 = vmatpush.bf16.msra.mxu0 %v8304
    %8794 = vmatmul.bf16.gmra.mxu0 %v7302
    %v8795 = vpop.f32.mrf.mxu0
    %v8796 = vadd.f32 %v8783, %v8795
    %v8797 = vpop.f32.mrf.mxu0
    %8798 = vdwg.mxu0
    %8799 = vmatpush.bf16.msra.mxu0 %v8109
    %8800 = vmatpush.bf16.msra.mxu0 %v8105
    %8801 = vmatpush.bf16.msra.mxu0 %v8101
    %8802 = vmatpush.bf16.msra.mxu0 %v8097
    %8803 = vmatpush.bf16.msra.mxu0 %v8093
    %8804 = vmatpush.bf16.msra.mxu0 %v8089
    %8805 = vmatpush.bf16.msra.mxu0 %v8085
    %8806 = vmatpush.bf16.msra.mxu0 %v8081
    %8807 = vmatmul.bf16.gmra.mxu0 %v7295
    %v8808 = vpop.f32.mrf.mxu0
    %v8809 = vadd.f32 %v7240, %v8808
    %v8810 = vpop.f32.mrf.mxu0
    %8811 = vdwg.mxu0
    %8812 = vmatpush.bf16.msra.mxu0 %v8141
    %8813 = vmatpush.bf16.msra.mxu0 %v8137
    %8814 = vmatpush.bf16.msra.mxu0 %v8133
    %8815 = vmatpush.bf16.msra.mxu0 %v8129
    %8816 = vmatpush.bf16.msra.mxu0 %v8125
    %8817 = vmatpush.bf16.msra.mxu0 %v8121
    %8818 = vmatpush.bf16.msra.mxu0 %v8117
    %8819 = vmatpush.bf16.msra.mxu0 %v8113
    %8820 = vmatmul.bf16.gmra.mxu0 %v7296
    %v8821 = vpop.f32.mrf.mxu0
    %v8822 = vadd.f32 %v8809, %v8821
    %v8823 = vpop.f32.mrf.mxu0
    %8824 = vdwg.mxu0
    %8825 = vmatpush.bf16.msra.mxu0 %v8173
    %8826 = vmatpush.bf16.msra.mxu0 %v8169
    %8827 = vmatpush.bf16.msra.mxu0 %v8165
    %8828 = vmatpush.bf16.msra.mxu0 %v8161
    %8829 = vmatpush.bf16.msra.mxu0 %v8157
    %8830 = vmatpush.bf16.msra.mxu0 %v8153
    %8831 = vmatpush.bf16.msra.mxu0 %v8149
    %8832 = vmatpush.bf16.msra.mxu0 %v8145
    %8833 = vmatmul.bf16.gmra.mxu0 %v7297
    %v8834 = vpop.f32.mrf.mxu0
    %v8835 = vadd.f32 %v8822, %v8834
    %v8836 = vpop.f32.mrf.mxu0
    %8837 = vdwg.mxu0
    %8838 = vmatpush.bf16.msra.mxu0 %v8205
    %8839 = vmatpush.bf16.msra.mxu0 %v8201
    %8840 = vmatpush.bf16.msra.mxu0 %v8197
    %8841 = vmatpush.bf16.msra.mxu0 %v8193
    %8842 = vmatpush.bf16.msra.mxu0 %v8189
    %8843 = vmatpush.bf16.msra.mxu0 %v8185
    %8844 = vmatpush.bf16.msra.mxu0 %v8181
    %8845 = vmatpush.bf16.msra.mxu0 %v8177
    %8846 = vmatmul.bf16.gmra.mxu0 %v7298
    %v8847 = vpop.f32.mrf.mxu0
    %v8848 = vadd.f32 %v8835, %v8847
    %v8849 = vpop.f32.mrf.mxu0
    %8850 = vdwg.mxu0
    %8851 = vmatpush.bf16.msra.mxu0 %v8237
    %8852 = vmatpush.bf16.msra.mxu0 %v8233
    %8853 = vmatpush.bf16.msra.mxu0 %v8229
    %8854 = vmatpush.bf16.msra.mxu0 %v8225
    %8855 = vmatpush.bf16.msra.mxu0 %v8221
    %8856 = vmatpush.bf16.msra.mxu0 %v8217
    %8857 = vmatpush.bf16.msra.mxu0 %v8213
    %8858 = vmatpush.bf16.msra.mxu0 %v8209
    %8859 = vmatmul.bf16.gmra.mxu0 %v7299
    %v8860 = vpop.f32.mrf.mxu0
    %v8861 = vadd.f32 %v8848, %v8860
    %v8862 = vpop.f32.mrf.mxu0
    %8863 = vdwg.mxu0
    %8864 = vmatpush.bf16.msra.mxu0 %v8269
    %8865 = vmatpush.bf16.msra.mxu0 %v8265
    %8866 = vmatpush.bf16.msra.mxu0 %v8261
    %8867 = vmatpush.bf16.msra.mxu0 %v8257
    %8868 = vmatpush.bf16.msra.mxu0 %v8253
    %8869 = vmatpush.bf16.msra.mxu0 %v8249
    %8870 = vmatpush.bf16.msra.mxu0 %v8245
    %8871 = vmatpush.bf16.msra.mxu0 %v8241
    %8872 = vmatmul.bf16.gmra.mxu0 %v7300
    %v8873 = vpop.f32.mrf.mxu0
    %v8874 = vadd.f32 %v8861, %v8873
    %v8875 = vpop.f32.mrf.mxu0
    %8876 = vdwg.mxu0
    %8877 = vmatpush.bf16.msra.mxu0 %v8301
    %8878 = vmatpush.bf16.msra.mxu0 %v8297
    %8879 = vmatpush.bf16.msra.mxu0 %v8293
    %8880 = vmatpush.bf16.msra.mxu0 %v8289
    %8881 = vmatpush.bf16.msra.mxu0 %v8285
    %8882 = vmatpush.bf16.msra.mxu0 %v8281
    %8883 = vmatpush.bf16.msra.mxu0 %v8277
    %8884 = vmatpush.bf16.msra.mxu0 %v8273
    %8885 = vmatmul.bf16.gmra.mxu0 %v7301
    %v8886 = vpop.f32.mrf.mxu0
    %v8887 = vadd.f32 %v8874, %v8886
    %v8888 = vpop.f32.mrf.mxu0
    %8889 = vdwg.mxu0
    %8890 = vmatpush.bf16.msra.mxu0 %v8333
    %8891 = vmatpush.bf16.msra.mxu0 %v8329
    %8892 = vmatpush.bf16.msra.mxu0 %v8325
    %8893 = vmatpush.bf16.msra.mxu0 %v8321
    %8894 = vmatpush.bf16.msra.mxu0 %v8317
    %8895 = vmatpush.bf16.msra.mxu0 %v8313
    %8896 = vmatpush.bf16.msra.mxu0 %v8309
    %8897 = vmatpush.bf16.msra.mxu0 %v8305
    %8898 = vmatmul.bf16.gmra.mxu0 %v7302
    %v8899 = vpop.f32.mrf.mxu0
    %v8900 = vadd.f32 %v8887, %v8899
    %v8901 = vpop.f32.mrf.mxu0
    %8902 = vdwg.mxu0
    %8903 = vmatpush.bf16.msra.mxu0 %v8110
    %8904 = vmatpush.bf16.msra.mxu0 %v8106
    %8905 = vmatpush.bf16.msra.mxu0 %v8102
    %8906 = vmatpush.bf16.msra.mxu0 %v8098
    %8907 = vmatpush.bf16.msra.mxu0 %v8094
    %8908 = vmatpush.bf16.msra.mxu0 %v8090
    %8909 = vmatpush.bf16.msra.mxu0 %v8086
    %8910 = vmatpush.bf16.msra.mxu0 %v8082
    %8911 = vmatmul.bf16.gmra.mxu0 %v7295
    %v8912 = vpop.f32.mrf.mxu0
    %v8913 = vadd.f32 %v7241, %v8912
    %v8914 = vpop.f32.mrf.mxu0
    %8915 = vdwg.mxu0
    %8916 = vmatpush.bf16.msra.mxu0 %v8142
    %8917 = vmatpush.bf16.msra.mxu0 %v8138
    %8918 = vmatpush.bf16.msra.mxu0 %v8134
    %8919 = vmatpush.bf16.msra.mxu0 %v8130
    %8920 = vmatpush.bf16.msra.mxu0 %v8126
    %8921 = vmatpush.bf16.msra.mxu0 %v8122
    %8922 = vmatpush.bf16.msra.mxu0 %v8118
    %8923 = vmatpush.bf16.msra.mxu0 %v8114
    %8924 = vmatmul.bf16.gmra.mxu0 %v7296
    %v8925 = vpop.f32.mrf.mxu0
    %v8926 = vadd.f32 %v8913, %v8925
    %v8927 = vpop.f32.mrf.mxu0
    %8928 = vdwg.mxu0
    %8929 = vmatpush.bf16.msra.mxu0 %v8174
    %8930 = vmatpush.bf16.msra.mxu0 %v8170
    %8931 = vmatpush.bf16.msra.mxu0 %v8166
    %8932 = vmatpush.bf16.msra.mxu0 %v8162
    %8933 = vmatpush.bf16.msra.mxu0 %v8158
    %8934 = vmatpush.bf16.msra.mxu0 %v8154
    %8935 = vmatpush.bf16.msra.mxu0 %v8150
    %8936 = vmatpush.bf16.msra.mxu0 %v8146
    %8937 = vmatmul.bf16.gmra.mxu0 %v7297
    %v8938 = vpop.f32.mrf.mxu0
    %v8939 = vadd.f32 %v8926, %v8938
    %v8940 = vpop.f32.mrf.mxu0
    %8941 = vdwg.mxu0
    %8942 = vmatpush.bf16.msra.mxu0 %v8206
    %8943 = vmatpush.bf16.msra.mxu0 %v8202
    %8944 = vmatpush.bf16.msra.mxu0 %v8198
    %8945 = vmatpush.bf16.msra.mxu0 %v8194
    %8946 = vmatpush.bf16.msra.mxu0 %v8190
    %8947 = vmatpush.bf16.msra.mxu0 %v8186
    %8948 = vmatpush.bf16.msra.mxu0 %v8182
    %8949 = vmatpush.bf16.msra.mxu0 %v8178
    %8950 = vmatmul.bf16.gmra.mxu0 %v7298
    %v8951 = vpop.f32.mrf.mxu0
    %v8952 = vadd.f32 %v8939, %v8951
    %v8953 = vpop.f32.mrf.mxu0
    %8954 = vdwg.mxu0
    %8955 = vmatpush.bf16.msra.mxu0 %v8238
    %8956 = vmatpush.bf16.msra.mxu0 %v8234
    %8957 = vmatpush.bf16.msra.mxu0 %v8230
    %8958 = vmatpush.bf16.msra.mxu0 %v8226
    %8959 = vmatpush.bf16.msra.mxu0 %v8222
    %8960 = vmatpush.bf16.msra.mxu0 %v8218
    %8961 = vmatpush.bf16.msra.mxu0 %v8214
    %8962 = vmatpush.bf16.msra.mxu0 %v8210
    %8963 = vmatmul.bf16.gmra.mxu0 %v7299
    %v8964 = vpop.f32.mrf.mxu0
    %v8965 = vadd.f32 %v8952, %v8964
    %v8966 = vpop.f32.mrf.mxu0
    %8967 = vdwg.mxu0
    %8968 = vmatpush.bf16.msra.mxu0 %v8270
    %8969 = vmatpush.bf16.msra.mxu0 %v8266
    %8970 = vmatpush.bf16.msra.mxu0 %v8262
    %8971 = vmatpush.bf16.msra.mxu0 %v8258
    %8972 = vmatpush.bf16.msra.mxu0 %v8254
    %8973 = vmatpush.bf16.msra.mxu0 %v8250
    %8974 = vmatpush.bf16.msra.mxu0 %v8246
    %8975 = vmatpush.bf16.msra.mxu0 %v8242
    %8976 = vmatmul.bf16.gmra.mxu0 %v7300
    %v8977 = vpop.f32.mrf.mxu0
    %v8978 = vadd.f32 %v8965, %v8977
    %v8979 = vpop.f32.mrf.mxu0
    %8980 = vdwg.mxu0
    %8981 = vmatpush.bf16.msra.mxu0 %v8302
    %8982 = vmatpush.bf16.msra.mxu0 %v8298
    %8983 = vmatpush.bf16.msra.mxu0 %v8294
    %8984 = vmatpush.bf16.msra.mxu0 %v8290
    %8985 = vmatpush.bf16.msra.mxu0 %v8286
    %8986 = vmatpush.bf16.msra.mxu0 %v8282
    %8987 = vmatpush.bf16.msra.mxu0 %v8278
    %8988 = vmatpush.bf16.msra.mxu0 %v8274
    %8989 = vmatmul.bf16.gmra.mxu0 %v7301
    %v8990 = vpop.f32.mrf.mxu0
    %v8991 = vadd.f32 %v8978, %v8990
    %v8992 = vpop.f32.mrf.mxu0
    %8993 = vdwg.mxu0
    %8994 = vmatpush.bf16.msra.mxu0 %v8334
    %8995 = vmatpush.bf16.msra.mxu0 %v8330
    %8996 = vmatpush.bf16.msra.mxu0 %v8326
    %8997 = vmatpush.bf16.msra.mxu0 %v8322
    %8998 = vmatpush.bf16.msra.mxu0 %v8318
    %8999 = vmatpush.bf16.msra.mxu0 %v8314
    %9000 = vmatpush.bf16.msra.mxu0 %v8310
    %9001 = vmatpush.bf16.msra.mxu0 %v8306
    %9002 = vmatmul.bf16.gmra.mxu0 %v7302
    %v9003 = vpop.f32.mrf.mxu0
    %v9004 = vadd.f32 %v8991, %v9003
    %v9005 = vpop.f32.mrf.mxu0
    %9006 = vdwg.mxu0
    %v9007 = vmax.f32 %v8692, 0.0
    %v9008 = vmax.f32 %v8796, 0.0
    %v9009 = vmax.f32 %v8900, 0.0
    %v9010 = vmax.f32 %v9004, 0.0
    %v9011 = vpack.c.bf16 %v9007, %v9007
    %v9012 = vpack.c.bf16 %v9008, %v9008
    %v9013 = vpack.c.bf16 %v9009, %v9009
    %v9014 = vpack.c.bf16 %v9010, %v9010
    %v9015 = vld [vmem:[#allocation22] sm:$0xf]
    %v9016 = vld [vmem:[#allocation22 + $0x4] sm:$0xf]
    %v9017 = vld [vmem:[#allocation22 + $0x8] sm:$0xf]
    %v9018 = vld [vmem:[#allocation22 + $0xc] sm:$0xf]
    %v9019 = vld [vmem:[#allocation22 + $0x10] sm:$0xf]
    %v9020 = vld [vmem:[#allocation22 + $0x14] sm:$0xf]
    %v9021 = vld [vmem:[#allocation22 + $0x18] sm:$0xf]
    %v9022 = vld [vmem:[#allocation22 + $0x1c] sm:$0xf]
    %v9023 = vld [vmem:[#allocation22 + $0x20] sm:$0xf]
    %v9024 = vld [vmem:[#allocation22 + $0x24] sm:$0xf]
    %v9025 = vld [vmem:[#allocation22 + $0x28] sm:$0xf]
    %v9026 = vld [vmem:[#allocation22 + $0x2c] sm:$0xf]
    %v9027 = vld [vmem:[#allocation22 + $0x30] sm:$0xf]
    %v9028 = vld [vmem:[#allocation22 + $0x34] sm:$0xf]
    %v9029 = vld [vmem:[#allocation22 + $0x38] sm:$0xf]
    %v9030 = vld [vmem:[#allocation22 + $0x3c] sm:$0xf]
    %v9031 = vld [vmem:[#allocation22 + $0x40] sm:$0xf]
    %v9032 = vld [vmem:[#allocation22 + $0x44] sm:$0xf]
    %v9033 = vld [vmem:[#allocation22 + $0x48] sm:$0xf]
    %v9034 = vld [vmem:[#allocation22 + $0x4c] sm:$0xf]
    %v9035 = vld [vmem:[#allocation22 + $0x50] sm:$0xf]
    %v9036 = vld [vmem:[#allocation22 + $0x54] sm:$0xf]
    %v9037 = vld [vmem:[#allocation22 + $0x58] sm:$0xf]
    %v9038 = vld [vmem:[#allocation22 + $0x5c] sm:$0xf]
    %v9039 = vld [vmem:[#allocation22 + $0x60] sm:$0xf]
    %v9040 = vld [vmem:[#allocation22 + $0x64] sm:$0xf]
    %v9041 = vld [vmem:[#allocation22 + $0x68] sm:$0xf]
    %v9042 = vld [vmem:[#allocation22 + $0x6c] sm:$0xf]
    %v9043 = vld [vmem:[#allocation22 + $0x70] sm:$0xf]
    %v9044 = vld [vmem:[#allocation22 + $0x74] sm:$0xf]
    %v9045 = vld [vmem:[#allocation22 + $0x78] sm:$0xf]
    %v9046 = vld [vmem:[#allocation22 + $0x7c] sm:$0xf]
    %v9047 = vld [vmem:[#allocation22 + $0x80] sm:$0xf]
    %v9048 = vld [vmem:[#allocation22 + $0x84] sm:$0xf]
    %v9049 = vld [vmem:[#allocation22 + $0x88] sm:$0xf]
    %v9050 = vld [vmem:[#allocation22 + $0x8c] sm:$0xf]
    %v9051 = vld [vmem:[#allocation22 + $0x90] sm:$0xf]
    %v9052 = vld [vmem:[#allocation22 + $0x94] sm:$0xf]
    %v9053 = vld [vmem:[#allocation22 + $0x98] sm:$0xf]
    %v9054 = vld [vmem:[#allocation22 + $0x9c] sm:$0xf]
    %v9055 = vld [vmem:[#allocation22 + $0xa0] sm:$0xf]
    %v9056 = vld [vmem:[#allocation22 + $0xa4] sm:$0xf]
    %v9057 = vld [vmem:[#allocation22 + $0xa8] sm:$0xf]
    %v9058 = vld [vmem:[#allocation22 + $0xac] sm:$0xf]
    %v9059 = vld [vmem:[#allocation22 + $0xb0] sm:$0xf]
    %v9060 = vld [vmem:[#allocation22 + $0xb4] sm:$0xf]
    %v9061 = vld [vmem:[#allocation22 + $0xb8] sm:$0xf]
    %v9062 = vld [vmem:[#allocation22 + $0xbc] sm:$0xf]
    %v9063 = vld [vmem:[#allocation22 + $0xc0] sm:$0xf]
    %v9064 = vld [vmem:[#allocation22 + $0xc4] sm:$0xf]
    %v9065 = vld [vmem:[#allocation22 + $0xc8] sm:$0xf]
    %v9066 = vld [vmem:[#allocation22 + $0xcc] sm:$0xf]
    %v9067 = vld [vmem:[#allocation22 + $0xd0] sm:$0xf]
    %v9068 = vld [vmem:[#allocation22 + $0xd4] sm:$0xf]
    %v9069 = vld [vmem:[#allocation22 + $0xd8] sm:$0xf]
    %v9070 = vld [vmem:[#allocation22 + $0xdc] sm:$0xf]
    %v9071 = vld [vmem:[#allocation22 + $0xe0] sm:$0xf]
    %v9072 = vld [vmem:[#allocation22 + $0xe4] sm:$0xf]
    %v9073 = vld [vmem:[#allocation22 + $0xe8] sm:$0xf]
    %v9074 = vld [vmem:[#allocation22 + $0xec] sm:$0xf]
    %v9075 = vld [vmem:[#allocation22 + $0xf0] sm:$0xf]
    %v9076 = vld [vmem:[#allocation22 + $0xf4] sm:$0xf]
    %v9077 = vld [vmem:[#allocation22 + $0xf8] sm:$0xf]
    %v9078 = vld [vmem:[#allocation22 + $0xfc] sm:$0xf]
    %v9079 = vld [vmem:[%s15] sm:$0x1]
    %v9081 = vperm.slane %v9079, 0
    %v9147 = vunpack.c.l.b16 %v9015
    %v9148 = vunpack.c.l.b16 %v9016
    %v9149 = vunpack.c.l.b16 %v9017
    %v9150 = vunpack.c.l.b16 %v9018
    %v9151 = vunpack.c.l.b16 %v9019
    %v9152 = vunpack.c.l.b16 %v9020
    %v9153 = vunpack.c.l.b16 %v9021
    %v9154 = vunpack.c.l.b16 %v9022
    %v9155 = vunpack.c.l.b16 %v9023
    %v9156 = vunpack.c.l.b16 %v9024
    %v9157 = vunpack.c.l.b16 %v9025
    %v9158 = vunpack.c.l.b16 %v9026
    %v9159 = vunpack.c.l.b16 %v9027
    %v9160 = vunpack.c.l.b16 %v9028
    %v9161 = vunpack.c.l.b16 %v9029
    %v9162 = vunpack.c.l.b16 %v9030
    %v9163 = vunpack.c.l.b16 %v9031
    %v9164 = vunpack.c.l.b16 %v9032
    %v9165 = vunpack.c.l.b16 %v9033
    %v9166 = vunpack.c.l.b16 %v9034
    %v9167 = vunpack.c.l.b16 %v9035
    %v9168 = vunpack.c.l.b16 %v9036
    %v9169 = vunpack.c.l.b16 %v9037
    %v9170 = vunpack.c.l.b16 %v9038
    %v9171 = vunpack.c.l.b16 %v9039
    %v9172 = vunpack.c.l.b16 %v9040
    %v9173 = vunpack.c.l.b16 %v9041
    %v9174 = vunpack.c.l.b16 %v9042
    %v9175 = vunpack.c.l.b16 %v9043
    %v9176 = vunpack.c.l.b16 %v9044
    %v9177 = vunpack.c.l.b16 %v9045
    %v9178 = vunpack.c.l.b16 %v9046
    %v9179 = vunpack.c.l.b16 %v9047
    %v9180 = vunpack.c.l.b16 %v9048
    %v9181 = vunpack.c.l.b16 %v9049
    %v9182 = vunpack.c.l.b16 %v9050
    %v9183 = vunpack.c.l.b16 %v9051
    %v9184 = vunpack.c.l.b16 %v9052
    %v9185 = vunpack.c.l.b16 %v9053
    %v9186 = vunpack.c.l.b16 %v9054
    %v9187 = vunpack.c.l.b16 %v9055
    %v9188 = vunpack.c.l.b16 %v9056
    %v9189 = vunpack.c.l.b16 %v9057
    %v9190 = vunpack.c.l.b16 %v9058
    %v9191 = vunpack.c.l.b16 %v9059
    %v9192 = vunpack.c.l.b16 %v9060
    %v9193 = vunpack.c.l.b16 %v9061
    %v9194 = vunpack.c.l.b16 %v9062
    %v9195 = vunpack.c.l.b16 %v9063
    %v9196 = vunpack.c.l.b16 %v9064
    %v9197 = vunpack.c.l.b16 %v9065
    %v9198 = vunpack.c.l.b16 %v9066
    %v9199 = vunpack.c.l.b16 %v9067
    %v9200 = vunpack.c.l.b16 %v9068
    %v9201 = vunpack.c.l.b16 %v9069
    %v9202 = vunpack.c.l.b16 %v9070
    %v9203 = vunpack.c.l.b16 %v9071
    %v9204 = vunpack.c.l.b16 %v9072
    %v9205 = vunpack.c.l.b16 %v9073
    %v9206 = vunpack.c.l.b16 %v9074
    %v9207 = vunpack.c.l.b16 %v9075
    %v9208 = vunpack.c.l.b16 %v9076
    %v9209 = vunpack.c.l.b16 %v9077
    %v9210 = vunpack.c.l.b16 %v9078
    %v9211 = vpack.c.b16 %v9148, %v9147
    %v9212 = vpack.c.b16 %v9150, %v9149
    %v9213 = vpack.c.b16 %v9152, %v9151
    %v9214 = vpack.c.b16 %v9154, %v9153
    %v9215 = vpack.c.b16 %v9156, %v9155
    %v9216 = vpack.c.b16 %v9158, %v9157
    %v9217 = vpack.c.b16 %v9160, %v9159
    %v9218 = vpack.c.b16 %v9162, %v9161
    %v9219 = vpack.c.b16 %v9164, %v9163
    %v9220 = vpack.c.b16 %v9166, %v9165
    %v9221 = vpack.c.b16 %v9168, %v9167
    %v9222 = vpack.c.b16 %v9170, %v9169
    %v9223 = vpack.c.b16 %v9172, %v9171
    %v9224 = vpack.c.b16 %v9174, %v9173
    %v9225 = vpack.c.b16 %v9176, %v9175
    %v9226 = vpack.c.b16 %v9178, %v9177
    %v9227 = vpack.c.b16 %v9180, %v9179
    %v9228 = vpack.c.b16 %v9182, %v9181
    %v9229 = vpack.c.b16 %v9184, %v9183
    %v9230 = vpack.c.b16 %v9186, %v9185
    %v9231 = vpack.c.b16 %v9188, %v9187
    %v9232 = vpack.c.b16 %v9190, %v9189
    %v9233 = vpack.c.b16 %v9192, %v9191
    %v9234 = vpack.c.b16 %v9194, %v9193
    %v9235 = vpack.c.b16 %v9196, %v9195
    %v9236 = vpack.c.b16 %v9198, %v9197
    %v9237 = vpack.c.b16 %v9200, %v9199
    %v9238 = vpack.c.b16 %v9202, %v9201
    %v9239 = vpack.c.b16 %v9204, %v9203
    %v9240 = vpack.c.b16 %v9206, %v9205
    %v9241 = vpack.c.b16 %v9208, %v9207
    %v9242 = vpack.c.b16 %v9210, %v9209
    %9275 = vmatpush.bf16.msra.mxu0 %v9218
    %9276 = vmatpush.bf16.msra.mxu0 %v9217
    %9277 = vmatpush.bf16.msra.mxu0 %v9216
    %9278 = vmatpush.bf16.msra.mxu0 %v9215
    %9279 = vmatpush.bf16.msra.mxu0 %v9214
    %9280 = vmatpush.bf16.msra.mxu0 %v9213
    %9281 = vmatpush.bf16.msra.mxu0 %v9212
    %9282 = vmatpush.bf16.msra.mxu0 %v9211
    %9283 = vmatmul.bf16.gmra.mxu0 %v9011
    %v9284 = vpop.f32.mrf.mxu0
    %v9285 = vadd.f32 %v9081, %v9284
    %v9286 = vpop.f32.mrf.mxu0
    %9287 = vdwg.mxu0
    %9288 = vmatpush.bf16.msra.mxu0 %v9226
    %9289 = vmatpush.bf16.msra.mxu0 %v9225
    %9290 = vmatpush.bf16.msra.mxu0 %v9224
    %9291 = vmatpush.bf16.msra.mxu0 %v9223
    %9292 = vmatpush.bf16.msra.mxu0 %v9222
    %9293 = vmatpush.bf16.msra.mxu0 %v9221
    %9294 = vmatpush.bf16.msra.mxu0 %v9220
    %9295 = vmatpush.bf16.msra.mxu0 %v9219
    %9296 = vmatmul.bf16.gmra.mxu0 %v9012
    %v9297 = vpop.f32.mrf.mxu0
    %v9298 = vadd.f32 %v9285, %v9297
    %v9299 = vpop.f32.mrf.mxu0
    %9300 = vdwg.mxu0
    %9301 = vmatpush.bf16.msra.mxu0 %v9234
    %9302 = vmatpush.bf16.msra.mxu0 %v9233
    %9303 = vmatpush.bf16.msra.mxu0 %v9232
    %9304 = vmatpush.bf16.msra.mxu0 %v9231
    %9305 = vmatpush.bf16.msra.mxu0 %v9230
    %9306 = vmatpush.bf16.msra.mxu0 %v9229
    %9307 = vmatpush.bf16.msra.mxu0 %v9228
    %9308 = vmatpush.bf16.msra.mxu0 %v9227
    %9309 = vmatmul.bf16.gmra.mxu0 %v9013
    %v9310 = vpop.f32.mrf.mxu0
    %v9311 = vadd.f32 %v9298, %v9310
    %v9312 = vpop.f32.mrf.mxu0
    %9313 = vdwg.mxu0
    %9314 = vmatpush.bf16.msra.mxu0 %v9242
    %9315 = vmatpush.bf16.msra.mxu0 %v9241
    %9316 = vmatpush.bf16.msra.mxu0 %v9240
    %9317 = vmatpush.bf16.msra.mxu0 %v9239
    %9318 = vmatpush.bf16.msra.mxu0 %v9238
    %9319 = vmatpush.bf16.msra.mxu0 %v9237
    %9320 = vmatpush.bf16.msra.mxu0 %v9236
    %9321 = vmatpush.bf16.msra.mxu0 %v9235
    %9322 = vmatmul.bf16.gmra.mxu0 %v9014
    %v9323 = vpop.f32.mrf.mxu0
    %v9324 = vadd.f32 %v9311, %v9323
    %v9325 = vpop.f32.mrf.mxu0
    %9326 = vdwg.mxu0
    %vm9327 = vcmask 1041408
    %v9328 = vsel %vm9327, %v9324, -inf
    %9329 = vmax.xlane.f32.xlu0 %v9328
    %v9330 = vpop.xlane.xlu0 %9329
    %v9331 = vsub.f32 %v9324, %v9330
    %v9332 = vmul.f32 %v9331, 1.442695
    %v9333 = vpow.pop %v9332
    %v9334 = vsel %vm9327, %v9333, 0.0
    %9335 = vadd.xlane.f32.xlu0 %v9334
    %v9336 = vpop.xlane.xlu0 %9335
    %v9337 = vlog2.pop %v9336
    %v9338 = vmul.f32 %v9337, 0.6931472
    %v9339 = vsub.f32 %v9331, %v9338
    %9340 = vst [vmem:[#allocation23] sm:$0x3] %v9339
    // Predicated region
    $region118: #{tpu_custom_call.1} parent=1 // pred_check
      _
    $region119: #{tpu_custom_call.1} parent=1 // pred_check_branch
      %9342 = sbr.rel (0) target = $region121
    $region120: #{tpu_custom_call.1} parent=1 // pred_region
      %9344 = vsyncadd [#allocation4], 0
      %s9346 = sshll.u32 [#allocation23], 4
      %s9347 = int_to_ptr.vmem [resolvable:$true] %s9346
      %s9348 = sshll.u32 %s16, 4
      %s9349 = int_to_ptr.hbm [resolvable:$true] %s9348
      %9351 = dma.vmem_to_hbm [thread:$0]  %s9347, 32, %s9349, [#allocation4]
    $region121: #{tpu_custom_call.1} parent=1 // pred_fallthru
      _
    // Predicated region
    $region122: #{tpu_custom_call.1} parent=1 // pred_check
      _
    $region123: #{tpu_custom_call.1} parent=1 // pred_check_branch
      %9353 = sbr.rel (0) target = $region125
    $region124: #{tpu_custom_call.1} parent=1 // pred_region
      %9355 = dma.done [#allocation4], 32
    $region125: #{tpu_custom_call.1} parent=1 // pred_fallthru
      _
    %9356 = vsyncpa [#allocation3], 1
    %9357 = vsyncpa [#allocation6], 1
    %9358 = vsyncpa [#allocation9], 1
    %9359 = vsyncpa [#allocation12], 1
    %9360 = vsyncpa [#allocation15], 1
    %9361 = vsyncpa [#allocation18], 1
    %9362 = vsyncpa [#allocation21], 1
    %9363 = vsyncpa [#allocation4], 1

</llo_original>
